<compile_context>
chip_gen: v6e
topology: v6e:2x2x1
jax: 0.10.0
libtpu: 0.0.40
codegen_flags: <defaults>
</compile_context>

<pallas_src>
import numpy as np
import jax
import jax.numpy as jnp
from jax import lax
from jax.experimental import pallas as pl
from jax.experimental.pallas import tpu as pltpu

NEG_SLOPE = 0.2
K = 5                          # conv kernel size
S0 = 7 * 7                     # 49   stage-1 input spatial (7x7)
H1 = 14
S1 = H1 * H1                   # 196  stage-1 output spatial (14x14)
H2 = 28                        # stage-2 output spatial (28x28)
FRAME2_H, FRAME2_W = 33, 32    # stage-2 zero-padded upsample frame (extra zero row
                               # keeps every tap's 896-wide lane slice in range)
FRAME2 = FRAME2_H * FRAME2_W   # 1056
OUT_ROW = H2 * FRAME2_W        # 896 = 28 rows x 32 cols (cols 28..31 are junk, cropped)


def _leaky(x):
    return jnp.where(x > 0.0, x, NEG_SLOPE * x)


# ----------------------------------------------------------------------------
# Pallas kernels
# ----------------------------------------------------------------------------
def _conv0_kernel(z_ref, w_ref, b_ref, o_ref):
    # z: (bt, 128)  w: (128, 6272)  b: (1, 6272)  o: (bt, 6272)
    y = jnp.dot(z_ref[...], w_ref[...], preferred_element_type=jnp.float32) + b_ref[...]
    o_ref[...] = _leaky(y)


def _stages_kernel(h0_ref, m1_ref, w1_ref, b1_ref, m2_ref, w2_ref, b2_ref, o_ref):
    """Fused up1(7->14)+conv1(5x5,128->64)+LReLU+up2(14->28)+conv2(5x5,64->1)+LReLU.

    Per-sample, channels-first (channels on sublanes, spatial flattened on lanes):
      h0_ref: (1, 128, 49)   conv0 output (torch .view order == channel-major)
      m1_ref: (25, 49, 196)  per-tap (upsample + pad + shift)^T matrices
      w1_ref: (1600, 128)    conv1 weights, row = tap*64 + cout
      b1_ref: (64, 1)
      m2_ref: (196, 1056)    (upsample 14->28 into zero-padded 33x32 frame)^T
      w2_ref: (25, 64)       conv2 weights, row = tap
      b2_ref: (1, 1)
      o_ref : (1, 1, 896)    28 rows x 32 frame cols (lane-dense store)
    """
    x1 = h0_ref[0]                                                      # (128, 49)

    # ---- stage 1: all-tap weight contraction in ONE matmul, then per-tap
    #      (upsample+shift) matmuls. Bias broadcast hoisted out of the loop. --
    y1 = jnp.dot(w1_ref[...], x1, preferred_element_type=jnp.float32)   # (1600, 49)
    acc1 = jnp.broadcast_to(b1_ref[...], (64, S1))                      # (64, 196)
    for t in range(K * K):
        acc1 = acc1 + jnp.dot(y1[t * 64:(t + 1) * 64, :], m1_ref[t],
                              preferred_element_type=jnp.float32)       # (64, 196)
    x2 = _leaky(acc1)                                                   # (64, 196)

    # ---- stage 2 (Cout=1): contract channels first for all taps (one matmul),
    #      one upsample matmul into the zero-padded frame, then 25 static
    #      lane-shifted slices accumulate the 5x5 taps. ------------------------
    y2 = jnp.dot(w2_ref[...], x2, preferred_element_type=jnp.float32)   # (25, 196)
    z2 = jnp.dot(y2, m2_ref[...], preferred_element_type=jnp.float32)   # (25, 1056)
    acc2 = jnp.broadcast_to(b2_ref[...], (1, OUT_ROW))                  # (1, 896)
    for t in range(K * K):
        ky, kx = t // K, t % K
        off = ky * FRAME2_W + kx                                        # static shift
        acc2 = acc2 + z2[t:t + 1, off:off + OUT_ROW]
    o_ref[0] = _leaky(acc2)


# ----------------------------------------------------------------------------
# Host-side precomputed bilinear (align_corners=True) upsample matrices.
# ----------------------------------------------------------------------------
def _bilinear_matrix(n_in, n_out):
    """PyTorch UpsamplingBilinear2d (align_corners=True) 1-D interpolation matrix."""
    A = np.zeros((n_out, n_in), np.float32)
    if n_out == 1 or n_in == 1:
        A[:, 0] = 1.0
        return A
    scale = (n_in - 1) / (n_out - 1)
    for i in range(n_out):
        src = i * scale
        lo = min(int(np.floor(src)), n_in - 1)
        hi = min(lo + 1, n_in - 1)
        frac = src - lo
        A[i, lo] += 1.0 - frac
        A[i, hi] += frac
    return A


def _stage1_tap_matrices():
    """(25, 49, 196): tap t maps x (.,49) -> shifted zero-padded 7->14 upsample."""
    A = _bilinear_matrix(7, 14)                        # (14, 7)
    Ap = np.zeros((18, 7), np.float32)
    Ap[2:16] = A                                       # pad=2 -> 18x18 frame
    Mpad = np.kron(Ap, Ap)                             # (324, 49): [(ph*18+pw), (ih*7+iw)]
    taps = np.zeros((K * K, S0, S1), np.float32)
    o = np.arange(H1)
    for ky in range(K):
        for kx in range(K):
            rows = ((o[:, None] + ky) * 18 + (o[None, :] + kx)).reshape(-1)  # (196,)
            taps[ky * K + kx] = Mpad[rows].T           # (49, 196)
    return taps


def _stage2_frame_matrix():
    """(196, 1056): x (.,196) -> zero-padded 33x32 frame of the 14->28 upsample."""
    A = _bilinear_matrix(14, 28)                       # (28, 14)
    Aph = np.zeros((FRAME2_H, 14), np.float32)
    Aph[2:30] = A                                      # rows 0,1,30,31,32 stay zero
    Apw = np.zeros((FRAME2_W, 14), np.float32)
    Apw[2:30] = A                                      # cols 0,1,30,31 stay zero
    Mpad = np.kron(Aph, Apw)                           # (1056, 196)
    return Mpad.T                                      # (196, 1056)


# ----------------------------------------------------------------------------
# Parameters: torch layouts -> kernel layouts (do this once on the host).
# ----------------------------------------------------------------------------
def init_torch_params(key):
    ks = jax.random.split(key, 6)
    s = 0.02
    return {
        "conv0_w": jax.random.normal(ks[0], (6272, 100), jnp.float32) * s,   # (Cout, Cin)
        "conv0_b": jax.random.normal(ks[1], (6272,), jnp.float32) * s,
        "conv1_w": jax.random.normal(ks[2], (64, 128, K, K), jnp.float32) * s,
        "conv1_b": jax.random.normal(ks[3], (64,), jnp.float32) * s,
        "conv2_w": jax.random.normal(ks[4], (1, 64, K, K), jnp.float32) * s,
        "conv2_b": jax.random.normal(ks[5], (1,), jnp.float32) * s,
    }


def prepare_kernel_params(tp):
    # conv0: (6272,100) -> (128, 6272), contraction padded 100 -> 128 with zeros.
    w0 = jnp.zeros((128, 6272), jnp.float32).at[:100].set(jnp.transpose(tp["conv0_w"]))
    b0 = tp["conv0_b"].reshape(1, 6272)
    # conv1: (64,128,5,5) -> rows = tap*64 + cout, cols = cin.
    w1 = jnp.transpose(tp["conv1_w"], (2, 3, 0, 1)).reshape(K * K * 64, 128)
    b1 = tp["conv1_b"].reshape(64, 1)
    # conv2: (1,64,5,5) -> rows = tap, cols = cin.
    w2 = jnp.transpose(tp["conv2_w"], (2, 3, 0, 1)).reshape(K * K, 64)
    b2 = tp["conv2_b"].reshape(1, 1)
    return {
        "w0": w0, "b0": b0,
        "w1": w1, "b1": b1, "m1": jnp.asarray(_stage1_tap_matrices()),
        "w2": w2, "b2": b2, "m2": jnp.asarray(_stage2_frame_matrix()),
    }


# ----------------------------------------------------------------------------
# Forward pass
# ----------------------------------------------------------------------------
def dcgan_generator_forward(z, kp):
    """z: (B, 100, 1, 1) NCHW  ->  (B, 1, 28, 28)."""
    B = z.shape[0]
    zp = z.reshape(B, 100).astype(jnp.float32)
    zp = jnp.pad(zp, ((0, 0), (0, 28)))                # contraction dim 100 -> 128

    # conv0 (1x1 conv == dense) as one batched MXU matmul, tiled over batch.
    bt = B if B <= 64 else 64
    h0 = pl.pallas_call(
        _conv0_kernel,
        out_shape=jax.ShapeDtypeStruct((B, 128 * S0), jnp.float32),
        grid=(pl.cdiv(B, bt),),
        in_specs=[
            pl.BlockSpec((bt, 128), lambda i: (i, 0)),
            pl.BlockSpec((128, 128 * S0), lambda i: (0, 0)),
            pl.BlockSpec((1, 128 * S0), lambda i: (0, 0)),
        ],
        out_specs=pl.BlockSpec((bt, 128 * S0), lambda i: (i, 0)),
        compiler_params=pltpu.CompilerParams(dimension_semantics=("parallel",)),
    )(zp, kp["w0"], kp["b0"])

    # torch .view(B,128,7,7) is channel-major, so this is a FREE reshape (no transpose).
    h0 = h0.reshape(B, 128, S0)

    # Fused stage1 + stage2, one grid step per sample (parallel across TCs on v7x).
    out = pl.pallas_call(
        _stages_kernel,
        out_shape=jax.ShapeDtypeStruct((B, 1, OUT_ROW), jnp.float32),
        grid=(B,),
        in_specs=[
            pl.BlockSpec((1, 128, S0), lambda b: (b, 0, 0)),
            pl.BlockSpec((K * K, S0, S1), lambda b: (0, 0, 0)),
            pl.BlockSpec((K * K * 64, 128), lambda b: (0, 0)),
            pl.BlockSpec((64, 1), lambda b: (0, 0)),
            pl.BlockSpec((S1, FRAME2), lambda b: (0, 0)),
            pl.BlockSpec((K * K, 64), lambda b: (0, 0)),
            pl.BlockSpec((1, 1), lambda b: (0, 0)),
        ],
        out_specs=pl.BlockSpec((1, 1, OUT_ROW), lambda b: (b, 0, 0)),
        compiler_params=pltpu.CompilerParams(dimension_semantics=("parallel",)),
    )(h0, kp["m1"], kp["w1"], kp["b1"], kp["m2"], kp["w2"], kp["b2"])

    # (B, 1, 896) -> (B, 28, 32) -> crop the 4 junk frame columns -> NCHW.
    img = out.reshape(B, H2, FRAME2_W)[:, :, :H2]
    return img[:, None, :, :]


# ----------------------------------------------------------------------------
# Pure-JAX reference (independent of the tap/kron construction) for validation.
# ----------------------------------------------------------------------------
def reference_forward(z, tp):
    B = z.shape[0]
    hp = lax.Precision.HIGHEST
    x = z.reshape(B, 100).astype(jnp.float32)
    h0 = jnp.dot(x, jnp.transpose(tp["conv0_w"]), precision=hp) + tp["conv0_b"]
    h0 = jnp.where(h0 > 0, h0, NEG_SLOPE * h0).reshape(B, 128, 7, 7)
    A1 = jnp.asarray(_bilinear_matrix(7, 14))
    A2 = jnp.asarray(_bilinear_matrix(14, 28))
    u1 = jnp.einsum("Oi,Pj,bcij->bcOP", A1, A1, h0, precision=hp)
    c1 = lax.conv_general_dilated(u1, tp["conv1_w"], (1, 1), ((2, 2), (2, 2)),
                                  dimension_numbers=("NCHW", "OIHW", "NCHW"),
                                  precision=hp) + tp["conv1_b"][None, :, None, None]
    c1 = jnp.where(c1 > 0, c1, NEG_SLOPE * c1)
    u2 = jnp.einsum("Oi,Pj,bcij->bcOP", A2, A2, c1, precision=hp)
    c2 = lax.conv_general_dilated(u2, tp["conv2_w"], (1, 1), ((2, 2), (2, 2)),
                                  dimension_numbers=("NCHW", "OIHW", "NCHW"),
                                  precision=hp) + tp["conv2_b"][None, :, None, None]
    return jnp.where(c2 > 0, c2, NEG_SLOPE * c2)


# ----------------------------------------------------------------------------
if __name__ == "__main__":
    key = jax.random.PRNGKey(0)
    kw, kz = jax.random.split(key)

    torch_params = init_torch_params(kw)
    kparams = prepare_kernel_params(torch_params)

    z = jax.random.normal(kz, (2, 100, 1, 1), jnp.float32)

    fwd = jax.jit(dcgan_generator_forward)
    out = jax.block_until_ready(fwd(z, kparams))

    assert out.shape == (2, 1, 28, 28), out.shape
    assert bool(jnp.all(jnp.isfinite(out)))

    ref = jax.block_until_ready(jax.jit(reference_forward)(z, torch_params))
    np.testing.assert_allclose(np.asarray(out), np.asarray(ref), rtol=5e-2, atol=5e-3)

    print("KERNEL_OK")
</pallas_src>

<mosaic_0001>
module attributes {stable_mosaic.version = 11 : i64} {
  func.func @_conv0_kernel(%arg0: i32, %arg1: memref<2x128xf32, #tpu.memory_space<vmem>>, %arg2: memref<128x6272xf32, #tpu.memory_space<vmem>>, %arg3: memref<1x6272xf32, #tpu.memory_space<vmem>>, %arg4: memref<2x6272xf32, #tpu.memory_space<vmem>>) attributes {dimension_semantics = [#tpu.dimension_semantics<parallel>], iteration_bounds = array<i64: 1>, scalar_prefetch = 0 : i64, scratch_operands = 0 : i64, tpu.core_type = #tpu.core_type<tc>, window_params = [{transform_indices = @transform_0, window_bounds = array<i64: 2, 128>}, {pipeline_mode = #tpu.pipeline_mode<synchronous>, transform_indices = @transform_1, window_bounds = array<i64: 128, 6272>}, {pipeline_mode = #tpu.pipeline_mode<synchronous>, transform_indices = @transform_2, window_bounds = array<i64: 1, 6272>}, {transform_indices = @transform_3, window_bounds = array<i64: 2, 6272>}]} {
    %c0 = arith.constant 0 : index
    %c0_0 = arith.constant 0 : index
    %0 = vector.load %arg1[%c0, %c0_0] : memref<2x128xf32, #tpu.memory_space<vmem>>, vector<2x128xf32>
    %c0_1 = arith.constant 0 : index
    %c0_2 = arith.constant 0 : index
    %1 = vector.load %arg2[%c0_1, %c0_2] : memref<128x6272xf32, #tpu.memory_space<vmem>>, vector<128x6272xf32>
    %cst = arith.constant dense<0.000000e+00> : vector<2x6272xf32>
    %2 = tpu.matmul %0, %1, %cst {dimension_numbers = #tpu.dot_dimension_numbers<[1], [0], [0], [1], [0, 0, 1, 1], [], []>} : vector<2x128xf32>, vector<128x6272xf32>, vector<2x6272xf32> -> vector<2x6272xf32>
    %c0_3 = arith.constant 0 : index
    %c0_4 = arith.constant 0 : index
    %3 = vector.load %arg3[%c0_3, %c0_4] : memref<1x6272xf32, #tpu.memory_space<vmem>>, vector<1x6272xf32>
    %4 = vector.broadcast %3 : vector<1x6272xf32> to vector<2x6272xf32>
    %5 = arith.addf %2, %4 : vector<2x6272xf32>
    %cst_5 = arith.constant 0.000000e+00 : f32
    %6 = vector.broadcast %cst_5 : f32 to vector<2x6272xf32>
    %7 = arith.cmpf ogt, %5, %6 : vector<2x6272xf32>
    %cst_6 = arith.constant 2.000000e-01 : f32
    %8 = vector.broadcast %cst_6 : f32 to vector<2x6272xf32>
    %9 = arith.mulf %8, %5 : vector<2x6272xf32>
    %10 = arith.select %7, %5, %9 : vector<2x6272xi1>, vector<2x6272xf32>
    %c0_7 = arith.constant 0 : index
    %c0_8 = arith.constant 0 : index
    %11 = vector.load %arg4[%c0_7, %c0_8] : memref<2x6272xf32, #tpu.memory_space<vmem>>, vector<2x6272xf32>
    tpu.vector_store %arg4[%c0_7, %c0_8], %10 {strides = array<i32>} : memref<2x6272xf32, #tpu.memory_space<vmem>>, vector<2x6272xf32>,
    return
  }
  func.func @transform_0(%arg0: i32) -> (i32, i32) {
    %c0_i32 = arith.constant 0 : i32
    %c0_i32_0 = arith.constant 0 : i32
    return %arg0, %c0_i32 : i32, i32
  }
  func.func @transform_1(%arg0: i32) -> (i32, i32) {
    %c0_i32 = arith.constant 0 : i32
    %c0_i32_0 = arith.constant 0 : i32
    %c0_i32_1 = arith.constant 0 : i32
    return %c0_i32, %c0_i32_0 : i32, i32
  }
  func.func @transform_2(%arg0: i32) -> (i32, i32) {
    %c0_i32 = arith.constant 0 : i32
    %c0_i32_0 = arith.constant 0 : i32
    %c0_i32_1 = arith.constant 0 : i32
    return %c0_i32, %c0_i32_0 : i32, i32
  }
  func.func @transform_3(%arg0: i32) -> (i32, i32) {
    %c0_i32 = arith.constant 0 : i32
    %c0_i32_0 = arith.constant 0 : i32
    return %arg0, %c0_i32 : i32, i32
  }
}

module attributes {stable_mosaic.version = 11 : i64} {
  func.func @_stages_kernel(%arg0: i32, %arg1: memref<1x128x49xf32, #tpu.memory_space<vmem>>, %arg2: memref<25x49x196xf32, #tpu.memory_space<vmem>>, %arg3: memref<1600x128xf32, #tpu.memory_space<vmem>>, %arg4: memref<64x1xf32, #tpu.memory_space<vmem>>, %arg5: memref<196x1056xf32, #tpu.memory_space<vmem>>, %arg6: memref<25x64xf32, #tpu.memory_space<vmem>>, %arg7: memref<1x1xf32, #tpu.memory_space<vmem>>, %arg8: memref<1x1x896xf32, #tpu.memory_space<vmem>>) attributes {dimension_semantics = [#tpu.dimension_semantics<parallel>], iteration_bounds = array<i64: 2>, scalar_prefetch = 0 : i64, scratch_operands = 0 : i64, tpu.core_type = #tpu.core_type<tc>, window_params = [{transform_indices = @transform_0, window_bounds = array<i64: 1, 128, 49>}, {pipeline_mode = #tpu.pipeline_mode<synchronous>, transform_indices = @transform_1, window_bounds = array<i64: 25, 49, 196>}, {pipeline_mode = #tpu.pipeline_mode<synchronous>, transform_indices = @transform_2, window_bounds = array<i64: 1600, 128>}, {pipeline_mode = #tpu.pipeline_mode<synchronous>, transform_indices = @transform_3, window_bounds = array<i64: 64, 1>}, {pipeline_mode = #tpu.pipeline_mode<synchronous>, transform_indices = @transform_4, window_bounds = array<i64: 196, 1056>}, {pipeline_mode = #tpu.pipeline_mode<synchronous>, transform_indices = @transform_5, window_bounds = array<i64: 25, 64>}, {pipeline_mode = #tpu.pipeline_mode<synchronous>, transform_indices = @transform_6, window_bounds = array<i64: 1, 1>}, {transform_indices = @transform_7, window_bounds = array<i64: 1, 1, 896>}]} {
    %c0 = arith.constant 0 : index
    %c0_0 = arith.constant 0 : index
    %c0_1 = arith.constant 0 : index
    %0 = vector.load %arg1[%c0, %c0_0, %c0_1] : memref<1x128x49xf32, #tpu.memory_space<vmem>>, vector<1x128x49xf32>
    %1 = vector.shape_cast %0 : vector<1x128x49xf32> to vector<128x49xf32>
    %c0_2 = arith.constant 0 : index
    %c0_3 = arith.constant 0 : index
    %2 = vector.load %arg3[%c0_2, %c0_3] : memref<1600x128xf32, #tpu.memory_space<vmem>>, vector<1600x128xf32>
    %cst = arith.constant dense<0.000000e+00> : vector<1600x49xf32>
    %3 = tpu.matmul %2, %1, %cst {dimension_numbers = #tpu.dot_dimension_numbers<[1], [0], [0], [1], [0, 0, 1, 1], [], []>} : vector<1600x128xf32>, vector<128x49xf32>, vector<1600x49xf32> -> vector<1600x49xf32>
    %c0_4 = arith.constant 0 : index
    %c0_5 = arith.constant 0 : index
    %4 = vector.load %arg4[%c0_4, %c0_5] : memref<64x1xf32, #tpu.memory_space<vmem>>, vector<64x1xf32>
    %5 = vector.shape_cast %4 : vector<64x1xf32> to vector<64x1xf32>
    %6 = vector.broadcast %5 : vector<64x1xf32> to vector<64x196xf32>
    %7 = vector.extract_strided_slice %3 {offsets = [0, 0], sizes = [64, 49], strides = [1, 1]} : vector<1600x49xf32> to vector<64x49xf32>
    %c0_6 = arith.constant 0 : index
    %c0_7 = arith.constant 0 : index
    %c0_8 = arith.constant 0 : index
    %8 = vector.load %arg2[%c0_6, %c0_7, %c0_8] : memref<25x49x196xf32, #tpu.memory_space<vmem>>, vector<1x49x196xf32>
    %9 = vector.shape_cast %8 : vector<1x49x196xf32> to vector<49x196xf32>
    %cst_9 = arith.constant dense<0.000000e+00> : vector<64x196xf32>
    %10 = tpu.matmul %7, %9, %cst_9 {dimension_numbers = #tpu.dot_dimension_numbers<[1], [0], [0], [1], [0, 0, 1, 1], [], []>} : vector<64x49xf32>, vector<49x196xf32>, vector<64x196xf32> -> vector<64x196xf32>
    %11 = arith.addf %6, %10 : vector<64x196xf32>
    %12 = vector.extract_strided_slice %3 {offsets = [64, 0], sizes = [64, 49], strides = [1, 1]} : vector<1600x49xf32> to vector<64x49xf32>
    %c1 = arith.constant 1 : index
    %c0_10 = arith.constant 0 : index
    %c0_11 = arith.constant 0 : index
    %13 = vector.load %arg2[%c1, %c0_10, %c0_11] : memref<25x49x196xf32, #tpu.memory_space<vmem>>, vector<1x49x196xf32>
    %14 = vector.shape_cast %13 : vector<1x49x196xf32> to vector<49x196xf32>
    %cst_12 = arith.constant dense<0.000000e+00> : vector<64x196xf32>
    %15 = tpu.matmul %12, %14, %cst_12 {dimension_numbers = #tpu.dot_dimension_numbers<[1], [0], [0], [1], [0, 0, 1, 1], [], []>} : vector<64x49xf32>, vector<49x196xf32>, vector<64x196xf32> -> vector<64x196xf32>
    %16 = arith.addf %11, %15 : vector<64x196xf32>
    %17 = vector.extract_strided_slice %3 {offsets = [128, 0], sizes = [64, 49], strides = [1, 1]} : vector<1600x49xf32> to vector<64x49xf32>
    %c2 = arith.constant 2 : index
    %c0_13 = arith.constant 0 : index
    %c0_14 = arith.constant 0 : index
    %18 = vector.load %arg2[%c2, %c0_13, %c0_14] : memref<25x49x196xf32, #tpu.memory_space<vmem>>, vector<1x49x196xf32>
    %19 = vector.shape_cast %18 : vector<1x49x196xf32> to vector<49x196xf32>
    %cst_15 = arith.constant dense<0.000000e+00> : vector<64x196xf32>
    %20 = tpu.matmul %17, %19, %cst_15 {dimension_numbers = #tpu.dot_dimension_numbers<[1], [0], [0], [1], [0, 0, 1, 1], [], []>} : vector<64x49xf32>, vector<49x196xf32>, vector<64x196xf32> -> vector<64x196xf32>
    %21 = arith.addf %16, %20 : vector<64x196xf32>
    %22 = vector.extract_strided_slice %3 {offsets = [192, 0], sizes = [64, 49], strides = [1, 1]} : vector<1600x49xf32> to vector<64x49xf32>
    %c3 = arith.constant 3 : index
    %c0_16 = arith.constant 0 : index
    %c0_17 = arith.constant 0 : index
    %23 = vector.load %arg2[%c3, %c0_16, %c0_17] : memref<25x49x196xf32, #tpu.memory_space<vmem>>, vector<1x49x196xf32>
    %24 = vector.shape_cast %23 : vector<1x49x196xf32> to vector<49x196xf32>
    %cst_18 = arith.constant dense<0.000000e+00> : vector<64x196xf32>
    %25 = tpu.matmul %22, %24, %cst_18 {dimension_numbers = #tpu.dot_dimension_numbers<[1], [0], [0], [1], [0, 0, 1, 1], [], []>} : vector<64x49xf32>, vector<49x196xf32>, vector<64x196xf32> -> vector<64x196xf32>
    %26 = arith.addf %21, %25 : vector<64x196xf32>
    %27 = vector.extract_strided_slice %3 {offsets = [256, 0], sizes = [64, 49], strides = [1, 1]} : vector<1600x49xf32> to vector<64x49xf32>
    %c4 = arith.constant 4 : index
    %c0_19 = arith.constant 0 : index
    %c0_20 = arith.constant 0 : index
    %28 = vector.load %arg2[%c4, %c0_19, %c0_20] : memref<25x49x196xf32, #tpu.memory_space<vmem>>, vector<1x49x196xf32>
    %29 = vector.shape_cast %28 : vector<1x49x196xf32> to vector<49x196xf32>
    %cst_21 = arith.constant dense<0.000000e+00> : vector<64x196xf32>
    %30 = tpu.matmul %27, %29, %cst_21 {dimension_numbers = #tpu.dot_dimension_numbers<[1], [0], [0], [1], [0, 0, 1, 1], [], []>} : vector<64x49xf32>, vector<49x196xf32>, vector<64x196xf32> -> vector<64x196xf32>
    %31 = arith.addf %26, %30 : vector<64x196xf32>
    %32 = vector.extract_strided_slice %3 {offsets = [320, 0], sizes = [64, 49], strides = [1, 1]} : vector<1600x49xf32> to vector<64x49xf32>
    %c5 = arith.constant 5 : index
    %c0_22 = arith.constant 0 : index
    %c0_23 = arith.constant 0 : index
    %33 = vector.load %arg2[%c5, %c0_22, %c0_23] : memref<25x49x196xf32, #tpu.memory_space<vmem>>, vector<1x49x196xf32>
    %34 = vector.shape_cast %33 : vector<1x49x196xf32> to vector<49x196xf32>
    %cst_24 = arith.constant dense<0.000000e+00> : vector<64x196xf32>
    %35 = tpu.matmul %32, %34, %cst_24 {dimension_numbers = #tpu.dot_dimension_numbers<[1], [0], [0], [1], [0, 0, 1, 1], [], []>} : vector<64x49xf32>, vector<49x196xf32>, vector<64x196xf32> -> vector<64x196xf32>
    %36 = arith.addf %31, %35 : vector<64x196xf32>
    %37 = vector.extract_strided_slice %3 {offsets = [384, 0], sizes = [64, 49], strides = [1, 1]} : vector<1600x49xf32> to vector<64x49xf32>
    %c6 = arith.constant 6 : index
    %c0_25 = arith.constant 0 : index
    %c0_26 = arith.constant 0 : index
    %38 = vector.load %arg2[%c6, %c0_25, %c0_26] : memref<25x49x196xf32, #tpu.memory_space<vmem>>, vector<1x49x196xf32>
    %39 = vector.shape_cast %38 : vector<1x49x196xf32> to vector<49x196xf32>
    %cst_27 = arith.constant dense<0.000000e+00> : vector<64x196xf32>
    %40 = tpu.matmul %37, %39, %cst_27 {dimension_numbers = #tpu.dot_dimension_numbers<[1], [0], [0], [1], [0, 0, 1, 1], [], []>} : vector<64x49xf32>, vector<49x196xf32>, vector<64x196xf32> -> vector<64x196xf32>
    %41 = arith.addf %36, %40 : vector<64x196xf32>
    %42 = vector.extract_strided_slice %3 {offsets = [448, 0], sizes = [64, 49], strides = [1, 1]} : vector<1600x49xf32> to vector<64x49xf32>
    %c7 = arith.constant 7 : index
    %c0_28 = arith.constant 0 : index
    %c0_29 = arith.constant 0 : index
    %43 = vector.load %arg2[%c7, %c0_28, %c0_29] : memref<25x49x196xf32, #tpu.memory_space<vmem>>, vector<1x49x196xf32>
    %44 = vector.shape_cast %43 : vector<1x49x196xf32> to vector<49x196xf32>
    %cst_30 = arith.constant dense<0.000000e+00> : vector<64x196xf32>
    %45 = tpu.matmul %42, %44, %cst_30 {dimension_numbers = #tpu.dot_dimension_numbers<[1], [0], [0], [1], [0, 0, 1, 1], [], []>} : vector<64x49xf32>, vector<49x196xf32>, vector<64x196xf32> -> vector<64x196xf32>
    %46 = arith.addf %41, %45 : vector<64x196xf32>
    %47 = vector.extract_strided_slice %3 {offsets = [512, 0], sizes = [64, 49], strides = [1, 1]} : vector<1600x49xf32> to vector<64x49xf32>
    %c8 = arith.constant 8 : index
    %c0_31 = arith.constant 0 : index
    %c0_32 = arith.constant 0 : index
    %48 = vector.load %arg2[%c8, %c0_31, %c0_32] : memref<25x49x196xf32, #tpu.memory_space<vmem>>, vector<1x49x196xf32>
    %49 = vector.shape_cast %48 : vector<1x49x196xf32> to vector<49x196xf32>
    %cst_33 = arith.constant dense<0.000000e+00> : vector<64x196xf32>
    %50 = tpu.matmul %47, %49, %cst_33 {dimension_numbers = #tpu.dot_dimension_numbers<[1], [0], [0], [1], [0, 0, 1, 1], [], []>} : vector<64x49xf32>, vector<49x196xf32>, vector<64x196xf32> -> vector<64x196xf32>
    %51 = arith.addf %46, %50 : vector<64x196xf32>
    %52 = vector.extract_strided_slice %3 {offsets = [576, 0], sizes = [64, 49], strides = [1, 1]} : vector<1600x49xf32> to vector<64x49xf32>
    %c9 = arith.constant 9 : index
    %c0_34 = arith.constant 0 : index
    %c0_35 = arith.constant 0 : index
    %53 = vector.load %arg2[%c9, %c0_34, %c0_35] : memref<25x49x196xf32, #tpu.memory_space<vmem>>, vector<1x49x196xf32>
    %54 = vector.shape_cast %53 : vector<1x49x196xf32> to vector<49x196xf32>
    %cst_36 = arith.constant dense<0.000000e+00> : vector<64x196xf32>
    %55 = tpu.matmul %52, %54, %cst_36 {dimension_numbers = #tpu.dot_dimension_numbers<[1], [0], [0], [1], [0, 0, 1, 1], [], []>} : vector<64x49xf32>, vector<49x196xf32>, vector<64x196xf32> -> vector<64x196xf32>
    %56 = arith.addf %51, %55 : vector<64x196xf32>
    %57 = vector.extract_strided_slice %3 {offsets = [640, 0], sizes = [64, 49], strides = [1, 1]} : vector<1600x49xf32> to vector<64x49xf32>
    %c10 = arith.constant 10 : index
    %c0_37 = arith.constant 0 : index
    %c0_38 = arith.constant 0 : index
    %58 = vector.load %arg2[%c10, %c0_37, %c0_38] : memref<25x49x196xf32, #tpu.memory_space<vmem>>, vector<1x49x196xf32>
    %59 = vector.shape_cast %58 : vector<1x49x196xf32> to vector<49x196xf32>
    %cst_39 = arith.constant dense<0.000000e+00> : vector<64x196xf32>
    %60 = tpu.matmul %57, %59, %cst_39 {dimension_numbers = #tpu.dot_dimension_numbers<[1], [0], [0], [1], [0, 0, 1, 1], [], []>} : vector<64x49xf32>, vector<49x196xf32>, vector<64x196xf32> -> vector<64x196xf32>
    %61 = arith.addf %56, %60 : vector<64x196xf32>
    %62 = vector.extract_strided_slice %3 {offsets = [704, 0], sizes = [64, 49], strides = [1, 1]} : vector<1600x49xf32> to vector<64x49xf32>
    %c11 = arith.constant 11 : index
    %c0_40 = arith.constant 0 : index
    %c0_41 = arith.constant 0 : index
    %63 = vector.load %arg2[%c11, %c0_40, %c0_41] : memref<25x49x196xf32, #tpu.memory_space<vmem>>, vector<1x49x196xf32>
    %64 = vector.shape_cast %63 : vector<1x49x196xf32> to vector<49x196xf32>
    %cst_42 = arith.constant dense<0.000000e+00> : vector<64x196xf32>
    %65 = tpu.matmul %62, %64, %cst_42 {dimension_numbers = #tpu.dot_dimension_numbers<[1], [0], [0], [1], [0, 0, 1, 1], [], []>} : vector<64x49xf32>, vector<49x196xf32>, vector<64x196xf32> -> vector<64x196xf32>
    %66 = arith.addf %61, %65 : vector<64x196xf32>
    %67 = vector.extract_strided_slice %3 {offsets = [768, 0], sizes = [64, 49], strides = [1, 1]} : vector<1600x49xf32> to vector<64x49xf32>
    %c12 = arith.constant 12 : index
    %c0_43 = arith.constant 0 : index
    %c0_44 = arith.constant 0 : index
    %68 = vector.load %arg2[%c12, %c0_43, %c0_44] : memref<25x49x196xf32, #tpu.memory_space<vmem>>, vector<1x49x196xf32>
    %69 = vector.shape_cast %68 : vector<1x49x196xf32> to vector<49x196xf32>
    %cst_45 = arith.constant dense<0.000000e+00> : vector<64x196xf32>
    %70 = tpu.matmul %67, %69, %cst_45 {dimension_numbers = #tpu.dot_dimension_numbers<[1], [0], [0], [1], [0, 0, 1, 1], [], []>} : vector<64x49xf32>, vector<49x196xf32>, vector<64x196xf32> -> vector<64x196xf32>
    %71 = arith.addf %66, %70 : vector<64x196xf32>
    %72 = vector.extract_strided_slice %3 {offsets = [832, 0], sizes = [64, 49], strides = [1, 1]} : vector<1600x49xf32> to vector<64x49xf32>
    %c13 = arith.constant 13 : index
    %c0_46 = arith.constant 0 : index
    %c0_47 = arith.constant 0 : index
    %73 = vector.load %arg2[%c13, %c0_46, %c0_47] : memref<25x49x196xf32, #tpu.memory_space<vmem>>, vector<1x49x196xf32>
    %74 = vector.shape_cast %73 : vector<1x49x196xf32> to vector<49x196xf32>
    %cst_48 = arith.constant dense<0.000000e+00> : vector<64x196xf32>
    %75 = tpu.matmul %72, %74, %cst_48 {dimension_numbers = #tpu.dot_dimension_numbers<[1], [0], [0], [1], [0, 0, 1, 1], [], []>} : vector<64x49xf32>, vector<49x196xf32>, vector<64x196xf32> -> vector<64x196xf32>
    %76 = arith.addf %71, %75 : vector<64x196xf32>
    %77 = vector.extract_strided_slice %3 {offsets = [896, 0], sizes = [64, 49], strides = [1, 1]} : vector<1600x49xf32> to vector<64x49xf32>
    %c14 = arith.constant 14 : index
    %c0_49 = arith.constant 0 : index
    %c0_50 = arith.constant 0 : index
    %78 = vector.load %arg2[%c14, %c0_49, %c0_50] : memref<25x49x196xf32, #tpu.memory_space<vmem>>, vector<1x49x196xf32>
    %79 = vector.shape_cast %78 : vector<1x49x196xf32> to vector<49x196xf32>
    %cst_51 = arith.constant dense<0.000000e+00> : vector<64x196xf32>
    %80 = tpu.matmul %77, %79, %cst_51 {dimension_numbers = #tpu.dot_dimension_numbers<[1], [0], [0], [1], [0, 0, 1, 1], [], []>} : vector<64x49xf32>, vector<49x196xf32>, vector<64x196xf32> -> vector<64x196xf32>
    %81 = arith.addf %76, %80 : vector<64x196xf32>
    %82 = vector.extract_strided_slice %3 {offsets = [960, 0], sizes = [64, 49], strides = [1, 1]} : vector<1600x49xf32> to vector<64x49xf32>
    %c15 = arith.constant 15 : index
    %c0_52 = arith.constant 0 : index
    %c0_53 = arith.constant 0 : index
    %83 = vector.load %arg2[%c15, %c0_52, %c0_53] : memref<25x49x196xf32, #tpu.memory_space<vmem>>, vector<1x49x196xf32>
    %84 = vector.shape_cast %83 : vector<1x49x196xf32> to vector<49x196xf32>
    %cst_54 = arith.constant dense<0.000000e+00> : vector<64x196xf32>
    %85 = tpu.matmul %82, %84, %cst_54 {dimension_numbers = #tpu.dot_dimension_numbers<[1], [0], [0], [1], [0, 0, 1, 1], [], []>} : vector<64x49xf32>, vector<49x196xf32>, vector<64x196xf32> -> vector<64x196xf32>
    %86 = arith.addf %81, %85 : vector<64x196xf32>
    %87 = vector.extract_strided_slice %3 {offsets = [1024, 0], sizes = [64, 49], strides = [1, 1]} : vector<1600x49xf32> to vector<64x49xf32>
    %c16 = arith.constant 16 : index
    %c0_55 = arith.constant 0 : index
    %c0_56 = arith.constant 0 : index
    %88 = vector.load %arg2[%c16, %c0_55, %c0_56] : memref<25x49x196xf32, #tpu.memory_space<vmem>>, vector<1x49x196xf32>
    %89 = vector.shape_cast %88 : vector<1x49x196xf32> to vector<49x196xf32>
    %cst_57 = arith.constant dense<0.000000e+00> : vector<64x196xf32>
    %90 = tpu.matmul %87, %89, %cst_57 {dimension_numbers = #tpu.dot_dimension_numbers<[1], [0], [0], [1], [0, 0, 1, 1], [], []>} : vector<64x49xf32>, vector<49x196xf32>, vector<64x196xf32> -> vector<64x196xf32>
    %91 = arith.addf %86, %90 : vector<64x196xf32>
    %92 = vector.extract_strided_slice %3 {offsets = [1088, 0], sizes = [64, 49], strides = [1, 1]} : vector<1600x49xf32> to vector<64x49xf32>
    %c17 = arith.constant 17 : index
    %c0_58 = arith.constant 0 : index
    %c0_59 = arith.constant 0 : index
    %93 = vector.load %arg2[%c17, %c0_58, %c0_59] : memref<25x49x196xf32, #tpu.memory_space<vmem>>, vector<1x49x196xf32>
    %94 = vector.shape_cast %93 : vector<1x49x196xf32> to vector<49x196xf32>
    %cst_60 = arith.constant dense<0.000000e+00> : vector<64x196xf32>
    %95 = tpu.matmul %92, %94, %cst_60 {dimension_numbers = #tpu.dot_dimension_numbers<[1], [0], [0], [1], [0, 0, 1, 1], [], []>} : vector<64x49xf32>, vector<49x196xf32>, vector<64x196xf32> -> vector<64x196xf32>
    %96 = arith.addf %91, %95 : vector<64x196xf32>
    %97 = vector.extract_strided_slice %3 {offsets = [1152, 0], sizes = [64, 49], strides = [1, 1]} : vector<1600x49xf32> to vector<64x49xf32>
    %c18 = arith.constant 18 : index
    %c0_61 = arith.constant 0 : index
    %c0_62 = arith.constant 0 : index
    %98 = vector.load %arg2[%c18, %c0_61, %c0_62] : memref<25x49x196xf32, #tpu.memory_space<vmem>>, vector<1x49x196xf32>
    %99 = vector.shape_cast %98 : vector<1x49x196xf32> to vector<49x196xf32>
    %cst_63 = arith.constant dense<0.000000e+00> : vector<64x196xf32>
    %100 = tpu.matmul %97, %99, %cst_63 {dimension_numbers = #tpu.dot_dimension_numbers<[1], [0], [0], [1], [0, 0, 1, 1], [], []>} : vector<64x49xf32>, vector<49x196xf32>, vector<64x196xf32> -> vector<64x196xf32>
    %101 = arith.addf %96, %100 : vector<64x196xf32>
    %102 = vector.extract_strided_slice %3 {offsets = [1216, 0], sizes = [64, 49], strides = [1, 1]} : vector<1600x49xf32> to vector<64x49xf32>
    %c19 = arith.constant 19 : index
    %c0_64 = arith.constant 0 : index
    %c0_65 = arith.constant 0 : index
    %103 = vector.load %arg2[%c19, %c0_64, %c0_65] : memref<25x49x196xf32, #tpu.memory_space<vmem>>, vector<1x49x196xf32>
    %104 = vector.shape_cast %103 : vector<1x49x196xf32> to vector<49x196xf32>
    %cst_66 = arith.constant dense<0.000000e+00> : vector<64x196xf32>
    %105 = tpu.matmul %102, %104, %cst_66 {dimension_numbers = #tpu.dot_dimension_numbers<[1], [0], [0], [1], [0, 0, 1, 1], [], []>} : vector<64x49xf32>, vector<49x196xf32>, vector<64x196xf32> -> vector<64x196xf32>
    %106 = arith.addf %101, %105 : vector<64x196xf32>
    %107 = vector.extract_strided_slice %3 {offsets = [1280, 0], sizes = [64, 49], strides = [1, 1]} : vector<1600x49xf32> to vector<64x49xf32>
    %c20 = arith.constant 20 : index
    %c0_67 = arith.constant 0 : index
    %c0_68 = arith.constant 0 : index
    %108 = vector.load %arg2[%c20, %c0_67, %c0_68] : memref<25x49x196xf32, #tpu.memory_space<vmem>>, vector<1x49x196xf32>
    %109 = vector.shape_cast %108 : vector<1x49x196xf32> to vector<49x196xf32>
    %cst_69 = arith.constant dense<0.000000e+00> : vector<64x196xf32>
    %110 = tpu.matmul %107, %109, %cst_69 {dimension_numbers = #tpu.dot_dimension_numbers<[1], [0], [0], [1], [0, 0, 1, 1], [], []>} : vector<64x49xf32>, vector<49x196xf32>, vector<64x196xf32> -> vector<64x196xf32>
    %111 = arith.addf %106, %110 : vector<64x196xf32>
    %112 = vector.extract_strided_slice %3 {offsets = [1344, 0], sizes = [64, 49], strides = [1, 1]} : vector<1600x49xf32> to vector<64x49xf32>
    %c21 = arith.constant 21 : index
    %c0_70 = arith.constant 0 : index
    %c0_71 = arith.constant 0 : index
    %113 = vector.load %arg2[%c21, %c0_70, %c0_71] : memref<25x49x196xf32, #tpu.memory_space<vmem>>, vector<1x49x196xf32>
    %114 = vector.shape_cast %113 : vector<1x49x196xf32> to vector<49x196xf32>
    %cst_72 = arith.constant dense<0.000000e+00> : vector<64x196xf32>
    %115 = tpu.matmul %112, %114, %cst_72 {dimension_numbers = #tpu.dot_dimension_numbers<[1], [0], [0], [1], [0, 0, 1, 1], [], []>} : vector<64x49xf32>, vector<49x196xf32>, vector<64x196xf32> -> vector<64x196xf32>
    %116 = arith.addf %111, %115 : vector<64x196xf32>
    %117 = vector.extract_strided_slice %3 {offsets = [1408, 0], sizes = [64, 49], strides = [1, 1]} : vector<1600x49xf32> to vector<64x49xf32>
    %c22 = arith.constant 22 : index
    %c0_73 = arith.constant 0 : index
    %c0_74 = arith.constant 0 : index
    %118 = vector.load %arg2[%c22, %c0_73, %c0_74] : memref<25x49x196xf32, #tpu.memory_space<vmem>>, vector<1x49x196xf32>
    %119 = vector.shape_cast %118 : vector<1x49x196xf32> to vector<49x196xf32>
    %cst_75 = arith.constant dense<0.000000e+00> : vector<64x196xf32>
    %120 = tpu.matmul %117, %119, %cst_75 {dimension_numbers = #tpu.dot_dimension_numbers<[1], [0], [0], [1], [0, 0, 1, 1], [], []>} : vector<64x49xf32>, vector<49x196xf32>, vector<64x196xf32> -> vector<64x196xf32>
    %121 = arith.addf %116, %120 : vector<64x196xf32>
    %122 = vector.extract_strided_slice %3 {offsets = [1472, 0], sizes = [64, 49], strides = [1, 1]} : vector<1600x49xf32> to vector<64x49xf32>
    %c23 = arith.constant 23 : index
    %c0_76 = arith.constant 0 : index
    %c0_77 = arith.constant 0 : index
    %123 = vector.load %arg2[%c23, %c0_76, %c0_77] : memref<25x49x196xf32, #tpu.memory_space<vmem>>, vector<1x49x196xf32>
    %124 = vector.shape_cast %123 : vector<1x49x196xf32> to vector<49x196xf32>
    %cst_78 = arith.constant dense<0.000000e+00> : vector<64x196xf32>
    %125 = tpu.matmul %122, %124, %cst_78 {dimension_numbers = #tpu.dot_dimension_numbers<[1], [0], [0], [1], [0, 0, 1, 1], [], []>} : vector<64x49xf32>, vector<49x196xf32>, vector<64x196xf32> -> vector<64x196xf32>
    %126 = arith.addf %121, %125 : vector<64x196xf32>
    %127 = vector.extract_strided_slice %3 {offsets = [1536, 0], sizes = [64, 49], strides = [1, 1]} : vector<1600x49xf32> to vector<64x49xf32>
    %c24 = arith.constant 24 : index
    %c0_79 = arith.constant 0 : index
    %c0_80 = arith.constant 0 : index
    %128 = vector.load %arg2[%c24, %c0_79, %c0_80] : memref<25x49x196xf32, #tpu.memory_space<vmem>>, vector<1x49x196xf32>
    %129 = vector.shape_cast %128 : vector<1x49x196xf32> to vector<49x196xf32>
    %cst_81 = arith.constant dense<0.000000e+00> : vector<64x196xf32>
    %130 = tpu.matmul %127, %129, %cst_81 {dimension_numbers = #tpu.dot_dimension_numbers<[1], [0], [0], [1], [0, 0, 1, 1], [], []>} : vector<64x49xf32>, vector<49x196xf32>, vector<64x196xf32> -> vector<64x196xf32>
    %131 = arith.addf %126, %130 : vector<64x196xf32>
    %cst_82 = arith.constant 0.000000e+00 : f32
    %132 = vector.broadcast %cst_82 : f32 to vector<64x196xf32>
    %133 = arith.cmpf ogt, %131, %132 : vector<64x196xf32>
    %cst_83 = arith.constant 2.000000e-01 : f32
    %134 = vector.broadcast %cst_83 : f32 to vector<64x196xf32>
    %135 = arith.mulf %134, %131 : vector<64x196xf32>
    %136 = arith.select %133, %131, %135 : vector<64x196xi1>, vector<64x196xf32>
    %c0_84 = arith.constant 0 : index
    %c0_85 = arith.constant 0 : index
    %137 = vector.load %arg6[%c0_84, %c0_85] : memref<25x64xf32, #tpu.memory_space<vmem>>, vector<25x64xf32>
    %cst_86 = arith.constant dense<0.000000e+00> : vector<25x196xf32>
    %138 = tpu.matmul %137, %136, %cst_86 {dimension_numbers = #tpu.dot_dimension_numbers<[1], [0], [0], [1], [0, 0, 1, 1], [], []>} : vector<25x64xf32>, vector<64x196xf32>, vector<25x196xf32> -> vector<25x196xf32>
    %c0_87 = arith.constant 0 : index
    %c0_88 = arith.constant 0 : index
    %139 = vector.load %arg5[%c0_87, %c0_88] : memref<196x1056xf32, #tpu.memory_space<vmem>>, vector<196x1056xf32>
    %cst_89 = arith.constant dense<0.000000e+00> : vector<25x1056xf32>
    %140 = tpu.matmul %138, %139, %cst_89 {dimension_numbers = #tpu.dot_dimension_numbers<[1], [0], [0], [1], [0, 0, 1, 1], [], []>} : vector<25x196xf32>, vector<196x1056xf32>, vector<25x1056xf32> -> vector<25x1056xf32>
    %c0_90 = arith.constant 0 : index
    %c0_91 = arith.constant 0 : index
    %141 = vector.load %arg7[%c0_90, %c0_91] : memref<1x1xf32, #tpu.memory_space<vmem>>, vector<1x1xf32>
    %142 = vector.shape_cast %141 : vector<1x1xf32> to vector<1x1xf32>
    %143 = vector.broadcast %142 : vector<1x1xf32> to vector<1x896xf32>
    %144 = vector.extract_strided_slice %140 {offsets = [0, 0], sizes = [1, 896], strides = [1, 1]} : vector<25x1056xf32> to vector<1x896xf32>
    %145 = arith.addf %143, %144 : vector<1x896xf32>
    %146 = vector.extract_strided_slice %140 {offsets = [1, 1], sizes = [1, 896], strides = [1, 1]} : vector<25x1056xf32> to vector<1x896xf32>
    %147 = arith.addf %145, %146 : vector<1x896xf32>
    %148 = vector.extract_strided_slice %140 {offsets = [2, 2], sizes = [1, 896], strides = [1, 1]} : vector<25x1056xf32> to vector<1x896xf32>
    %149 = arith.addf %147, %148 : vector<1x896xf32>
    %150 = vector.extract_strided_slice %140 {offsets = [3, 3], sizes = [1, 896], strides = [1, 1]} : vector<25x1056xf32> to vector<1x896xf32>
    %151 = arith.addf %149, %150 : vector<1x896xf32>
    %152 = vector.extract_strided_slice %140 {offsets = [4, 4], sizes = [1, 896], strides = [1, 1]} : vector<25x1056xf32> to vector<1x896xf32>
    %153 = arith.addf %151, %152 : vector<1x896xf32>
    %154 = vector.extract_strided_slice %140 {offsets = [5, 32], sizes = [1, 896], strides = [1, 1]} : vector<25x1056xf32> to vector<1x896xf32>
    %155 = arith.addf %153, %154 : vector<1x896xf32>
    %156 = vector.extract_strided_slice %140 {offsets = [6, 33], sizes = [1, 896], strides = [1, 1]} : vector<25x1056xf32> to vector<1x896xf32>
    %157 = arith.addf %155, %156 : vector<1x896xf32>
    %158 = vector.extract_strided_slice %140 {offsets = [7, 34], sizes = [1, 896], strides = [1, 1]} : vector<25x1056xf32> to vector<1x896xf32>
    %159 = arith.addf %157, %158 : vector<1x896xf32>
    %160 = vector.extract_strided_slice %140 {offsets = [8, 35], sizes = [1, 896], strides = [1, 1]} : vector<25x1056xf32> to vector<1x896xf32>
    %161 = arith.addf %159, %160 : vector<1x896xf32>
    %162 = vector.extract_strided_slice %140 {offsets = [9, 36], sizes = [1, 896], strides = [1, 1]} : vector<25x1056xf32> to vector<1x896xf32>
    %163 = arith.addf %161, %162 : vector<1x896xf32>
    %164 = vector.extract_strided_slice %140 {offsets = [10, 64], sizes = [1, 896], strides = [1, 1]} : vector<25x1056xf32> to vector<1x896xf32>
    %165 = arith.addf %163, %164 : vector<1x896xf32>
    %166 = vector.extract_strided_slice %140 {offsets = [11, 65], sizes = [1, 896], strides = [1, 1]} : vector<25x1056xf32> to vector<1x896xf32>
    %167 = arith.addf %165, %166 : vector<1x896xf32>
    %168 = vector.extract_strided_slice %140 {offsets = [12, 66], sizes = [1, 896], strides = [1, 1]} : vector<25x1056xf32> to vector<1x896xf32>
    %169 = arith.addf %167, %168 : vector<1x896xf32>
    %170 = vector.extract_strided_slice %140 {offsets = [13, 67], sizes = [1, 896], strides = [1, 1]} : vector<25x1056xf32> to vector<1x896xf32>
    %171 = arith.addf %169, %170 : vector<1x896xf32>
    %172 = vector.extract_strided_slice %140 {offsets = [14, 68], sizes = [1, 896], strides = [1, 1]} : vector<25x1056xf32> to vector<1x896xf32>
    %173 = arith.addf %171, %172 : vector<1x896xf32>
    %174 = vector.extract_strided_slice %140 {offsets = [15, 96], sizes = [1, 896], strides = [1, 1]} : vector<25x1056xf32> to vector<1x896xf32>
    %175 = arith.addf %173, %174 : vector<1x896xf32>
    %176 = vector.extract_strided_slice %140 {offsets = [16, 97], sizes = [1, 896], strides = [1, 1]} : vector<25x1056xf32> to vector<1x896xf32>
    %177 = arith.addf %175, %176 : vector<1x896xf32>
    %178 = vector.extract_strided_slice %140 {offsets = [17, 98], sizes = [1, 896], strides = [1, 1]} : vector<25x1056xf32> to vector<1x896xf32>
    %179 = arith.addf %177, %178 : vector<1x896xf32>
    %180 = vector.extract_strided_slice %140 {offsets = [18, 99], sizes = [1, 896], strides = [1, 1]} : vector<25x1056xf32> to vector<1x896xf32>
    %181 = arith.addf %179, %180 : vector<1x896xf32>
    %182 = vector.extract_strided_slice %140 {offsets = [19, 100], sizes = [1, 896], strides = [1, 1]} : vector<25x1056xf32> to vector<1x896xf32>
    %183 = arith.addf %181, %182 : vector<1x896xf32>
    %184 = vector.extract_strided_slice %140 {offsets = [20, 128], sizes = [1, 896], strides = [1, 1]} : vector<25x1056xf32> to vector<1x896xf32>
    %185 = arith.addf %183, %184 : vector<1x896xf32>
    %186 = vector.extract_strided_slice %140 {offsets = [21, 129], sizes = [1, 896], strides = [1, 1]} : vector<25x1056xf32> to vector<1x896xf32>
    %187 = arith.addf %185, %186 : vector<1x896xf32>
    %188 = vector.extract_strided_slice %140 {offsets = [22, 130], sizes = [1, 896], strides = [1, 1]} : vector<25x1056xf32> to vector<1x896xf32>
    %189 = arith.addf %187, %188 : vector<1x896xf32>
    %190 = vector.extract_strided_slice %140 {offsets = [23, 131], sizes = [1, 896], strides = [1, 1]} : vector<25x1056xf32> to vector<1x896xf32>
    %191 = arith.addf %189, %190 : vector<1x896xf32>
    %192 = vector.extract_strided_slice %140 {offsets = [24, 132], sizes = [1, 896], strides = [1, 1]} : vector<25x1056xf32> to vector<1x896xf32>
    %193 = arith.addf %191, %192 : vector<1x896xf32>
    %cst_92 = arith.constant 0.000000e+00 : f32
    %194 = vector.broadcast %cst_92 : f32 to vector<1x896xf32>
    %195 = arith.cmpf ogt, %193, %194 : vector<1x896xf32>
    %cst_93 = arith.constant 2.000000e-01 : f32
    %196 = vector.broadcast %cst_93 : f32 to vector<1x896xf32>
    %197 = arith.mulf %196, %193 : vector<1x896xf32>
    %198 = arith.select %195, %193, %197 : vector<1x896xi1>, vector<1x896xf32>
    %c0_94 = arith.constant 0 : index
    %c0_95 = arith.constant 0 : index
    %c0_96 = arith.constant 0 : index
    %199 = vector.load %arg8[%c0_94, %c0_95, %c0_96] : memref<1x1x896xf32, #tpu.memory_space<vmem>>, vector<1x1x896xf32>
    %200 = vector.shape_cast %199 : vector<1x1x896xf32> to vector<1x896xf32>
    %201 = vector.shape_cast %198 : vector<1x896xf32> to vector<1x1x896xf32>
    tpu.vector_store %arg8[%c0_94, %c0_95, %c0_96], %201 {strides = array<i32>} : memref<1x1x896xf32, #tpu.memory_space<vmem>>, vector<1x1x896xf32>,
    return
  }
  func.func @transform_0(%arg0: i32) -> (i32, i32, i32) {
    %c0_i32 = arith.constant 0 : i32
    %c0_i32_0 = arith.constant 0 : i32
    %c0_i32_1 = arith.constant 0 : i32
    return %arg0, %c0_i32, %c0_i32_0 : i32, i32, i32
  }
  func.func @transform_1(%arg0: i32) -> (i32, i32, i32) {
    %c0_i32 = arith.constant 0 : i32
    %c0_i32_0 = arith.constant 0 : i32
    %c0_i32_1 = arith.constant 0 : i32
    %c0_i32_2 = arith.constant 0 : i32
    return %c0_i32, %c0_i32_0, %c0_i32_1 : i32, i32, i32
  }
  func.func @transform_2(%arg0: i32) -> (i32, i32) {
    %c0_i32 = arith.constant 0 : i32
    %c0_i32_0 = arith.constant 0 : i32
    %c0_i32_1 = arith.constant 0 : i32
    return %c0_i32, %c0_i32_0 : i32, i32
  }
  func.func @transform_3(%arg0: i32) -> (i32, i32) {
    %c0_i32 = arith.constant 0 : i32
    %c0_i32_0 = arith.constant 0 : i32
    %c0_i32_1 = arith.constant 0 : i32
    return %c0_i32, %c0_i32_0 : i32, i32
  }
  func.func @transform_4(%arg0: i32) -> (i32, i32) {
    %c0_i32 = arith.constant 0 : i32
    %c0_i32_0 = arith.constant 0 : i32
    %c0_i32_1 = arith.constant 0 : i32
    return %c0_i32, %c0_i32_0 : i32, i32
  }
  func.func @transform_5(%arg0: i32) -> (i32, i32) {
    %c0_i32 = arith.constant 0 : i32
    %c0_i32_0 = arith.constant 0 : i32
    %c0_i32_1 = arith.constant 0 : i32
    return %c0_i32, %c0_i32_0 : i32, i32
  }
  func.func @transform_6(%arg0: i32) -> (i32, i32) {
    %c0_i32 = arith.constant 0 : i32
    %c0_i32_0 = arith.constant 0 : i32
    %c0_i32_1 = arith.constant 0 : i32
    return %c0_i32, %c0_i32_0 : i32, i32
  }
  func.func @transform_7(%arg0: i32) -> (i32, i32, i32) {
    %c0_i32 = arith.constant 0 : i32
    %c0_i32_0 = arith.constant 0 : i32
    %c0_i32_1 = arith.constant 0 : i32
    return %arg0, %c0_i32, %c0_i32_0 : i32, i32, i32
  }
}

</mosaic_0001>

<llo_original>
// kernel: dcgan_generator_forward.2
$region0: #{dcgan_generator_forward.2}
  #allocation0 [shape = 'u32[]', space=smem, size = 0x4, offset = 0x4, fixed_abs, tag = 'smem constant byte address 0x4 - core index']
  #allocation1 [shape = 'u32[144,128]{1,0:T(1,128)}', space=vmem, size = 0x12000, scoped, tag = 'internal scratch']
  %s0 = inlined_call_operand.vmem [shape: f32[2,128], index: 0, kind: input, shape index: {}]
  %s1 = inlined_call_operand.hbm [shape: f32[128,6272], index: 1, kind: input, shape index: {}]
  %s2 = inlined_call_operand.hbm [shape: f32[1,6272], index: 2, kind: input, shape index: {}]
  %s3 = inlined_call_operand.vmem [shape: f32[2,6272], index: 3, kind: output, shape index: {}]
  %s4 = sld [smem:[#allocation0]]
  $region30: #{dcgan_generator_forward.2} parent=0
    _
  %s6 = ssub.s32 1, %s4
  %s7 = scalar_select 0, %s6, %s4
  $region1: #{dcgan_generator_forward.2} parent=0
    #allocation2 [shape = 'u8[3211264]{0}', space=vmem, size = 0x310000, scoped, tag = 'input window, operand 1, single buffered']
    #allocation3 [shape = 's32[1]{0}', space=sflag, size = 0x4, scoped, tag = 'scoped memory for dcgan_generator_forward.2']
    #allocation4 [shape = 'u8[25088]{0}', space=vmem, size = 0x6400, scoped, tag = 'input window, operand 2, single buffered']
    #allocation5 [shape = 's32[1]{0}', space=sflag, size = 0x4, scoped, tag = 'scoped memory for dcgan_generator_forward.2']
    %8 = vsyncpa [#allocation3], 0
    %9 = vsyncpa [#allocation5], 0
    // Predicated region
    $region2: #{dcgan_generator_forward.2} parent=1 // pred_check
      _
    $region3: #{dcgan_generator_forward.2} parent=1 // pred_check_branch
      %11 = sbr.rel (0) target = $region5
    $region4: #{dcgan_generator_forward.2} parent=1 // pred_region
      _
    $region5: #{dcgan_generator_forward.2} parent=1 // pred_fallthru
      _
    // Predicated region
    $region6: #{dcgan_generator_forward.2} parent=1 // pred_check
      _
    $region7: #{dcgan_generator_forward.2} parent=1 // pred_check_branch
      %13 = sbr.rel (0) target = $region9
    $region8: #{dcgan_generator_forward.2} parent=1 // pred_region
      %s15 = ssub.s32 100352, 100352
      %16 = vsyncadd [#allocation3], %s15
      %s17 = sshll.u32 [#allocation2], 4
      %s18 = int_to_ptr.vmem [resolvable:$true] %s17
      %23 = dma.hbm_to_vmem [thread:$0]  %s1, 100352, %s18, [#allocation3], 6272, 6272, 392
    $region9: #{dcgan_generator_forward.2} parent=1 // pred_fallthru
      _
    // Predicated region
    $region10: #{dcgan_generator_forward.2} parent=1 // pred_check
      _
    $region11: #{dcgan_generator_forward.2} parent=1 // pred_check_branch
      %25 = sbr.rel (0) target = $region13
    $region12: #{dcgan_generator_forward.2} parent=1 // pred_region
      %s27 = ssub.s32 784, 784
      %28 = vsyncadd [#allocation5], %s27
      %s30 = sshll.u32 [#allocation4], 4
      %s31 = int_to_ptr.vmem [resolvable:$true] %s30
      %33 = dma.hbm_to_vmem [thread:$0]  %s2, 784, %s31, [#allocation5]
    $region13: #{dcgan_generator_forward.2} parent=1 // pred_fallthru
      _
    // Predicated region
    $region14: #{dcgan_generator_forward.2} parent=1 // pred_check
      _
    $region15: #{dcgan_generator_forward.2} parent=1 // pred_check_branch
      %35 = sbr.rel (0) target = $region17
    $region16: #{dcgan_generator_forward.2} parent=1 // pred_region
      %36 = dma.done [#allocation3], 100352
    $region17: #{dcgan_generator_forward.2} parent=1 // pred_fallthru
      _
    // Predicated region
    $region18: #{dcgan_generator_forward.2} parent=1 // pred_check
      _
    $region19: #{dcgan_generator_forward.2} parent=1 // pred_check_branch
      %38 = sbr.rel (0) target = $region21
    $region20: #{dcgan_generator_forward.2} parent=1 // pred_region
      %39 = dma.done [#allocation5], 784
    $region21: #{dcgan_generator_forward.2} parent=1 // pred_fallthru
      _
    %v40 = vld [vmem:[%s0] sm:$0x3]
    %v41 = vld [vmem:[#allocation2] sm:$0xff]
    %v42 = vld [vmem:[#allocation2 + $0x8] sm:$0xff]
    %v43 = vld [vmem:[#allocation2 + $0x10] sm:$0xff]
    %v44 = vld [vmem:[#allocation2 + $0x18] sm:$0xff]
    %v45 = vld [vmem:[#allocation2 + $0x20] sm:$0xff]
    %v46 = vld [vmem:[#allocation2 + $0x28] sm:$0xff]
    %v47 = vld [vmem:[#allocation2 + $0x30] sm:$0xff]
    %v48 = vld [vmem:[#allocation2 + $0x38] sm:$0xff]
    %v49 = vld [vmem:[#allocation2 + $0x40] sm:$0xff]
    %v50 = vld [vmem:[#allocation2 + $0x48] sm:$0xff]
    %v51 = vld [vmem:[#allocation2 + $0x50] sm:$0xff]
    %v52 = vld [vmem:[#allocation2 + $0x58] sm:$0xff]
    %v53 = vld [vmem:[#allocation2 + $0x60] sm:$0xff]
    %v54 = vld [vmem:[#allocation2 + $0x68] sm:$0xff]
    %v55 = vld [vmem:[#allocation2 + $0x70] sm:$0xff]
    %v56 = vld [vmem:[#allocation2 + $0x78] sm:$0xff]
    %v57 = vld [vmem:[#allocation2 + $0x80] sm:$0xff]
    %v58 = vld [vmem:[#allocation2 + $0x88] sm:$0xff]
    %v59 = vld [vmem:[#allocation2 + $0x90] sm:$0xff]
    %v60 = vld [vmem:[#allocation2 + $0x98] sm:$0xff]
    %v61 = vld [vmem:[#allocation2 + $0xa0] sm:$0xff]
    %v62 = vld [vmem:[#allocation2 + $0xa8] sm:$0xff]
    %v63 = vld [vmem:[#allocation2 + $0xb0] sm:$0xff]
    %v64 = vld [vmem:[#allocation2 + $0xb8] sm:$0xff]
    %v65 = vld [vmem:[#allocation2 + $0xc0] sm:$0xff]
    %v66 = vld [vmem:[#allocation2 + $0xc8] sm:$0xff]
    %v67 = vld [vmem:[#allocation2 + $0xd0] sm:$0xff]
    %v68 = vld [vmem:[#allocation2 + $0xd8] sm:$0xff]
    %v69 = vld [vmem:[#allocation2 + $0xe0] sm:$0xff]
    %v70 = vld [vmem:[#allocation2 + $0xe8] sm:$0xff]
    %v71 = vld [vmem:[#allocation2 + $0xf0] sm:$0xff]
    %v72 = vld [vmem:[#allocation2 + $0xf8] sm:$0xff]
    %v73 = vld [vmem:[#allocation2 + $0x100] sm:$0xff]
    %v74 = vld [vmem:[#allocation2 + $0x108] sm:$0xff]
    %v75 = vld [vmem:[#allocation2 + $0x110] sm:$0xff]
    %v76 = vld [vmem:[#allocation2 + $0x118] sm:$0xff]
    %v77 = vld [vmem:[#allocation2 + $0x120] sm:$0xff]
    %v78 = vld [vmem:[#allocation2 + $0x128] sm:$0xff]
    %v79 = vld [vmem:[#allocation2 + $0x130] sm:$0xff]
    %v80 = vld [vmem:[#allocation2 + $0x138] sm:$0xff]
    %v81 = vld [vmem:[#allocation2 + $0x140] sm:$0xff]
    %v82 = vld [vmem:[#allocation2 + $0x148] sm:$0xff]
    %v83 = vld [vmem:[#allocation2 + $0x150] sm:$0xff]
    %v84 = vld [vmem:[#allocation2 + $0x158] sm:$0xff]
    %v85 = vld [vmem:[#allocation2 + $0x160] sm:$0xff]
    %v86 = vld [vmem:[#allocation2 + $0x168] sm:$0xff]
    %v87 = vld [vmem:[#allocation2 + $0x170] sm:$0xff]
    %v88 = vld [vmem:[#allocation2 + $0x178] sm:$0xff]
    %v89 = vld [vmem:[#allocation2 + $0x180] sm:$0xff]
    %v90 = vld [vmem:[#allocation2 + $0x188] sm:$0xff]
    %v91 = vld [vmem:[#allocation2 + $0x190] sm:$0xff]
    %v92 = vld [vmem:[#allocation2 + $0x198] sm:$0xff]
    %v93 = vld [vmem:[#allocation2 + $0x1a0] sm:$0xff]
    %v94 = vld [vmem:[#allocation2 + $0x1a8] sm:$0xff]
    %v95 = vld [vmem:[#allocation2 + $0x1b0] sm:$0xff]
    %v96 = vld [vmem:[#allocation2 + $0x1b8] sm:$0xff]
    %v97 = vld [vmem:[#allocation2 + $0x1c0] sm:$0xff]
    %v98 = vld [vmem:[#allocation2 + $0x1c8] sm:$0xff]
    %v99 = vld [vmem:[#allocation2 + $0x1d0] sm:$0xff]
    %v100 = vld [vmem:[#allocation2 + $0x1d8] sm:$0xff]
    %v101 = vld [vmem:[#allocation2 + $0x1e0] sm:$0xff]
    %v102 = vld [vmem:[#allocation2 + $0x1e8] sm:$0xff]
    %v103 = vld [vmem:[#allocation2 + $0x1f0] sm:$0xff]
    %v104 = vld [vmem:[#allocation2 + $0x1f8] sm:$0xff]
    %v105 = vld [vmem:[#allocation2 + $0x200] sm:$0xff]
    %v106 = vld [vmem:[#allocation2 + $0x208] sm:$0xff]
    %v107 = vld [vmem:[#allocation2 + $0x210] sm:$0xff]
    %v108 = vld [vmem:[#allocation2 + $0x218] sm:$0xff]
    %v109 = vld [vmem:[#allocation2 + $0x220] sm:$0xff]
    %v110 = vld [vmem:[#allocation2 + $0x228] sm:$0xff]
    %v111 = vld [vmem:[#allocation2 + $0x230] sm:$0xff]
    %v112 = vld [vmem:[#allocation2 + $0x238] sm:$0xff]
    %v113 = vld [vmem:[#allocation2 + $0x240] sm:$0xff]
    %v114 = vld [vmem:[#allocation2 + $0x248] sm:$0xff]
    %v115 = vld [vmem:[#allocation2 + $0x250] sm:$0xff]
    %v116 = vld [vmem:[#allocation2 + $0x258] sm:$0xff]
    %v117 = vld [vmem:[#allocation2 + $0x260] sm:$0xff]
    %v118 = vld [vmem:[#allocation2 + $0x268] sm:$0xff]
    %v119 = vld [vmem:[#allocation2 + $0x270] sm:$0xff]
    %v120 = vld [vmem:[#allocation2 + $0x278] sm:$0xff]
    %v121 = vld [vmem:[#allocation2 + $0x280] sm:$0xff]
    %v122 = vld [vmem:[#allocation2 + $0x288] sm:$0xff]
    %v123 = vld [vmem:[#allocation2 + $0x290] sm:$0xff]
    %v124 = vld [vmem:[#allocation2 + $0x298] sm:$0xff]
    %v125 = vld [vmem:[#allocation2 + $0x2a0] sm:$0xff]
    %v126 = vld [vmem:[#allocation2 + $0x2a8] sm:$0xff]
    %v127 = vld [vmem:[#allocation2 + $0x2b0] sm:$0xff]
    %v128 = vld [vmem:[#allocation2 + $0x2b8] sm:$0xff]
    %v129 = vld [vmem:[#allocation2 + $0x2c0] sm:$0xff]
    %v130 = vld [vmem:[#allocation2 + $0x2c8] sm:$0xff]
    %v131 = vld [vmem:[#allocation2 + $0x2d0] sm:$0xff]
    %v132 = vld [vmem:[#allocation2 + $0x2d8] sm:$0xff]
    %v133 = vld [vmem:[#allocation2 + $0x2e0] sm:$0xff]
    %v134 = vld [vmem:[#allocation2 + $0x2e8] sm:$0xff]
    %v135 = vld [vmem:[#allocation2 + $0x2f0] sm:$0xff]
    %v136 = vld [vmem:[#allocation2 + $0x2f8] sm:$0xff]
    %v137 = vld [vmem:[#allocation2 + $0x300] sm:$0xff]
    %v138 = vld [vmem:[#allocation2 + $0x308] sm:$0xff]
    %v139 = vld [vmem:[#allocation2 + $0x310] sm:$0xff]
    %v140 = vld [vmem:[#allocation2 + $0x318] sm:$0xff]
    %v141 = vld [vmem:[#allocation2 + $0x320] sm:$0xff]
    %v142 = vld [vmem:[#allocation2 + $0x328] sm:$0xff]
    %v143 = vld [vmem:[#allocation2 + $0x330] sm:$0xff]
    %v144 = vld [vmem:[#allocation2 + $0x338] sm:$0xff]
    %v145 = vld [vmem:[#allocation2 + $0x340] sm:$0xff]
    %v146 = vld [vmem:[#allocation2 + $0x348] sm:$0xff]
    %v147 = vld [vmem:[#allocation2 + $0x350] sm:$0xff]
    %v148 = vld [vmem:[#allocation2 + $0x358] sm:$0xff]
    %v149 = vld [vmem:[#allocation2 + $0x360] sm:$0xff]
    %v150 = vld [vmem:[#allocation2 + $0x368] sm:$0xff]
    %v151 = vld [vmem:[#allocation2 + $0x370] sm:$0xff]
    %v152 = vld [vmem:[#allocation2 + $0x378] sm:$0xff]
    %v153 = vld [vmem:[#allocation2 + $0x380] sm:$0xff]
    %v154 = vld [vmem:[#allocation2 + $0x388] sm:$0xff]
    %v155 = vld [vmem:[#allocation2 + $0x390] sm:$0xff]
    %v156 = vld [vmem:[#allocation2 + $0x398] sm:$0xff]
    %v157 = vld [vmem:[#allocation2 + $0x3a0] sm:$0xff]
    %v158 = vld [vmem:[#allocation2 + $0x3a8] sm:$0xff]
    %v159 = vld [vmem:[#allocation2 + $0x3b0] sm:$0xff]
    %v160 = vld [vmem:[#allocation2 + $0x3b8] sm:$0xff]
    %v161 = vld [vmem:[#allocation2 + $0x3c0] sm:$0xff]
    %v162 = vld [vmem:[#allocation2 + $0x3c8] sm:$0xff]
    %v163 = vld [vmem:[#allocation2 + $0x3d0] sm:$0xff]
    %v164 = vld [vmem:[#allocation2 + $0x3d8] sm:$0xff]
    %v165 = vld [vmem:[#allocation2 + $0x3e0] sm:$0xff]
    %v166 = vld [vmem:[#allocation2 + $0x3e8] sm:$0xff]
    %v167 = vld [vmem:[#allocation2 + $0x3f0] sm:$0xff]
    %v168 = vld [vmem:[#allocation2 + $0x3f8] sm:$0xff]
    %v169 = vld [vmem:[#allocation2 + $0x400] sm:$0xff]
    %v170 = vld [vmem:[#allocation2 + $0x408] sm:$0xff]
    %v171 = vld [vmem:[#allocation2 + $0x410] sm:$0xff]
    %v172 = vld [vmem:[#allocation2 + $0x418] sm:$0xff]
    %v173 = vld [vmem:[#allocation2 + $0x420] sm:$0xff]
    %v174 = vld [vmem:[#allocation2 + $0x428] sm:$0xff]
    %v175 = vld [vmem:[#allocation2 + $0x430] sm:$0xff]
    %v176 = vld [vmem:[#allocation2 + $0x438] sm:$0xff]
    %v177 = vld [vmem:[#allocation2 + $0x440] sm:$0xff]
    %v178 = vld [vmem:[#allocation2 + $0x448] sm:$0xff]
    %v179 = vld [vmem:[#allocation2 + $0x450] sm:$0xff]
    %v180 = vld [vmem:[#allocation2 + $0x458] sm:$0xff]
    %v181 = vld [vmem:[#allocation2 + $0x460] sm:$0xff]
    %v182 = vld [vmem:[#allocation2 + $0x468] sm:$0xff]
    %v183 = vld [vmem:[#allocation2 + $0x470] sm:$0xff]
    %v184 = vld [vmem:[#allocation2 + $0x478] sm:$0xff]
    %v185 = vld [vmem:[#allocation2 + $0x480] sm:$0xff]
    %v186 = vld [vmem:[#allocation2 + $0x488] sm:$0xff]
    %v187 = vld [vmem:[#allocation2 + $0x490] sm:$0xff]
    %v188 = vld [vmem:[#allocation2 + $0x498] sm:$0xff]
    %v189 = vld [vmem:[#allocation2 + $0x4a0] sm:$0xff]
    %v190 = vld [vmem:[#allocation2 + $0x4a8] sm:$0xff]
    %v191 = vld [vmem:[#allocation2 + $0x4b0] sm:$0xff]
    %v192 = vld [vmem:[#allocation2 + $0x4b8] sm:$0xff]
    %v193 = vld [vmem:[#allocation2 + $0x4c0] sm:$0xff]
    %v194 = vld [vmem:[#allocation2 + $0x4c8] sm:$0xff]
    %v195 = vld [vmem:[#allocation2 + $0x4d0] sm:$0xff]
    %v196 = vld [vmem:[#allocation2 + $0x4d8] sm:$0xff]
    %v197 = vld [vmem:[#allocation2 + $0x4e0] sm:$0xff]
    %v198 = vld [vmem:[#allocation2 + $0x4e8] sm:$0xff]
    %v199 = vld [vmem:[#allocation2 + $0x4f0] sm:$0xff]
    %v200 = vld [vmem:[#allocation2 + $0x4f8] sm:$0xff]
    %v201 = vld [vmem:[#allocation2 + $0x500] sm:$0xff]
    %v202 = vld [vmem:[#allocation2 + $0x508] sm:$0xff]
    %v203 = vld [vmem:[#allocation2 + $0x510] sm:$0xff]
    %v204 = vld [vmem:[#allocation2 + $0x518] sm:$0xff]
    %v205 = vld [vmem:[#allocation2 + $0x520] sm:$0xff]
    %v206 = vld [vmem:[#allocation2 + $0x528] sm:$0xff]
    %v207 = vld [vmem:[#allocation2 + $0x530] sm:$0xff]
    %v208 = vld [vmem:[#allocation2 + $0x538] sm:$0xff]
    %v209 = vld [vmem:[#allocation2 + $0x540] sm:$0xff]
    %v210 = vld [vmem:[#allocation2 + $0x548] sm:$0xff]
    %v211 = vld [vmem:[#allocation2 + $0x550] sm:$0xff]
    %v212 = vld [vmem:[#allocation2 + $0x558] sm:$0xff]
    %v213 = vld [vmem:[#allocation2 + $0x560] sm:$0xff]
    %v214 = vld [vmem:[#allocation2 + $0x568] sm:$0xff]
    %v215 = vld [vmem:[#allocation2 + $0x570] sm:$0xff]
    %v216 = vld [vmem:[#allocation2 + $0x578] sm:$0xff]
    %v217 = vld [vmem:[#allocation2 + $0x580] sm:$0xff]
    %v218 = vld [vmem:[#allocation2 + $0x588] sm:$0xff]
    %v219 = vld [vmem:[#allocation2 + $0x590] sm:$0xff]
    %v220 = vld [vmem:[#allocation2 + $0x598] sm:$0xff]
    %v221 = vld [vmem:[#allocation2 + $0x5a0] sm:$0xff]
    %v222 = vld [vmem:[#allocation2 + $0x5a8] sm:$0xff]
    %v223 = vld [vmem:[#allocation2 + $0x5b0] sm:$0xff]
    %v224 = vld [vmem:[#allocation2 + $0x5b8] sm:$0xff]
    %v225 = vld [vmem:[#allocation2 + $0x5c0] sm:$0xff]
    %v226 = vld [vmem:[#allocation2 + $0x5c8] sm:$0xff]
    %v227 = vld [vmem:[#allocation2 + $0x5d0] sm:$0xff]
    %v228 = vld [vmem:[#allocation2 + $0x5d8] sm:$0xff]
    %v229 = vld [vmem:[#allocation2 + $0x5e0] sm:$0xff]
    %v230 = vld [vmem:[#allocation2 + $0x5e8] sm:$0xff]
    %v231 = vld [vmem:[#allocation2 + $0x5f0] sm:$0xff]
    %v232 = vld [vmem:[#allocation2 + $0x5f8] sm:$0xff]
    %v233 = vld [vmem:[#allocation2 + $0x600] sm:$0xff]
    %v234 = vld [vmem:[#allocation2 + $0x608] sm:$0xff]
    %v235 = vld [vmem:[#allocation2 + $0x610] sm:$0xff]
    %v236 = vld [vmem:[#allocation2 + $0x618] sm:$0xff]
    %v237 = vld [vmem:[#allocation2 + $0x620] sm:$0xff]
    %v238 = vld [vmem:[#allocation2 + $0x628] sm:$0xff]
    %v239 = vld [vmem:[#allocation2 + $0x630] sm:$0xff]
    %v240 = vld [vmem:[#allocation2 + $0x638] sm:$0xff]
    %v241 = vld [vmem:[#allocation2 + $0x640] sm:$0xff]
    %v242 = vld [vmem:[#allocation2 + $0x648] sm:$0xff]
    %v243 = vld [vmem:[#allocation2 + $0x650] sm:$0xff]
    %v244 = vld [vmem:[#allocation2 + $0x658] sm:$0xff]
    %v245 = vld [vmem:[#allocation2 + $0x660] sm:$0xff]
    %v246 = vld [vmem:[#allocation2 + $0x668] sm:$0xff]
    %v247 = vld [vmem:[#allocation2 + $0x670] sm:$0xff]
    %v248 = vld [vmem:[#allocation2 + $0x678] sm:$0xff]
    %v249 = vld [vmem:[#allocation2 + $0x680] sm:$0xff]
    %v250 = vld [vmem:[#allocation2 + $0x688] sm:$0xff]
    %v251 = vld [vmem:[#allocation2 + $0x690] sm:$0xff]
    %v252 = vld [vmem:[#allocation2 + $0x698] sm:$0xff]
    %v253 = vld [vmem:[#allocation2 + $0x6a0] sm:$0xff]
    %v254 = vld [vmem:[#allocation2 + $0x6a8] sm:$0xff]
    %v255 = vld [vmem:[#allocation2 + $0x6b0] sm:$0xff]
    %v256 = vld [vmem:[#allocation2 + $0x6b8] sm:$0xff]
    %v257 = vld [vmem:[#allocation2 + $0x6c0] sm:$0xff]
    %v258 = vld [vmem:[#allocation2 + $0x6c8] sm:$0xff]
    %v259 = vld [vmem:[#allocation2 + $0x6d0] sm:$0xff]
    %v260 = vld [vmem:[#allocation2 + $0x6d8] sm:$0xff]
    %v261 = vld [vmem:[#allocation2 + $0x6e0] sm:$0xff]
    %v262 = vld [vmem:[#allocation2 + $0x6e8] sm:$0xff]
    %v263 = vld [vmem:[#allocation2 + $0x6f0] sm:$0xff]
    %v264 = vld [vmem:[#allocation2 + $0x6f8] sm:$0xff]
    %v265 = vld [vmem:[#allocation2 + $0x700] sm:$0xff]
    %v266 = vld [vmem:[#allocation2 + $0x708] sm:$0xff]
    %v267 = vld [vmem:[#allocation2 + $0x710] sm:$0xff]
    %v268 = vld [vmem:[#allocation2 + $0x718] sm:$0xff]
    %v269 = vld [vmem:[#allocation2 + $0x720] sm:$0xff]
    %v270 = vld [vmem:[#allocation2 + $0x728] sm:$0xff]
    %v271 = vld [vmem:[#allocation2 + $0x730] sm:$0xff]
    %v272 = vld [vmem:[#allocation2 + $0x738] sm:$0xff]
    %v273 = vld [vmem:[#allocation2 + $0x740] sm:$0xff]
    %v274 = vld [vmem:[#allocation2 + $0x748] sm:$0xff]
    %v275 = vld [vmem:[#allocation2 + $0x750] sm:$0xff]
    %v276 = vld [vmem:[#allocation2 + $0x758] sm:$0xff]
    %v277 = vld [vmem:[#allocation2 + $0x760] sm:$0xff]
    %v278 = vld [vmem:[#allocation2 + $0x768] sm:$0xff]
    %v279 = vld [vmem:[#allocation2 + $0x770] sm:$0xff]
    %v280 = vld [vmem:[#allocation2 + $0x778] sm:$0xff]
    %v281 = vld [vmem:[#allocation2 + $0x780] sm:$0xff]
    %v282 = vld [vmem:[#allocation2 + $0x788] sm:$0xff]
    %v283 = vld [vmem:[#allocation2 + $0x790] sm:$0xff]
    %v284 = vld [vmem:[#allocation2 + $0x798] sm:$0xff]
    %v285 = vld [vmem:[#allocation2 + $0x7a0] sm:$0xff]
    %v286 = vld [vmem:[#allocation2 + $0x7a8] sm:$0xff]
    %v287 = vld [vmem:[#allocation2 + $0x7b0] sm:$0xff]
    %v288 = vld [vmem:[#allocation2 + $0x7b8] sm:$0xff]
    %v289 = vld [vmem:[#allocation2 + $0x7c0] sm:$0xff]
    %v290 = vld [vmem:[#allocation2 + $0x7c8] sm:$0xff]
    %v291 = vld [vmem:[#allocation2 + $0x7d0] sm:$0xff]
    %v292 = vld [vmem:[#allocation2 + $0x7d8] sm:$0xff]
    %v293 = vld [vmem:[#allocation2 + $0x7e0] sm:$0xff]
    %v294 = vld [vmem:[#allocation2 + $0x7e8] sm:$0xff]
    %v295 = vld [vmem:[#allocation2 + $0x7f0] sm:$0xff]
    %v296 = vld [vmem:[#allocation2 + $0x7f8] sm:$0xff]
    %v297 = vld [vmem:[#allocation2 + $0x800] sm:$0xff]
    %v298 = vld [vmem:[#allocation2 + $0x808] sm:$0xff]
    %v299 = vld [vmem:[#allocation2 + $0x810] sm:$0xff]
    %v300 = vld [vmem:[#allocation2 + $0x818] sm:$0xff]
    %v301 = vld [vmem:[#allocation2 + $0x820] sm:$0xff]
    %v302 = vld [vmem:[#allocation2 + $0x828] sm:$0xff]
    %v303 = vld [vmem:[#allocation2 + $0x830] sm:$0xff]
    %v304 = vld [vmem:[#allocation2 + $0x838] sm:$0xff]
    %v305 = vld [vmem:[#allocation2 + $0x840] sm:$0xff]
    %v306 = vld [vmem:[#allocation2 + $0x848] sm:$0xff]
    %v307 = vld [vmem:[#allocation2 + $0x850] sm:$0xff]
    %v308 = vld [vmem:[#allocation2 + $0x858] sm:$0xff]
    %v309 = vld [vmem:[#allocation2 + $0x860] sm:$0xff]
    %v310 = vld [vmem:[#allocation2 + $0x868] sm:$0xff]
    %v311 = vld [vmem:[#allocation2 + $0x870] sm:$0xff]
    %v312 = vld [vmem:[#allocation2 + $0x878] sm:$0xff]
    %v313 = vld [vmem:[#allocation2 + $0x880] sm:$0xff]
    %v314 = vld [vmem:[#allocation2 + $0x888] sm:$0xff]
    %v315 = vld [vmem:[#allocation2 + $0x890] sm:$0xff]
    %v316 = vld [vmem:[#allocation2 + $0x898] sm:$0xff]
    %v317 = vld [vmem:[#allocation2 + $0x8a0] sm:$0xff]
    %v318 = vld [vmem:[#allocation2 + $0x8a8] sm:$0xff]
    %v319 = vld [vmem:[#allocation2 + $0x8b0] sm:$0xff]
    %v320 = vld [vmem:[#allocation2 + $0x8b8] sm:$0xff]
    %v321 = vld [vmem:[#allocation2 + $0x8c0] sm:$0xff]
    %v322 = vld [vmem:[#allocation2 + $0x8c8] sm:$0xff]
    %v323 = vld [vmem:[#allocation2 + $0x8d0] sm:$0xff]
    %v324 = vld [vmem:[#allocation2 + $0x8d8] sm:$0xff]
    %v325 = vld [vmem:[#allocation2 + $0x8e0] sm:$0xff]
    %v326 = vld [vmem:[#allocation2 + $0x8e8] sm:$0xff]
    %v327 = vld [vmem:[#allocation2 + $0x8f0] sm:$0xff]
    %v328 = vld [vmem:[#allocation2 + $0x8f8] sm:$0xff]
    %v329 = vld [vmem:[#allocation2 + $0x900] sm:$0xff]
    %v330 = vld [vmem:[#allocation2 + $0x908] sm:$0xff]
    %v331 = vld [vmem:[#allocation2 + $0x910] sm:$0xff]
    %v332 = vld [vmem:[#allocation2 + $0x918] sm:$0xff]
    %v333 = vld [vmem:[#allocation2 + $0x920] sm:$0xff]
    %v334 = vld [vmem:[#allocation2 + $0x928] sm:$0xff]
    %v335 = vld [vmem:[#allocation2 + $0x930] sm:$0xff]
    %v336 = vld [vmem:[#allocation2 + $0x938] sm:$0xff]
    %v337 = vld [vmem:[#allocation2 + $0x940] sm:$0xff]
    %v338 = vld [vmem:[#allocation2 + $0x948] sm:$0xff]
    %v339 = vld [vmem:[#allocation2 + $0x950] sm:$0xff]
    %v340 = vld [vmem:[#allocation2 + $0x958] sm:$0xff]
    %v341 = vld [vmem:[#allocation2 + $0x960] sm:$0xff]
    %v342 = vld [vmem:[#allocation2 + $0x968] sm:$0xff]
    %v343 = vld [vmem:[#allocation2 + $0x970] sm:$0xff]
    %v344 = vld [vmem:[#allocation2 + $0x978] sm:$0xff]
    %v345 = vld [vmem:[#allocation2 + $0x980] sm:$0xff]
    %v346 = vld [vmem:[#allocation2 + $0x988] sm:$0xff]
    %v347 = vld [vmem:[#allocation2 + $0x990] sm:$0xff]
    %v348 = vld [vmem:[#allocation2 + $0x998] sm:$0xff]
    %v349 = vld [vmem:[#allocation2 + $0x9a0] sm:$0xff]
    %v350 = vld [vmem:[#allocation2 + $0x9a8] sm:$0xff]
    %v351 = vld [vmem:[#allocation2 + $0x9b0] sm:$0xff]
    %v352 = vld [vmem:[#allocation2 + $0x9b8] sm:$0xff]
    %v353 = vld [vmem:[#allocation2 + $0x9c0] sm:$0xff]
    %v354 = vld [vmem:[#allocation2 + $0x9c8] sm:$0xff]
    %v355 = vld [vmem:[#allocation2 + $0x9d0] sm:$0xff]
    %v356 = vld [vmem:[#allocation2 + $0x9d8] sm:$0xff]
    %v357 = vld [vmem:[#allocation2 + $0x9e0] sm:$0xff]
    %v358 = vld [vmem:[#allocation2 + $0x9e8] sm:$0xff]
    %v359 = vld [vmem:[#allocation2 + $0x9f0] sm:$0xff]
    %v360 = vld [vmem:[#allocation2 + $0x9f8] sm:$0xff]
    %v361 = vld [vmem:[#allocation2 + $0xa00] sm:$0xff]
    %v362 = vld [vmem:[#allocation2 + $0xa08] sm:$0xff]
    %v363 = vld [vmem:[#allocation2 + $0xa10] sm:$0xff]
    %v364 = vld [vmem:[#allocation2 + $0xa18] sm:$0xff]
    %v365 = vld [vmem:[#allocation2 + $0xa20] sm:$0xff]
    %v366 = vld [vmem:[#allocation2 + $0xa28] sm:$0xff]
    %v367 = vld [vmem:[#allocation2 + $0xa30] sm:$0xff]
    %v368 = vld [vmem:[#allocation2 + $0xa38] sm:$0xff]
    %v369 = vld [vmem:[#allocation2 + $0xa40] sm:$0xff]
    %v370 = vld [vmem:[#allocation2 + $0xa48] sm:$0xff]
    %v371 = vld [vmem:[#allocation2 + $0xa50] sm:$0xff]
    %v372 = vld [vmem:[#allocation2 + $0xa58] sm:$0xff]
    %v373 = vld [vmem:[#allocation2 + $0xa60] sm:$0xff]
    %v374 = vld [vmem:[#allocation2 + $0xa68] sm:$0xff]
    %v375 = vld [vmem:[#allocation2 + $0xa70] sm:$0xff]
    %v376 = vld [vmem:[#allocation2 + $0xa78] sm:$0xff]
    %v377 = vld [vmem:[#allocation2 + $0xa80] sm:$0xff]
    %v378 = vld [vmem:[#allocation2 + $0xa88] sm:$0xff]
    %v379 = vld [vmem:[#allocation2 + $0xa90] sm:$0xff]
    %v380 = vld [vmem:[#allocation2 + $0xa98] sm:$0xff]
    %v381 = vld [vmem:[#allocation2 + $0xaa0] sm:$0xff]
    %v382 = vld [vmem:[#allocation2 + $0xaa8] sm:$0xff]
    %v383 = vld [vmem:[#allocation2 + $0xab0] sm:$0xff]
    %v384 = vld [vmem:[#allocation2 + $0xab8] sm:$0xff]
    %v385 = vld [vmem:[#allocation2 + $0xac0] sm:$0xff]
    %v386 = vld [vmem:[#allocation2 + $0xac8] sm:$0xff]
    %v387 = vld [vmem:[#allocation2 + $0xad0] sm:$0xff]
    %v388 = vld [vmem:[#allocation2 + $0xad8] sm:$0xff]
    %v389 = vld [vmem:[#allocation2 + $0xae0] sm:$0xff]
    %v390 = vld [vmem:[#allocation2 + $0xae8] sm:$0xff]
    %v391 = vld [vmem:[#allocation2 + $0xaf0] sm:$0xff]
    %v392 = vld [vmem:[#allocation2 + $0xaf8] sm:$0xff]
    %v393 = vld [vmem:[#allocation2 + $0xb00] sm:$0xff]
    %v394 = vld [vmem:[#allocation2 + $0xb08] sm:$0xff]
    %v395 = vld [vmem:[#allocation2 + $0xb10] sm:$0xff]
    %v396 = vld [vmem:[#allocation2 + $0xb18] sm:$0xff]
    %v397 = vld [vmem:[#allocation2 + $0xb20] sm:$0xff]
    %v398 = vld [vmem:[#allocation2 + $0xb28] sm:$0xff]
    %v399 = vld [vmem:[#allocation2 + $0xb30] sm:$0xff]
    %v400 = vld [vmem:[#allocation2 + $0xb38] sm:$0xff]
    %v401 = vld [vmem:[#allocation2 + $0xb40] sm:$0xff]
    %v402 = vld [vmem:[#allocation2 + $0xb48] sm:$0xff]
    %v403 = vld [vmem:[#allocation2 + $0xb50] sm:$0xff]
    %v404 = vld [vmem:[#allocation2 + $0xb58] sm:$0xff]
    %v405 = vld [vmem:[#allocation2 + $0xb60] sm:$0xff]
    %v406 = vld [vmem:[#allocation2 + $0xb68] sm:$0xff]
    %v407 = vld [vmem:[#allocation2 + $0xb70] sm:$0xff]
    %v408 = vld [vmem:[#allocation2 + $0xb78] sm:$0xff]
    %v409 = vld [vmem:[#allocation2 + $0xb80] sm:$0xff]
    %v410 = vld [vmem:[#allocation2 + $0xb88] sm:$0xff]
    %v411 = vld [vmem:[#allocation2 + $0xb90] sm:$0xff]
    %v412 = vld [vmem:[#allocation2 + $0xb98] sm:$0xff]
    %v413 = vld [vmem:[#allocation2 + $0xba0] sm:$0xff]
    %v414 = vld [vmem:[#allocation2 + $0xba8] sm:$0xff]
    %v415 = vld [vmem:[#allocation2 + $0xbb0] sm:$0xff]
    %v416 = vld [vmem:[#allocation2 + $0xbb8] sm:$0xff]
    %v417 = vld [vmem:[#allocation2 + $0xbc0] sm:$0xff]
    %v418 = vld [vmem:[#allocation2 + $0xbc8] sm:$0xff]
    %v419 = vld [vmem:[#allocation2 + $0xbd0] sm:$0xff]
    %v420 = vld [vmem:[#allocation2 + $0xbd8] sm:$0xff]
    %v421 = vld [vmem:[#allocation2 + $0xbe0] sm:$0xff]
    %v422 = vld [vmem:[#allocation2 + $0xbe8] sm:$0xff]
    %v423 = vld [vmem:[#allocation2 + $0xbf0] sm:$0xff]
    %v424 = vld [vmem:[#allocation2 + $0xbf8] sm:$0xff]
    %v425 = vld [vmem:[#allocation2 + $0xc00] sm:$0xff]
    %v426 = vld [vmem:[#allocation2 + $0xc08] sm:$0xff]
    %v427 = vld [vmem:[#allocation2 + $0xc10] sm:$0xff]
    %v428 = vld [vmem:[#allocation2 + $0xc18] sm:$0xff]
    %v429 = vld [vmem:[#allocation2 + $0xc20] sm:$0xff]
    %v430 = vld [vmem:[#allocation2 + $0xc28] sm:$0xff]
    %v431 = vld [vmem:[#allocation2 + $0xc30] sm:$0xff]
    %v432 = vld [vmem:[#allocation2 + $0xc38] sm:$0xff]
    %v433 = vld [vmem:[#allocation2 + $0xc40] sm:$0xff]
    %v434 = vld [vmem:[#allocation2 + $0xc48] sm:$0xff]
    %v435 = vld [vmem:[#allocation2 + $0xc50] sm:$0xff]
    %v436 = vld [vmem:[#allocation2 + $0xc58] sm:$0xff]
    %v437 = vld [vmem:[#allocation2 + $0xc60] sm:$0xff]
    %v438 = vld [vmem:[#allocation2 + $0xc68] sm:$0xff]
    %v439 = vld [vmem:[#allocation2 + $0xc70] sm:$0xff]
    %v440 = vld [vmem:[#allocation2 + $0xc78] sm:$0xff]
    %v441 = vld [vmem:[#allocation2 + $0xc80] sm:$0xff]
    %v442 = vld [vmem:[#allocation2 + $0xc88] sm:$0xff]
    %v443 = vld [vmem:[#allocation2 + $0xc90] sm:$0xff]
    %v444 = vld [vmem:[#allocation2 + $0xc98] sm:$0xff]
    %v445 = vld [vmem:[#allocation2 + $0xca0] sm:$0xff]
    %v446 = vld [vmem:[#allocation2 + $0xca8] sm:$0xff]
    %v447 = vld [vmem:[#allocation2 + $0xcb0] sm:$0xff]
    %v448 = vld [vmem:[#allocation2 + $0xcb8] sm:$0xff]
    %v449 = vld [vmem:[#allocation2 + $0xcc0] sm:$0xff]
    %v450 = vld [vmem:[#allocation2 + $0xcc8] sm:$0xff]
    %v451 = vld [vmem:[#allocation2 + $0xcd0] sm:$0xff]
    %v452 = vld [vmem:[#allocation2 + $0xcd8] sm:$0xff]
    %v453 = vld [vmem:[#allocation2 + $0xce0] sm:$0xff]
    %v454 = vld [vmem:[#allocation2 + $0xce8] sm:$0xff]
    %v455 = vld [vmem:[#allocation2 + $0xcf0] sm:$0xff]
    %v456 = vld [vmem:[#allocation2 + $0xcf8] sm:$0xff]
    %v457 = vld [vmem:[#allocation2 + $0xd00] sm:$0xff]
    %v458 = vld [vmem:[#allocation2 + $0xd08] sm:$0xff]
    %v459 = vld [vmem:[#allocation2 + $0xd10] sm:$0xff]
    %v460 = vld [vmem:[#allocation2 + $0xd18] sm:$0xff]
    %v461 = vld [vmem:[#allocation2 + $0xd20] sm:$0xff]
    %v462 = vld [vmem:[#allocation2 + $0xd28] sm:$0xff]
    %v463 = vld [vmem:[#allocation2 + $0xd30] sm:$0xff]
    %v464 = vld [vmem:[#allocation2 + $0xd38] sm:$0xff]
    %v465 = vld [vmem:[#allocation2 + $0xd40] sm:$0xff]
    %v466 = vld [vmem:[#allocation2 + $0xd48] sm:$0xff]
    %v467 = vld [vmem:[#allocation2 + $0xd50] sm:$0xff]
    %v468 = vld [vmem:[#allocation2 + $0xd58] sm:$0xff]
    %v469 = vld [vmem:[#allocation2 + $0xd60] sm:$0xff]
    %v470 = vld [vmem:[#allocation2 + $0xd68] sm:$0xff]
    %v471 = vld [vmem:[#allocation2 + $0xd70] sm:$0xff]
    %v472 = vld [vmem:[#allocation2 + $0xd78] sm:$0xff]
    %v473 = vld [vmem:[#allocation2 + $0xd80] sm:$0xff]
    %v474 = vld [vmem:[#allocation2 + $0xd88] sm:$0xff]
    %v475 = vld [vmem:[#allocation2 + $0xd90] sm:$0xff]
    %v476 = vld [vmem:[#allocation2 + $0xd98] sm:$0xff]
    %v477 = vld [vmem:[#allocation2 + $0xda0] sm:$0xff]
    %v478 = vld [vmem:[#allocation2 + $0xda8] sm:$0xff]
    %v479 = vld [vmem:[#allocation2 + $0xdb0] sm:$0xff]
    %v480 = vld [vmem:[#allocation2 + $0xdb8] sm:$0xff]
    %v481 = vld [vmem:[#allocation2 + $0xdc0] sm:$0xff]
    %v482 = vld [vmem:[#allocation2 + $0xdc8] sm:$0xff]
    %v483 = vld [vmem:[#allocation2 + $0xdd0] sm:$0xff]
    %v484 = vld [vmem:[#allocation2 + $0xdd8] sm:$0xff]
    %v485 = vld [vmem:[#allocation2 + $0xde0] sm:$0xff]
    %v486 = vld [vmem:[#allocation2 + $0xde8] sm:$0xff]
    %v487 = vld [vmem:[#allocation2 + $0xdf0] sm:$0xff]
    %v488 = vld [vmem:[#allocation2 + $0xdf8] sm:$0xff]
    %v489 = vld [vmem:[#allocation2 + $0xe00] sm:$0xff]
    %v490 = vld [vmem:[#allocation2 + $0xe08] sm:$0xff]
    %v491 = vld [vmem:[#allocation2 + $0xe10] sm:$0xff]
    %v492 = vld [vmem:[#allocation2 + $0xe18] sm:$0xff]
    %v493 = vld [vmem:[#allocation2 + $0xe20] sm:$0xff]
    %v494 = vld [vmem:[#allocation2 + $0xe28] sm:$0xff]
    %v495 = vld [vmem:[#allocation2 + $0xe30] sm:$0xff]
    %v496 = vld [vmem:[#allocation2 + $0xe38] sm:$0xff]
    %v497 = vld [vmem:[#allocation2 + $0xe40] sm:$0xff]
    %v498 = vld [vmem:[#allocation2 + $0xe48] sm:$0xff]
    %v499 = vld [vmem:[#allocation2 + $0xe50] sm:$0xff]
    %v500 = vld [vmem:[#allocation2 + $0xe58] sm:$0xff]
    %v501 = vld [vmem:[#allocation2 + $0xe60] sm:$0xff]
    %v502 = vld [vmem:[#allocation2 + $0xe68] sm:$0xff]
    %v503 = vld [vmem:[#allocation2 + $0xe70] sm:$0xff]
    %v504 = vld [vmem:[#allocation2 + $0xe78] sm:$0xff]
    %v505 = vld [vmem:[#allocation2 + $0xe80] sm:$0xff]
    %v506 = vld [vmem:[#allocation2 + $0xe88] sm:$0xff]
    %v507 = vld [vmem:[#allocation2 + $0xe90] sm:$0xff]
    %v508 = vld [vmem:[#allocation2 + $0xe98] sm:$0xff]
    %v509 = vld [vmem:[#allocation2 + $0xea0] sm:$0xff]
    %v510 = vld [vmem:[#allocation2 + $0xea8] sm:$0xff]
    %v511 = vld [vmem:[#allocation2 + $0xeb0] sm:$0xff]
    %v512 = vld [vmem:[#allocation2 + $0xeb8] sm:$0xff]
    %v513 = vld [vmem:[#allocation2 + $0xec0] sm:$0xff]
    %v514 = vld [vmem:[#allocation2 + $0xec8] sm:$0xff]
    %v515 = vld [vmem:[#allocation2 + $0xed0] sm:$0xff]
    %v516 = vld [vmem:[#allocation2 + $0xed8] sm:$0xff]
    %v517 = vld [vmem:[#allocation2 + $0xee0] sm:$0xff]
    %v518 = vld [vmem:[#allocation2 + $0xee8] sm:$0xff]
    %v519 = vld [vmem:[#allocation2 + $0xef0] sm:$0xff]
    %v520 = vld [vmem:[#allocation2 + $0xef8] sm:$0xff]
    %v521 = vld [vmem:[#allocation2 + $0xf00] sm:$0xff]
    %v522 = vld [vmem:[#allocation2 + $0xf08] sm:$0xff]
    %v523 = vld [vmem:[#allocation2 + $0xf10] sm:$0xff]
    %v524 = vld [vmem:[#allocation2 + $0xf18] sm:$0xff]
    %v525 = vld [vmem:[#allocation2 + $0xf20] sm:$0xff]
    %v526 = vld [vmem:[#allocation2 + $0xf28] sm:$0xff]
    %v527 = vld [vmem:[#allocation2 + $0xf30] sm:$0xff]
    %v528 = vld [vmem:[#allocation2 + $0xf38] sm:$0xff]
    %v529 = vld [vmem:[#allocation2 + $0xf40] sm:$0xff]
    %v530 = vld [vmem:[#allocation2 + $0xf48] sm:$0xff]
    %v531 = vld [vmem:[#allocation2 + $0xf50] sm:$0xff]
    %v532 = vld [vmem:[#allocation2 + $0xf58] sm:$0xff]
    %v533 = vld [vmem:[#allocation2 + $0xf60] sm:$0xff]
    %v534 = vld [vmem:[#allocation2 + $0xf68] sm:$0xff]
    %v535 = vld [vmem:[#allocation2 + $0xf70] sm:$0xff]
    %v536 = vld [vmem:[#allocation2 + $0xf78] sm:$0xff]
    %v537 = vld [vmem:[#allocation2 + $0xf80] sm:$0xff]
    %v538 = vld [vmem:[#allocation2 + $0xf88] sm:$0xff]
    %v539 = vld [vmem:[#allocation2 + $0xf90] sm:$0xff]
    %v540 = vld [vmem:[#allocation2 + $0xf98] sm:$0xff]
    %v541 = vld [vmem:[#allocation2 + $0xfa0] sm:$0xff]
    %v542 = vld [vmem:[#allocation2 + $0xfa8] sm:$0xff]
    %v543 = vld [vmem:[#allocation2 + $0xfb0] sm:$0xff]
    %v544 = vld [vmem:[#allocation2 + $0xfb8] sm:$0xff]
    %v545 = vld [vmem:[#allocation2 + $0xfc0] sm:$0xff]
    %v546 = vld [vmem:[#allocation2 + $0xfc8] sm:$0xff]
    %v547 = vld [vmem:[#allocation2 + $0xfd0] sm:$0xff]
    %v548 = vld [vmem:[#allocation2 + $0xfd8] sm:$0xff]
    %v549 = vld [vmem:[#allocation2 + $0xfe0] sm:$0xff]
    %v550 = vld [vmem:[#allocation2 + $0xfe8] sm:$0xff]
    %v551 = vld [vmem:[#allocation2 + $0xff0] sm:$0xff]
    %v552 = vld [vmem:[#allocation2 + $0xff8] sm:$0xff]
    %v553 = vld [vmem:[#allocation2 + $0x1000] sm:$0xff]
    %v554 = vld [vmem:[#allocation2 + $0x1008] sm:$0xff]
    %v555 = vld [vmem:[#allocation2 + $0x1010] sm:$0xff]
    %v556 = vld [vmem:[#allocation2 + $0x1018] sm:$0xff]
    %v557 = vld [vmem:[#allocation2 + $0x1020] sm:$0xff]
    %v558 = vld [vmem:[#allocation2 + $0x1028] sm:$0xff]
    %v559 = vld [vmem:[#allocation2 + $0x1030] sm:$0xff]
    %v560 = vld [vmem:[#allocation2 + $0x1038] sm:$0xff]
    %v561 = vld [vmem:[#allocation2 + $0x1040] sm:$0xff]
    %v562 = vld [vmem:[#allocation2 + $0x1048] sm:$0xff]
    %v563 = vld [vmem:[#allocation2 + $0x1050] sm:$0xff]
    %v564 = vld [vmem:[#allocation2 + $0x1058] sm:$0xff]
    %v565 = vld [vmem:[#allocation2 + $0x1060] sm:$0xff]
    %v566 = vld [vmem:[#allocation2 + $0x1068] sm:$0xff]
    %v567 = vld [vmem:[#allocation2 + $0x1070] sm:$0xff]
    %v568 = vld [vmem:[#allocation2 + $0x1078] sm:$0xff]
    %v569 = vld [vmem:[#allocation2 + $0x1080] sm:$0xff]
    %v570 = vld [vmem:[#allocation2 + $0x1088] sm:$0xff]
    %v571 = vld [vmem:[#allocation2 + $0x1090] sm:$0xff]
    %v572 = vld [vmem:[#allocation2 + $0x1098] sm:$0xff]
    %v573 = vld [vmem:[#allocation2 + $0x10a0] sm:$0xff]
    %v574 = vld [vmem:[#allocation2 + $0x10a8] sm:$0xff]
    %v575 = vld [vmem:[#allocation2 + $0x10b0] sm:$0xff]
    %v576 = vld [vmem:[#allocation2 + $0x10b8] sm:$0xff]
    %v577 = vld [vmem:[#allocation2 + $0x10c0] sm:$0xff]
    %v578 = vld [vmem:[#allocation2 + $0x10c8] sm:$0xff]
    %v579 = vld [vmem:[#allocation2 + $0x10d0] sm:$0xff]
    %v580 = vld [vmem:[#allocation2 + $0x10d8] sm:$0xff]
    %v581 = vld [vmem:[#allocation2 + $0x10e0] sm:$0xff]
    %v582 = vld [vmem:[#allocation2 + $0x10e8] sm:$0xff]
    %v583 = vld [vmem:[#allocation2 + $0x10f0] sm:$0xff]
    %v584 = vld [vmem:[#allocation2 + $0x10f8] sm:$0xff]
    %v585 = vld [vmem:[#allocation2 + $0x1100] sm:$0xff]
    %v586 = vld [vmem:[#allocation2 + $0x1108] sm:$0xff]
    %v587 = vld [vmem:[#allocation2 + $0x1110] sm:$0xff]
    %v588 = vld [vmem:[#allocation2 + $0x1118] sm:$0xff]
    %v589 = vld [vmem:[#allocation2 + $0x1120] sm:$0xff]
    %v590 = vld [vmem:[#allocation2 + $0x1128] sm:$0xff]
    %v591 = vld [vmem:[#allocation2 + $0x1130] sm:$0xff]
    %v592 = vld [vmem:[#allocation2 + $0x1138] sm:$0xff]
    %v593 = vld [vmem:[#allocation2 + $0x1140] sm:$0xff]
    %v594 = vld [vmem:[#allocation2 + $0x1148] sm:$0xff]
    %v595 = vld [vmem:[#allocation2 + $0x1150] sm:$0xff]
    %v596 = vld [vmem:[#allocation2 + $0x1158] sm:$0xff]
    %v597 = vld [vmem:[#allocation2 + $0x1160] sm:$0xff]
    %v598 = vld [vmem:[#allocation2 + $0x1168] sm:$0xff]
    %v599 = vld [vmem:[#allocation2 + $0x1170] sm:$0xff]
    %v600 = vld [vmem:[#allocation2 + $0x1178] sm:$0xff]
    %v601 = vld [vmem:[#allocation2 + $0x1180] sm:$0xff]
    %v602 = vld [vmem:[#allocation2 + $0x1188] sm:$0xff]
    %v603 = vld [vmem:[#allocation2 + $0x1190] sm:$0xff]
    %v604 = vld [vmem:[#allocation2 + $0x1198] sm:$0xff]
    %v605 = vld [vmem:[#allocation2 + $0x11a0] sm:$0xff]
    %v606 = vld [vmem:[#allocation2 + $0x11a8] sm:$0xff]
    %v607 = vld [vmem:[#allocation2 + $0x11b0] sm:$0xff]
    %v608 = vld [vmem:[#allocation2 + $0x11b8] sm:$0xff]
    %v609 = vld [vmem:[#allocation2 + $0x11c0] sm:$0xff]
    %v610 = vld [vmem:[#allocation2 + $0x11c8] sm:$0xff]
    %v611 = vld [vmem:[#allocation2 + $0x11d0] sm:$0xff]
    %v612 = vld [vmem:[#allocation2 + $0x11d8] sm:$0xff]
    %v613 = vld [vmem:[#allocation2 + $0x11e0] sm:$0xff]
    %v614 = vld [vmem:[#allocation2 + $0x11e8] sm:$0xff]
    %v615 = vld [vmem:[#allocation2 + $0x11f0] sm:$0xff]
    %v616 = vld [vmem:[#allocation2 + $0x11f8] sm:$0xff]
    %v617 = vld [vmem:[#allocation2 + $0x1200] sm:$0xff]
    %v618 = vld [vmem:[#allocation2 + $0x1208] sm:$0xff]
    %v619 = vld [vmem:[#allocation2 + $0x1210] sm:$0xff]
    %v620 = vld [vmem:[#allocation2 + $0x1218] sm:$0xff]
    %v621 = vld [vmem:[#allocation2 + $0x1220] sm:$0xff]
    %v622 = vld [vmem:[#allocation2 + $0x1228] sm:$0xff]
    %v623 = vld [vmem:[#allocation2 + $0x1230] sm:$0xff]
    %v624 = vld [vmem:[#allocation2 + $0x1238] sm:$0xff]
    %v625 = vld [vmem:[#allocation2 + $0x1240] sm:$0xff]
    %v626 = vld [vmem:[#allocation2 + $0x1248] sm:$0xff]
    %v627 = vld [vmem:[#allocation2 + $0x1250] sm:$0xff]
    %v628 = vld [vmem:[#allocation2 + $0x1258] sm:$0xff]
    %v629 = vld [vmem:[#allocation2 + $0x1260] sm:$0xff]
    %v630 = vld [vmem:[#allocation2 + $0x1268] sm:$0xff]
    %v631 = vld [vmem:[#allocation2 + $0x1270] sm:$0xff]
    %v632 = vld [vmem:[#allocation2 + $0x1278] sm:$0xff]
    %v633 = vld [vmem:[#allocation2 + $0x1280] sm:$0xff]
    %v634 = vld [vmem:[#allocation2 + $0x1288] sm:$0xff]
    %v635 = vld [vmem:[#allocation2 + $0x1290] sm:$0xff]
    %v636 = vld [vmem:[#allocation2 + $0x1298] sm:$0xff]
    %v637 = vld [vmem:[#allocation2 + $0x12a0] sm:$0xff]
    %v638 = vld [vmem:[#allocation2 + $0x12a8] sm:$0xff]
    %v639 = vld [vmem:[#allocation2 + $0x12b0] sm:$0xff]
    %v640 = vld [vmem:[#allocation2 + $0x12b8] sm:$0xff]
    %v641 = vld [vmem:[#allocation2 + $0x12c0] sm:$0xff]
    %v642 = vld [vmem:[#allocation2 + $0x12c8] sm:$0xff]
    %v643 = vld [vmem:[#allocation2 + $0x12d0] sm:$0xff]
    %v644 = vld [vmem:[#allocation2 + $0x12d8] sm:$0xff]
    %v645 = vld [vmem:[#allocation2 + $0x12e0] sm:$0xff]
    %v646 = vld [vmem:[#allocation2 + $0x12e8] sm:$0xff]
    %v647 = vld [vmem:[#allocation2 + $0x12f0] sm:$0xff]
    %v648 = vld [vmem:[#allocation2 + $0x12f8] sm:$0xff]
    %v649 = vld [vmem:[#allocation2 + $0x1300] sm:$0xff]
    %v650 = vld [vmem:[#allocation2 + $0x1308] sm:$0xff]
    %v651 = vld [vmem:[#allocation2 + $0x1310] sm:$0xff]
    %v652 = vld [vmem:[#allocation2 + $0x1318] sm:$0xff]
    %v653 = vld [vmem:[#allocation2 + $0x1320] sm:$0xff]
    %v654 = vld [vmem:[#allocation2 + $0x1328] sm:$0xff]
    %v655 = vld [vmem:[#allocation2 + $0x1330] sm:$0xff]
    %v656 = vld [vmem:[#allocation2 + $0x1338] sm:$0xff]
    %v657 = vld [vmem:[#allocation2 + $0x1340] sm:$0xff]
    %v658 = vld [vmem:[#allocation2 + $0x1348] sm:$0xff]
    %v659 = vld [vmem:[#allocation2 + $0x1350] sm:$0xff]
    %v660 = vld [vmem:[#allocation2 + $0x1358] sm:$0xff]
    %v661 = vld [vmem:[#allocation2 + $0x1360] sm:$0xff]
    %v662 = vld [vmem:[#allocation2 + $0x1368] sm:$0xff]
    %v663 = vld [vmem:[#allocation2 + $0x1370] sm:$0xff]
    %v664 = vld [vmem:[#allocation2 + $0x1378] sm:$0xff]
    %v665 = vld [vmem:[#allocation2 + $0x1380] sm:$0xff]
    %v666 = vld [vmem:[#allocation2 + $0x1388] sm:$0xff]
    %v667 = vld [vmem:[#allocation2 + $0x1390] sm:$0xff]
    %v668 = vld [vmem:[#allocation2 + $0x1398] sm:$0xff]
    %v669 = vld [vmem:[#allocation2 + $0x13a0] sm:$0xff]
    %v670 = vld [vmem:[#allocation2 + $0x13a8] sm:$0xff]
    %v671 = vld [vmem:[#allocation2 + $0x13b0] sm:$0xff]
    %v672 = vld [vmem:[#allocation2 + $0x13b8] sm:$0xff]
    %v673 = vld [vmem:[#allocation2 + $0x13c0] sm:$0xff]
    %v674 = vld [vmem:[#allocation2 + $0x13c8] sm:$0xff]
    %v675 = vld [vmem:[#allocation2 + $0x13d0] sm:$0xff]
    %v676 = vld [vmem:[#allocation2 + $0x13d8] sm:$0xff]
    %v677 = vld [vmem:[#allocation2 + $0x13e0] sm:$0xff]
    %v678 = vld [vmem:[#allocation2 + $0x13e8] sm:$0xff]
    %v679 = vld [vmem:[#allocation2 + $0x13f0] sm:$0xff]
    %v680 = vld [vmem:[#allocation2 + $0x13f8] sm:$0xff]
    %v681 = vld [vmem:[#allocation2 + $0x1400] sm:$0xff]
    %v682 = vld [vmem:[#allocation2 + $0x1408] sm:$0xff]
    %v683 = vld [vmem:[#allocation2 + $0x1410] sm:$0xff]
    %v684 = vld [vmem:[#allocation2 + $0x1418] sm:$0xff]
    %v685 = vld [vmem:[#allocation2 + $0x1420] sm:$0xff]
    %v686 = vld [vmem:[#allocation2 + $0x1428] sm:$0xff]
    %v687 = vld [vmem:[#allocation2 + $0x1430] sm:$0xff]
    %v688 = vld [vmem:[#allocation2 + $0x1438] sm:$0xff]
    %v689 = vld [vmem:[#allocation2 + $0x1440] sm:$0xff]
    %v690 = vld [vmem:[#allocation2 + $0x1448] sm:$0xff]
    %v691 = vld [vmem:[#allocation2 + $0x1450] sm:$0xff]
    %v692 = vld [vmem:[#allocation2 + $0x1458] sm:$0xff]
    %v693 = vld [vmem:[#allocation2 + $0x1460] sm:$0xff]
    %v694 = vld [vmem:[#allocation2 + $0x1468] sm:$0xff]
    %v695 = vld [vmem:[#allocation2 + $0x1470] sm:$0xff]
    %v696 = vld [vmem:[#allocation2 + $0x1478] sm:$0xff]
    %v697 = vld [vmem:[#allocation2 + $0x1480] sm:$0xff]
    %v698 = vld [vmem:[#allocation2 + $0x1488] sm:$0xff]
    %v699 = vld [vmem:[#allocation2 + $0x1490] sm:$0xff]
    %v700 = vld [vmem:[#allocation2 + $0x1498] sm:$0xff]
    %v701 = vld [vmem:[#allocation2 + $0x14a0] sm:$0xff]
    %v702 = vld [vmem:[#allocation2 + $0x14a8] sm:$0xff]
    %v703 = vld [vmem:[#allocation2 + $0x14b0] sm:$0xff]
    %v704 = vld [vmem:[#allocation2 + $0x14b8] sm:$0xff]
    %v705 = vld [vmem:[#allocation2 + $0x14c0] sm:$0xff]
    %v706 = vld [vmem:[#allocation2 + $0x14c8] sm:$0xff]
    %v707 = vld [vmem:[#allocation2 + $0x14d0] sm:$0xff]
    %v708 = vld [vmem:[#allocation2 + $0x14d8] sm:$0xff]
    %v709 = vld [vmem:[#allocation2 + $0x14e0] sm:$0xff]
    %v710 = vld [vmem:[#allocation2 + $0x14e8] sm:$0xff]
    %v711 = vld [vmem:[#allocation2 + $0x14f0] sm:$0xff]
    %v712 = vld [vmem:[#allocation2 + $0x14f8] sm:$0xff]
    %v713 = vld [vmem:[#allocation2 + $0x1500] sm:$0xff]
    %v714 = vld [vmem:[#allocation2 + $0x1508] sm:$0xff]
    %v715 = vld [vmem:[#allocation2 + $0x1510] sm:$0xff]
    %v716 = vld [vmem:[#allocation2 + $0x1518] sm:$0xff]
    %v717 = vld [vmem:[#allocation2 + $0x1520] sm:$0xff]
    %v718 = vld [vmem:[#allocation2 + $0x1528] sm:$0xff]
    %v719 = vld [vmem:[#allocation2 + $0x1530] sm:$0xff]
    %v720 = vld [vmem:[#allocation2 + $0x1538] sm:$0xff]
    %v721 = vld [vmem:[#allocation2 + $0x1540] sm:$0xff]
    %v722 = vld [vmem:[#allocation2 + $0x1548] sm:$0xff]
    %v723 = vld [vmem:[#allocation2 + $0x1550] sm:$0xff]
    %v724 = vld [vmem:[#allocation2 + $0x1558] sm:$0xff]
    %v725 = vld [vmem:[#allocation2 + $0x1560] sm:$0xff]
    %v726 = vld [vmem:[#allocation2 + $0x1568] sm:$0xff]
    %v727 = vld [vmem:[#allocation2 + $0x1570] sm:$0xff]
    %v728 = vld [vmem:[#allocation2 + $0x1578] sm:$0xff]
    %v729 = vld [vmem:[#allocation2 + $0x1580] sm:$0xff]
    %v730 = vld [vmem:[#allocation2 + $0x1588] sm:$0xff]
    %v731 = vld [vmem:[#allocation2 + $0x1590] sm:$0xff]
    %v732 = vld [vmem:[#allocation2 + $0x1598] sm:$0xff]
    %v733 = vld [vmem:[#allocation2 + $0x15a0] sm:$0xff]
    %v734 = vld [vmem:[#allocation2 + $0x15a8] sm:$0xff]
    %v735 = vld [vmem:[#allocation2 + $0x15b0] sm:$0xff]
    %v736 = vld [vmem:[#allocation2 + $0x15b8] sm:$0xff]
    %v737 = vld [vmem:[#allocation2 + $0x15c0] sm:$0xff]
    %v738 = vld [vmem:[#allocation2 + $0x15c8] sm:$0xff]
    %v739 = vld [vmem:[#allocation2 + $0x15d0] sm:$0xff]
    %v740 = vld [vmem:[#allocation2 + $0x15d8] sm:$0xff]
    %v741 = vld [vmem:[#allocation2 + $0x15e0] sm:$0xff]
    %v742 = vld [vmem:[#allocation2 + $0x15e8] sm:$0xff]
    %v743 = vld [vmem:[#allocation2 + $0x15f0] sm:$0xff]
    %v744 = vld [vmem:[#allocation2 + $0x15f8] sm:$0xff]
    %v745 = vld [vmem:[#allocation2 + $0x1600] sm:$0xff]
    %v746 = vld [vmem:[#allocation2 + $0x1608] sm:$0xff]
    %v747 = vld [vmem:[#allocation2 + $0x1610] sm:$0xff]
    %v748 = vld [vmem:[#allocation2 + $0x1618] sm:$0xff]
    %v749 = vld [vmem:[#allocation2 + $0x1620] sm:$0xff]
    %v750 = vld [vmem:[#allocation2 + $0x1628] sm:$0xff]
    %v751 = vld [vmem:[#allocation2 + $0x1630] sm:$0xff]
    %v752 = vld [vmem:[#allocation2 + $0x1638] sm:$0xff]
    %v753 = vld [vmem:[#allocation2 + $0x1640] sm:$0xff]
    %v754 = vld [vmem:[#allocation2 + $0x1648] sm:$0xff]
    %v755 = vld [vmem:[#allocation2 + $0x1650] sm:$0xff]
    %v756 = vld [vmem:[#allocation2 + $0x1658] sm:$0xff]
    %v757 = vld [vmem:[#allocation2 + $0x1660] sm:$0xff]
    %v758 = vld [vmem:[#allocation2 + $0x1668] sm:$0xff]
    %v759 = vld [vmem:[#allocation2 + $0x1670] sm:$0xff]
    %v760 = vld [vmem:[#allocation2 + $0x1678] sm:$0xff]
    %v761 = vld [vmem:[#allocation2 + $0x1680] sm:$0xff]
    %v762 = vld [vmem:[#allocation2 + $0x1688] sm:$0xff]
    %v763 = vld [vmem:[#allocation2 + $0x1690] sm:$0xff]
    %v764 = vld [vmem:[#allocation2 + $0x1698] sm:$0xff]
    %v765 = vld [vmem:[#allocation2 + $0x16a0] sm:$0xff]
    %v766 = vld [vmem:[#allocation2 + $0x16a8] sm:$0xff]
    %v767 = vld [vmem:[#allocation2 + $0x16b0] sm:$0xff]
    %v768 = vld [vmem:[#allocation2 + $0x16b8] sm:$0xff]
    %v769 = vld [vmem:[#allocation2 + $0x16c0] sm:$0xff]
    %v770 = vld [vmem:[#allocation2 + $0x16c8] sm:$0xff]
    %v771 = vld [vmem:[#allocation2 + $0x16d0] sm:$0xff]
    %v772 = vld [vmem:[#allocation2 + $0x16d8] sm:$0xff]
    %v773 = vld [vmem:[#allocation2 + $0x16e0] sm:$0xff]
    %v774 = vld [vmem:[#allocation2 + $0x16e8] sm:$0xff]
    %v775 = vld [vmem:[#allocation2 + $0x16f0] sm:$0xff]
    %v776 = vld [vmem:[#allocation2 + $0x16f8] sm:$0xff]
    %v777 = vld [vmem:[#allocation2 + $0x1700] sm:$0xff]
    %v778 = vld [vmem:[#allocation2 + $0x1708] sm:$0xff]
    %v779 = vld [vmem:[#allocation2 + $0x1710] sm:$0xff]
    %v780 = vld [vmem:[#allocation2 + $0x1718] sm:$0xff]
    %v781 = vld [vmem:[#allocation2 + $0x1720] sm:$0xff]
    %v782 = vld [vmem:[#allocation2 + $0x1728] sm:$0xff]
    %v783 = vld [vmem:[#allocation2 + $0x1730] sm:$0xff]
    %v784 = vld [vmem:[#allocation2 + $0x1738] sm:$0xff]
    %v785 = vld [vmem:[#allocation2 + $0x1740] sm:$0xff]
    %v786 = vld [vmem:[#allocation2 + $0x1748] sm:$0xff]
    %v787 = vld [vmem:[#allocation2 + $0x1750] sm:$0xff]
    %v788 = vld [vmem:[#allocation2 + $0x1758] sm:$0xff]
    %v789 = vld [vmem:[#allocation2 + $0x1760] sm:$0xff]
    %v790 = vld [vmem:[#allocation2 + $0x1768] sm:$0xff]
    %v791 = vld [vmem:[#allocation2 + $0x1770] sm:$0xff]
    %v792 = vld [vmem:[#allocation2 + $0x1778] sm:$0xff]
    %v793 = vld [vmem:[#allocation2 + $0x1780] sm:$0xff]
    %v794 = vld [vmem:[#allocation2 + $0x1788] sm:$0xff]
    %v795 = vld [vmem:[#allocation2 + $0x1790] sm:$0xff]
    %v796 = vld [vmem:[#allocation2 + $0x1798] sm:$0xff]
    %v797 = vld [vmem:[#allocation2 + $0x17a0] sm:$0xff]
    %v798 = vld [vmem:[#allocation2 + $0x17a8] sm:$0xff]
    %v799 = vld [vmem:[#allocation2 + $0x17b0] sm:$0xff]
    %v800 = vld [vmem:[#allocation2 + $0x17b8] sm:$0xff]
    %v801 = vld [vmem:[#allocation2 + $0x17c0] sm:$0xff]
    %v802 = vld [vmem:[#allocation2 + $0x17c8] sm:$0xff]
    %v803 = vld [vmem:[#allocation2 + $0x17d0] sm:$0xff]
    %v804 = vld [vmem:[#allocation2 + $0x17d8] sm:$0xff]
    %v805 = vld [vmem:[#allocation2 + $0x17e0] sm:$0xff]
    %v806 = vld [vmem:[#allocation2 + $0x17e8] sm:$0xff]
    %v807 = vld [vmem:[#allocation2 + $0x17f0] sm:$0xff]
    %v808 = vld [vmem:[#allocation2 + $0x17f8] sm:$0xff]
    %v809 = vld [vmem:[#allocation2 + $0x1800] sm:$0xff]
    %v810 = vld [vmem:[#allocation2 + $0x1808] sm:$0xff]
    %v811 = vld [vmem:[#allocation2 + $0x1810] sm:$0xff]
    %v812 = vld [vmem:[#allocation2 + $0x1818] sm:$0xff]
    %v813 = vld [vmem:[#allocation2 + $0x1820] sm:$0xff]
    %v814 = vld [vmem:[#allocation2 + $0x1828] sm:$0xff]
    %v815 = vld [vmem:[#allocation2 + $0x1830] sm:$0xff]
    %v816 = vld [vmem:[#allocation2 + $0x1838] sm:$0xff]
    %v817 = vld [vmem:[#allocation2 + $0x1840] sm:$0xff]
    %v818 = vld [vmem:[#allocation2 + $0x1848] sm:$0xff]
    %v819 = vld [vmem:[#allocation2 + $0x1850] sm:$0xff]
    %v820 = vld [vmem:[#allocation2 + $0x1858] sm:$0xff]
    %v821 = vld [vmem:[#allocation2 + $0x1860] sm:$0xff]
    %v822 = vld [vmem:[#allocation2 + $0x1868] sm:$0xff]
    %v823 = vld [vmem:[#allocation2 + $0x1870] sm:$0xff]
    %v824 = vld [vmem:[#allocation2 + $0x1878] sm:$0xff]
    %v825 = vld [vmem:[#allocation4] sm:$0xff]
    %v826 = vld [vmem:[#allocation4 + $0x8] sm:$0xff]
    %v827 = vld [vmem:[#allocation4 + $0x10] sm:$0xff]
    %v828 = vld [vmem:[#allocation4 + $0x18] sm:$0xff]
    %v829 = vld [vmem:[#allocation4 + $0x20] sm:$0xff]
    %v830 = vld [vmem:[#allocation4 + $0x28] sm:$0xff]
    %v831 = vld [vmem:[#allocation4 + $0x30] sm:$0x1]
    %v839 = vlaneseq
    %v840 = vshrl.u32 %v839, 7
    %v841 = vsub.s32 0, %v840
    %v842 = vrot.slane %v825, %v841
    %v843 = vlaneseq
    %v844 = vshrl.u32 %v843, 7
    %v845 = vsub.s32 1, %v844
    %v846 = vrot.slane %v825, %v845
    %v847 = vlaneseq
    %v848 = vshrl.u32 %v847, 7
    %v849 = vsub.s32 2, %v848
    %v850 = vrot.slane %v825, %v849
    %v851 = vlaneseq
    %v852 = vshrl.u32 %v851, 7
    %v853 = vsub.s32 3, %v852
    %v854 = vrot.slane %v825, %v853
    %v855 = vlaneseq
    %v856 = vshrl.u32 %v855, 7
    %v857 = vsub.s32 4, %v856
    %v858 = vrot.slane %v825, %v857
    %v859 = vlaneseq
    %v860 = vshrl.u32 %v859, 7
    %v861 = vsub.s32 5, %v860
    %v862 = vrot.slane %v825, %v861
    %v863 = vlaneseq
    %v864 = vshrl.u32 %v863, 7
    %v865 = vsub.s32 6, %v864
    %v866 = vrot.slane %v825, %v865
    %v867 = vlaneseq
    %v868 = vshrl.u32 %v867, 7
    %v869 = vsub.s32 7, %v868
    %v870 = vrot.slane %v825, %v869
    %v871 = vlaneseq
    %v872 = vshrl.u32 %v871, 7
    %v873 = vsub.s32 0, %v872
    %v874 = vrot.slane %v826, %v873
    %v875 = vlaneseq
    %v876 = vshrl.u32 %v875, 7
    %v877 = vsub.s32 1, %v876
    %v878 = vrot.slane %v826, %v877
    %v879 = vlaneseq
    %v880 = vshrl.u32 %v879, 7
    %v881 = vsub.s32 2, %v880
    %v882 = vrot.slane %v826, %v881
    %v883 = vlaneseq
    %v884 = vshrl.u32 %v883, 7
    %v885 = vsub.s32 3, %v884
    %v886 = vrot.slane %v826, %v885
    %v887 = vlaneseq
    %v888 = vshrl.u32 %v887, 7
    %v889 = vsub.s32 4, %v888
    %v890 = vrot.slane %v826, %v889
    %v891 = vlaneseq
    %v892 = vshrl.u32 %v891, 7
    %v893 = vsub.s32 5, %v892
    %v894 = vrot.slane %v826, %v893
    %v895 = vlaneseq
    %v896 = vshrl.u32 %v895, 7
    %v897 = vsub.s32 6, %v896
    %v898 = vrot.slane %v826, %v897
    %v899 = vlaneseq
    %v900 = vshrl.u32 %v899, 7
    %v901 = vsub.s32 7, %v900
    %v902 = vrot.slane %v826, %v901
    %v903 = vlaneseq
    %v904 = vshrl.u32 %v903, 7
    %v905 = vsub.s32 0, %v904
    %v906 = vrot.slane %v827, %v905
    %v907 = vlaneseq
    %v908 = vshrl.u32 %v907, 7
    %v909 = vsub.s32 1, %v908
    %v910 = vrot.slane %v827, %v909
    %v911 = vlaneseq
    %v912 = vshrl.u32 %v911, 7
    %v913 = vsub.s32 2, %v912
    %v914 = vrot.slane %v827, %v913
    %v915 = vlaneseq
    %v916 = vshrl.u32 %v915, 7
    %v917 = vsub.s32 3, %v916
    %v918 = vrot.slane %v827, %v917
    %v919 = vlaneseq
    %v920 = vshrl.u32 %v919, 7
    %v921 = vsub.s32 4, %v920
    %v922 = vrot.slane %v827, %v921
    %v923 = vlaneseq
    %v924 = vshrl.u32 %v923, 7
    %v925 = vsub.s32 5, %v924
    %v926 = vrot.slane %v827, %v925
    %v927 = vlaneseq
    %v928 = vshrl.u32 %v927, 7
    %v929 = vsub.s32 6, %v928
    %v930 = vrot.slane %v827, %v929
    %v931 = vlaneseq
    %v932 = vshrl.u32 %v931, 7
    %v933 = vsub.s32 7, %v932
    %v934 = vrot.slane %v827, %v933
    %v935 = vlaneseq
    %v936 = vshrl.u32 %v935, 7
    %v937 = vsub.s32 0, %v936
    %v938 = vrot.slane %v828, %v937
    %v939 = vlaneseq
    %v940 = vshrl.u32 %v939, 7
    %v941 = vsub.s32 1, %v940
    %v942 = vrot.slane %v828, %v941
    %v943 = vlaneseq
    %v944 = vshrl.u32 %v943, 7
    %v945 = vsub.s32 2, %v944
    %v946 = vrot.slane %v828, %v945
    %v947 = vlaneseq
    %v948 = vshrl.u32 %v947, 7
    %v949 = vsub.s32 3, %v948
    %v950 = vrot.slane %v828, %v949
    %v951 = vlaneseq
    %v952 = vshrl.u32 %v951, 7
    %v953 = vsub.s32 4, %v952
    %v954 = vrot.slane %v828, %v953
    %v955 = vlaneseq
    %v956 = vshrl.u32 %v955, 7
    %v957 = vsub.s32 5, %v956
    %v958 = vrot.slane %v828, %v957
    %v959 = vlaneseq
    %v960 = vshrl.u32 %v959, 7
    %v961 = vsub.s32 6, %v960
    %v962 = vrot.slane %v828, %v961
    %v963 = vlaneseq
    %v964 = vshrl.u32 %v963, 7
    %v965 = vsub.s32 7, %v964
    %v966 = vrot.slane %v828, %v965
    %v967 = vlaneseq
    %v968 = vshrl.u32 %v967, 7
    %v969 = vsub.s32 0, %v968
    %v970 = vrot.slane %v829, %v969
    %v971 = vlaneseq
    %v972 = vshrl.u32 %v971, 7
    %v973 = vsub.s32 1, %v972
    %v974 = vrot.slane %v829, %v973
    %v975 = vlaneseq
    %v976 = vshrl.u32 %v975, 7
    %v977 = vsub.s32 2, %v976
    %v978 = vrot.slane %v829, %v977
    %v979 = vlaneseq
    %v980 = vshrl.u32 %v979, 7
    %v981 = vsub.s32 3, %v980
    %v982 = vrot.slane %v829, %v981
    %v983 = vlaneseq
    %v984 = vshrl.u32 %v983, 7
    %v985 = vsub.s32 4, %v984
    %v986 = vrot.slane %v829, %v985
    %v987 = vlaneseq
    %v988 = vshrl.u32 %v987, 7
    %v989 = vsub.s32 5, %v988
    %v990 = vrot.slane %v829, %v989
    %v991 = vlaneseq
    %v992 = vshrl.u32 %v991, 7
    %v993 = vsub.s32 6, %v992
    %v994 = vrot.slane %v829, %v993
    %v995 = vlaneseq
    %v996 = vshrl.u32 %v995, 7
    %v997 = vsub.s32 7, %v996
    %v998 = vrot.slane %v829, %v997
    %v999 = vlaneseq
    %v1000 = vshrl.u32 %v999, 7
    %v1001 = vsub.s32 0, %v1000
    %v1002 = vrot.slane %v830, %v1001
    %v1003 = vlaneseq
    %v1004 = vshrl.u32 %v1003, 7
    %v1005 = vsub.s32 1, %v1004
    %v1006 = vrot.slane %v830, %v1005
    %v1007 = vlaneseq
    %v1008 = vshrl.u32 %v1007, 7
    %v1009 = vsub.s32 2, %v1008
    %v1010 = vrot.slane %v830, %v1009
    %v1011 = vlaneseq
    %v1012 = vshrl.u32 %v1011, 7
    %v1013 = vsub.s32 3, %v1012
    %v1014 = vrot.slane %v830, %v1013
    %v1015 = vlaneseq
    %v1016 = vshrl.u32 %v1015, 7
    %v1017 = vsub.s32 4, %v1016
    %v1018 = vrot.slane %v830, %v1017
    %v1019 = vlaneseq
    %v1020 = vshrl.u32 %v1019, 7
    %v1021 = vsub.s32 5, %v1020
    %v1022 = vrot.slane %v830, %v1021
    %v1023 = vlaneseq
    %v1024 = vshrl.u32 %v1023, 7
    %v1025 = vsub.s32 6, %v1024
    %v1026 = vrot.slane %v830, %v1025
    %v1027 = vlaneseq
    %v1028 = vshrl.u32 %v1027, 7
    %v1029 = vsub.s32 7, %v1028
    %v1030 = vrot.slane %v830, %v1029
    %v1031 = vlaneseq
    %v1032 = vshrl.u32 %v1031, 7
    %v1033 = vsub.s32 0, %v1032
    %v1034 = vrot.slane %v831, %v1033
    %1084 = vmatprep.subr.mxu0 %v777
    %1085 = vmatpush1.msra.mxu0 %v776
    %1086 = vmatprep.subr.mxu0 %v728
    %1087 = vmatpush1.msra.mxu0 %v727
    %1088 = vmatprep.subr.mxu0 %v679
    %1089 = vmatpush1.msra.mxu0 %v678
    %1090 = vmatprep.subr.mxu0 %v630
    %1091 = vmatpush1.msra.mxu0 %v629
    %1092 = vmatprep.subr.mxu0 %v581
    %1093 = vmatpush1.msra.mxu0 %v580
    %1094 = vmatprep.subr.mxu0 %v532
    %1095 = vmatpush1.msra.mxu0 %v531
    %1096 = vmatprep.subr.mxu0 %v483
    %1097 = vmatpush1.msra.mxu0 %v482
    %1098 = vmatprep.subr.mxu0 %v434
    %1099 = vmatpush1.msra.mxu0 %v433
    %1100 = vmatprep.subr.mxu0 %v385
    %1101 = vmatpush1.msra.mxu0 %v384
    %1102 = vmatprep.subr.mxu0 %v336
    %1103 = vmatpush1.msra.mxu0 %v335
    %1104 = vmatprep.subr.mxu0 %v287
    %1105 = vmatpush1.msra.mxu0 %v286
    %1106 = vmatprep.subr.mxu0 %v238
    %1107 = vmatpush1.msra.mxu0 %v237
    %1108 = vmatprep.subr.mxu0 %v189
    %1109 = vmatpush1.msra.mxu0 %v188
    %1110 = vmatprep.subr.mxu0 %v140
    %1111 = vmatpush1.msra.mxu0 %v139
    %1112 = vmatprep.subr.mxu0 %v91
    %1113 = vmatpush1.msra.mxu0 %v90
    %1114 = vmatprep.subr.mxu0 %v42
    %1115 = vmatpush1.msra.mxu0 %v41
    %1116 = vmatprep.subr.mxu0 0.0
    %1117 = vmatpush2.msra.mxu0 0.0
    %1118 = vmatprep.subr.mxu0 0.0
    %1119 = vmatpush2.msra.mxu0 0.0
    %1120 = vmatprep.subr.mxu0 0.0
    %1121 = vmatpush2.msra.mxu0 0.0
    %1122 = vmatprep.subr.mxu0 0.0
    %1123 = vmatpush2.msra.mxu0 0.0
    %1124 = vmatprep.subr.mxu0 0.0
    %1125 = vmatpush2.msra.mxu0 0.0
    %1126 = vmatprep.subr.mxu0 0.0
    %1127 = vmatpush2.msra.mxu0 0.0
    %1128 = vmatprep.subr.mxu0 0.0
    %1129 = vmatpush2.msra.mxu0 0.0
    %1130 = vmatprep.subr.mxu0 0.0
    %1131 = vmatpush2.msra.mxu0 0.0
    %1132 = vmatprep.subr.mxu0 0.0
    %1133 = vmatpush2.msra.mxu0 0.0
    %1134 = vmatprep.subr.mxu0 0.0
    %1135 = vmatpush2.msra.mxu0 0.0
    %1136 = vmatprep.subr.mxu0 0.0
    %1137 = vmatpush2.msra.mxu0 0.0
    %1138 = vmatprep.subr.mxu0 0.0
    %1139 = vmatpush2.msra.mxu0 0.0
    %1140 = vmatprep.subr.mxu0 0.0
    %1141 = vmatpush2.msra.mxu0 0.0
    %1142 = vmatprep.subr.mxu0 0.0
    %1143 = vmatpush2.msra.mxu0 0.0
    %1144 = vmatprep.subr.mxu0 0.0
    %1145 = vmatpush2.msra.mxu0 0.0
    %1146 = vmatprep.subr.mxu0 0.0
    %1147 = vmatpush2.msra.mxu0 0.0
    %1148 = vmatprep.mubr.f32.mxu0 0.0
    %1149 = vmatmul.mubr.f32.gmra.mxu0 %v40
    %v1150 = vpop.f32.mrf.mxu0
    %v1151 = vadd.f32 %v842, %v1150
    %v1152 = vpop.f32.mrf.mxu0
    %v1153 = vadd.f32 %v846, %v1152
    %1154 = vdwg.mxu0
    %1155 = vmatprep.subr.mxu0 %v779
    %1156 = vmatpush1.msra.mxu0 %v778
    %1157 = vmatprep.subr.mxu0 %v730
    %1158 = vmatpush1.msra.mxu0 %v729
    %1159 = vmatprep.subr.mxu0 %v681
    %1160 = vmatpush1.msra.mxu0 %v680
    %1161 = vmatprep.subr.mxu0 %v632
    %1162 = vmatpush1.msra.mxu0 %v631
    %1163 = vmatprep.subr.mxu0 %v583
    %1164 = vmatpush1.msra.mxu0 %v582
    %1165 = vmatprep.subr.mxu0 %v534
    %1166 = vmatpush1.msra.mxu0 %v533
    %1167 = vmatprep.subr.mxu0 %v485
    %1168 = vmatpush1.msra.mxu0 %v484
    %1169 = vmatprep.subr.mxu0 %v436
    %1170 = vmatpush1.msra.mxu0 %v435
    %1171 = vmatprep.subr.mxu0 %v387
    %1172 = vmatpush1.msra.mxu0 %v386
    %1173 = vmatprep.subr.mxu0 %v338
    %1174 = vmatpush1.msra.mxu0 %v337
    %1175 = vmatprep.subr.mxu0 %v289
    %1176 = vmatpush1.msra.mxu0 %v288
    %1177 = vmatprep.subr.mxu0 %v240
    %1178 = vmatpush1.msra.mxu0 %v239
    %1179 = vmatprep.subr.mxu0 %v191
    %1180 = vmatpush1.msra.mxu0 %v190
    %1181 = vmatprep.subr.mxu0 %v142
    %1182 = vmatpush1.msra.mxu0 %v141
    %1183 = vmatprep.subr.mxu0 %v93
    %1184 = vmatpush1.msra.mxu0 %v92
    %1185 = vmatprep.subr.mxu0 %v44
    %1186 = vmatpush1.msra.mxu0 %v43
    %1187 = vmatprep.subr.mxu0 0.0
    %1188 = vmatpush2.msra.mxu0 0.0
    %1189 = vmatprep.subr.mxu0 0.0
    %1190 = vmatpush2.msra.mxu0 0.0
    %1191 = vmatprep.subr.mxu0 0.0
    %1192 = vmatpush2.msra.mxu0 0.0
    %1193 = vmatprep.subr.mxu0 0.0
    %1194 = vmatpush2.msra.mxu0 0.0
    %1195 = vmatprep.subr.mxu0 0.0
    %1196 = vmatpush2.msra.mxu0 0.0
    %1197 = vmatprep.subr.mxu0 0.0
    %1198 = vmatpush2.msra.mxu0 0.0
    %1199 = vmatprep.subr.mxu0 0.0
    %1200 = vmatpush2.msra.mxu0 0.0
    %1201 = vmatprep.subr.mxu0 0.0
    %1202 = vmatpush2.msra.mxu0 0.0
    %1203 = vmatprep.subr.mxu0 0.0
    %1204 = vmatpush2.msra.mxu0 0.0
    %1205 = vmatprep.subr.mxu0 0.0
    %1206 = vmatpush2.msra.mxu0 0.0
    %1207 = vmatprep.subr.mxu0 0.0
    %1208 = vmatpush2.msra.mxu0 0.0
    %1209 = vmatprep.subr.mxu0 0.0
    %1210 = vmatpush2.msra.mxu0 0.0
    %1211 = vmatprep.subr.mxu0 0.0
    %1212 = vmatpush2.msra.mxu0 0.0
    %1213 = vmatprep.subr.mxu0 0.0
    %1214 = vmatpush2.msra.mxu0 0.0
    %1215 = vmatprep.subr.mxu0 0.0
    %1216 = vmatpush2.msra.mxu0 0.0
    %1217 = vmatprep.subr.mxu0 0.0
    %1218 = vmatpush2.msra.mxu0 0.0
    %1219 = vmatprep.mubr.f32.mxu0 0.0
    %1220 = vmatmul.mubr.f32.gmra.mxu0 %v40
    %v1221 = vpop.f32.mrf.mxu0
    %v1222 = vadd.f32 %v850, %v1221
    %v1223 = vpop.f32.mrf.mxu0
    %v1224 = vadd.f32 %v854, %v1223
    %1225 = vdwg.mxu0
    %1226 = vmatprep.subr.mxu0 %v781
    %1227 = vmatpush1.msra.mxu0 %v780
    %1228 = vmatprep.subr.mxu0 %v732
    %1229 = vmatpush1.msra.mxu0 %v731
    %1230 = vmatprep.subr.mxu0 %v683
    %1231 = vmatpush1.msra.mxu0 %v682
    %1232 = vmatprep.subr.mxu0 %v634
    %1233 = vmatpush1.msra.mxu0 %v633
    %1234 = vmatprep.subr.mxu0 %v585
    %1235 = vmatpush1.msra.mxu0 %v584
    %1236 = vmatprep.subr.mxu0 %v536
    %1237 = vmatpush1.msra.mxu0 %v535
    %1238 = vmatprep.subr.mxu0 %v487
    %1239 = vmatpush1.msra.mxu0 %v486
    %1240 = vmatprep.subr.mxu0 %v438
    %1241 = vmatpush1.msra.mxu0 %v437
    %1242 = vmatprep.subr.mxu0 %v389
    %1243 = vmatpush1.msra.mxu0 %v388
    %1244 = vmatprep.subr.mxu0 %v340
    %1245 = vmatpush1.msra.mxu0 %v339
    %1246 = vmatprep.subr.mxu0 %v291
    %1247 = vmatpush1.msra.mxu0 %v290
    %1248 = vmatprep.subr.mxu0 %v242
    %1249 = vmatpush1.msra.mxu0 %v241
    %1250 = vmatprep.subr.mxu0 %v193
    %1251 = vmatpush1.msra.mxu0 %v192
    %1252 = vmatprep.subr.mxu0 %v144
    %1253 = vmatpush1.msra.mxu0 %v143
    %1254 = vmatprep.subr.mxu0 %v95
    %1255 = vmatpush1.msra.mxu0 %v94
    %1256 = vmatprep.subr.mxu0 %v46
    %1257 = vmatpush1.msra.mxu0 %v45
    %1258 = vmatprep.subr.mxu0 0.0
    %1259 = vmatpush2.msra.mxu0 0.0
    %1260 = vmatprep.subr.mxu0 0.0
    %1261 = vmatpush2.msra.mxu0 0.0
    %1262 = vmatprep.subr.mxu0 0.0
    %1263 = vmatpush2.msra.mxu0 0.0
    %1264 = vmatprep.subr.mxu0 0.0
    %1265 = vmatpush2.msra.mxu0 0.0
    %1266 = vmatprep.subr.mxu0 0.0
    %1267 = vmatpush2.msra.mxu0 0.0
    %1268 = vmatprep.subr.mxu0 0.0
    %1269 = vmatpush2.msra.mxu0 0.0
    %1270 = vmatprep.subr.mxu0 0.0
    %1271 = vmatpush2.msra.mxu0 0.0
    %1272 = vmatprep.subr.mxu0 0.0
    %1273 = vmatpush2.msra.mxu0 0.0
    %1274 = vmatprep.subr.mxu0 0.0
    %1275 = vmatpush2.msra.mxu0 0.0
    %1276 = vmatprep.subr.mxu0 0.0
    %1277 = vmatpush2.msra.mxu0 0.0
    %1278 = vmatprep.subr.mxu0 0.0
    %1279 = vmatpush2.msra.mxu0 0.0
    %1280 = vmatprep.subr.mxu0 0.0
    %1281 = vmatpush2.msra.mxu0 0.0
    %1282 = vmatprep.subr.mxu0 0.0
    %1283 = vmatpush2.msra.mxu0 0.0
    %1284 = vmatprep.subr.mxu0 0.0
    %1285 = vmatpush2.msra.mxu0 0.0
    %1286 = vmatprep.subr.mxu0 0.0
    %1287 = vmatpush2.msra.mxu0 0.0
    %1288 = vmatprep.subr.mxu0 0.0
    %1289 = vmatpush2.msra.mxu0 0.0
    %1290 = vmatprep.mubr.f32.mxu0 0.0
    %1291 = vmatmul.mubr.f32.gmra.mxu0 %v40
    %v1292 = vpop.f32.mrf.mxu0
    %v1293 = vadd.f32 %v858, %v1292
    %v1294 = vpop.f32.mrf.mxu0
    %v1295 = vadd.f32 %v862, %v1294
    %1296 = vdwg.mxu0
    %1297 = vmatprep.subr.mxu0 %v783
    %1298 = vmatpush1.msra.mxu0 %v782
    %1299 = vmatprep.subr.mxu0 %v734
    %1300 = vmatpush1.msra.mxu0 %v733
    %1301 = vmatprep.subr.mxu0 %v685
    %1302 = vmatpush1.msra.mxu0 %v684
    %1303 = vmatprep.subr.mxu0 %v636
    %1304 = vmatpush1.msra.mxu0 %v635
    %1305 = vmatprep.subr.mxu0 %v587
    %1306 = vmatpush1.msra.mxu0 %v586
    %1307 = vmatprep.subr.mxu0 %v538
    %1308 = vmatpush1.msra.mxu0 %v537
    %1309 = vmatprep.subr.mxu0 %v489
    %1310 = vmatpush1.msra.mxu0 %v488
    %1311 = vmatprep.subr.mxu0 %v440
    %1312 = vmatpush1.msra.mxu0 %v439
    %1313 = vmatprep.subr.mxu0 %v391
    %1314 = vmatpush1.msra.mxu0 %v390
    %1315 = vmatprep.subr.mxu0 %v342
    %1316 = vmatpush1.msra.mxu0 %v341
    %1317 = vmatprep.subr.mxu0 %v293
    %1318 = vmatpush1.msra.mxu0 %v292
    %1319 = vmatprep.subr.mxu0 %v244
    %1320 = vmatpush1.msra.mxu0 %v243
    %1321 = vmatprep.subr.mxu0 %v195
    %1322 = vmatpush1.msra.mxu0 %v194
    %1323 = vmatprep.subr.mxu0 %v146
    %1324 = vmatpush1.msra.mxu0 %v145
    %1325 = vmatprep.subr.mxu0 %v97
    %1326 = vmatpush1.msra.mxu0 %v96
    %1327 = vmatprep.subr.mxu0 %v48
    %1328 = vmatpush1.msra.mxu0 %v47
    %1329 = vmatprep.subr.mxu0 0.0
    %1330 = vmatpush2.msra.mxu0 0.0
    %1331 = vmatprep.subr.mxu0 0.0
    %1332 = vmatpush2.msra.mxu0 0.0
    %1333 = vmatprep.subr.mxu0 0.0
    %1334 = vmatpush2.msra.mxu0 0.0
    %1335 = vmatprep.subr.mxu0 0.0
    %1336 = vmatpush2.msra.mxu0 0.0
    %1337 = vmatprep.subr.mxu0 0.0
    %1338 = vmatpush2.msra.mxu0 0.0
    %1339 = vmatprep.subr.mxu0 0.0
    %1340 = vmatpush2.msra.mxu0 0.0
    %1341 = vmatprep.subr.mxu0 0.0
    %1342 = vmatpush2.msra.mxu0 0.0
    %1343 = vmatprep.subr.mxu0 0.0
    %1344 = vmatpush2.msra.mxu0 0.0
    %1345 = vmatprep.subr.mxu0 0.0
    %1346 = vmatpush2.msra.mxu0 0.0
    %1347 = vmatprep.subr.mxu0 0.0
    %1348 = vmatpush2.msra.mxu0 0.0
    %1349 = vmatprep.subr.mxu0 0.0
    %1350 = vmatpush2.msra.mxu0 0.0
    %1351 = vmatprep.subr.mxu0 0.0
    %1352 = vmatpush2.msra.mxu0 0.0
    %1353 = vmatprep.subr.mxu0 0.0
    %1354 = vmatpush2.msra.mxu0 0.0
    %1355 = vmatprep.subr.mxu0 0.0
    %1356 = vmatpush2.msra.mxu0 0.0
    %1357 = vmatprep.subr.mxu0 0.0
    %1358 = vmatpush2.msra.mxu0 0.0
    %1359 = vmatprep.subr.mxu0 0.0
    %1360 = vmatpush2.msra.mxu0 0.0
    %1361 = vmatprep.mubr.f32.mxu0 0.0
    %1362 = vmatmul.mubr.f32.gmra.mxu0 %v40
    %v1363 = vpop.f32.mrf.mxu0
    %v1364 = vadd.f32 %v866, %v1363
    %v1365 = vpop.f32.mrf.mxu0
    %v1366 = vadd.f32 %v870, %v1365
    %1367 = vdwg.mxu0
    %1368 = vmatprep.subr.mxu0 %v785
    %1369 = vmatpush1.msra.mxu0 %v784
    %1370 = vmatprep.subr.mxu0 %v736
    %1371 = vmatpush1.msra.mxu0 %v735
    %1372 = vmatprep.subr.mxu0 %v687
    %1373 = vmatpush1.msra.mxu0 %v686
    %1374 = vmatprep.subr.mxu0 %v638
    %1375 = vmatpush1.msra.mxu0 %v637
    %1376 = vmatprep.subr.mxu0 %v589
    %1377 = vmatpush1.msra.mxu0 %v588
    %1378 = vmatprep.subr.mxu0 %v540
    %1379 = vmatpush1.msra.mxu0 %v539
    %1380 = vmatprep.subr.mxu0 %v491
    %1381 = vmatpush1.msra.mxu0 %v490
    %1382 = vmatprep.subr.mxu0 %v442
    %1383 = vmatpush1.msra.mxu0 %v441
    %1384 = vmatprep.subr.mxu0 %v393
    %1385 = vmatpush1.msra.mxu0 %v392
    %1386 = vmatprep.subr.mxu0 %v344
    %1387 = vmatpush1.msra.mxu0 %v343
    %1388 = vmatprep.subr.mxu0 %v295
    %1389 = vmatpush1.msra.mxu0 %v294
    %1390 = vmatprep.subr.mxu0 %v246
    %1391 = vmatpush1.msra.mxu0 %v245
    %1392 = vmatprep.subr.mxu0 %v197
    %1393 = vmatpush1.msra.mxu0 %v196
    %1394 = vmatprep.subr.mxu0 %v148
    %1395 = vmatpush1.msra.mxu0 %v147
    %1396 = vmatprep.subr.mxu0 %v99
    %1397 = vmatpush1.msra.mxu0 %v98
    %1398 = vmatprep.subr.mxu0 %v50
    %1399 = vmatpush1.msra.mxu0 %v49
    %1400 = vmatprep.subr.mxu0 0.0
    %1401 = vmatpush2.msra.mxu0 0.0
    %1402 = vmatprep.subr.mxu0 0.0
    %1403 = vmatpush2.msra.mxu0 0.0
    %1404 = vmatprep.subr.mxu0 0.0
    %1405 = vmatpush2.msra.mxu0 0.0
    %1406 = vmatprep.subr.mxu0 0.0
    %1407 = vmatpush2.msra.mxu0 0.0
    %1408 = vmatprep.subr.mxu0 0.0
    %1409 = vmatpush2.msra.mxu0 0.0
    %1410 = vmatprep.subr.mxu0 0.0
    %1411 = vmatpush2.msra.mxu0 0.0
    %1412 = vmatprep.subr.mxu0 0.0
    %1413 = vmatpush2.msra.mxu0 0.0
    %1414 = vmatprep.subr.mxu0 0.0
    %1415 = vmatpush2.msra.mxu0 0.0
    %1416 = vmatprep.subr.mxu0 0.0
    %1417 = vmatpush2.msra.mxu0 0.0
    %1418 = vmatprep.subr.mxu0 0.0
    %1419 = vmatpush2.msra.mxu0 0.0
    %1420 = vmatprep.subr.mxu0 0.0
    %1421 = vmatpush2.msra.mxu0 0.0
    %1422 = vmatprep.subr.mxu0 0.0
    %1423 = vmatpush2.msra.mxu0 0.0
    %1424 = vmatprep.subr.mxu0 0.0
    %1425 = vmatpush2.msra.mxu0 0.0
    %1426 = vmatprep.subr.mxu0 0.0
    %1427 = vmatpush2.msra.mxu0 0.0
    %1428 = vmatprep.subr.mxu0 0.0
    %1429 = vmatpush2.msra.mxu0 0.0
    %1430 = vmatprep.subr.mxu0 0.0
    %1431 = vmatpush2.msra.mxu0 0.0
    %1432 = vmatprep.mubr.f32.mxu0 0.0
    %1433 = vmatmul.mubr.f32.gmra.mxu0 %v40
    %v1434 = vpop.f32.mrf.mxu0
    %v1435 = vadd.f32 %v874, %v1434
    %v1436 = vpop.f32.mrf.mxu0
    %v1437 = vadd.f32 %v878, %v1436
    %1438 = vdwg.mxu0
    %1439 = vmatprep.subr.mxu0 %v787
    %1440 = vmatpush1.msra.mxu0 %v786
    %1441 = vmatprep.subr.mxu0 %v738
    %1442 = vmatpush1.msra.mxu0 %v737
    %1443 = vmatprep.subr.mxu0 %v689
    %1444 = vmatpush1.msra.mxu0 %v688
    %1445 = vmatprep.subr.mxu0 %v640
    %1446 = vmatpush1.msra.mxu0 %v639
    %1447 = vmatprep.subr.mxu0 %v591
    %1448 = vmatpush1.msra.mxu0 %v590
    %1449 = vmatprep.subr.mxu0 %v542
    %1450 = vmatpush1.msra.mxu0 %v541
    %1451 = vmatprep.subr.mxu0 %v493
    %1452 = vmatpush1.msra.mxu0 %v492
    %1453 = vmatprep.subr.mxu0 %v444
    %1454 = vmatpush1.msra.mxu0 %v443
    %1455 = vmatprep.subr.mxu0 %v395
    %1456 = vmatpush1.msra.mxu0 %v394
    %1457 = vmatprep.subr.mxu0 %v346
    %1458 = vmatpush1.msra.mxu0 %v345
    %1459 = vmatprep.subr.mxu0 %v297
    %1460 = vmatpush1.msra.mxu0 %v296
    %1461 = vmatprep.subr.mxu0 %v248
    %1462 = vmatpush1.msra.mxu0 %v247
    %1463 = vmatprep.subr.mxu0 %v199
    %1464 = vmatpush1.msra.mxu0 %v198
    %1465 = vmatprep.subr.mxu0 %v150
    %1466 = vmatpush1.msra.mxu0 %v149
    %1467 = vmatprep.subr.mxu0 %v101
    %1468 = vmatpush1.msra.mxu0 %v100
    %1469 = vmatprep.subr.mxu0 %v52
    %1470 = vmatpush1.msra.mxu0 %v51
    %1471 = vmatprep.subr.mxu0 0.0
    %1472 = vmatpush2.msra.mxu0 0.0
    %1473 = vmatprep.subr.mxu0 0.0
    %1474 = vmatpush2.msra.mxu0 0.0
    %1475 = vmatprep.subr.mxu0 0.0
    %1476 = vmatpush2.msra.mxu0 0.0
    %1477 = vmatprep.subr.mxu0 0.0
    %1478 = vmatpush2.msra.mxu0 0.0
    %1479 = vmatprep.subr.mxu0 0.0
    %1480 = vmatpush2.msra.mxu0 0.0
    %1481 = vmatprep.subr.mxu0 0.0
    %1482 = vmatpush2.msra.mxu0 0.0
    %1483 = vmatprep.subr.mxu0 0.0
    %1484 = vmatpush2.msra.mxu0 0.0
    %1485 = vmatprep.subr.mxu0 0.0
    %1486 = vmatpush2.msra.mxu0 0.0
    %1487 = vmatprep.subr.mxu0 0.0
    %1488 = vmatpush2.msra.mxu0 0.0
    %1489 = vmatprep.subr.mxu0 0.0
    %1490 = vmatpush2.msra.mxu0 0.0
    %1491 = vmatprep.subr.mxu0 0.0
    %1492 = vmatpush2.msra.mxu0 0.0
    %1493 = vmatprep.subr.mxu0 0.0
    %1494 = vmatpush2.msra.mxu0 0.0
    %1495 = vmatprep.subr.mxu0 0.0
    %1496 = vmatpush2.msra.mxu0 0.0
    %1497 = vmatprep.subr.mxu0 0.0
    %1498 = vmatpush2.msra.mxu0 0.0
    %1499 = vmatprep.subr.mxu0 0.0
    %1500 = vmatpush2.msra.mxu0 0.0
    %1501 = vmatprep.subr.mxu0 0.0
    %1502 = vmatpush2.msra.mxu0 0.0
    %1503 = vmatprep.mubr.f32.mxu0 0.0
    %1504 = vmatmul.mubr.f32.gmra.mxu0 %v40
    %v1505 = vpop.f32.mrf.mxu0
    %v1506 = vadd.f32 %v882, %v1505
    %v1507 = vpop.f32.mrf.mxu0
    %v1508 = vadd.f32 %v886, %v1507
    %1509 = vdwg.mxu0
    %1510 = vmatprep.subr.mxu0 %v789
    %1511 = vmatpush1.msra.mxu0 %v788
    %1512 = vmatprep.subr.mxu0 %v740
    %1513 = vmatpush1.msra.mxu0 %v739
    %1514 = vmatprep.subr.mxu0 %v691
    %1515 = vmatpush1.msra.mxu0 %v690
    %1516 = vmatprep.subr.mxu0 %v642
    %1517 = vmatpush1.msra.mxu0 %v641
    %1518 = vmatprep.subr.mxu0 %v593
    %1519 = vmatpush1.msra.mxu0 %v592
    %1520 = vmatprep.subr.mxu0 %v544
    %1521 = vmatpush1.msra.mxu0 %v543
    %1522 = vmatprep.subr.mxu0 %v495
    %1523 = vmatpush1.msra.mxu0 %v494
    %1524 = vmatprep.subr.mxu0 %v446
    %1525 = vmatpush1.msra.mxu0 %v445
    %1526 = vmatprep.subr.mxu0 %v397
    %1527 = vmatpush1.msra.mxu0 %v396
    %1528 = vmatprep.subr.mxu0 %v348
    %1529 = vmatpush1.msra.mxu0 %v347
    %1530 = vmatprep.subr.mxu0 %v299
    %1531 = vmatpush1.msra.mxu0 %v298
    %1532 = vmatprep.subr.mxu0 %v250
    %1533 = vmatpush1.msra.mxu0 %v249
    %1534 = vmatprep.subr.mxu0 %v201
    %1535 = vmatpush1.msra.mxu0 %v200
    %1536 = vmatprep.subr.mxu0 %v152
    %1537 = vmatpush1.msra.mxu0 %v151
    %1538 = vmatprep.subr.mxu0 %v103
    %1539 = vmatpush1.msra.mxu0 %v102
    %1540 = vmatprep.subr.mxu0 %v54
    %1541 = vmatpush1.msra.mxu0 %v53
    %1542 = vmatprep.subr.mxu0 0.0
    %1543 = vmatpush2.msra.mxu0 0.0
    %1544 = vmatprep.subr.mxu0 0.0
    %1545 = vmatpush2.msra.mxu0 0.0
    %1546 = vmatprep.subr.mxu0 0.0
    %1547 = vmatpush2.msra.mxu0 0.0
    %1548 = vmatprep.subr.mxu0 0.0
    %1549 = vmatpush2.msra.mxu0 0.0
    %1550 = vmatprep.subr.mxu0 0.0
    %1551 = vmatpush2.msra.mxu0 0.0
    %1552 = vmatprep.subr.mxu0 0.0
    %1553 = vmatpush2.msra.mxu0 0.0
    %1554 = vmatprep.subr.mxu0 0.0
    %1555 = vmatpush2.msra.mxu0 0.0
    %1556 = vmatprep.subr.mxu0 0.0
    %1557 = vmatpush2.msra.mxu0 0.0
    %1558 = vmatprep.subr.mxu0 0.0
    %1559 = vmatpush2.msra.mxu0 0.0
    %1560 = vmatprep.subr.mxu0 0.0
    %1561 = vmatpush2.msra.mxu0 0.0
    %1562 = vmatprep.subr.mxu0 0.0
    %1563 = vmatpush2.msra.mxu0 0.0
    %1564 = vmatprep.subr.mxu0 0.0
    %1565 = vmatpush2.msra.mxu0 0.0
    %1566 = vmatprep.subr.mxu0 0.0
    %1567 = vmatpush2.msra.mxu0 0.0
    %1568 = vmatprep.subr.mxu0 0.0
    %1569 = vmatpush2.msra.mxu0 0.0
    %1570 = vmatprep.subr.mxu0 0.0
    %1571 = vmatpush2.msra.mxu0 0.0
    %1572 = vmatprep.subr.mxu0 0.0
    %1573 = vmatpush2.msra.mxu0 0.0
    %1574 = vmatprep.mubr.f32.mxu0 0.0
    %1575 = vmatmul.mubr.f32.gmra.mxu0 %v40
    %v1576 = vpop.f32.mrf.mxu0
    %v1577 = vadd.f32 %v890, %v1576
    %v1578 = vpop.f32.mrf.mxu0
    %v1579 = vadd.f32 %v894, %v1578
    %1580 = vdwg.mxu0
    %1581 = vmatprep.subr.mxu0 %v791
    %1582 = vmatpush1.msra.mxu0 %v790
    %1583 = vmatprep.subr.mxu0 %v742
    %1584 = vmatpush1.msra.mxu0 %v741
    %1585 = vmatprep.subr.mxu0 %v693
    %1586 = vmatpush1.msra.mxu0 %v692
    %1587 = vmatprep.subr.mxu0 %v644
    %1588 = vmatpush1.msra.mxu0 %v643
    %1589 = vmatprep.subr.mxu0 %v595
    %1590 = vmatpush1.msra.mxu0 %v594
    %1591 = vmatprep.subr.mxu0 %v546
    %1592 = vmatpush1.msra.mxu0 %v545
    %1593 = vmatprep.subr.mxu0 %v497
    %1594 = vmatpush1.msra.mxu0 %v496
    %1595 = vmatprep.subr.mxu0 %v448
    %1596 = vmatpush1.msra.mxu0 %v447
    %1597 = vmatprep.subr.mxu0 %v399
    %1598 = vmatpush1.msra.mxu0 %v398
    %1599 = vmatprep.subr.mxu0 %v350
    %1600 = vmatpush1.msra.mxu0 %v349
    %1601 = vmatprep.subr.mxu0 %v301
    %1602 = vmatpush1.msra.mxu0 %v300
    %1603 = vmatprep.subr.mxu0 %v252
    %1604 = vmatpush1.msra.mxu0 %v251
    %1605 = vmatprep.subr.mxu0 %v203
    %1606 = vmatpush1.msra.mxu0 %v202
    %1607 = vmatprep.subr.mxu0 %v154
    %1608 = vmatpush1.msra.mxu0 %v153
    %1609 = vmatprep.subr.mxu0 %v105
    %1610 = vmatpush1.msra.mxu0 %v104
    %1611 = vmatprep.subr.mxu0 %v56
    %1612 = vmatpush1.msra.mxu0 %v55
    %1613 = vmatprep.subr.mxu0 0.0
    %1614 = vmatpush2.msra.mxu0 0.0
    %1615 = vmatprep.subr.mxu0 0.0
    %1616 = vmatpush2.msra.mxu0 0.0
    %1617 = vmatprep.subr.mxu0 0.0
    %1618 = vmatpush2.msra.mxu0 0.0
    %1619 = vmatprep.subr.mxu0 0.0
    %1620 = vmatpush2.msra.mxu0 0.0
    %1621 = vmatprep.subr.mxu0 0.0
    %1622 = vmatpush2.msra.mxu0 0.0
    %1623 = vmatprep.subr.mxu0 0.0
    %1624 = vmatpush2.msra.mxu0 0.0
    %1625 = vmatprep.subr.mxu0 0.0
    %1626 = vmatpush2.msra.mxu0 0.0
    %1627 = vmatprep.subr.mxu0 0.0
    %1628 = vmatpush2.msra.mxu0 0.0
    %1629 = vmatprep.subr.mxu0 0.0
    %1630 = vmatpush2.msra.mxu0 0.0
    %1631 = vmatprep.subr.mxu0 0.0
    %1632 = vmatpush2.msra.mxu0 0.0
    %1633 = vmatprep.subr.mxu0 0.0
    %1634 = vmatpush2.msra.mxu0 0.0
    %1635 = vmatprep.subr.mxu0 0.0
    %1636 = vmatpush2.msra.mxu0 0.0
    %1637 = vmatprep.subr.mxu0 0.0
    %1638 = vmatpush2.msra.mxu0 0.0
    %1639 = vmatprep.subr.mxu0 0.0
    %1640 = vmatpush2.msra.mxu0 0.0
    %1641 = vmatprep.subr.mxu0 0.0
    %1642 = vmatpush2.msra.mxu0 0.0
    %1643 = vmatprep.subr.mxu0 0.0
    %1644 = vmatpush2.msra.mxu0 0.0
    %1645 = vmatprep.mubr.f32.mxu0 0.0
    %1646 = vmatmul.mubr.f32.gmra.mxu0 %v40
    %v1647 = vpop.f32.mrf.mxu0
    %v1648 = vadd.f32 %v898, %v1647
    %v1649 = vpop.f32.mrf.mxu0
    %v1650 = vadd.f32 %v902, %v1649
    %1651 = vdwg.mxu0
    %1652 = vmatprep.subr.mxu0 %v793
    %1653 = vmatpush1.msra.mxu0 %v792
    %1654 = vmatprep.subr.mxu0 %v744
    %1655 = vmatpush1.msra.mxu0 %v743
    %1656 = vmatprep.subr.mxu0 %v695
    %1657 = vmatpush1.msra.mxu0 %v694
    %1658 = vmatprep.subr.mxu0 %v646
    %1659 = vmatpush1.msra.mxu0 %v645
    %1660 = vmatprep.subr.mxu0 %v597
    %1661 = vmatpush1.msra.mxu0 %v596
    %1662 = vmatprep.subr.mxu0 %v548
    %1663 = vmatpush1.msra.mxu0 %v547
    %1664 = vmatprep.subr.mxu0 %v499
    %1665 = vmatpush1.msra.mxu0 %v498
    %1666 = vmatprep.subr.mxu0 %v450
    %1667 = vmatpush1.msra.mxu0 %v449
    %1668 = vmatprep.subr.mxu0 %v401
    %1669 = vmatpush1.msra.mxu0 %v400
    %1670 = vmatprep.subr.mxu0 %v352
    %1671 = vmatpush1.msra.mxu0 %v351
    %1672 = vmatprep.subr.mxu0 %v303
    %1673 = vmatpush1.msra.mxu0 %v302
    %1674 = vmatprep.subr.mxu0 %v254
    %1675 = vmatpush1.msra.mxu0 %v253
    %1676 = vmatprep.subr.mxu0 %v205
    %1677 = vmatpush1.msra.mxu0 %v204
    %1678 = vmatprep.subr.mxu0 %v156
    %1679 = vmatpush1.msra.mxu0 %v155
    %1680 = vmatprep.subr.mxu0 %v107
    %1681 = vmatpush1.msra.mxu0 %v106
    %1682 = vmatprep.subr.mxu0 %v58
    %1683 = vmatpush1.msra.mxu0 %v57
    %1684 = vmatprep.subr.mxu0 0.0
    %1685 = vmatpush2.msra.mxu0 0.0
    %1686 = vmatprep.subr.mxu0 0.0
    %1687 = vmatpush2.msra.mxu0 0.0
    %1688 = vmatprep.subr.mxu0 0.0
    %1689 = vmatpush2.msra.mxu0 0.0
    %1690 = vmatprep.subr.mxu0 0.0
    %1691 = vmatpush2.msra.mxu0 0.0
    %1692 = vmatprep.subr.mxu0 0.0
    %1693 = vmatpush2.msra.mxu0 0.0
    %1694 = vmatprep.subr.mxu0 0.0
    %1695 = vmatpush2.msra.mxu0 0.0
    %1696 = vmatprep.subr.mxu0 0.0
    %1697 = vmatpush2.msra.mxu0 0.0
    %1698 = vmatprep.subr.mxu0 0.0
    %1699 = vmatpush2.msra.mxu0 0.0
    %1700 = vmatprep.subr.mxu0 0.0
    %1701 = vmatpush2.msra.mxu0 0.0
    %1702 = vmatprep.subr.mxu0 0.0
    %1703 = vmatpush2.msra.mxu0 0.0
    %1704 = vmatprep.subr.mxu0 0.0
    %1705 = vmatpush2.msra.mxu0 0.0
    %1706 = vmatprep.subr.mxu0 0.0
    %1707 = vmatpush2.msra.mxu0 0.0
    %1708 = vmatprep.subr.mxu0 0.0
    %1709 = vmatpush2.msra.mxu0 0.0
    %1710 = vmatprep.subr.mxu0 0.0
    %1711 = vmatpush2.msra.mxu0 0.0
    %1712 = vmatprep.subr.mxu0 0.0
    %1713 = vmatpush2.msra.mxu0 0.0
    %1714 = vmatprep.subr.mxu0 0.0
    %1715 = vmatpush2.msra.mxu0 0.0
    %1716 = vmatprep.mubr.f32.mxu0 0.0
    %1717 = vmatmul.mubr.f32.gmra.mxu0 %v40
    %v1718 = vpop.f32.mrf.mxu0
    %v1719 = vadd.f32 %v906, %v1718
    %v1720 = vpop.f32.mrf.mxu0
    %v1721 = vadd.f32 %v910, %v1720
    %1722 = vdwg.mxu0
    %1723 = vmatprep.subr.mxu0 %v795
    %1724 = vmatpush1.msra.mxu0 %v794
    %1725 = vmatprep.subr.mxu0 %v746
    %1726 = vmatpush1.msra.mxu0 %v745
    %1727 = vmatprep.subr.mxu0 %v697
    %1728 = vmatpush1.msra.mxu0 %v696
    %1729 = vmatprep.subr.mxu0 %v648
    %1730 = vmatpush1.msra.mxu0 %v647
    %1731 = vmatprep.subr.mxu0 %v599
    %1732 = vmatpush1.msra.mxu0 %v598
    %1733 = vmatprep.subr.mxu0 %v550
    %1734 = vmatpush1.msra.mxu0 %v549
    %1735 = vmatprep.subr.mxu0 %v501
    %1736 = vmatpush1.msra.mxu0 %v500
    %1737 = vmatprep.subr.mxu0 %v452
    %1738 = vmatpush1.msra.mxu0 %v451
    %1739 = vmatprep.subr.mxu0 %v403
    %1740 = vmatpush1.msra.mxu0 %v402
    %1741 = vmatprep.subr.mxu0 %v354
    %1742 = vmatpush1.msra.mxu0 %v353
    %1743 = vmatprep.subr.mxu0 %v305
    %1744 = vmatpush1.msra.mxu0 %v304
    %1745 = vmatprep.subr.mxu0 %v256
    %1746 = vmatpush1.msra.mxu0 %v255
    %1747 = vmatprep.subr.mxu0 %v207
    %1748 = vmatpush1.msra.mxu0 %v206
    %1749 = vmatprep.subr.mxu0 %v158
    %1750 = vmatpush1.msra.mxu0 %v157
    %1751 = vmatprep.subr.mxu0 %v109
    %1752 = vmatpush1.msra.mxu0 %v108
    %1753 = vmatprep.subr.mxu0 %v60
    %1754 = vmatpush1.msra.mxu0 %v59
    %1755 = vmatprep.subr.mxu0 0.0
    %1756 = vmatpush2.msra.mxu0 0.0
    %1757 = vmatprep.subr.mxu0 0.0
    %1758 = vmatpush2.msra.mxu0 0.0
    %1759 = vmatprep.subr.mxu0 0.0
    %1760 = vmatpush2.msra.mxu0 0.0
    %1761 = vmatprep.subr.mxu0 0.0
    %1762 = vmatpush2.msra.mxu0 0.0
    %1763 = vmatprep.subr.mxu0 0.0
    %1764 = vmatpush2.msra.mxu0 0.0
    %1765 = vmatprep.subr.mxu0 0.0
    %1766 = vmatpush2.msra.mxu0 0.0
    %1767 = vmatprep.subr.mxu0 0.0
    %1768 = vmatpush2.msra.mxu0 0.0
    %1769 = vmatprep.subr.mxu0 0.0
    %1770 = vmatpush2.msra.mxu0 0.0
    %1771 = vmatprep.subr.mxu0 0.0
    %1772 = vmatpush2.msra.mxu0 0.0
    %1773 = vmatprep.subr.mxu0 0.0
    %1774 = vmatpush2.msra.mxu0 0.0
    %1775 = vmatprep.subr.mxu0 0.0
    %1776 = vmatpush2.msra.mxu0 0.0
    %1777 = vmatprep.subr.mxu0 0.0
    %1778 = vmatpush2.msra.mxu0 0.0
    %1779 = vmatprep.subr.mxu0 0.0
    %1780 = vmatpush2.msra.mxu0 0.0
    %1781 = vmatprep.subr.mxu0 0.0
    %1782 = vmatpush2.msra.mxu0 0.0
    %1783 = vmatprep.subr.mxu0 0.0
    %1784 = vmatpush2.msra.mxu0 0.0
    %1785 = vmatprep.subr.mxu0 0.0
    %1786 = vmatpush2.msra.mxu0 0.0
    %1787 = vmatprep.mubr.f32.mxu0 0.0
    %1788 = vmatmul.mubr.f32.gmra.mxu0 %v40
    %v1789 = vpop.f32.mrf.mxu0
    %v1790 = vadd.f32 %v914, %v1789
    %v1791 = vpop.f32.mrf.mxu0
    %v1792 = vadd.f32 %v918, %v1791
    %1793 = vdwg.mxu0
    %1794 = vmatprep.subr.mxu0 %v797
    %1795 = vmatpush1.msra.mxu0 %v796
    %1796 = vmatprep.subr.mxu0 %v748
    %1797 = vmatpush1.msra.mxu0 %v747
    %1798 = vmatprep.subr.mxu0 %v699
    %1799 = vmatpush1.msra.mxu0 %v698
    %1800 = vmatprep.subr.mxu0 %v650
    %1801 = vmatpush1.msra.mxu0 %v649
    %1802 = vmatprep.subr.mxu0 %v601
    %1803 = vmatpush1.msra.mxu0 %v600
    %1804 = vmatprep.subr.mxu0 %v552
    %1805 = vmatpush1.msra.mxu0 %v551
    %1806 = vmatprep.subr.mxu0 %v503
    %1807 = vmatpush1.msra.mxu0 %v502
    %1808 = vmatprep.subr.mxu0 %v454
    %1809 = vmatpush1.msra.mxu0 %v453
    %1810 = vmatprep.subr.mxu0 %v405
    %1811 = vmatpush1.msra.mxu0 %v404
    %1812 = vmatprep.subr.mxu0 %v356
    %1813 = vmatpush1.msra.mxu0 %v355
    %1814 = vmatprep.subr.mxu0 %v307
    %1815 = vmatpush1.msra.mxu0 %v306
    %1816 = vmatprep.subr.mxu0 %v258
    %1817 = vmatpush1.msra.mxu0 %v257
    %1818 = vmatprep.subr.mxu0 %v209
    %1819 = vmatpush1.msra.mxu0 %v208
    %1820 = vmatprep.subr.mxu0 %v160
    %1821 = vmatpush1.msra.mxu0 %v159
    %1822 = vmatprep.subr.mxu0 %v111
    %1823 = vmatpush1.msra.mxu0 %v110
    %1824 = vmatprep.subr.mxu0 %v62
    %1825 = vmatpush1.msra.mxu0 %v61
    %1826 = vmatprep.subr.mxu0 0.0
    %1827 = vmatpush2.msra.mxu0 0.0
    %1828 = vmatprep.subr.mxu0 0.0
    %1829 = vmatpush2.msra.mxu0 0.0
    %1830 = vmatprep.subr.mxu0 0.0
    %1831 = vmatpush2.msra.mxu0 0.0
    %1832 = vmatprep.subr.mxu0 0.0
    %1833 = vmatpush2.msra.mxu0 0.0
    %1834 = vmatprep.subr.mxu0 0.0
    %1835 = vmatpush2.msra.mxu0 0.0
    %1836 = vmatprep.subr.mxu0 0.0
    %1837 = vmatpush2.msra.mxu0 0.0
    %1838 = vmatprep.subr.mxu0 0.0
    %1839 = vmatpush2.msra.mxu0 0.0
    %1840 = vmatprep.subr.mxu0 0.0
    %1841 = vmatpush2.msra.mxu0 0.0
    %1842 = vmatprep.subr.mxu0 0.0
    %1843 = vmatpush2.msra.mxu0 0.0
    %1844 = vmatprep.subr.mxu0 0.0
    %1845 = vmatpush2.msra.mxu0 0.0
    %1846 = vmatprep.subr.mxu0 0.0
    %1847 = vmatpush2.msra.mxu0 0.0
    %1848 = vmatprep.subr.mxu0 0.0
    %1849 = vmatpush2.msra.mxu0 0.0
    %1850 = vmatprep.subr.mxu0 0.0
    %1851 = vmatpush2.msra.mxu0 0.0
    %1852 = vmatprep.subr.mxu0 0.0
    %1853 = vmatpush2.msra.mxu0 0.0
    %1854 = vmatprep.subr.mxu0 0.0
    %1855 = vmatpush2.msra.mxu0 0.0
    %1856 = vmatprep.subr.mxu0 0.0
    %1857 = vmatpush2.msra.mxu0 0.0
    %1858 = vmatprep.mubr.f32.mxu0 0.0
    %1859 = vmatmul.mubr.f32.gmra.mxu0 %v40
    %v1860 = vpop.f32.mrf.mxu0
    %v1861 = vadd.f32 %v922, %v1860
    %v1862 = vpop.f32.mrf.mxu0
    %v1863 = vadd.f32 %v926, %v1862
    %1864 = vdwg.mxu0
    %1865 = vmatprep.subr.mxu0 %v799
    %1866 = vmatpush1.msra.mxu0 %v798
    %1867 = vmatprep.subr.mxu0 %v750
    %1868 = vmatpush1.msra.mxu0 %v749
    %1869 = vmatprep.subr.mxu0 %v701
    %1870 = vmatpush1.msra.mxu0 %v700
    %1871 = vmatprep.subr.mxu0 %v652
    %1872 = vmatpush1.msra.mxu0 %v651
    %1873 = vmatprep.subr.mxu0 %v603
    %1874 = vmatpush1.msra.mxu0 %v602
    %1875 = vmatprep.subr.mxu0 %v554
    %1876 = vmatpush1.msra.mxu0 %v553
    %1877 = vmatprep.subr.mxu0 %v505
    %1878 = vmatpush1.msra.mxu0 %v504
    %1879 = vmatprep.subr.mxu0 %v456
    %1880 = vmatpush1.msra.mxu0 %v455
    %1881 = vmatprep.subr.mxu0 %v407
    %1882 = vmatpush1.msra.mxu0 %v406
    %1883 = vmatprep.subr.mxu0 %v358
    %1884 = vmatpush1.msra.mxu0 %v357
    %1885 = vmatprep.subr.mxu0 %v309
    %1886 = vmatpush1.msra.mxu0 %v308
    %1887 = vmatprep.subr.mxu0 %v260
    %1888 = vmatpush1.msra.mxu0 %v259
    %1889 = vmatprep.subr.mxu0 %v211
    %1890 = vmatpush1.msra.mxu0 %v210
    %1891 = vmatprep.subr.mxu0 %v162
    %1892 = vmatpush1.msra.mxu0 %v161
    %1893 = vmatprep.subr.mxu0 %v113
    %1894 = vmatpush1.msra.mxu0 %v112
    %1895 = vmatprep.subr.mxu0 %v64
    %1896 = vmatpush1.msra.mxu0 %v63
    %1897 = vmatprep.subr.mxu0 0.0
    %1898 = vmatpush2.msra.mxu0 0.0
    %1899 = vmatprep.subr.mxu0 0.0
    %1900 = vmatpush2.msra.mxu0 0.0
    %1901 = vmatprep.subr.mxu0 0.0
    %1902 = vmatpush2.msra.mxu0 0.0
    %1903 = vmatprep.subr.mxu0 0.0
    %1904 = vmatpush2.msra.mxu0 0.0
    %1905 = vmatprep.subr.mxu0 0.0
    %1906 = vmatpush2.msra.mxu0 0.0
    %1907 = vmatprep.subr.mxu0 0.0
    %1908 = vmatpush2.msra.mxu0 0.0
    %1909 = vmatprep.subr.mxu0 0.0
    %1910 = vmatpush2.msra.mxu0 0.0
    %1911 = vmatprep.subr.mxu0 0.0
    %1912 = vmatpush2.msra.mxu0 0.0
    %1913 = vmatprep.subr.mxu0 0.0
    %1914 = vmatpush2.msra.mxu0 0.0
    %1915 = vmatprep.subr.mxu0 0.0
    %1916 = vmatpush2.msra.mxu0 0.0
    %1917 = vmatprep.subr.mxu0 0.0
    %1918 = vmatpush2.msra.mxu0 0.0
    %1919 = vmatprep.subr.mxu0 0.0
    %1920 = vmatpush2.msra.mxu0 0.0
    %1921 = vmatprep.subr.mxu0 0.0
    %1922 = vmatpush2.msra.mxu0 0.0
    %1923 = vmatprep.subr.mxu0 0.0
    %1924 = vmatpush2.msra.mxu0 0.0
    %1925 = vmatprep.subr.mxu0 0.0
    %1926 = vmatpush2.msra.mxu0 0.0
    %1927 = vmatprep.subr.mxu0 0.0
    %1928 = vmatpush2.msra.mxu0 0.0
    %1929 = vmatprep.mubr.f32.mxu0 0.0
    %1930 = vmatmul.mubr.f32.gmra.mxu0 %v40
    %v1931 = vpop.f32.mrf.mxu0
    %v1932 = vadd.f32 %v930, %v1931
    %v1933 = vpop.f32.mrf.mxu0
    %v1934 = vadd.f32 %v934, %v1933
    %1935 = vdwg.mxu0
    %1936 = vmatprep.subr.mxu0 %v801
    %1937 = vmatpush1.msra.mxu0 %v800
    %1938 = vmatprep.subr.mxu0 %v752
    %1939 = vmatpush1.msra.mxu0 %v751
    %1940 = vmatprep.subr.mxu0 %v703
    %1941 = vmatpush1.msra.mxu0 %v702
    %1942 = vmatprep.subr.mxu0 %v654
    %1943 = vmatpush1.msra.mxu0 %v653
    %1944 = vmatprep.subr.mxu0 %v605
    %1945 = vmatpush1.msra.mxu0 %v604
    %1946 = vmatprep.subr.mxu0 %v556
    %1947 = vmatpush1.msra.mxu0 %v555
    %1948 = vmatprep.subr.mxu0 %v507
    %1949 = vmatpush1.msra.mxu0 %v506
    %1950 = vmatprep.subr.mxu0 %v458
    %1951 = vmatpush1.msra.mxu0 %v457
    %1952 = vmatprep.subr.mxu0 %v409
    %1953 = vmatpush1.msra.mxu0 %v408
    %1954 = vmatprep.subr.mxu0 %v360
    %1955 = vmatpush1.msra.mxu0 %v359
    %1956 = vmatprep.subr.mxu0 %v311
    %1957 = vmatpush1.msra.mxu0 %v310
    %1958 = vmatprep.subr.mxu0 %v262
    %1959 = vmatpush1.msra.mxu0 %v261
    %1960 = vmatprep.subr.mxu0 %v213
    %1961 = vmatpush1.msra.mxu0 %v212
    %1962 = vmatprep.subr.mxu0 %v164
    %1963 = vmatpush1.msra.mxu0 %v163
    %1964 = vmatprep.subr.mxu0 %v115
    %1965 = vmatpush1.msra.mxu0 %v114
    %1966 = vmatprep.subr.mxu0 %v66
    %1967 = vmatpush1.msra.mxu0 %v65
    %1968 = vmatprep.subr.mxu0 0.0
    %1969 = vmatpush2.msra.mxu0 0.0
    %1970 = vmatprep.subr.mxu0 0.0
    %1971 = vmatpush2.msra.mxu0 0.0
    %1972 = vmatprep.subr.mxu0 0.0
    %1973 = vmatpush2.msra.mxu0 0.0
    %1974 = vmatprep.subr.mxu0 0.0
    %1975 = vmatpush2.msra.mxu0 0.0
    %1976 = vmatprep.subr.mxu0 0.0
    %1977 = vmatpush2.msra.mxu0 0.0
    %1978 = vmatprep.subr.mxu0 0.0
    %1979 = vmatpush2.msra.mxu0 0.0
    %1980 = vmatprep.subr.mxu0 0.0
    %1981 = vmatpush2.msra.mxu0 0.0
    %1982 = vmatprep.subr.mxu0 0.0
    %1983 = vmatpush2.msra.mxu0 0.0
    %1984 = vmatprep.subr.mxu0 0.0
    %1985 = vmatpush2.msra.mxu0 0.0
    %1986 = vmatprep.subr.mxu0 0.0
    %1987 = vmatpush2.msra.mxu0 0.0
    %1988 = vmatprep.subr.mxu0 0.0
    %1989 = vmatpush2.msra.mxu0 0.0
    %1990 = vmatprep.subr.mxu0 0.0
    %1991 = vmatpush2.msra.mxu0 0.0
    %1992 = vmatprep.subr.mxu0 0.0
    %1993 = vmatpush2.msra.mxu0 0.0
    %1994 = vmatprep.subr.mxu0 0.0
    %1995 = vmatpush2.msra.mxu0 0.0
    %1996 = vmatprep.subr.mxu0 0.0
    %1997 = vmatpush2.msra.mxu0 0.0
    %1998 = vmatprep.subr.mxu0 0.0
    %1999 = vmatpush2.msra.mxu0 0.0
    %2000 = vmatprep.mubr.f32.mxu0 0.0
    %2001 = vmatmul.mubr.f32.gmra.mxu0 %v40
    %v2002 = vpop.f32.mrf.mxu0
    %v2003 = vadd.f32 %v938, %v2002
    %v2004 = vpop.f32.mrf.mxu0
    %v2005 = vadd.f32 %v942, %v2004
    %2006 = vdwg.mxu0
    %2007 = vmatprep.subr.mxu0 %v803
    %2008 = vmatpush1.msra.mxu0 %v802
    %2009 = vmatprep.subr.mxu0 %v754
    %2010 = vmatpush1.msra.mxu0 %v753
    %2011 = vmatprep.subr.mxu0 %v705
    %2012 = vmatpush1.msra.mxu0 %v704
    %2013 = vmatprep.subr.mxu0 %v656
    %2014 = vmatpush1.msra.mxu0 %v655
    %2015 = vmatprep.subr.mxu0 %v607
    %2016 = vmatpush1.msra.mxu0 %v606
    %2017 = vmatprep.subr.mxu0 %v558
    %2018 = vmatpush1.msra.mxu0 %v557
    %2019 = vmatprep.subr.mxu0 %v509
    %2020 = vmatpush1.msra.mxu0 %v508
    %2021 = vmatprep.subr.mxu0 %v460
    %2022 = vmatpush1.msra.mxu0 %v459
    %2023 = vmatprep.subr.mxu0 %v411
    %2024 = vmatpush1.msra.mxu0 %v410
    %2025 = vmatprep.subr.mxu0 %v362
    %2026 = vmatpush1.msra.mxu0 %v361
    %2027 = vmatprep.subr.mxu0 %v313
    %2028 = vmatpush1.msra.mxu0 %v312
    %2029 = vmatprep.subr.mxu0 %v264
    %2030 = vmatpush1.msra.mxu0 %v263
    %2031 = vmatprep.subr.mxu0 %v215
    %2032 = vmatpush1.msra.mxu0 %v214
    %2033 = vmatprep.subr.mxu0 %v166
    %2034 = vmatpush1.msra.mxu0 %v165
    %2035 = vmatprep.subr.mxu0 %v117
    %2036 = vmatpush1.msra.mxu0 %v116
    %2037 = vmatprep.subr.mxu0 %v68
    %2038 = vmatpush1.msra.mxu0 %v67
    %2039 = vmatprep.subr.mxu0 0.0
    %2040 = vmatpush2.msra.mxu0 0.0
    %2041 = vmatprep.subr.mxu0 0.0
    %2042 = vmatpush2.msra.mxu0 0.0
    %2043 = vmatprep.subr.mxu0 0.0
    %2044 = vmatpush2.msra.mxu0 0.0
    %2045 = vmatprep.subr.mxu0 0.0
    %2046 = vmatpush2.msra.mxu0 0.0
    %2047 = vmatprep.subr.mxu0 0.0
    %2048 = vmatpush2.msra.mxu0 0.0
    %2049 = vmatprep.subr.mxu0 0.0
    %2050 = vmatpush2.msra.mxu0 0.0
    %2051 = vmatprep.subr.mxu0 0.0
    %2052 = vmatpush2.msra.mxu0 0.0
    %2053 = vmatprep.subr.mxu0 0.0
    %2054 = vmatpush2.msra.mxu0 0.0
    %2055 = vmatprep.subr.mxu0 0.0
    %2056 = vmatpush2.msra.mxu0 0.0
    %2057 = vmatprep.subr.mxu0 0.0
    %2058 = vmatpush2.msra.mxu0 0.0
    %2059 = vmatprep.subr.mxu0 0.0
    %2060 = vmatpush2.msra.mxu0 0.0
    %2061 = vmatprep.subr.mxu0 0.0
    %2062 = vmatpush2.msra.mxu0 0.0
    %2063 = vmatprep.subr.mxu0 0.0
    %2064 = vmatpush2.msra.mxu0 0.0
    %2065 = vmatprep.subr.mxu0 0.0
    %2066 = vmatpush2.msra.mxu0 0.0
    %2067 = vmatprep.subr.mxu0 0.0
    %2068 = vmatpush2.msra.mxu0 0.0
    %2069 = vmatprep.subr.mxu0 0.0
    %2070 = vmatpush2.msra.mxu0 0.0
    %2071 = vmatprep.mubr.f32.mxu0 0.0
    %2072 = vmatmul.mubr.f32.gmra.mxu0 %v40
    %v2073 = vpop.f32.mrf.mxu0
    %v2074 = vadd.f32 %v946, %v2073
    %v2075 = vpop.f32.mrf.mxu0
    %v2076 = vadd.f32 %v950, %v2075
    %2077 = vdwg.mxu0
    %2078 = vmatprep.subr.mxu0 %v805
    %2079 = vmatpush1.msra.mxu0 %v804
    %2080 = vmatprep.subr.mxu0 %v756
    %2081 = vmatpush1.msra.mxu0 %v755
    %2082 = vmatprep.subr.mxu0 %v707
    %2083 = vmatpush1.msra.mxu0 %v706
    %2084 = vmatprep.subr.mxu0 %v658
    %2085 = vmatpush1.msra.mxu0 %v657
    %2086 = vmatprep.subr.mxu0 %v609
    %2087 = vmatpush1.msra.mxu0 %v608
    %2088 = vmatprep.subr.mxu0 %v560
    %2089 = vmatpush1.msra.mxu0 %v559
    %2090 = vmatprep.subr.mxu0 %v511
    %2091 = vmatpush1.msra.mxu0 %v510
    %2092 = vmatprep.subr.mxu0 %v462
    %2093 = vmatpush1.msra.mxu0 %v461
    %2094 = vmatprep.subr.mxu0 %v413
    %2095 = vmatpush1.msra.mxu0 %v412
    %2096 = vmatprep.subr.mxu0 %v364
    %2097 = vmatpush1.msra.mxu0 %v363
    %2098 = vmatprep.subr.mxu0 %v315
    %2099 = vmatpush1.msra.mxu0 %v314
    %2100 = vmatprep.subr.mxu0 %v266
    %2101 = vmatpush1.msra.mxu0 %v265
    %2102 = vmatprep.subr.mxu0 %v217
    %2103 = vmatpush1.msra.mxu0 %v216
    %2104 = vmatprep.subr.mxu0 %v168
    %2105 = vmatpush1.msra.mxu0 %v167
    %2106 = vmatprep.subr.mxu0 %v119
    %2107 = vmatpush1.msra.mxu0 %v118
    %2108 = vmatprep.subr.mxu0 %v70
    %2109 = vmatpush1.msra.mxu0 %v69
    %2110 = vmatprep.subr.mxu0 0.0
    %2111 = vmatpush2.msra.mxu0 0.0
    %2112 = vmatprep.subr.mxu0 0.0
    %2113 = vmatpush2.msra.mxu0 0.0
    %2114 = vmatprep.subr.mxu0 0.0
    %2115 = vmatpush2.msra.mxu0 0.0
    %2116 = vmatprep.subr.mxu0 0.0
    %2117 = vmatpush2.msra.mxu0 0.0
    %2118 = vmatprep.subr.mxu0 0.0
    %2119 = vmatpush2.msra.mxu0 0.0
    %2120 = vmatprep.subr.mxu0 0.0
    %2121 = vmatpush2.msra.mxu0 0.0
    %2122 = vmatprep.subr.mxu0 0.0
    %2123 = vmatpush2.msra.mxu0 0.0
    %2124 = vmatprep.subr.mxu0 0.0
    %2125 = vmatpush2.msra.mxu0 0.0
    %2126 = vmatprep.subr.mxu0 0.0
    %2127 = vmatpush2.msra.mxu0 0.0
    %2128 = vmatprep.subr.mxu0 0.0
    %2129 = vmatpush2.msra.mxu0 0.0
    %2130 = vmatprep.subr.mxu0 0.0
    %2131 = vmatpush2.msra.mxu0 0.0
    %2132 = vmatprep.subr.mxu0 0.0
    %2133 = vmatpush2.msra.mxu0 0.0
    %2134 = vmatprep.subr.mxu0 0.0
    %2135 = vmatpush2.msra.mxu0 0.0
    %2136 = vmatprep.subr.mxu0 0.0
    %2137 = vmatpush2.msra.mxu0 0.0
    %2138 = vmatprep.subr.mxu0 0.0
    %2139 = vmatpush2.msra.mxu0 0.0
    %2140 = vmatprep.subr.mxu0 0.0
    %2141 = vmatpush2.msra.mxu0 0.0
    %2142 = vmatprep.mubr.f32.mxu0 0.0
    %2143 = vmatmul.mubr.f32.gmra.mxu0 %v40
    %v2144 = vpop.f32.mrf.mxu0
    %v2145 = vadd.f32 %v954, %v2144
    %v2146 = vpop.f32.mrf.mxu0
    %v2147 = vadd.f32 %v958, %v2146
    %2148 = vdwg.mxu0
    %2149 = vmatprep.subr.mxu0 %v807
    %2150 = vmatpush1.msra.mxu0 %v806
    %2151 = vmatprep.subr.mxu0 %v758
    %2152 = vmatpush1.msra.mxu0 %v757
    %2153 = vmatprep.subr.mxu0 %v709
    %2154 = vmatpush1.msra.mxu0 %v708
    %2155 = vmatprep.subr.mxu0 %v660
    %2156 = vmatpush1.msra.mxu0 %v659
    %2157 = vmatprep.subr.mxu0 %v611
    %2158 = vmatpush1.msra.mxu0 %v610
    %2159 = vmatprep.subr.mxu0 %v562
    %2160 = vmatpush1.msra.mxu0 %v561
    %2161 = vmatprep.subr.mxu0 %v513
    %2162 = vmatpush1.msra.mxu0 %v512
    %2163 = vmatprep.subr.mxu0 %v464
    %2164 = vmatpush1.msra.mxu0 %v463
    %2165 = vmatprep.subr.mxu0 %v415
    %2166 = vmatpush1.msra.mxu0 %v414
    %2167 = vmatprep.subr.mxu0 %v366
    %2168 = vmatpush1.msra.mxu0 %v365
    %2169 = vmatprep.subr.mxu0 %v317
    %2170 = vmatpush1.msra.mxu0 %v316
    %2171 = vmatprep.subr.mxu0 %v268
    %2172 = vmatpush1.msra.mxu0 %v267
    %2173 = vmatprep.subr.mxu0 %v219
    %2174 = vmatpush1.msra.mxu0 %v218
    %2175 = vmatprep.subr.mxu0 %v170
    %2176 = vmatpush1.msra.mxu0 %v169
    %2177 = vmatprep.subr.mxu0 %v121
    %2178 = vmatpush1.msra.mxu0 %v120
    %2179 = vmatprep.subr.mxu0 %v72
    %2180 = vmatpush1.msra.mxu0 %v71
    %2181 = vmatprep.subr.mxu0 0.0
    %2182 = vmatpush2.msra.mxu0 0.0
    %2183 = vmatprep.subr.mxu0 0.0
    %2184 = vmatpush2.msra.mxu0 0.0
    %2185 = vmatprep.subr.mxu0 0.0
    %2186 = vmatpush2.msra.mxu0 0.0
    %2187 = vmatprep.subr.mxu0 0.0
    %2188 = vmatpush2.msra.mxu0 0.0
    %2189 = vmatprep.subr.mxu0 0.0
    %2190 = vmatpush2.msra.mxu0 0.0
    %2191 = vmatprep.subr.mxu0 0.0
    %2192 = vmatpush2.msra.mxu0 0.0
    %2193 = vmatprep.subr.mxu0 0.0
    %2194 = vmatpush2.msra.mxu0 0.0
    %2195 = vmatprep.subr.mxu0 0.0
    %2196 = vmatpush2.msra.mxu0 0.0
    %2197 = vmatprep.subr.mxu0 0.0
    %2198 = vmatpush2.msra.mxu0 0.0
    %2199 = vmatprep.subr.mxu0 0.0
    %2200 = vmatpush2.msra.mxu0 0.0
    %2201 = vmatprep.subr.mxu0 0.0
    %2202 = vmatpush2.msra.mxu0 0.0
    %2203 = vmatprep.subr.mxu0 0.0
    %2204 = vmatpush2.msra.mxu0 0.0
    %2205 = vmatprep.subr.mxu0 0.0
    %2206 = vmatpush2.msra.mxu0 0.0
    %2207 = vmatprep.subr.mxu0 0.0
    %2208 = vmatpush2.msra.mxu0 0.0
    %2209 = vmatprep.subr.mxu0 0.0
    %2210 = vmatpush2.msra.mxu0 0.0
    %2211 = vmatprep.subr.mxu0 0.0
    %2212 = vmatpush2.msra.mxu0 0.0
    %2213 = vmatprep.mubr.f32.mxu0 0.0
    %2214 = vmatmul.mubr.f32.gmra.mxu0 %v40
    %v2215 = vpop.f32.mrf.mxu0
    %v2216 = vadd.f32 %v962, %v2215
    %v2217 = vpop.f32.mrf.mxu0
    %v2218 = vadd.f32 %v966, %v2217
    %2219 = vdwg.mxu0
    %2220 = vmatprep.subr.mxu0 %v809
    %2221 = vmatpush1.msra.mxu0 %v808
    %2222 = vmatprep.subr.mxu0 %v760
    %2223 = vmatpush1.msra.mxu0 %v759
    %2224 = vmatprep.subr.mxu0 %v711
    %2225 = vmatpush1.msra.mxu0 %v710
    %2226 = vmatprep.subr.mxu0 %v662
    %2227 = vmatpush1.msra.mxu0 %v661
    %2228 = vmatprep.subr.mxu0 %v613
    %2229 = vmatpush1.msra.mxu0 %v612
    %2230 = vmatprep.subr.mxu0 %v564
    %2231 = vmatpush1.msra.mxu0 %v563
    %2232 = vmatprep.subr.mxu0 %v515
    %2233 = vmatpush1.msra.mxu0 %v514
    %2234 = vmatprep.subr.mxu0 %v466
    %2235 = vmatpush1.msra.mxu0 %v465
    %2236 = vmatprep.subr.mxu0 %v417
    %2237 = vmatpush1.msra.mxu0 %v416
    %2238 = vmatprep.subr.mxu0 %v368
    %2239 = vmatpush1.msra.mxu0 %v367
    %2240 = vmatprep.subr.mxu0 %v319
    %2241 = vmatpush1.msra.mxu0 %v318
    %2242 = vmatprep.subr.mxu0 %v270
    %2243 = vmatpush1.msra.mxu0 %v269
    %2244 = vmatprep.subr.mxu0 %v221
    %2245 = vmatpush1.msra.mxu0 %v220
    %2246 = vmatprep.subr.mxu0 %v172
    %2247 = vmatpush1.msra.mxu0 %v171
    %2248 = vmatprep.subr.mxu0 %v123
    %2249 = vmatpush1.msra.mxu0 %v122
    %2250 = vmatprep.subr.mxu0 %v74
    %2251 = vmatpush1.msra.mxu0 %v73
    %2252 = vmatprep.subr.mxu0 0.0
    %2253 = vmatpush2.msra.mxu0 0.0
    %2254 = vmatprep.subr.mxu0 0.0
    %2255 = vmatpush2.msra.mxu0 0.0
    %2256 = vmatprep.subr.mxu0 0.0
    %2257 = vmatpush2.msra.mxu0 0.0
    %2258 = vmatprep.subr.mxu0 0.0
    %2259 = vmatpush2.msra.mxu0 0.0
    %2260 = vmatprep.subr.mxu0 0.0
    %2261 = vmatpush2.msra.mxu0 0.0
    %2262 = vmatprep.subr.mxu0 0.0
    %2263 = vmatpush2.msra.mxu0 0.0
    %2264 = vmatprep.subr.mxu0 0.0
    %2265 = vmatpush2.msra.mxu0 0.0
    %2266 = vmatprep.subr.mxu0 0.0
    %2267 = vmatpush2.msra.mxu0 0.0
    %2268 = vmatprep.subr.mxu0 0.0
    %2269 = vmatpush2.msra.mxu0 0.0
    %2270 = vmatprep.subr.mxu0 0.0
    %2271 = vmatpush2.msra.mxu0 0.0
    %2272 = vmatprep.subr.mxu0 0.0
    %2273 = vmatpush2.msra.mxu0 0.0
    %2274 = vmatprep.subr.mxu0 0.0
    %2275 = vmatpush2.msra.mxu0 0.0
    %2276 = vmatprep.subr.mxu0 0.0
    %2277 = vmatpush2.msra.mxu0 0.0
    %2278 = vmatprep.subr.mxu0 0.0
    %2279 = vmatpush2.msra.mxu0 0.0
    %2280 = vmatprep.subr.mxu0 0.0
    %2281 = vmatpush2.msra.mxu0 0.0
    %2282 = vmatprep.subr.mxu0 0.0
    %2283 = vmatpush2.msra.mxu0 0.0
    %2284 = vmatprep.mubr.f32.mxu0 0.0
    %2285 = vmatmul.mubr.f32.gmra.mxu0 %v40
    %v2286 = vpop.f32.mrf.mxu0
    %v2287 = vadd.f32 %v970, %v2286
    %v2288 = vpop.f32.mrf.mxu0
    %v2289 = vadd.f32 %v974, %v2288
    %2290 = vdwg.mxu0
    %2291 = vmatprep.subr.mxu0 %v811
    %2292 = vmatpush1.msra.mxu0 %v810
    %2293 = vmatprep.subr.mxu0 %v762
    %2294 = vmatpush1.msra.mxu0 %v761
    %2295 = vmatprep.subr.mxu0 %v713
    %2296 = vmatpush1.msra.mxu0 %v712
    %2297 = vmatprep.subr.mxu0 %v664
    %2298 = vmatpush1.msra.mxu0 %v663
    %2299 = vmatprep.subr.mxu0 %v615
    %2300 = vmatpush1.msra.mxu0 %v614
    %2301 = vmatprep.subr.mxu0 %v566
    %2302 = vmatpush1.msra.mxu0 %v565
    %2303 = vmatprep.subr.mxu0 %v517
    %2304 = vmatpush1.msra.mxu0 %v516
    %2305 = vmatprep.subr.mxu0 %v468
    %2306 = vmatpush1.msra.mxu0 %v467
    %2307 = vmatprep.subr.mxu0 %v419
    %2308 = vmatpush1.msra.mxu0 %v418
    %2309 = vmatprep.subr.mxu0 %v370
    %2310 = vmatpush1.msra.mxu0 %v369
    %2311 = vmatprep.subr.mxu0 %v321
    %2312 = vmatpush1.msra.mxu0 %v320
    %2313 = vmatprep.subr.mxu0 %v272
    %2314 = vmatpush1.msra.mxu0 %v271
    %2315 = vmatprep.subr.mxu0 %v223
    %2316 = vmatpush1.msra.mxu0 %v222
    %2317 = vmatprep.subr.mxu0 %v174
    %2318 = vmatpush1.msra.mxu0 %v173
    %2319 = vmatprep.subr.mxu0 %v125
    %2320 = vmatpush1.msra.mxu0 %v124
    %2321 = vmatprep.subr.mxu0 %v76
    %2322 = vmatpush1.msra.mxu0 %v75
    %2323 = vmatprep.subr.mxu0 0.0
    %2324 = vmatpush2.msra.mxu0 0.0
    %2325 = vmatprep.subr.mxu0 0.0
    %2326 = vmatpush2.msra.mxu0 0.0
    %2327 = vmatprep.subr.mxu0 0.0
    %2328 = vmatpush2.msra.mxu0 0.0
    %2329 = vmatprep.subr.mxu0 0.0
    %2330 = vmatpush2.msra.mxu0 0.0
    %2331 = vmatprep.subr.mxu0 0.0
    %2332 = vmatpush2.msra.mxu0 0.0
    %2333 = vmatprep.subr.mxu0 0.0
    %2334 = vmatpush2.msra.mxu0 0.0
    %2335 = vmatprep.subr.mxu0 0.0
    %2336 = vmatpush2.msra.mxu0 0.0
    %2337 = vmatprep.subr.mxu0 0.0
    %2338 = vmatpush2.msra.mxu0 0.0
    %2339 = vmatprep.subr.mxu0 0.0
    %2340 = vmatpush2.msra.mxu0 0.0
    %2341 = vmatprep.subr.mxu0 0.0
    %2342 = vmatpush2.msra.mxu0 0.0
    %2343 = vmatprep.subr.mxu0 0.0
    %2344 = vmatpush2.msra.mxu0 0.0
    %2345 = vmatprep.subr.mxu0 0.0
    %2346 = vmatpush2.msra.mxu0 0.0
    %2347 = vmatprep.subr.mxu0 0.0
    %2348 = vmatpush2.msra.mxu0 0.0
    %2349 = vmatprep.subr.mxu0 0.0
    %2350 = vmatpush2.msra.mxu0 0.0
    %2351 = vmatprep.subr.mxu0 0.0
    %2352 = vmatpush2.msra.mxu0 0.0
    %2353 = vmatprep.subr.mxu0 0.0
    %2354 = vmatpush2.msra.mxu0 0.0
    %2355 = vmatprep.mubr.f32.mxu0 0.0
    %2356 = vmatmul.mubr.f32.gmra.mxu0 %v40
    %v2357 = vpop.f32.mrf.mxu0
    %v2358 = vadd.f32 %v978, %v2357
    %v2359 = vpop.f32.mrf.mxu0
    %v2360 = vadd.f32 %v982, %v2359
    %2361 = vdwg.mxu0
    %2362 = vmatprep.subr.mxu0 %v813
    %2363 = vmatpush1.msra.mxu0 %v812
    %2364 = vmatprep.subr.mxu0 %v764
    %2365 = vmatpush1.msra.mxu0 %v763
    %2366 = vmatprep.subr.mxu0 %v715
    %2367 = vmatpush1.msra.mxu0 %v714
    %2368 = vmatprep.subr.mxu0 %v666
    %2369 = vmatpush1.msra.mxu0 %v665
    %2370 = vmatprep.subr.mxu0 %v617
    %2371 = vmatpush1.msra.mxu0 %v616
    %2372 = vmatprep.subr.mxu0 %v568
    %2373 = vmatpush1.msra.mxu0 %v567
    %2374 = vmatprep.subr.mxu0 %v519
    %2375 = vmatpush1.msra.mxu0 %v518
    %2376 = vmatprep.subr.mxu0 %v470
    %2377 = vmatpush1.msra.mxu0 %v469
    %2378 = vmatprep.subr.mxu0 %v421
    %2379 = vmatpush1.msra.mxu0 %v420
    %2380 = vmatprep.subr.mxu0 %v372
    %2381 = vmatpush1.msra.mxu0 %v371
    %2382 = vmatprep.subr.mxu0 %v323
    %2383 = vmatpush1.msra.mxu0 %v322
    %2384 = vmatprep.subr.mxu0 %v274
    %2385 = vmatpush1.msra.mxu0 %v273
    %2386 = vmatprep.subr.mxu0 %v225
    %2387 = vmatpush1.msra.mxu0 %v224
    %2388 = vmatprep.subr.mxu0 %v176
    %2389 = vmatpush1.msra.mxu0 %v175
    %2390 = vmatprep.subr.mxu0 %v127
    %2391 = vmatpush1.msra.mxu0 %v126
    %2392 = vmatprep.subr.mxu0 %v78
    %2393 = vmatpush1.msra.mxu0 %v77
    %2394 = vmatprep.subr.mxu0 0.0
    %2395 = vmatpush2.msra.mxu0 0.0
    %2396 = vmatprep.subr.mxu0 0.0
    %2397 = vmatpush2.msra.mxu0 0.0
    %2398 = vmatprep.subr.mxu0 0.0
    %2399 = vmatpush2.msra.mxu0 0.0
    %2400 = vmatprep.subr.mxu0 0.0
    %2401 = vmatpush2.msra.mxu0 0.0
    %2402 = vmatprep.subr.mxu0 0.0
    %2403 = vmatpush2.msra.mxu0 0.0
    %2404 = vmatprep.subr.mxu0 0.0
    %2405 = vmatpush2.msra.mxu0 0.0
    %2406 = vmatprep.subr.mxu0 0.0
    %2407 = vmatpush2.msra.mxu0 0.0
    %2408 = vmatprep.subr.mxu0 0.0
    %2409 = vmatpush2.msra.mxu0 0.0
    %2410 = vmatprep.subr.mxu0 0.0
    %2411 = vmatpush2.msra.mxu0 0.0
    %2412 = vmatprep.subr.mxu0 0.0
    %2413 = vmatpush2.msra.mxu0 0.0
    %2414 = vmatprep.subr.mxu0 0.0
    %2415 = vmatpush2.msra.mxu0 0.0
    %2416 = vmatprep.subr.mxu0 0.0
    %2417 = vmatpush2.msra.mxu0 0.0
    %2418 = vmatprep.subr.mxu0 0.0
    %2419 = vmatpush2.msra.mxu0 0.0
    %2420 = vmatprep.subr.mxu0 0.0
    %2421 = vmatpush2.msra.mxu0 0.0
    %2422 = vmatprep.subr.mxu0 0.0
    %2423 = vmatpush2.msra.mxu0 0.0
    %2424 = vmatprep.subr.mxu0 0.0
    %2425 = vmatpush2.msra.mxu0 0.0
    %2426 = vmatprep.mubr.f32.mxu0 0.0
    %2427 = vmatmul.mubr.f32.gmra.mxu0 %v40
    %v2428 = vpop.f32.mrf.mxu0
    %v2429 = vadd.f32 %v986, %v2428
    %v2430 = vpop.f32.mrf.mxu0
    %v2431 = vadd.f32 %v990, %v2430
    %2432 = vdwg.mxu0
    %2433 = vmatprep.subr.mxu0 %v815
    %2434 = vmatpush1.msra.mxu0 %v814
    %2435 = vmatprep.subr.mxu0 %v766
    %2436 = vmatpush1.msra.mxu0 %v765
    %2437 = vmatprep.subr.mxu0 %v717
    %2438 = vmatpush1.msra.mxu0 %v716
    %2439 = vmatprep.subr.mxu0 %v668
    %2440 = vmatpush1.msra.mxu0 %v667
    %2441 = vmatprep.subr.mxu0 %v619
    %2442 = vmatpush1.msra.mxu0 %v618
    %2443 = vmatprep.subr.mxu0 %v570
    %2444 = vmatpush1.msra.mxu0 %v569
    %2445 = vmatprep.subr.mxu0 %v521
    %2446 = vmatpush1.msra.mxu0 %v520
    %2447 = vmatprep.subr.mxu0 %v472
    %2448 = vmatpush1.msra.mxu0 %v471
    %2449 = vmatprep.subr.mxu0 %v423
    %2450 = vmatpush1.msra.mxu0 %v422
    %2451 = vmatprep.subr.mxu0 %v374
    %2452 = vmatpush1.msra.mxu0 %v373
    %2453 = vmatprep.subr.mxu0 %v325
    %2454 = vmatpush1.msra.mxu0 %v324
    %2455 = vmatprep.subr.mxu0 %v276
    %2456 = vmatpush1.msra.mxu0 %v275
    %2457 = vmatprep.subr.mxu0 %v227
    %2458 = vmatpush1.msra.mxu0 %v226
    %2459 = vmatprep.subr.mxu0 %v178
    %2460 = vmatpush1.msra.mxu0 %v177
    %2461 = vmatprep.subr.mxu0 %v129
    %2462 = vmatpush1.msra.mxu0 %v128
    %2463 = vmatprep.subr.mxu0 %v80
    %2464 = vmatpush1.msra.mxu0 %v79
    %2465 = vmatprep.subr.mxu0 0.0
    %2466 = vmatpush2.msra.mxu0 0.0
    %2467 = vmatprep.subr.mxu0 0.0
    %2468 = vmatpush2.msra.mxu0 0.0
    %2469 = vmatprep.subr.mxu0 0.0
    %2470 = vmatpush2.msra.mxu0 0.0
    %2471 = vmatprep.subr.mxu0 0.0
    %2472 = vmatpush2.msra.mxu0 0.0
    %2473 = vmatprep.subr.mxu0 0.0
    %2474 = vmatpush2.msra.mxu0 0.0
    %2475 = vmatprep.subr.mxu0 0.0
    %2476 = vmatpush2.msra.mxu0 0.0
    %2477 = vmatprep.subr.mxu0 0.0
    %2478 = vmatpush2.msra.mxu0 0.0
    %2479 = vmatprep.subr.mxu0 0.0
    %2480 = vmatpush2.msra.mxu0 0.0
    %2481 = vmatprep.subr.mxu0 0.0
    %2482 = vmatpush2.msra.mxu0 0.0
    %2483 = vmatprep.subr.mxu0 0.0
    %2484 = vmatpush2.msra.mxu0 0.0
    %2485 = vmatprep.subr.mxu0 0.0
    %2486 = vmatpush2.msra.mxu0 0.0
    %2487 = vmatprep.subr.mxu0 0.0
    %2488 = vmatpush2.msra.mxu0 0.0
    %2489 = vmatprep.subr.mxu0 0.0
    %2490 = vmatpush2.msra.mxu0 0.0
    %2491 = vmatprep.subr.mxu0 0.0
    %2492 = vmatpush2.msra.mxu0 0.0
    %2493 = vmatprep.subr.mxu0 0.0
    %2494 = vmatpush2.msra.mxu0 0.0
    %2495 = vmatprep.subr.mxu0 0.0
    %2496 = vmatpush2.msra.mxu0 0.0
    %2497 = vmatprep.mubr.f32.mxu0 0.0
    %2498 = vmatmul.mubr.f32.gmra.mxu0 %v40
    %v2499 = vpop.f32.mrf.mxu0
    %v2500 = vadd.f32 %v994, %v2499
    %v2501 = vpop.f32.mrf.mxu0
    %v2502 = vadd.f32 %v998, %v2501
    %2503 = vdwg.mxu0
    %2504 = vmatprep.subr.mxu0 %v817
    %2505 = vmatpush1.msra.mxu0 %v816
    %2506 = vmatprep.subr.mxu0 %v768
    %2507 = vmatpush1.msra.mxu0 %v767
    %2508 = vmatprep.subr.mxu0 %v719
    %2509 = vmatpush1.msra.mxu0 %v718
    %2510 = vmatprep.subr.mxu0 %v670
    %2511 = vmatpush1.msra.mxu0 %v669
    %2512 = vmatprep.subr.mxu0 %v621
    %2513 = vmatpush1.msra.mxu0 %v620
    %2514 = vmatprep.subr.mxu0 %v572
    %2515 = vmatpush1.msra.mxu0 %v571
    %2516 = vmatprep.subr.mxu0 %v523
    %2517 = vmatpush1.msra.mxu0 %v522
    %2518 = vmatprep.subr.mxu0 %v474
    %2519 = vmatpush1.msra.mxu0 %v473
    %2520 = vmatprep.subr.mxu0 %v425
    %2521 = vmatpush1.msra.mxu0 %v424
    %2522 = vmatprep.subr.mxu0 %v376
    %2523 = vmatpush1.msra.mxu0 %v375
    %2524 = vmatprep.subr.mxu0 %v327
    %2525 = vmatpush1.msra.mxu0 %v326
    %2526 = vmatprep.subr.mxu0 %v278
    %2527 = vmatpush1.msra.mxu0 %v277
    %2528 = vmatprep.subr.mxu0 %v229
    %2529 = vmatpush1.msra.mxu0 %v228
    %2530 = vmatprep.subr.mxu0 %v180
    %2531 = vmatpush1.msra.mxu0 %v179
    %2532 = vmatprep.subr.mxu0 %v131
    %2533 = vmatpush1.msra.mxu0 %v130
    %2534 = vmatprep.subr.mxu0 %v82
    %2535 = vmatpush1.msra.mxu0 %v81
    %2536 = vmatprep.subr.mxu0 0.0
    %2537 = vmatpush2.msra.mxu0 0.0
    %2538 = vmatprep.subr.mxu0 0.0
    %2539 = vmatpush2.msra.mxu0 0.0
    %2540 = vmatprep.subr.mxu0 0.0
    %2541 = vmatpush2.msra.mxu0 0.0
    %2542 = vmatprep.subr.mxu0 0.0
    %2543 = vmatpush2.msra.mxu0 0.0
    %2544 = vmatprep.subr.mxu0 0.0
    %2545 = vmatpush2.msra.mxu0 0.0
    %2546 = vmatprep.subr.mxu0 0.0
    %2547 = vmatpush2.msra.mxu0 0.0
    %2548 = vmatprep.subr.mxu0 0.0
    %2549 = vmatpush2.msra.mxu0 0.0
    %2550 = vmatprep.subr.mxu0 0.0
    %2551 = vmatpush2.msra.mxu0 0.0
    %2552 = vmatprep.subr.mxu0 0.0
    %2553 = vmatpush2.msra.mxu0 0.0
    %2554 = vmatprep.subr.mxu0 0.0
    %2555 = vmatpush2.msra.mxu0 0.0
    %2556 = vmatprep.subr.mxu0 0.0
    %2557 = vmatpush2.msra.mxu0 0.0
    %2558 = vmatprep.subr.mxu0 0.0
    %2559 = vmatpush2.msra.mxu0 0.0
    %2560 = vmatprep.subr.mxu0 0.0
    %2561 = vmatpush2.msra.mxu0 0.0
    %2562 = vmatprep.subr.mxu0 0.0
    %2563 = vmatpush2.msra.mxu0 0.0
    %2564 = vmatprep.subr.mxu0 0.0
    %2565 = vmatpush2.msra.mxu0 0.0
    %2566 = vmatprep.subr.mxu0 0.0
    %2567 = vmatpush2.msra.mxu0 0.0
    %2568 = vmatprep.mubr.f32.mxu0 0.0
    %2569 = vmatmul.mubr.f32.gmra.mxu0 %v40
    %v2570 = vpop.f32.mrf.mxu0
    %v2571 = vadd.f32 %v1002, %v2570
    %v2572 = vpop.f32.mrf.mxu0
    %v2573 = vadd.f32 %v1006, %v2572
    %2574 = vdwg.mxu0
    %2575 = vmatprep.subr.mxu0 %v819
    %2576 = vmatpush1.msra.mxu0 %v818
    %2577 = vmatprep.subr.mxu0 %v770
    %2578 = vmatpush1.msra.mxu0 %v769
    %2579 = vmatprep.subr.mxu0 %v721
    %2580 = vmatpush1.msra.mxu0 %v720
    %2581 = vmatprep.subr.mxu0 %v672
    %2582 = vmatpush1.msra.mxu0 %v671
    %2583 = vmatprep.subr.mxu0 %v623
    %2584 = vmatpush1.msra.mxu0 %v622
    %2585 = vmatprep.subr.mxu0 %v574
    %2586 = vmatpush1.msra.mxu0 %v573
    %2587 = vmatprep.subr.mxu0 %v525
    %2588 = vmatpush1.msra.mxu0 %v524
    %2589 = vmatprep.subr.mxu0 %v476
    %2590 = vmatpush1.msra.mxu0 %v475
    %2591 = vmatprep.subr.mxu0 %v427
    %2592 = vmatpush1.msra.mxu0 %v426
    %2593 = vmatprep.subr.mxu0 %v378
    %2594 = vmatpush1.msra.mxu0 %v377
    %2595 = vmatprep.subr.mxu0 %v329
    %2596 = vmatpush1.msra.mxu0 %v328
    %2597 = vmatprep.subr.mxu0 %v280
    %2598 = vmatpush1.msra.mxu0 %v279
    %2599 = vmatprep.subr.mxu0 %v231
    %2600 = vmatpush1.msra.mxu0 %v230
    %2601 = vmatprep.subr.mxu0 %v182
    %2602 = vmatpush1.msra.mxu0 %v181
    %2603 = vmatprep.subr.mxu0 %v133
    %2604 = vmatpush1.msra.mxu0 %v132
    %2605 = vmatprep.subr.mxu0 %v84
    %2606 = vmatpush1.msra.mxu0 %v83
    %2607 = vmatprep.subr.mxu0 0.0
    %2608 = vmatpush2.msra.mxu0 0.0
    %2609 = vmatprep.subr.mxu0 0.0
    %2610 = vmatpush2.msra.mxu0 0.0
    %2611 = vmatprep.subr.mxu0 0.0
    %2612 = vmatpush2.msra.mxu0 0.0
    %2613 = vmatprep.subr.mxu0 0.0
    %2614 = vmatpush2.msra.mxu0 0.0
    %2615 = vmatprep.subr.mxu0 0.0
    %2616 = vmatpush2.msra.mxu0 0.0
    %2617 = vmatprep.subr.mxu0 0.0
    %2618 = vmatpush2.msra.mxu0 0.0
    %2619 = vmatprep.subr.mxu0 0.0
    %2620 = vmatpush2.msra.mxu0 0.0
    %2621 = vmatprep.subr.mxu0 0.0
    %2622 = vmatpush2.msra.mxu0 0.0
    %2623 = vmatprep.subr.mxu0 0.0
    %2624 = vmatpush2.msra.mxu0 0.0
    %2625 = vmatprep.subr.mxu0 0.0
    %2626 = vmatpush2.msra.mxu0 0.0
    %2627 = vmatprep.subr.mxu0 0.0
    %2628 = vmatpush2.msra.mxu0 0.0
    %2629 = vmatprep.subr.mxu0 0.0
    %2630 = vmatpush2.msra.mxu0 0.0
    %2631 = vmatprep.subr.mxu0 0.0
    %2632 = vmatpush2.msra.mxu0 0.0
    %2633 = vmatprep.subr.mxu0 0.0
    %2634 = vmatpush2.msra.mxu0 0.0
    %2635 = vmatprep.subr.mxu0 0.0
    %2636 = vmatpush2.msra.mxu0 0.0
    %2637 = vmatprep.subr.mxu0 0.0
    %2638 = vmatpush2.msra.mxu0 0.0
    %2639 = vmatprep.mubr.f32.mxu0 0.0
    %2640 = vmatmul.mubr.f32.gmra.mxu0 %v40
    %v2641 = vpop.f32.mrf.mxu0
    %v2642 = vadd.f32 %v1010, %v2641
    %v2643 = vpop.f32.mrf.mxu0
    %v2644 = vadd.f32 %v1014, %v2643
    %2645 = vdwg.mxu0
    %2646 = vmatprep.subr.mxu0 %v821
    %2647 = vmatpush1.msra.mxu0 %v820
    %2648 = vmatprep.subr.mxu0 %v772
    %2649 = vmatpush1.msra.mxu0 %v771
    %2650 = vmatprep.subr.mxu0 %v723
    %2651 = vmatpush1.msra.mxu0 %v722
    %2652 = vmatprep.subr.mxu0 %v674
    %2653 = vmatpush1.msra.mxu0 %v673
    %2654 = vmatprep.subr.mxu0 %v625
    %2655 = vmatpush1.msra.mxu0 %v624
    %2656 = vmatprep.subr.mxu0 %v576
    %2657 = vmatpush1.msra.mxu0 %v575
    %2658 = vmatprep.subr.mxu0 %v527
    %2659 = vmatpush1.msra.mxu0 %v526
    %2660 = vmatprep.subr.mxu0 %v478
    %2661 = vmatpush1.msra.mxu0 %v477
    %2662 = vmatprep.subr.mxu0 %v429
    %2663 = vmatpush1.msra.mxu0 %v428
    %2664 = vmatprep.subr.mxu0 %v380
    %2665 = vmatpush1.msra.mxu0 %v379
    %2666 = vmatprep.subr.mxu0 %v331
    %2667 = vmatpush1.msra.mxu0 %v330
    %2668 = vmatprep.subr.mxu0 %v282
    %2669 = vmatpush1.msra.mxu0 %v281
    %2670 = vmatprep.subr.mxu0 %v233
    %2671 = vmatpush1.msra.mxu0 %v232
    %2672 = vmatprep.subr.mxu0 %v184
    %2673 = vmatpush1.msra.mxu0 %v183
    %2674 = vmatprep.subr.mxu0 %v135
    %2675 = vmatpush1.msra.mxu0 %v134
    %2676 = vmatprep.subr.mxu0 %v86
    %2677 = vmatpush1.msra.mxu0 %v85
    %2678 = vmatprep.subr.mxu0 0.0
    %2679 = vmatpush2.msra.mxu0 0.0
    %2680 = vmatprep.subr.mxu0 0.0
    %2681 = vmatpush2.msra.mxu0 0.0
    %2682 = vmatprep.subr.mxu0 0.0
    %2683 = vmatpush2.msra.mxu0 0.0
    %2684 = vmatprep.subr.mxu0 0.0
    %2685 = vmatpush2.msra.mxu0 0.0
    %2686 = vmatprep.subr.mxu0 0.0
    %2687 = vmatpush2.msra.mxu0 0.0
    %2688 = vmatprep.subr.mxu0 0.0
    %2689 = vmatpush2.msra.mxu0 0.0
    %2690 = vmatprep.subr.mxu0 0.0
    %2691 = vmatpush2.msra.mxu0 0.0
    %2692 = vmatprep.subr.mxu0 0.0
    %2693 = vmatpush2.msra.mxu0 0.0
    %2694 = vmatprep.subr.mxu0 0.0
    %2695 = vmatpush2.msra.mxu0 0.0
    %2696 = vmatprep.subr.mxu0 0.0
    %2697 = vmatpush2.msra.mxu0 0.0
    %2698 = vmatprep.subr.mxu0 0.0
    %2699 = vmatpush2.msra.mxu0 0.0
    %2700 = vmatprep.subr.mxu0 0.0
    %2701 = vmatpush2.msra.mxu0 0.0
    %2702 = vmatprep.subr.mxu0 0.0
    %2703 = vmatpush2.msra.mxu0 0.0
    %2704 = vmatprep.subr.mxu0 0.0
    %2705 = vmatpush2.msra.mxu0 0.0
    %2706 = vmatprep.subr.mxu0 0.0
    %2707 = vmatpush2.msra.mxu0 0.0
    %2708 = vmatprep.subr.mxu0 0.0
    %2709 = vmatpush2.msra.mxu0 0.0
    %2710 = vmatprep.mubr.f32.mxu0 0.0
    %2711 = vmatmul.mubr.f32.gmra.mxu0 %v40
    %v2712 = vpop.f32.mrf.mxu0
    %v2713 = vadd.f32 %v1018, %v2712
    %v2714 = vpop.f32.mrf.mxu0
    %v2715 = vadd.f32 %v1022, %v2714
    %2716 = vdwg.mxu0
    %2717 = vmatprep.subr.mxu0 %v823
    %2718 = vmatpush1.msra.mxu0 %v822
    %2719 = vmatprep.subr.mxu0 %v774
    %2720 = vmatpush1.msra.mxu0 %v773
    %2721 = vmatprep.subr.mxu0 %v725
    %2722 = vmatpush1.msra.mxu0 %v724
    %2723 = vmatprep.subr.mxu0 %v676
    %2724 = vmatpush1.msra.mxu0 %v675
    %2725 = vmatprep.subr.mxu0 %v627
    %2726 = vmatpush1.msra.mxu0 %v626
    %2727 = vmatprep.subr.mxu0 %v578
    %2728 = vmatpush1.msra.mxu0 %v577
    %2729 = vmatprep.subr.mxu0 %v529
    %2730 = vmatpush1.msra.mxu0 %v528
    %2731 = vmatprep.subr.mxu0 %v480
    %2732 = vmatpush1.msra.mxu0 %v479
    %2733 = vmatprep.subr.mxu0 %v431
    %2734 = vmatpush1.msra.mxu0 %v430
    %2735 = vmatprep.subr.mxu0 %v382
    %2736 = vmatpush1.msra.mxu0 %v381
    %2737 = vmatprep.subr.mxu0 %v333
    %2738 = vmatpush1.msra.mxu0 %v332
    %2739 = vmatprep.subr.mxu0 %v284
    %2740 = vmatpush1.msra.mxu0 %v283
    %2741 = vmatprep.subr.mxu0 %v235
    %2742 = vmatpush1.msra.mxu0 %v234
    %2743 = vmatprep.subr.mxu0 %v186
    %2744 = vmatpush1.msra.mxu0 %v185
    %2745 = vmatprep.subr.mxu0 %v137
    %2746 = vmatpush1.msra.mxu0 %v136
    %2747 = vmatprep.subr.mxu0 %v88
    %2748 = vmatpush1.msra.mxu0 %v87
    %2749 = vmatprep.subr.mxu0 0.0
    %2750 = vmatpush2.msra.mxu0 0.0
    %2751 = vmatprep.subr.mxu0 0.0
    %2752 = vmatpush2.msra.mxu0 0.0
    %2753 = vmatprep.subr.mxu0 0.0
    %2754 = vmatpush2.msra.mxu0 0.0
    %2755 = vmatprep.subr.mxu0 0.0
    %2756 = vmatpush2.msra.mxu0 0.0
    %2757 = vmatprep.subr.mxu0 0.0
    %2758 = vmatpush2.msra.mxu0 0.0
    %2759 = vmatprep.subr.mxu0 0.0
    %2760 = vmatpush2.msra.mxu0 0.0
    %2761 = vmatprep.subr.mxu0 0.0
    %2762 = vmatpush2.msra.mxu0 0.0
    %2763 = vmatprep.subr.mxu0 0.0
    %2764 = vmatpush2.msra.mxu0 0.0
    %2765 = vmatprep.subr.mxu0 0.0
    %2766 = vmatpush2.msra.mxu0 0.0
    %2767 = vmatprep.subr.mxu0 0.0
    %2768 = vmatpush2.msra.mxu0 0.0
    %2769 = vmatprep.subr.mxu0 0.0
    %2770 = vmatpush2.msra.mxu0 0.0
    %2771 = vmatprep.subr.mxu0 0.0
    %2772 = vmatpush2.msra.mxu0 0.0
    %2773 = vmatprep.subr.mxu0 0.0
    %2774 = vmatpush2.msra.mxu0 0.0
    %2775 = vmatprep.subr.mxu0 0.0
    %2776 = vmatpush2.msra.mxu0 0.0
    %2777 = vmatprep.subr.mxu0 0.0
    %2778 = vmatpush2.msra.mxu0 0.0
    %2779 = vmatprep.subr.mxu0 0.0
    %2780 = vmatpush2.msra.mxu0 0.0
    %2781 = vmatprep.mubr.f32.mxu0 0.0
    %2782 = vmatmul.mubr.f32.gmra.mxu0 %v40
    %v2783 = vpop.f32.mrf.mxu0
    %v2784 = vadd.f32 %v1026, %v2783
    %v2785 = vpop.f32.mrf.mxu0
    %v2786 = vadd.f32 %v1030, %v2785
    %2787 = vdwg.mxu0
    %2788 = vmatprep.subr.mxu0 0.0
    %2789 = vmatpush1.msra.mxu0 %v824
    %2790 = vmatprep.subr.mxu0 0.0
    %2791 = vmatpush1.msra.mxu0 %v775
    %2792 = vmatprep.subr.mxu0 0.0
    %2793 = vmatpush1.msra.mxu0 %v726
    %2794 = vmatprep.subr.mxu0 0.0
    %2795 = vmatpush1.msra.mxu0 %v677
    %2796 = vmatprep.subr.mxu0 0.0
    %2797 = vmatpush1.msra.mxu0 %v628
    %2798 = vmatprep.subr.mxu0 0.0
    %2799 = vmatpush1.msra.mxu0 %v579
    %2800 = vmatprep.subr.mxu0 0.0
    %2801 = vmatpush1.msra.mxu0 %v530
    %2802 = vmatprep.subr.mxu0 0.0
    %2803 = vmatpush1.msra.mxu0 %v481
    %2804 = vmatprep.subr.mxu0 0.0
    %2805 = vmatpush1.msra.mxu0 %v432
    %2806 = vmatprep.subr.mxu0 0.0
    %2807 = vmatpush1.msra.mxu0 %v383
    %2808 = vmatprep.subr.mxu0 0.0
    %2809 = vmatpush1.msra.mxu0 %v334
    %2810 = vmatprep.subr.mxu0 0.0
    %2811 = vmatpush1.msra.mxu0 %v285
    %2812 = vmatprep.subr.mxu0 0.0
    %2813 = vmatpush1.msra.mxu0 %v236
    %2814 = vmatprep.subr.mxu0 0.0
    %2815 = vmatpush1.msra.mxu0 %v187
    %2816 = vmatprep.subr.mxu0 0.0
    %2817 = vmatpush1.msra.mxu0 %v138
    %2818 = vmatprep.subr.mxu0 0.0
    %2819 = vmatpush1.msra.mxu0 %v89
    %2820 = vmatprep.subr.mxu0 0.0
    %2821 = vmatpush2.msra.mxu0 0.0
    %2822 = vmatprep.subr.mxu0 0.0
    %2823 = vmatpush2.msra.mxu0 0.0
    %2824 = vmatprep.subr.mxu0 0.0
    %2825 = vmatpush2.msra.mxu0 0.0
    %2826 = vmatprep.subr.mxu0 0.0
    %2827 = vmatpush2.msra.mxu0 0.0
    %2828 = vmatprep.subr.mxu0 0.0
    %2829 = vmatpush2.msra.mxu0 0.0
    %2830 = vmatprep.subr.mxu0 0.0
    %2831 = vmatpush2.msra.mxu0 0.0
    %2832 = vmatprep.subr.mxu0 0.0
    %2833 = vmatpush2.msra.mxu0 0.0
    %2834 = vmatprep.subr.mxu0 0.0
    %2835 = vmatpush2.msra.mxu0 0.0
    %2836 = vmatprep.subr.mxu0 0.0
    %2837 = vmatpush2.msra.mxu0 0.0
    %2838 = vmatprep.subr.mxu0 0.0
    %2839 = vmatpush2.msra.mxu0 0.0
    %2840 = vmatprep.subr.mxu0 0.0
    %2841 = vmatpush2.msra.mxu0 0.0
    %2842 = vmatprep.subr.mxu0 0.0
    %2843 = vmatpush2.msra.mxu0 0.0
    %2844 = vmatprep.subr.mxu0 0.0
    %2845 = vmatpush2.msra.mxu0 0.0
    %2846 = vmatprep.subr.mxu0 0.0
    %2847 = vmatpush2.msra.mxu0 0.0
    %2848 = vmatprep.subr.mxu0 0.0
    %2849 = vmatpush2.msra.mxu0 0.0
    %2850 = vmatprep.subr.mxu0 0.0
    %2851 = vmatpush2.msra.mxu0 0.0
    %2852 = vmatprep.mubr.f32.mxu0 0.0
    %2853 = vmatmul.mubr.f32.gmra.mxu0 %v40
    %v2854 = vpop.f32.mrf.mxu0
    %v2855 = vadd.f32 %v1034, %v2854
    %v2856 = vpop.f32.mrf.mxu0
    %2857 = vdwg.mxu0
    %vm2858 = vcmp.gt.f32.partialorder %v1151, 0.0
    %vm2859 = vcmp.gt.f32.partialorder %v1153, 0.0
    %vm2860 = vcmp.gt.f32.partialorder %v1222, 0.0
    %vm2861 = vcmp.gt.f32.partialorder %v1224, 0.0
    %vm2862 = vcmp.gt.f32.partialorder %v1293, 0.0
    %vm2863 = vcmp.gt.f32.partialorder %v1295, 0.0
    %vm2864 = vcmp.gt.f32.partialorder %v1364, 0.0
    %vm2865 = vcmp.gt.f32.partialorder %v1366, 0.0
    %vm2866 = vcmp.gt.f32.partialorder %v1435, 0.0
    %vm2867 = vcmp.gt.f32.partialorder %v1437, 0.0
    %vm2868 = vcmp.gt.f32.partialorder %v1506, 0.0
    %vm2869 = vcmp.gt.f32.partialorder %v1508, 0.0
    %vm2870 = vcmp.gt.f32.partialorder %v1577, 0.0
    %vm2871 = vcmp.gt.f32.partialorder %v1579, 0.0
    %vm2872 = vcmp.gt.f32.partialorder %v1648, 0.0
    %vm2873 = vcmp.gt.f32.partialorder %v1650, 0.0
    %vm2874 = vcmp.gt.f32.partialorder %v1719, 0.0
    %vm2875 = vcmp.gt.f32.partialorder %v1721, 0.0
    %vm2876 = vcmp.gt.f32.partialorder %v1790, 0.0
    %vm2877 = vcmp.gt.f32.partialorder %v1792, 0.0
    %vm2878 = vcmp.gt.f32.partialorder %v1861, 0.0
    %vm2879 = vcmp.gt.f32.partialorder %v1863, 0.0
    %vm2880 = vcmp.gt.f32.partialorder %v1932, 0.0
    %vm2881 = vcmp.gt.f32.partialorder %v1934, 0.0
    %vm2882 = vcmp.gt.f32.partialorder %v2003, 0.0
    %vm2883 = vcmp.gt.f32.partialorder %v2005, 0.0
    %vm2884 = vcmp.gt.f32.partialorder %v2074, 0.0
    %vm2885 = vcmp.gt.f32.partialorder %v2076, 0.0
    %vm2886 = vcmp.gt.f32.partialorder %v2145, 0.0
    %vm2887 = vcmp.gt.f32.partialorder %v2147, 0.0
    %vm2888 = vcmp.gt.f32.partialorder %v2216, 0.0
    %vm2889 = vcmp.gt.f32.partialorder %v2218, 0.0
    %vm2890 = vcmp.gt.f32.partialorder %v2287, 0.0
    %vm2891 = vcmp.gt.f32.partialorder %v2289, 0.0
    %vm2892 = vcmp.gt.f32.partialorder %v2358, 0.0
    %vm2893 = vcmp.gt.f32.partialorder %v2360, 0.0
    %vm2894 = vcmp.gt.f32.partialorder %v2429, 0.0
    %vm2895 = vcmp.gt.f32.partialorder %v2431, 0.0
    %vm2896 = vcmp.gt.f32.partialorder %v2500, 0.0
    %vm2897 = vcmp.gt.f32.partialorder %v2502, 0.0
    %vm2898 = vcmp.gt.f32.partialorder %v2571, 0.0
    %vm2899 = vcmp.gt.f32.partialorder %v2573, 0.0
    %vm2900 = vcmp.gt.f32.partialorder %v2642, 0.0
    %vm2901 = vcmp.gt.f32.partialorder %v2644, 0.0
    %vm2902 = vcmp.gt.f32.partialorder %v2713, 0.0
    %vm2903 = vcmp.gt.f32.partialorder %v2715, 0.0
    %vm2904 = vcmp.gt.f32.partialorder %v2784, 0.0
    %vm2905 = vcmp.gt.f32.partialorder %v2786, 0.0
    %vm2906 = vcmp.gt.f32.partialorder %v2855, 0.0
    %v2907 = vmul.f32 %v1151, 0.2
    %v2908 = vmul.f32 %v1153, 0.2
    %v2909 = vmul.f32 %v1222, 0.2
    %v2910 = vmul.f32 %v1224, 0.2
    %v2911 = vmul.f32 %v1293, 0.2
    %v2912 = vmul.f32 %v1295, 0.2
    %v2913 = vmul.f32 %v1364, 0.2
    %v2914 = vmul.f32 %v1366, 0.2
    %v2915 = vmul.f32 %v1435, 0.2
    %v2916 = vmul.f32 %v1437, 0.2
    %v2917 = vmul.f32 %v1506, 0.2
    %v2918 = vmul.f32 %v1508, 0.2
    %v2919 = vmul.f32 %v1577, 0.2
    %v2920 = vmul.f32 %v1579, 0.2
    %v2921 = vmul.f32 %v1648, 0.2
    %v2922 = vmul.f32 %v1650, 0.2
    %v2923 = vmul.f32 %v1719, 0.2
    %v2924 = vmul.f32 %v1721, 0.2
    %v2925 = vmul.f32 %v1790, 0.2
    %v2926 = vmul.f32 %v1792, 0.2
    %v2927 = vmul.f32 %v1861, 0.2
    %v2928 = vmul.f32 %v1863, 0.2
    %v2929 = vmul.f32 %v1932, 0.2
    %v2930 = vmul.f32 %v1934, 0.2
    %v2931 = vmul.f32 %v2003, 0.2
    %v2932 = vmul.f32 %v2005, 0.2
    %v2933 = vmul.f32 %v2074, 0.2
    %v2934 = vmul.f32 %v2076, 0.2
    %v2935 = vmul.f32 %v2145, 0.2
    %v2936 = vmul.f32 %v2147, 0.2
    %v2937 = vmul.f32 %v2216, 0.2
    %v2938 = vmul.f32 %v2218, 0.2
    %v2939 = vmul.f32 %v2287, 0.2
    %v2940 = vmul.f32 %v2289, 0.2
    %v2941 = vmul.f32 %v2358, 0.2
    %v2942 = vmul.f32 %v2360, 0.2
    %v2943 = vmul.f32 %v2429, 0.2
    %v2944 = vmul.f32 %v2431, 0.2
    %v2945 = vmul.f32 %v2500, 0.2
    %v2946 = vmul.f32 %v2502, 0.2
    %v2947 = vmul.f32 %v2571, 0.2
    %v2948 = vmul.f32 %v2573, 0.2
    %v2949 = vmul.f32 %v2642, 0.2
    %v2950 = vmul.f32 %v2644, 0.2
    %v2951 = vmul.f32 %v2713, 0.2
    %v2952 = vmul.f32 %v2715, 0.2
    %v2953 = vmul.f32 %v2784, 0.2
    %v2954 = vmul.f32 %v2786, 0.2
    %v2955 = vmul.f32 %v2855, 0.2
    %v2956 = vsel %vm2858, %v1151, %v2907
    %v2957 = vsel %vm2859, %v1153, %v2908
    %v2958 = vsel %vm2860, %v1222, %v2909
    %v2959 = vsel %vm2861, %v1224, %v2910
    %v2960 = vsel %vm2862, %v1293, %v2911
    %v2961 = vsel %vm2863, %v1295, %v2912
    %v2962 = vsel %vm2864, %v1364, %v2913
    %v2963 = vsel %vm2865, %v1366, %v2914
    %v2964 = vsel %vm2866, %v1435, %v2915
    %v2965 = vsel %vm2867, %v1437, %v2916
    %v2966 = vsel %vm2868, %v1506, %v2917
    %v2967 = vsel %vm2869, %v1508, %v2918
    %v2968 = vsel %vm2870, %v1577, %v2919
    %v2969 = vsel %vm2871, %v1579, %v2920
    %v2970 = vsel %vm2872, %v1648, %v2921
    %v2971 = vsel %vm2873, %v1650, %v2922
    %v2972 = vsel %vm2874, %v1719, %v2923
    %v2973 = vsel %vm2875, %v1721, %v2924
    %v2974 = vsel %vm2876, %v1790, %v2925
    %v2975 = vsel %vm2877, %v1792, %v2926
    %v2976 = vsel %vm2878, %v1861, %v2927
    %v2977 = vsel %vm2879, %v1863, %v2928
    %v2978 = vsel %vm2880, %v1932, %v2929
    %v2979 = vsel %vm2881, %v1934, %v2930
    %v2980 = vsel %vm2882, %v2003, %v2931
    %v2981 = vsel %vm2883, %v2005, %v2932
    %v2982 = vsel %vm2884, %v2074, %v2933
    %v2983 = vsel %vm2885, %v2076, %v2934
    %v2984 = vsel %vm2886, %v2145, %v2935
    %v2985 = vsel %vm2887, %v2147, %v2936
    %v2986 = vsel %vm2888, %v2216, %v2937
    %v2987 = vsel %vm2889, %v2218, %v2938
    %v2988 = vsel %vm2890, %v2287, %v2939
    %v2989 = vsel %vm2891, %v2289, %v2940
    %v2990 = vsel %vm2892, %v2358, %v2941
    %v2991 = vsel %vm2893, %v2360, %v2942
    %v2992 = vsel %vm2894, %v2429, %v2943
    %v2993 = vsel %vm2895, %v2431, %v2944
    %v2994 = vsel %vm2896, %v2500, %v2945
    %v2995 = vsel %vm2897, %v2502, %v2946
    %v2996 = vsel %vm2898, %v2571, %v2947
    %v2997 = vsel %vm2899, %v2573, %v2948
    %v2998 = vsel %vm2900, %v2642, %v2949
    %v2999 = vsel %vm2901, %v2644, %v2950
    %v3000 = vsel %vm2902, %v2713, %v2951
    %v3001 = vsel %vm2903, %v2715, %v2952
    %v3002 = vsel %vm2904, %v2784, %v2953
    %v3003 = vsel %vm2905, %v2786, %v2954
    %v3004 = vsel %vm2906, %v2855, %v2955
    %v3054 = vcombine.low %v2956, %v2957
    %v3055 = vcombine.low %v2958, %v2959
    %v3057 = vunpack.c.l.s4 1983009808
    %v3058 = vunpack.c.0.s8 %v3057
    %v3059 = vlaneseq
    %v3060 = vshrl.u32 %v3059, 7
    %v3061 = vsub.s32 %v3058, %v3060
    %v3062 = vrot.slane %v3054, %v3061
    %v3064 = vunpack.c.l.s4 1983009808
    %v3065 = vunpack.c.0.s8 %v3064
    %v3066 = vlaneseq
    %v3067 = vshrl.u32 %v3066, 7
    %v3068 = vsub.s32 %v3065, %v3067
    %v3069 = vrot.slane %v3055, %v3068
    %v3070 = vcombine.low %v3062, %v3069
    %v3071 = vcombine.low %v2960, %v2961
    %v3072 = vcombine.low %v2962, %v2963
    %v3074 = vunpack.c.l.s4 1983009808
    %v3075 = vunpack.c.0.s8 %v3074
    %v3076 = vlaneseq
    %v3077 = vshrl.u32 %v3076, 7
    %v3078 = vsub.s32 %v3075, %v3077
    %v3079 = vrot.slane %v3071, %v3078
    %v3081 = vunpack.c.l.s4 1983009808
    %v3082 = vunpack.c.0.s8 %v3081
    %v3083 = vlaneseq
    %v3084 = vshrl.u32 %v3083, 7
    %v3085 = vsub.s32 %v3082, %v3084
    %v3086 = vrot.slane %v3072, %v3085
    %v3087 = vcombine.low %v3079, %v3086
    %v3088 = vcombine.low %v2964, %v2965
    %v3089 = vcombine.low %v2966, %v2967
    %v3091 = vunpack.c.l.s4 1983009808
    %v3092 = vunpack.c.0.s8 %v3091
    %v3093 = vlaneseq
    %v3094 = vshrl.u32 %v3093, 7
    %v3095 = vsub.s32 %v3092, %v3094
    %v3096 = vrot.slane %v3088, %v3095
    %v3098 = vunpack.c.l.s4 1983009808
    %v3099 = vunpack.c.0.s8 %v3098
    %v3100 = vlaneseq
    %v3101 = vshrl.u32 %v3100, 7
    %v3102 = vsub.s32 %v3099, %v3101
    %v3103 = vrot.slane %v3089, %v3102
    %v3104 = vcombine.low %v3096, %v3103
    %v3105 = vcombine.low %v2968, %v2969
    %v3106 = vcombine.low %v2970, %v2971
    %v3108 = vunpack.c.l.s4 1983009808
    %v3109 = vunpack.c.0.s8 %v3108
    %v3110 = vlaneseq
    %v3111 = vshrl.u32 %v3110, 7
    %v3112 = vsub.s32 %v3109, %v3111
    %v3113 = vrot.slane %v3105, %v3112
    %v3115 = vunpack.c.l.s4 1983009808
    %v3116 = vunpack.c.0.s8 %v3115
    %v3117 = vlaneseq
    %v3118 = vshrl.u32 %v3117, 7
    %v3119 = vsub.s32 %v3116, %v3118
    %v3120 = vrot.slane %v3106, %v3119
    %v3121 = vcombine.low %v3113, %v3120
    %v3122 = vcombine.low %v2972, %v2973
    %v3123 = vcombine.low %v2974, %v2975
    %v3125 = vunpack.c.l.s4 1983009808
    %v3126 = vunpack.c.0.s8 %v3125
    %v3127 = vlaneseq
    %v3128 = vshrl.u32 %v3127, 7
    %v3129 = vsub.s32 %v3126, %v3128
    %v3130 = vrot.slane %v3122, %v3129
    %v3132 = vunpack.c.l.s4 1983009808
    %v3133 = vunpack.c.0.s8 %v3132
    %v3134 = vlaneseq
    %v3135 = vshrl.u32 %v3134, 7
    %v3136 = vsub.s32 %v3133, %v3135
    %v3137 = vrot.slane %v3123, %v3136
    %v3138 = vcombine.low %v3130, %v3137
    %v3139 = vcombine.low %v2976, %v2977
    %v3140 = vcombine.low %v2978, %v2979
    %v3142 = vunpack.c.l.s4 1983009808
    %v3143 = vunpack.c.0.s8 %v3142
    %v3144 = vlaneseq
    %v3145 = vshrl.u32 %v3144, 7
    %v3146 = vsub.s32 %v3143, %v3145
    %v3147 = vrot.slane %v3139, %v3146
    %v3149 = vunpack.c.l.s4 1983009808
    %v3150 = vunpack.c.0.s8 %v3149
    %v3151 = vlaneseq
    %v3152 = vshrl.u32 %v3151, 7
    %v3153 = vsub.s32 %v3150, %v3152
    %v3154 = vrot.slane %v3140, %v3153
    %v3155 = vcombine.low %v3147, %v3154
    %v3156 = vcombine.low %v2980, %v2981
    %v3157 = vcombine.low %v2982, %v2983
    %v3159 = vunpack.c.l.s4 1983009808
    %v3160 = vunpack.c.0.s8 %v3159
    %v3161 = vlaneseq
    %v3162 = vshrl.u32 %v3161, 7
    %v3163 = vsub.s32 %v3160, %v3162
    %v3164 = vrot.slane %v3156, %v3163
    %v3166 = vunpack.c.l.s4 1983009808
    %v3167 = vunpack.c.0.s8 %v3166
    %v3168 = vlaneseq
    %v3169 = vshrl.u32 %v3168, 7
    %v3170 = vsub.s32 %v3167, %v3169
    %v3171 = vrot.slane %v3157, %v3170
    %v3172 = vcombine.low %v3164, %v3171
    %v3173 = vcombine.low %v2984, %v2985
    %v3174 = vcombine.low %v2986, %v2987
    %v3176 = vunpack.c.l.s4 1983009808
    %v3177 = vunpack.c.0.s8 %v3176
    %v3178 = vlaneseq
    %v3179 = vshrl.u32 %v3178, 7
    %v3180 = vsub.s32 %v3177, %v3179
    %v3181 = vrot.slane %v3173, %v3180
    %v3183 = vunpack.c.l.s4 1983009808
    %v3184 = vunpack.c.0.s8 %v3183
    %v3185 = vlaneseq
    %v3186 = vshrl.u32 %v3185, 7
    %v3187 = vsub.s32 %v3184, %v3186
    %v3188 = vrot.slane %v3174, %v3187
    %v3189 = vcombine.low %v3181, %v3188
    %v3190 = vcombine.low %v2988, %v2989
    %v3191 = vcombine.low %v2990, %v2991
    %v3193 = vunpack.c.l.s4 1983009808
    %v3194 = vunpack.c.0.s8 %v3193
    %v3195 = vlaneseq
    %v3196 = vshrl.u32 %v3195, 7
    %v3197 = vsub.s32 %v3194, %v3196
    %v3198 = vrot.slane %v3190, %v3197
    %v3200 = vunpack.c.l.s4 1983009808
    %v3201 = vunpack.c.0.s8 %v3200
    %v3202 = vlaneseq
    %v3203 = vshrl.u32 %v3202, 7
    %v3204 = vsub.s32 %v3201, %v3203
    %v3205 = vrot.slane %v3191, %v3204
    %v3206 = vcombine.low %v3198, %v3205
    %v3207 = vcombine.low %v2992, %v2993
    %v3208 = vcombine.low %v2994, %v2995
    %v3210 = vunpack.c.l.s4 1983009808
    %v3211 = vunpack.c.0.s8 %v3210
    %v3212 = vlaneseq
    %v3213 = vshrl.u32 %v3212, 7
    %v3214 = vsub.s32 %v3211, %v3213
    %v3215 = vrot.slane %v3207, %v3214
    %v3217 = vunpack.c.l.s4 1983009808
    %v3218 = vunpack.c.0.s8 %v3217
    %v3219 = vlaneseq
    %v3220 = vshrl.u32 %v3219, 7
    %v3221 = vsub.s32 %v3218, %v3220
    %v3222 = vrot.slane %v3208, %v3221
    %v3223 = vcombine.low %v3215, %v3222
    %v3224 = vcombine.low %v2996, %v2997
    %v3225 = vcombine.low %v2998, %v2999
    %v3227 = vunpack.c.l.s4 1983009808
    %v3228 = vunpack.c.0.s8 %v3227
    %v3229 = vlaneseq
    %v3230 = vshrl.u32 %v3229, 7
    %v3231 = vsub.s32 %v3228, %v3230
    %v3232 = vrot.slane %v3224, %v3231
    %v3234 = vunpack.c.l.s4 1983009808
    %v3235 = vunpack.c.0.s8 %v3234
    %v3236 = vlaneseq
    %v3237 = vshrl.u32 %v3236, 7
    %v3238 = vsub.s32 %v3235, %v3237
    %v3239 = vrot.slane %v3225, %v3238
    %v3240 = vcombine.low %v3232, %v3239
    %v3241 = vcombine.low %v3000, %v3001
    %v3242 = vcombine.low %v3002, %v3003
    %v3244 = vunpack.c.l.s4 1983009808
    %v3245 = vunpack.c.0.s8 %v3244
    %v3246 = vlaneseq
    %v3247 = vshrl.u32 %v3246, 7
    %v3248 = vsub.s32 %v3245, %v3247
    %v3249 = vrot.slane %v3241, %v3248
    %v3251 = vunpack.c.l.s4 1983009808
    %v3252 = vunpack.c.0.s8 %v3251
    %v3253 = vlaneseq
    %v3254 = vshrl.u32 %v3253, 7
    %v3255 = vsub.s32 %v3252, %v3254
    %v3256 = vrot.slane %v3242, %v3255
    %v3257 = vcombine.low %v3249, %v3256
    %v3259 = vunpack.c.l.s4 1983009808
    %v3260 = vunpack.c.0.s8 %v3259
    %v3261 = vlaneseq
    %v3262 = vshrl.u32 %v3261, 7
    %v3263 = vsub.s32 %v3260, %v3262
    %v3264 = vrot.slane %v3004, %v3263
    %3278 = vst [vmem:[%s3] sm:$0xff] %v3070
    %3279 = vst [vmem:[%s3 + $0x8] sm:$0xff] %v3087
    %3280 = vst [vmem:[%s3 + $0x10] sm:$0xff] %v3104
    %3281 = vst [vmem:[%s3 + $0x18] sm:$0xff] %v3121
    %3282 = vst [vmem:[%s3 + $0x20] sm:$0xff] %v3138
    %3283 = vst [vmem:[%s3 + $0x28] sm:$0xff] %v3155
    %3284 = vst [vmem:[%s3 + $0x30] sm:$0xff] %v3172
    %3285 = vst [vmem:[%s3 + $0x38] sm:$0xff] %v3189
    %3286 = vst [vmem:[%s3 + $0x40] sm:$0xff] %v3206
    %3287 = vst [vmem:[%s3 + $0x48] sm:$0xff] %v3223
    %3288 = vst [vmem:[%s3 + $0x50] sm:$0xff] %v3240
    %3289 = vst [vmem:[%s3 + $0x58] sm:$0xff] %v3257
    %3290 = vst [vmem:[%s3 + $0x60] sm:$0x3] %v3264
    // Predicated region
    $region22: #{dcgan_generator_forward.2} parent=1 // pred_check
      _
    $region23: #{dcgan_generator_forward.2} parent=1 // pred_check_branch
      %3292 = sbr.rel (0) target = $region25
    $region24: #{dcgan_generator_forward.2} parent=1 // pred_region
      _
    $region25: #{dcgan_generator_forward.2} parent=1 // pred_fallthru
      _
    // Predicated region
    $region26: #{dcgan_generator_forward.2} parent=1 // pred_check
      _
    $region27: #{dcgan_generator_forward.2} parent=1 // pred_check_branch
      %3294 = sbr.rel (0) target = $region29
    $region28: #{dcgan_generator_forward.2} parent=1 // pred_region
      _
    $region29: #{dcgan_generator_forward.2} parent=1 // pred_fallthru
      _
    %3295 = vsyncpa [#allocation3], 1
    %3296 = vsyncpa [#allocation5], 1

// kernel: dcgan_generator_forward.3
$region0: #{dcgan_generator_forward.3}
  #allocation0 [shape = 'u32[]', space=smem, size = 0x4, offset = 0x4, fixed_abs, tag = 'smem constant byte address 0x4 - core index']
  #allocation1 [shape = 'u32[144,128]{1,0:T(1,128)}', space=vmem, size = 0x12000, scoped, tag = 'internal scratch']
  #allocation2 [shape = 'f32[1,1]{1,0:T(1,128)S(1)}', space=vmem, size = 0x200, scoped, tag = 'scoped memory for dcgan_generator_forward.3']
  %s0 = inlined_call_operand.vmem [shape: f32[2,128,49], index: 0, kind: input, shape index: {}]
  %s1 = inlined_call_operand.vmem [shape: f32[25,49,196], index: 1, kind: input, shape index: {}]
  %s2 = inlined_call_operand.vmem [shape: f32[1600,128], index: 2, kind: input, shape index: {}]
  %s3 = inlined_call_operand.vmem [shape: f32[64,1], index: 3, kind: input, shape index: {}]
  %s4 = inlined_call_operand.vmem [shape: f32[196,1056], index: 4, kind: input, shape index: {}]
  %s5 = inlined_call_operand.vmem [shape: f32[25,64], index: 5, kind: input, shape index: {}]
  %s6 = inlined_call_operand.<no memory space> [shape: f32[1,1], index: 6, kind: input, shape index: {}]
  %s7 = inlined_call_operand.vmem [shape: f32[2,1,896], index: 7, kind: output, shape index: {}]
  %s8 = sld [smem:[#allocation0]]
  $region61: #{dcgan_generator_forward.3} parent=0
    _
  %s10 = ssub.s32 1, %s8
  %s11 = scalar_select 0, %s10, %s8
  %v12 = vstv %s6
  %13 = vst [vmem:[#allocation2] sm:$0x1] %v12
  loop: start=0, step=1, limit=4
  $region2: #{dcgan_generator_forward.3} parent=0 // loop_pre_header
    _
  $region3: #{dcgan_generator_forward.3} parent=0 // loop_header
    %s15 = sphi 0, %s19
    %p16 = scmp.ge.s32.totalorder %s15, 4
    %s25 = sphi 0, %s27
    %s28 = sphi 0, %s25
    %s29 = sphi 0, %s28
    %s45 = sphi 0, %s29
    %s49 = sphi 0, %s49
    %s51 = sphi 0, %s49
    %s52 = sphi 0, %s51
    %s66 = sphi 0, %s52
    %s70 = sphi 0, %s70
    %s72 = sphi 0, %s70
    %s73 = sphi 0, %s72
    %s87 = sphi 0, %s73
    %s91 = sphi 0, %s91
    %s93 = sphi 0, %s91
    %s94 = sphi 0, %s93
    %s108 = sphi 0, %s94
    %s112 = sphi 0, %s112
    %s114 = sphi 0, %s112
    %s115 = sphi 0, %s114
    %s129 = sphi 0, %s115
    %s133 = sphi 0, %s133
    %s135 = sphi 0, %s133
    %s136 = sphi 0, %s135
    %s150 = sphi 0, %s136
    %s154 = sphi 0, %s154
    %s156 = sphi 0, %s154
    %s157 = sphi 0, %s156
    %s171 = sphi 0, %s157
    %s177 = sphi 0, %s179
    %s180 = sphi 0, %s177
    %s181 = sphi 0, %s180
    %s197 = sphi 0, %s181
  $region4: #{dcgan_generator_forward.3} parent=0 // loop_header_branch
    %18 = sbr.rel (%p16) target = $region8
  $region5: #{dcgan_generator_forward.3} parent=0 // loop_body
    %s20 = ssub.s32 %s15, 1
    %s21 = ssub.s32 %s15, 2
    %s22 = sadd.s32 %s15, 1
    %s23 = ssub.s32 %s15, %s22
    %p24 = scmp.eq.s32.totalorder %s23, 0
    %s26 = sadd.s32 %s25, 1
    %s27 = scalar_select %p24, %s25, %s26
    %p30 = pneg %p24
    %p31 = scmp.eq.s32.totalorder %s15, 1
    %p32 = por %p30, %p31
    %p33 = scmp.ne.s32.totalorder %s25, %s28
    %p34 = scmp.eq.s32.totalorder %s15, 0
    %p35 = por %p33, %p34
    %p36 = scmp.ne.s32.totalorder %s25, %s28
    %p37 = scmp.eq.s32.totalorder %s20, 1
    %p38 = por %p36, %p37
    %p39 = scmp.ne.s32.totalorder %s28, %s29
    %p40 = scmp.eq.s32.totalorder %s20, 0
    %p41 = por %p39, %p40
    %p42 = scmp.ne.s32.totalorder %s28, %s29
    %p43 = scmp.eq.s32.totalorder %s21, 1
    %p44 = por %p42, %p43
    %p46 = scmp.ne.s32.totalorder %s29, %s45
    %p47 = scmp.eq.s32.totalorder %s21, 0
    %p48 = por %p46, %p47
    %s50 = sadd.s32 %s49, 1
    %p53 = scmp.eq.s32.totalorder %s15, 1
    %p54 = scmp.ne.s32.totalorder %s49, %s51
    %p55 = scmp.eq.s32.totalorder %s15, 0
    %p56 = por %p54, %p55
    %p57 = scmp.ne.s32.totalorder %s49, %s51
    %p58 = scmp.eq.s32.totalorder %s20, 1
    %p59 = por %p57, %p58
    %p60 = scmp.ne.s32.totalorder %s51, %s52
    %p61 = scmp.eq.s32.totalorder %s20, 0
    %p62 = por %p60, %p61
    %p63 = scmp.ne.s32.totalorder %s51, %s52
    %p64 = scmp.eq.s32.totalorder %s21, 1
    %p65 = por %p63, %p64
    %p67 = scmp.ne.s32.totalorder %s52, %s66
    %p68 = scmp.eq.s32.totalorder %s21, 0
    %p69 = por %p67, %p68
    %s71 = sadd.s32 %s70, 1
    %p74 = scmp.eq.s32.totalorder %s15, 1
    %p75 = scmp.ne.s32.totalorder %s70, %s72
    %p76 = scmp.eq.s32.totalorder %s15, 0
    %p77 = por %p75, %p76
    %p78 = scmp.ne.s32.totalorder %s70, %s72
    %p79 = scmp.eq.s32.totalorder %s20, 1
    %p80 = por %p78, %p79
    %p81 = scmp.ne.s32.totalorder %s72, %s73
    %p82 = scmp.eq.s32.totalorder %s20, 0
    %p83 = por %p81, %p82
    %p84 = scmp.ne.s32.totalorder %s72, %s73
    %p85 = scmp.eq.s32.totalorder %s21, 1
    %p86 = por %p84, %p85
    %p88 = scmp.ne.s32.totalorder %s73, %s87
    %p89 = scmp.eq.s32.totalorder %s21, 0
    %p90 = por %p88, %p89
    %s92 = sadd.s32 %s91, 1
    %p95 = scmp.eq.s32.totalorder %s15, 1
    %p96 = scmp.ne.s32.totalorder %s91, %s93
    %p97 = scmp.eq.s32.totalorder %s15, 0
    %p98 = por %p96, %p97
    %p99 = scmp.ne.s32.totalorder %s91, %s93
    %p100 = scmp.eq.s32.totalorder %s20, 1
    %p101 = por %p99, %p100
    %p102 = scmp.ne.s32.totalorder %s93, %s94
    %p103 = scmp.eq.s32.totalorder %s20, 0
    %p104 = por %p102, %p103
    %p105 = scmp.ne.s32.totalorder %s93, %s94
    %p106 = scmp.eq.s32.totalorder %s21, 1
    %p107 = por %p105, %p106
    %p109 = scmp.ne.s32.totalorder %s94, %s108
    %p110 = scmp.eq.s32.totalorder %s21, 0
    %p111 = por %p109, %p110
    %s113 = sadd.s32 %s112, 1
    %p116 = scmp.eq.s32.totalorder %s15, 1
    %p117 = scmp.ne.s32.totalorder %s112, %s114
    %p118 = scmp.eq.s32.totalorder %s15, 0
    %p119 = por %p117, %p118
    %p120 = scmp.ne.s32.totalorder %s112, %s114
    %p121 = scmp.eq.s32.totalorder %s20, 1
    %p122 = por %p120, %p121
    %p123 = scmp.ne.s32.totalorder %s114, %s115
    %p124 = scmp.eq.s32.totalorder %s20, 0
    %p125 = por %p123, %p124
    %p126 = scmp.ne.s32.totalorder %s114, %s115
    %p127 = scmp.eq.s32.totalorder %s21, 1
    %p128 = por %p126, %p127
    %p130 = scmp.ne.s32.totalorder %s115, %s129
    %p131 = scmp.eq.s32.totalorder %s21, 0
    %p132 = por %p130, %p131
    %s134 = sadd.s32 %s133, 1
    %p137 = scmp.eq.s32.totalorder %s15, 1
    %p138 = scmp.ne.s32.totalorder %s133, %s135
    %p139 = scmp.eq.s32.totalorder %s15, 0
    %p140 = por %p138, %p139
    %p141 = scmp.ne.s32.totalorder %s133, %s135
    %p142 = scmp.eq.s32.totalorder %s20, 1
    %p143 = por %p141, %p142
    %p144 = scmp.ne.s32.totalorder %s135, %s136
    %p145 = scmp.eq.s32.totalorder %s20, 0
    %p146 = por %p144, %p145
    %p147 = scmp.ne.s32.totalorder %s135, %s136
    %p148 = scmp.eq.s32.totalorder %s21, 1
    %p149 = por %p147, %p148
    %p151 = scmp.ne.s32.totalorder %s136, %s150
    %p152 = scmp.eq.s32.totalorder %s21, 0
    %p153 = por %p151, %p152
    %s155 = sadd.s32 %s154, 1
    %p158 = scmp.eq.s32.totalorder %s15, 1
    %p159 = scmp.ne.s32.totalorder %s154, %s156
    %p160 = scmp.eq.s32.totalorder %s15, 0
    %p161 = por %p159, %p160
    %p162 = scmp.ne.s32.totalorder %s154, %s156
    %p163 = scmp.eq.s32.totalorder %s20, 1
    %p164 = por %p162, %p163
    %p165 = scmp.ne.s32.totalorder %s156, %s157
    %p166 = scmp.eq.s32.totalorder %s20, 0
    %p167 = por %p165, %p166
    %p168 = scmp.ne.s32.totalorder %s156, %s157
    %p169 = scmp.eq.s32.totalorder %s21, 1
    %p170 = por %p168, %p169
    %p172 = scmp.ne.s32.totalorder %s157, %s171
    %p173 = scmp.eq.s32.totalorder %s21, 0
    %p174 = por %p172, %p173
    %s175 = ssub.s32 %s15, %s22
    %p176 = scmp.eq.s32.totalorder %s175, 0
    %s178 = sadd.s32 %s177, 1
    %s179 = scalar_select %p176, %s177, %s178
    %p182 = pneg %p176
    %p183 = scmp.eq.s32.totalorder %s15, 1
    %p184 = por %p182, %p183
    %p185 = scmp.ne.s32.totalorder %s177, %s180
    %p186 = scmp.eq.s32.totalorder %s15, 0
    %p187 = por %p185, %p186
    %p188 = scmp.ne.s32.totalorder %s177, %s180
    %p189 = scmp.eq.s32.totalorder %s20, 1
    %p190 = por %p188, %p189
    %p191 = scmp.ne.s32.totalorder %s180, %s181
    %p192 = scmp.eq.s32.totalorder %s20, 0
    %p193 = por %p191, %p192
    %p194 = scmp.ne.s32.totalorder %s180, %s181
    %p195 = scmp.eq.s32.totalorder %s21, 1
    %p196 = por %p194, %p195
    %p198 = scmp.ne.s32.totalorder %s181, %s197
    %p199 = scmp.eq.s32.totalorder %s21, 0
    %p200 = por %p198, %p199
    %p201 = scmp.le.s32.totalorder 1, %s15
    %p202 = scmp.lt.s32.totalorder %s15, 3
    %p203 = pnand %p201, %p202
    %p204 = pneg %p203
    // Predicated region
    $region9: #{dcgan_generator_forward.3} parent=5 // pred_check
      _
    $region10: #{dcgan_generator_forward.3} parent=5 // pred_check_branch
      %206 = sbr.rel (%p203) target = $region12
    $region11: #{dcgan_generator_forward.3} parent=5 // pred_region
      %s207 = ssub.s32 %s15, 1
      // Predicated region
      $region13: #{dcgan_generator_forward.3} parent=11 // pred_check
        %p208 = pneg %p62
      $region14: #{dcgan_generator_forward.3} parent=11 // pred_check_branch
        %210 = sbr.rel (%p208) target = $region16
      $region15: #{dcgan_generator_forward.3} parent=11 // pred_region
        _
      $region16: #{dcgan_generator_forward.3} parent=11 // pred_fallthru
        _
      // Predicated region
      $region17: #{dcgan_generator_forward.3} parent=11 // pred_check
        %p211 = pneg %p83
      $region18: #{dcgan_generator_forward.3} parent=11 // pred_check_branch
        %213 = sbr.rel (%p211) target = $region20
      $region19: #{dcgan_generator_forward.3} parent=11 // pred_region
        _
      $region20: #{dcgan_generator_forward.3} parent=11 // pred_fallthru
        _
      // Predicated region
      $region21: #{dcgan_generator_forward.3} parent=11 // pred_check
        %p214 = pneg %p104
      $region22: #{dcgan_generator_forward.3} parent=11 // pred_check_branch
        %216 = sbr.rel (%p214) target = $region24
      $region23: #{dcgan_generator_forward.3} parent=11 // pred_region
        _
      $region24: #{dcgan_generator_forward.3} parent=11 // pred_fallthru
        _
      // Predicated region
      $region25: #{dcgan_generator_forward.3} parent=11 // pred_check
        %p217 = pneg %p125
      $region26: #{dcgan_generator_forward.3} parent=11 // pred_check_branch
        %219 = sbr.rel (%p217) target = $region28
      $region27: #{dcgan_generator_forward.3} parent=11 // pred_region
        _
      $region28: #{dcgan_generator_forward.3} parent=11 // pred_fallthru
        _
      // Predicated region
      $region29: #{dcgan_generator_forward.3} parent=11 // pred_check
        %p220 = pneg %p146
      $region30: #{dcgan_generator_forward.3} parent=11 // pred_check_branch
        %222 = sbr.rel (%p220) target = $region32
      $region31: #{dcgan_generator_forward.3} parent=11 // pred_region
        _
      $region32: #{dcgan_generator_forward.3} parent=11 // pred_fallthru
        _
      // Predicated region
      $region33: #{dcgan_generator_forward.3} parent=11 // pred_check
        %p223 = pneg %p167
      $region34: #{dcgan_generator_forward.3} parent=11 // pred_check_branch
        %225 = sbr.rel (%p223) target = $region36
      $region35: #{dcgan_generator_forward.3} parent=11 // pred_region
        _
      $region36: #{dcgan_generator_forward.3} parent=11 // pred_fallthru
        _
    $region12: #{dcgan_generator_forward.3} parent=5 // pred_fallthru
      _
    %p226 = scmp.lt.s32.totalorder %s15, 2
    // Predicated region
    $region37: #{dcgan_generator_forward.3} parent=5 // pred_check
      %p227 = pneg %p226
    $region38: #{dcgan_generator_forward.3} parent=5 // pred_check_branch
      %229 = sbr.rel (%p227) target = $region40
    $region39: #{dcgan_generator_forward.3} parent=5 // pred_region
      // Predicated region
      $region41: #{dcgan_generator_forward.3} parent=39 // pred_check
        %p230 = pneg %p35
      $region42: #{dcgan_generator_forward.3} parent=39 // pred_check_branch
        %232 = sbr.rel (%p230) target = $region44
      $region43: #{dcgan_generator_forward.3} parent=39 // pred_region
        %p233 = scmp.lt.s32.totalorder %s15, 1
        %s234 = scalar_select %p233, %s15, 1
        %s235 = smul.addr %s234, 16
        %s236 = smul.addr %s235, 8
        %s237 = scalar_lea.vmem %s0, %s236
      $region44: #{dcgan_generator_forward.3} parent=39 // pred_fallthru
        _
    $region40: #{dcgan_generator_forward.3} parent=5 // pred_fallthru
      _
    %p238 = scmp.le.s32.totalorder 1, %s15
    %p239 = scmp.lt.s32.totalorder %s15, 3
    %p240 = pnand %p238, %p239
    %p241 = pneg %p240
    // Predicated region
    $region45: #{dcgan_generator_forward.3} parent=5 // pred_check
      _
    $region46: #{dcgan_generator_forward.3} parent=5 // pred_check_branch
      %243 = sbr.rel (%p240) target = $region48
    $region47: #{dcgan_generator_forward.3} parent=5 // pred_region
      %s244 = ssub.s32 %s15, 1
      %p245 = scmp.lt.s32.totalorder %s20, 1
      %s246 = scalar_select %p245, %s20, 1
      %s247 = smul.addr %s246, 16
      %s248 = smul.addr %s247, 8
      %s249 = scalar_lea.vmem %s0, %s248
      %p250 = pneg %p41
      %p251 = pneg %p38
      %p252 = pneg %p62
      %p253 = pneg %p59
      %p254 = pneg %p83
      %p255 = pneg %p80
      %p256 = pneg %p104
      %p257 = pneg %p101
      %p258 = pneg %p125
      %p259 = pneg %p122
      %p260 = pneg %p146
      %p261 = pneg %p143
      %p262 = pneg %p167
      %p263 = pneg %p164
      %p264 = pneg %p193
      %p265 = pneg %p190
      %p266 = scmp.lt.s32.totalorder %s20, 1
      %s267 = scalar_select %p266, %s20, 1
      %s268 = smul.addr %s267, 7
      %s269 = scalar_lea.vmem %s7, %s268
      %p270 = scmp.lt.s32.totalorder %s20, 1
      %s271 = scalar_select %p270, %s20, 1
      %s272 = smul.addr %s271, 16
      %s273 = smul.addr %s272, 8
      %s274 = scalar_lea.vmem %s0, %s273
      %p275 = scmp.lt.s32.totalorder %s20, 1
      %s276 = scalar_select %p275, %s20, 1
      %s277 = smul.addr %s276, 7
      %s278 = scalar_lea.vmem %s7, %s277
      %v279 = vld [vmem:[%s274] sm:$0xff]
      %v280 = vld [vmem:[%s274 + $0x8] sm:$0xff]
      %v281 = vld [vmem:[%s274 + $0x10] sm:$0xff]
      %v282 = vld [vmem:[%s274 + $0x18] sm:$0xff]
      %v283 = vld [vmem:[%s274 + $0x20] sm:$0xff]
      %v284 = vld [vmem:[%s274 + $0x28] sm:$0xff]
      %v285 = vld [vmem:[%s274 + $0x30] sm:$0xff]
      %v286 = vld [vmem:[%s274 + $0x38] sm:$0xff]
      %v287 = vld [vmem:[%s274 + $0x40] sm:$0xff]
      %v288 = vld [vmem:[%s274 + $0x48] sm:$0xff]
      %v289 = vld [vmem:[%s274 + $0x50] sm:$0xff]
      %v290 = vld [vmem:[%s274 + $0x58] sm:$0xff]
      %v291 = vld [vmem:[%s274 + $0x60] sm:$0xff]
      %v292 = vld [vmem:[%s274 + $0x68] sm:$0xff]
      %v293 = vld [vmem:[%s274 + $0x70] sm:$0xff]
      %v294 = vld [vmem:[%s274 + $0x78] sm:$0xff]
      %v295 = vld [vmem:[%s2] sm:$0xff]
      %v296 = vld [vmem:[%s2 + $0x8] sm:$0xff]
      %v297 = vld [vmem:[%s2 + $0x10] sm:$0xff]
      %v298 = vld [vmem:[%s2 + $0x18] sm:$0xff]
      %v299 = vld [vmem:[%s2 + $0x20] sm:$0xff]
      %v300 = vld [vmem:[%s2 + $0x28] sm:$0xff]
      %v301 = vld [vmem:[%s2 + $0x30] sm:$0xff]
      %v302 = vld [vmem:[%s2 + $0x38] sm:$0xff]
      %v303 = vld [vmem:[%s2 + $0x40] sm:$0xff]
      %v304 = vld [vmem:[%s2 + $0x48] sm:$0xff]
      %v305 = vld [vmem:[%s2 + $0x50] sm:$0xff]
      %v306 = vld [vmem:[%s2 + $0x58] sm:$0xff]
      %v307 = vld [vmem:[%s2 + $0x60] sm:$0xff]
      %v308 = vld [vmem:[%s2 + $0x68] sm:$0xff]
      %v309 = vld [vmem:[%s2 + $0x70] sm:$0xff]
      %v310 = vld [vmem:[%s2 + $0x78] sm:$0xff]
      %v311 = vld [vmem:[%s2 + $0x80] sm:$0xff]
      %v312 = vld [vmem:[%s2 + $0x88] sm:$0xff]
      %v313 = vld [vmem:[%s2 + $0x90] sm:$0xff]
      %v314 = vld [vmem:[%s2 + $0x98] sm:$0xff]
      %v315 = vld [vmem:[%s2 + $0xa0] sm:$0xff]
      %v316 = vld [vmem:[%s2 + $0xa8] sm:$0xff]
      %v317 = vld [vmem:[%s2 + $0xb0] sm:$0xff]
      %v318 = vld [vmem:[%s2 + $0xb8] sm:$0xff]
      %v319 = vld [vmem:[%s2 + $0xc0] sm:$0xff]
      %v320 = vld [vmem:[%s2 + $0xc8] sm:$0xff]
      %v321 = vld [vmem:[%s2 + $0xd0] sm:$0xff]
      %v322 = vld [vmem:[%s2 + $0xd8] sm:$0xff]
      %v323 = vld [vmem:[%s2 + $0xe0] sm:$0xff]
      %v324 = vld [vmem:[%s2 + $0xe8] sm:$0xff]
      %v325 = vld [vmem:[%s2 + $0xf0] sm:$0xff]
      %v326 = vld [vmem:[%s2 + $0xf8] sm:$0xff]
      %v327 = vld [vmem:[%s2 + $0x100] sm:$0xff]
      %v328 = vld [vmem:[%s2 + $0x108] sm:$0xff]
      %v329 = vld [vmem:[%s2 + $0x110] sm:$0xff]
      %v330 = vld [vmem:[%s2 + $0x118] sm:$0xff]
      %v331 = vld [vmem:[%s2 + $0x120] sm:$0xff]
      %v332 = vld [vmem:[%s2 + $0x128] sm:$0xff]
      %v333 = vld [vmem:[%s2 + $0x130] sm:$0xff]
      %v334 = vld [vmem:[%s2 + $0x138] sm:$0xff]
      %v335 = vld [vmem:[%s2 + $0x140] sm:$0xff]
      %v336 = vld [vmem:[%s2 + $0x148] sm:$0xff]
      %v337 = vld [vmem:[%s2 + $0x150] sm:$0xff]
      %v338 = vld [vmem:[%s2 + $0x158] sm:$0xff]
      %v339 = vld [vmem:[%s2 + $0x160] sm:$0xff]
      %v340 = vld [vmem:[%s2 + $0x168] sm:$0xff]
      %v341 = vld [vmem:[%s2 + $0x170] sm:$0xff]
      %v342 = vld [vmem:[%s2 + $0x178] sm:$0xff]
      %v343 = vld [vmem:[%s2 + $0x180] sm:$0xff]
      %v344 = vld [vmem:[%s2 + $0x188] sm:$0xff]
      %v345 = vld [vmem:[%s2 + $0x190] sm:$0xff]
      %v346 = vld [vmem:[%s2 + $0x198] sm:$0xff]
      %v347 = vld [vmem:[%s2 + $0x1a0] sm:$0xff]
      %v348 = vld [vmem:[%s2 + $0x1a8] sm:$0xff]
      %v349 = vld [vmem:[%s2 + $0x1b0] sm:$0xff]
      %v350 = vld [vmem:[%s2 + $0x1b8] sm:$0xff]
      %v351 = vld [vmem:[%s2 + $0x1c0] sm:$0xff]
      %v352 = vld [vmem:[%s2 + $0x1c8] sm:$0xff]
      %v353 = vld [vmem:[%s2 + $0x1d0] sm:$0xff]
      %v354 = vld [vmem:[%s2 + $0x1d8] sm:$0xff]
      %v355 = vld [vmem:[%s2 + $0x1e0] sm:$0xff]
      %v356 = vld [vmem:[%s2 + $0x1e8] sm:$0xff]
      %v357 = vld [vmem:[%s2 + $0x1f0] sm:$0xff]
      %v358 = vld [vmem:[%s2 + $0x1f8] sm:$0xff]
      %v359 = vld [vmem:[%s2 + $0x200] sm:$0xff]
      %v360 = vld [vmem:[%s2 + $0x208] sm:$0xff]
      %v361 = vld [vmem:[%s2 + $0x210] sm:$0xff]
      %v362 = vld [vmem:[%s2 + $0x218] sm:$0xff]
      %v363 = vld [vmem:[%s2 + $0x220] sm:$0xff]
      %v364 = vld [vmem:[%s2 + $0x228] sm:$0xff]
      %v365 = vld [vmem:[%s2 + $0x230] sm:$0xff]
      %v366 = vld [vmem:[%s2 + $0x238] sm:$0xff]
      %v367 = vld [vmem:[%s2 + $0x240] sm:$0xff]
      %v368 = vld [vmem:[%s2 + $0x248] sm:$0xff]
      %v369 = vld [vmem:[%s2 + $0x250] sm:$0xff]
      %v370 = vld [vmem:[%s2 + $0x258] sm:$0xff]
      %v371 = vld [vmem:[%s2 + $0x260] sm:$0xff]
      %v372 = vld [vmem:[%s2 + $0x268] sm:$0xff]
      %v373 = vld [vmem:[%s2 + $0x270] sm:$0xff]
      %v374 = vld [vmem:[%s2 + $0x278] sm:$0xff]
      %v375 = vld [vmem:[%s2 + $0x280] sm:$0xff]
      %v376 = vld [vmem:[%s2 + $0x288] sm:$0xff]
      %v377 = vld [vmem:[%s2 + $0x290] sm:$0xff]
      %v378 = vld [vmem:[%s2 + $0x298] sm:$0xff]
      %v379 = vld [vmem:[%s2 + $0x2a0] sm:$0xff]
      %v380 = vld [vmem:[%s2 + $0x2a8] sm:$0xff]
      %v381 = vld [vmem:[%s2 + $0x2b0] sm:$0xff]
      %v382 = vld [vmem:[%s2 + $0x2b8] sm:$0xff]
      %v383 = vld [vmem:[%s2 + $0x2c0] sm:$0xff]
      %v384 = vld [vmem:[%s2 + $0x2c8] sm:$0xff]
      %v385 = vld [vmem:[%s2 + $0x2d0] sm:$0xff]
      %v386 = vld [vmem:[%s2 + $0x2d8] sm:$0xff]
      %v387 = vld [vmem:[%s2 + $0x2e0] sm:$0xff]
      %v388 = vld [vmem:[%s2 + $0x2e8] sm:$0xff]
      %v389 = vld [vmem:[%s2 + $0x2f0] sm:$0xff]
      %v390 = vld [vmem:[%s2 + $0x2f8] sm:$0xff]
      %v391 = vld [vmem:[%s2 + $0x300] sm:$0xff]
      %v392 = vld [vmem:[%s2 + $0x308] sm:$0xff]
      %v393 = vld [vmem:[%s2 + $0x310] sm:$0xff]
      %v394 = vld [vmem:[%s2 + $0x318] sm:$0xff]
      %v395 = vld [vmem:[%s2 + $0x320] sm:$0xff]
      %v396 = vld [vmem:[%s2 + $0x328] sm:$0xff]
      %v397 = vld [vmem:[%s2 + $0x330] sm:$0xff]
      %v398 = vld [vmem:[%s2 + $0x338] sm:$0xff]
      %v399 = vld [vmem:[%s2 + $0x340] sm:$0xff]
      %v400 = vld [vmem:[%s2 + $0x348] sm:$0xff]
      %v401 = vld [vmem:[%s2 + $0x350] sm:$0xff]
      %v402 = vld [vmem:[%s2 + $0x358] sm:$0xff]
      %v403 = vld [vmem:[%s2 + $0x360] sm:$0xff]
      %v404 = vld [vmem:[%s2 + $0x368] sm:$0xff]
      %v405 = vld [vmem:[%s2 + $0x370] sm:$0xff]
      %v406 = vld [vmem:[%s2 + $0x378] sm:$0xff]
      %v407 = vld [vmem:[%s2 + $0x380] sm:$0xff]
      %v408 = vld [vmem:[%s2 + $0x388] sm:$0xff]
      %v409 = vld [vmem:[%s2 + $0x390] sm:$0xff]
      %v410 = vld [vmem:[%s2 + $0x398] sm:$0xff]
      %v411 = vld [vmem:[%s2 + $0x3a0] sm:$0xff]
      %v412 = vld [vmem:[%s2 + $0x3a8] sm:$0xff]
      %v413 = vld [vmem:[%s2 + $0x3b0] sm:$0xff]
      %v414 = vld [vmem:[%s2 + $0x3b8] sm:$0xff]
      %v415 = vld [vmem:[%s2 + $0x3c0] sm:$0xff]
      %v416 = vld [vmem:[%s2 + $0x3c8] sm:$0xff]
      %v417 = vld [vmem:[%s2 + $0x3d0] sm:$0xff]
      %v418 = vld [vmem:[%s2 + $0x3d8] sm:$0xff]
      %v419 = vld [vmem:[%s2 + $0x3e0] sm:$0xff]
      %v420 = vld [vmem:[%s2 + $0x3e8] sm:$0xff]
      %v421 = vld [vmem:[%s2 + $0x3f0] sm:$0xff]
      %v422 = vld [vmem:[%s2 + $0x3f8] sm:$0xff]
      %v423 = vld [vmem:[%s2 + $0x400] sm:$0xff]
      %v424 = vld [vmem:[%s2 + $0x408] sm:$0xff]
      %v425 = vld [vmem:[%s2 + $0x410] sm:$0xff]
      %v426 = vld [vmem:[%s2 + $0x418] sm:$0xff]
      %v427 = vld [vmem:[%s2 + $0x420] sm:$0xff]
      %v428 = vld [vmem:[%s2 + $0x428] sm:$0xff]
      %v429 = vld [vmem:[%s2 + $0x430] sm:$0xff]
      %v430 = vld [vmem:[%s2 + $0x438] sm:$0xff]
      %v431 = vld [vmem:[%s2 + $0x440] sm:$0xff]
      %v432 = vld [vmem:[%s2 + $0x448] sm:$0xff]
      %v433 = vld [vmem:[%s2 + $0x450] sm:$0xff]
      %v434 = vld [vmem:[%s2 + $0x458] sm:$0xff]
      %v435 = vld [vmem:[%s2 + $0x460] sm:$0xff]
      %v436 = vld [vmem:[%s2 + $0x468] sm:$0xff]
      %v437 = vld [vmem:[%s2 + $0x470] sm:$0xff]
      %v438 = vld [vmem:[%s2 + $0x478] sm:$0xff]
      %v439 = vld [vmem:[%s2 + $0x480] sm:$0xff]
      %v440 = vld [vmem:[%s2 + $0x488] sm:$0xff]
      %v441 = vld [vmem:[%s2 + $0x490] sm:$0xff]
      %v442 = vld [vmem:[%s2 + $0x498] sm:$0xff]
      %v443 = vld [vmem:[%s2 + $0x4a0] sm:$0xff]
      %v444 = vld [vmem:[%s2 + $0x4a8] sm:$0xff]
      %v445 = vld [vmem:[%s2 + $0x4b0] sm:$0xff]
      %v446 = vld [vmem:[%s2 + $0x4b8] sm:$0xff]
      %v447 = vld [vmem:[%s2 + $0x4c0] sm:$0xff]
      %v448 = vld [vmem:[%s2 + $0x4c8] sm:$0xff]
      %v449 = vld [vmem:[%s2 + $0x4d0] sm:$0xff]
      %v450 = vld [vmem:[%s2 + $0x4d8] sm:$0xff]
      %v451 = vld [vmem:[%s2 + $0x4e0] sm:$0xff]
      %v452 = vld [vmem:[%s2 + $0x4e8] sm:$0xff]
      %v453 = vld [vmem:[%s2 + $0x4f0] sm:$0xff]
      %v454 = vld [vmem:[%s2 + $0x4f8] sm:$0xff]
      %v455 = vld [vmem:[%s2 + $0x500] sm:$0xff]
      %v456 = vld [vmem:[%s2 + $0x508] sm:$0xff]
      %v457 = vld [vmem:[%s2 + $0x510] sm:$0xff]
      %v458 = vld [vmem:[%s2 + $0x518] sm:$0xff]
      %v459 = vld [vmem:[%s2 + $0x520] sm:$0xff]
      %v460 = vld [vmem:[%s2 + $0x528] sm:$0xff]
      %v461 = vld [vmem:[%s2 + $0x530] sm:$0xff]
      %v462 = vld [vmem:[%s2 + $0x538] sm:$0xff]
      %v463 = vld [vmem:[%s2 + $0x540] sm:$0xff]
      %v464 = vld [vmem:[%s2 + $0x548] sm:$0xff]
      %v465 = vld [vmem:[%s2 + $0x550] sm:$0xff]
      %v466 = vld [vmem:[%s2 + $0x558] sm:$0xff]
      %v467 = vld [vmem:[%s2 + $0x560] sm:$0xff]
      %v468 = vld [vmem:[%s2 + $0x568] sm:$0xff]
      %v469 = vld [vmem:[%s2 + $0x570] sm:$0xff]
      %v470 = vld [vmem:[%s2 + $0x578] sm:$0xff]
      %v471 = vld [vmem:[%s2 + $0x580] sm:$0xff]
      %v472 = vld [vmem:[%s2 + $0x588] sm:$0xff]
      %v473 = vld [vmem:[%s2 + $0x590] sm:$0xff]
      %v474 = vld [vmem:[%s2 + $0x598] sm:$0xff]
      %v475 = vld [vmem:[%s2 + $0x5a0] sm:$0xff]
      %v476 = vld [vmem:[%s2 + $0x5a8] sm:$0xff]
      %v477 = vld [vmem:[%s2 + $0x5b0] sm:$0xff]
      %v478 = vld [vmem:[%s2 + $0x5b8] sm:$0xff]
      %v479 = vld [vmem:[%s2 + $0x5c0] sm:$0xff]
      %v480 = vld [vmem:[%s2 + $0x5c8] sm:$0xff]
      %v481 = vld [vmem:[%s2 + $0x5d0] sm:$0xff]
      %v482 = vld [vmem:[%s2 + $0x5d8] sm:$0xff]
      %v483 = vld [vmem:[%s2 + $0x5e0] sm:$0xff]
      %v484 = vld [vmem:[%s2 + $0x5e8] sm:$0xff]
      %v485 = vld [vmem:[%s2 + $0x5f0] sm:$0xff]
      %v486 = vld [vmem:[%s2 + $0x5f8] sm:$0xff]
      %v487 = vld [vmem:[%s2 + $0x600] sm:$0xff]
      %v488 = vld [vmem:[%s2 + $0x608] sm:$0xff]
      %v489 = vld [vmem:[%s2 + $0x610] sm:$0xff]
      %v490 = vld [vmem:[%s2 + $0x618] sm:$0xff]
      %v491 = vld [vmem:[%s2 + $0x620] sm:$0xff]
      %v492 = vld [vmem:[%s2 + $0x628] sm:$0xff]
      %v493 = vld [vmem:[%s2 + $0x630] sm:$0xff]
      %v494 = vld [vmem:[%s2 + $0x638] sm:$0xff]
      %495 = vmatprep.subr.mxu0 0.0
      %496 = vmatpush1.msra.mxu0 %v294
      %497 = vmatprep.subr.mxu0 0.0
      %498 = vmatpush1.msra.mxu0 %v293
      %499 = vmatprep.subr.mxu0 0.0
      %500 = vmatpush1.msra.mxu0 %v292
      %501 = vmatprep.subr.mxu0 0.0
      %502 = vmatpush1.msra.mxu0 %v291
      %503 = vmatprep.subr.mxu0 0.0
      %504 = vmatpush1.msra.mxu0 %v290
      %505 = vmatprep.subr.mxu0 0.0
      %506 = vmatpush1.msra.mxu0 %v289
      %507 = vmatprep.subr.mxu0 0.0
      %508 = vmatpush1.msra.mxu0 %v288
      %509 = vmatprep.subr.mxu0 0.0
      %510 = vmatpush1.msra.mxu0 %v287
      %511 = vmatprep.subr.mxu0 0.0
      %512 = vmatpush1.msra.mxu0 %v286
      %513 = vmatprep.subr.mxu0 0.0
      %514 = vmatpush1.msra.mxu0 %v285
      %515 = vmatprep.subr.mxu0 0.0
      %516 = vmatpush1.msra.mxu0 %v284
      %517 = vmatprep.subr.mxu0 0.0
      %518 = vmatpush1.msra.mxu0 %v283
      %519 = vmatprep.subr.mxu0 0.0
      %520 = vmatpush1.msra.mxu0 %v282
      %521 = vmatprep.subr.mxu0 0.0
      %522 = vmatpush1.msra.mxu0 %v281
      %523 = vmatprep.subr.mxu0 0.0
      %524 = vmatpush1.msra.mxu0 %v280
      %525 = vmatprep.subr.mxu0 0.0
      %526 = vmatpush1.msra.mxu0 %v279
      %527 = vmatprep.subr.mxu0 0.0
      %528 = vmatpush2.msra.mxu0 0.0
      %529 = vmatprep.subr.mxu0 0.0
      %530 = vmatpush2.msra.mxu0 0.0
      %531 = vmatprep.subr.mxu0 0.0
      %532 = vmatpush2.msra.mxu0 0.0
      %533 = vmatprep.subr.mxu0 0.0
      %534 = vmatpush2.msra.mxu0 0.0
      %535 = vmatprep.subr.mxu0 0.0
      %536 = vmatpush2.msra.mxu0 0.0
      %537 = vmatprep.subr.mxu0 0.0
      %538 = vmatpush2.msra.mxu0 0.0
      %539 = vmatprep.subr.mxu0 0.0
      %540 = vmatpush2.msra.mxu0 0.0
      %541 = vmatprep.subr.mxu0 0.0
      %542 = vmatpush2.msra.mxu0 0.0
      %543 = vmatprep.subr.mxu0 0.0
      %544 = vmatpush2.msra.mxu0 0.0
      %545 = vmatprep.subr.mxu0 0.0
      %546 = vmatpush2.msra.mxu0 0.0
      %547 = vmatprep.subr.mxu0 0.0
      %548 = vmatpush2.msra.mxu0 0.0
      %549 = vmatprep.subr.mxu0 0.0
      %550 = vmatpush2.msra.mxu0 0.0
      %551 = vmatprep.subr.mxu0 0.0
      %552 = vmatpush2.msra.mxu0 0.0
      %553 = vmatprep.subr.mxu0 0.0
      %554 = vmatpush2.msra.mxu0 0.0
      %555 = vmatprep.subr.mxu0 0.0
      %556 = vmatpush2.msra.mxu0 0.0
      %557 = vmatprep.subr.mxu0 0.0
      %558 = vmatpush2.msra.mxu0 0.0
      %559 = vmatprep.mubr.f32.mxu0 0.0
      %560 = vmatmul.mubr.f32.gmra.mxu0 %v295
      %v561 = vpop.f32.mrf.mxu0
      %v562 = vadd.f32 0.0, %v561
      %v563 = vpop.f32.mrf.mxu0
      %564 = vmatprep.mubr.f32.mxu0 0.0
      %565 = vmatmul.mubr.f32.gmra.mxu0 %v296
      %v566 = vpop.f32.mrf.mxu0
      %v567 = vadd.f32 0.0, %v566
      %v568 = vpop.f32.mrf.mxu0
      %569 = vmatprep.mubr.f32.mxu0 0.0
      %570 = vmatmul.mubr.f32.gmra.mxu0 %v297
      %v571 = vpop.f32.mrf.mxu0
      %v572 = vadd.f32 0.0, %v571
      %v573 = vpop.f32.mrf.mxu0
      %574 = vmatprep.mubr.f32.mxu0 0.0
      %575 = vmatmul.mubr.f32.gmra.mxu0 %v298
      %v576 = vpop.f32.mrf.mxu0
      %v577 = vadd.f32 0.0, %v576
      %v578 = vpop.f32.mrf.mxu0
      %579 = vmatprep.mubr.f32.mxu0 0.0
      %580 = vmatmul.mubr.f32.gmra.mxu0 %v299
      %v581 = vpop.f32.mrf.mxu0
      %v582 = vadd.f32 0.0, %v581
      %v583 = vpop.f32.mrf.mxu0
      %584 = vmatprep.mubr.f32.mxu0 0.0
      %585 = vmatmul.mubr.f32.gmra.mxu0 %v300
      %v586 = vpop.f32.mrf.mxu0
      %v587 = vadd.f32 0.0, %v586
      %v588 = vpop.f32.mrf.mxu0
      %589 = vmatprep.mubr.f32.mxu0 0.0
      %590 = vmatmul.mubr.f32.gmra.mxu0 %v301
      %v591 = vpop.f32.mrf.mxu0
      %v592 = vadd.f32 0.0, %v591
      %v593 = vpop.f32.mrf.mxu0
      %594 = vmatprep.mubr.f32.mxu0 0.0
      %595 = vmatmul.mubr.f32.gmra.mxu0 %v302
      %v596 = vpop.f32.mrf.mxu0
      %v597 = vadd.f32 0.0, %v596
      %v598 = vpop.f32.mrf.mxu0
      %599 = vmatprep.mubr.f32.mxu0 0.0
      %600 = vmatmul.mubr.f32.gmra.mxu0 %v303
      %v601 = vpop.f32.mrf.mxu0
      %v602 = vadd.f32 0.0, %v601
      %v603 = vpop.f32.mrf.mxu0
      %604 = vmatprep.mubr.f32.mxu0 0.0
      %605 = vmatmul.mubr.f32.gmra.mxu0 %v304
      %v606 = vpop.f32.mrf.mxu0
      %v607 = vadd.f32 0.0, %v606
      %v608 = vpop.f32.mrf.mxu0
      %609 = vmatprep.mubr.f32.mxu0 0.0
      %610 = vmatmul.mubr.f32.gmra.mxu0 %v305
      %v611 = vpop.f32.mrf.mxu0
      %v612 = vadd.f32 0.0, %v611
      %v613 = vpop.f32.mrf.mxu0
      %614 = vmatprep.mubr.f32.mxu0 0.0
      %615 = vmatmul.mubr.f32.gmra.mxu0 %v306
      %v616 = vpop.f32.mrf.mxu0
      %v617 = vadd.f32 0.0, %v616
      %v618 = vpop.f32.mrf.mxu0
      %619 = vmatprep.mubr.f32.mxu0 0.0
      %620 = vmatmul.mubr.f32.gmra.mxu0 %v307
      %v621 = vpop.f32.mrf.mxu0
      %v622 = vadd.f32 0.0, %v621
      %v623 = vpop.f32.mrf.mxu0
      %624 = vmatprep.mubr.f32.mxu0 0.0
      %625 = vmatmul.mubr.f32.gmra.mxu0 %v308
      %v626 = vpop.f32.mrf.mxu0
      %v627 = vadd.f32 0.0, %v626
      %v628 = vpop.f32.mrf.mxu0
      %629 = vmatprep.mubr.f32.mxu0 0.0
      %630 = vmatmul.mubr.f32.gmra.mxu0 %v309
      %v631 = vpop.f32.mrf.mxu0
      %v632 = vadd.f32 0.0, %v631
      %v633 = vpop.f32.mrf.mxu0
      %634 = vmatprep.mubr.f32.mxu0 0.0
      %635 = vmatmul.mubr.f32.gmra.mxu0 %v310
      %v636 = vpop.f32.mrf.mxu0
      %v637 = vadd.f32 0.0, %v636
      %v638 = vpop.f32.mrf.mxu0
      %639 = vmatprep.mubr.f32.mxu0 0.0
      %640 = vmatmul.mubr.f32.gmra.mxu0 %v311
      %v641 = vpop.f32.mrf.mxu0
      %v642 = vadd.f32 0.0, %v641
      %v643 = vpop.f32.mrf.mxu0
      %644 = vmatprep.mubr.f32.mxu0 0.0
      %645 = vmatmul.mubr.f32.gmra.mxu0 %v312
      %v646 = vpop.f32.mrf.mxu0
      %v647 = vadd.f32 0.0, %v646
      %v648 = vpop.f32.mrf.mxu0
      %649 = vmatprep.mubr.f32.mxu0 0.0
      %650 = vmatmul.mubr.f32.gmra.mxu0 %v313
      %v651 = vpop.f32.mrf.mxu0
      %v652 = vadd.f32 0.0, %v651
      %v653 = vpop.f32.mrf.mxu0
      %654 = vmatprep.mubr.f32.mxu0 0.0
      %655 = vmatmul.mubr.f32.gmra.mxu0 %v314
      %v656 = vpop.f32.mrf.mxu0
      %v657 = vadd.f32 0.0, %v656
      %v658 = vpop.f32.mrf.mxu0
      %659 = vmatprep.mubr.f32.mxu0 0.0
      %660 = vmatmul.mubr.f32.gmra.mxu0 %v315
      %v661 = vpop.f32.mrf.mxu0
      %v662 = vadd.f32 0.0, %v661
      %v663 = vpop.f32.mrf.mxu0
      %664 = vmatprep.mubr.f32.mxu0 0.0
      %665 = vmatmul.mubr.f32.gmra.mxu0 %v316
      %v666 = vpop.f32.mrf.mxu0
      %v667 = vadd.f32 0.0, %v666
      %v668 = vpop.f32.mrf.mxu0
      %669 = vmatprep.mubr.f32.mxu0 0.0
      %670 = vmatmul.mubr.f32.gmra.mxu0 %v317
      %v671 = vpop.f32.mrf.mxu0
      %v672 = vadd.f32 0.0, %v671
      %v673 = vpop.f32.mrf.mxu0
      %674 = vmatprep.mubr.f32.mxu0 0.0
      %675 = vmatmul.mubr.f32.gmra.mxu0 %v318
      %v676 = vpop.f32.mrf.mxu0
      %v677 = vadd.f32 0.0, %v676
      %v678 = vpop.f32.mrf.mxu0
      %679 = vmatprep.mubr.f32.mxu0 0.0
      %680 = vmatmul.mubr.f32.gmra.mxu0 %v319
      %v681 = vpop.f32.mrf.mxu0
      %v682 = vadd.f32 0.0, %v681
      %v683 = vpop.f32.mrf.mxu0
      %684 = vmatprep.mubr.f32.mxu0 0.0
      %685 = vmatmul.mubr.f32.gmra.mxu0 %v320
      %v686 = vpop.f32.mrf.mxu0
      %v687 = vadd.f32 0.0, %v686
      %v688 = vpop.f32.mrf.mxu0
      %689 = vmatprep.mubr.f32.mxu0 0.0
      %690 = vmatmul.mubr.f32.gmra.mxu0 %v321
      %v691 = vpop.f32.mrf.mxu0
      %v692 = vadd.f32 0.0, %v691
      %v693 = vpop.f32.mrf.mxu0
      %694 = vmatprep.mubr.f32.mxu0 0.0
      %695 = vmatmul.mubr.f32.gmra.mxu0 %v322
      %v696 = vpop.f32.mrf.mxu0
      %v697 = vadd.f32 0.0, %v696
      %v698 = vpop.f32.mrf.mxu0
      %699 = vmatprep.mubr.f32.mxu0 0.0
      %700 = vmatmul.mubr.f32.gmra.mxu0 %v323
      %v701 = vpop.f32.mrf.mxu0
      %v702 = vadd.f32 0.0, %v701
      %v703 = vpop.f32.mrf.mxu0
      %704 = vmatprep.mubr.f32.mxu0 0.0
      %705 = vmatmul.mubr.f32.gmra.mxu0 %v324
      %v706 = vpop.f32.mrf.mxu0
      %v707 = vadd.f32 0.0, %v706
      %v708 = vpop.f32.mrf.mxu0
      %709 = vmatprep.mubr.f32.mxu0 0.0
      %710 = vmatmul.mubr.f32.gmra.mxu0 %v325
      %v711 = vpop.f32.mrf.mxu0
      %v712 = vadd.f32 0.0, %v711
      %v713 = vpop.f32.mrf.mxu0
      %714 = vmatprep.mubr.f32.mxu0 0.0
      %715 = vmatmul.mubr.f32.gmra.mxu0 %v326
      %v716 = vpop.f32.mrf.mxu0
      %v717 = vadd.f32 0.0, %v716
      %v718 = vpop.f32.mrf.mxu0
      %719 = vmatprep.mubr.f32.mxu0 0.0
      %720 = vmatmul.mubr.f32.gmra.mxu0 %v327
      %v721 = vpop.f32.mrf.mxu0
      %v722 = vadd.f32 0.0, %v721
      %v723 = vpop.f32.mrf.mxu0
      %724 = vmatprep.mubr.f32.mxu0 0.0
      %725 = vmatmul.mubr.f32.gmra.mxu0 %v328
      %v726 = vpop.f32.mrf.mxu0
      %v727 = vadd.f32 0.0, %v726
      %v728 = vpop.f32.mrf.mxu0
      %729 = vmatprep.mubr.f32.mxu0 0.0
      %730 = vmatmul.mubr.f32.gmra.mxu0 %v329
      %v731 = vpop.f32.mrf.mxu0
      %v732 = vadd.f32 0.0, %v731
      %v733 = vpop.f32.mrf.mxu0
      %734 = vmatprep.mubr.f32.mxu0 0.0
      %735 = vmatmul.mubr.f32.gmra.mxu0 %v330
      %v736 = vpop.f32.mrf.mxu0
      %v737 = vadd.f32 0.0, %v736
      %v738 = vpop.f32.mrf.mxu0
      %739 = vmatprep.mubr.f32.mxu0 0.0
      %740 = vmatmul.mubr.f32.gmra.mxu0 %v331
      %v741 = vpop.f32.mrf.mxu0
      %v742 = vadd.f32 0.0, %v741
      %v743 = vpop.f32.mrf.mxu0
      %744 = vmatprep.mubr.f32.mxu0 0.0
      %745 = vmatmul.mubr.f32.gmra.mxu0 %v332
      %v746 = vpop.f32.mrf.mxu0
      %v747 = vadd.f32 0.0, %v746
      %v748 = vpop.f32.mrf.mxu0
      %749 = vmatprep.mubr.f32.mxu0 0.0
      %750 = vmatmul.mubr.f32.gmra.mxu0 %v333
      %v751 = vpop.f32.mrf.mxu0
      %v752 = vadd.f32 0.0, %v751
      %v753 = vpop.f32.mrf.mxu0
      %754 = vmatprep.mubr.f32.mxu0 0.0
      %755 = vmatmul.mubr.f32.gmra.mxu0 %v334
      %v756 = vpop.f32.mrf.mxu0
      %v757 = vadd.f32 0.0, %v756
      %v758 = vpop.f32.mrf.mxu0
      %759 = vmatprep.mubr.f32.mxu0 0.0
      %760 = vmatmul.mubr.f32.gmra.mxu0 %v335
      %v761 = vpop.f32.mrf.mxu0
      %v762 = vadd.f32 0.0, %v761
      %v763 = vpop.f32.mrf.mxu0
      %764 = vmatprep.mubr.f32.mxu0 0.0
      %765 = vmatmul.mubr.f32.gmra.mxu0 %v336
      %v766 = vpop.f32.mrf.mxu0
      %v767 = vadd.f32 0.0, %v766
      %v768 = vpop.f32.mrf.mxu0
      %769 = vmatprep.mubr.f32.mxu0 0.0
      %770 = vmatmul.mubr.f32.gmra.mxu0 %v337
      %v771 = vpop.f32.mrf.mxu0
      %v772 = vadd.f32 0.0, %v771
      %v773 = vpop.f32.mrf.mxu0
      %774 = vmatprep.mubr.f32.mxu0 0.0
      %775 = vmatmul.mubr.f32.gmra.mxu0 %v338
      %v776 = vpop.f32.mrf.mxu0
      %v777 = vadd.f32 0.0, %v776
      %v778 = vpop.f32.mrf.mxu0
      %779 = vmatprep.mubr.f32.mxu0 0.0
      %780 = vmatmul.mubr.f32.gmra.mxu0 %v339
      %v781 = vpop.f32.mrf.mxu0
      %v782 = vadd.f32 0.0, %v781
      %v783 = vpop.f32.mrf.mxu0
      %784 = vmatprep.mubr.f32.mxu0 0.0
      %785 = vmatmul.mubr.f32.gmra.mxu0 %v340
      %v786 = vpop.f32.mrf.mxu0
      %v787 = vadd.f32 0.0, %v786
      %v788 = vpop.f32.mrf.mxu0
      %789 = vmatprep.mubr.f32.mxu0 0.0
      %790 = vmatmul.mubr.f32.gmra.mxu0 %v341
      %v791 = vpop.f32.mrf.mxu0
      %v792 = vadd.f32 0.0, %v791
      %v793 = vpop.f32.mrf.mxu0
      %794 = vmatprep.mubr.f32.mxu0 0.0
      %795 = vmatmul.mubr.f32.gmra.mxu0 %v342
      %v796 = vpop.f32.mrf.mxu0
      %v797 = vadd.f32 0.0, %v796
      %v798 = vpop.f32.mrf.mxu0
      %799 = vmatprep.mubr.f32.mxu0 0.0
      %800 = vmatmul.mubr.f32.gmra.mxu0 %v343
      %v801 = vpop.f32.mrf.mxu0
      %v802 = vadd.f32 0.0, %v801
      %v803 = vpop.f32.mrf.mxu0
      %804 = vmatprep.mubr.f32.mxu0 0.0
      %805 = vmatmul.mubr.f32.gmra.mxu0 %v344
      %v806 = vpop.f32.mrf.mxu0
      %v807 = vadd.f32 0.0, %v806
      %v808 = vpop.f32.mrf.mxu0
      %809 = vmatprep.mubr.f32.mxu0 0.0
      %810 = vmatmul.mubr.f32.gmra.mxu0 %v345
      %v811 = vpop.f32.mrf.mxu0
      %v812 = vadd.f32 0.0, %v811
      %v813 = vpop.f32.mrf.mxu0
      %814 = vmatprep.mubr.f32.mxu0 0.0
      %815 = vmatmul.mubr.f32.gmra.mxu0 %v346
      %v816 = vpop.f32.mrf.mxu0
      %v817 = vadd.f32 0.0, %v816
      %v818 = vpop.f32.mrf.mxu0
      %819 = vmatprep.mubr.f32.mxu0 0.0
      %820 = vmatmul.mubr.f32.gmra.mxu0 %v347
      %v821 = vpop.f32.mrf.mxu0
      %v822 = vadd.f32 0.0, %v821
      %v823 = vpop.f32.mrf.mxu0
      %824 = vmatprep.mubr.f32.mxu0 0.0
      %825 = vmatmul.mubr.f32.gmra.mxu0 %v348
      %v826 = vpop.f32.mrf.mxu0
      %v827 = vadd.f32 0.0, %v826
      %v828 = vpop.f32.mrf.mxu0
      %829 = vmatprep.mubr.f32.mxu0 0.0
      %830 = vmatmul.mubr.f32.gmra.mxu0 %v349
      %v831 = vpop.f32.mrf.mxu0
      %v832 = vadd.f32 0.0, %v831
      %v833 = vpop.f32.mrf.mxu0
      %834 = vmatprep.mubr.f32.mxu0 0.0
      %835 = vmatmul.mubr.f32.gmra.mxu0 %v350
      %v836 = vpop.f32.mrf.mxu0
      %v837 = vadd.f32 0.0, %v836
      %v838 = vpop.f32.mrf.mxu0
      %839 = vmatprep.mubr.f32.mxu0 0.0
      %840 = vmatmul.mubr.f32.gmra.mxu0 %v351
      %v841 = vpop.f32.mrf.mxu0
      %v842 = vadd.f32 0.0, %v841
      %v843 = vpop.f32.mrf.mxu0
      %844 = vmatprep.mubr.f32.mxu0 0.0
      %845 = vmatmul.mubr.f32.gmra.mxu0 %v352
      %v846 = vpop.f32.mrf.mxu0
      %v847 = vadd.f32 0.0, %v846
      %v848 = vpop.f32.mrf.mxu0
      %849 = vmatprep.mubr.f32.mxu0 0.0
      %850 = vmatmul.mubr.f32.gmra.mxu0 %v353
      %v851 = vpop.f32.mrf.mxu0
      %v852 = vadd.f32 0.0, %v851
      %v853 = vpop.f32.mrf.mxu0
      %854 = vmatprep.mubr.f32.mxu0 0.0
      %855 = vmatmul.mubr.f32.gmra.mxu0 %v354
      %v856 = vpop.f32.mrf.mxu0
      %v857 = vadd.f32 0.0, %v856
      %v858 = vpop.f32.mrf.mxu0
      %859 = vmatprep.mubr.f32.mxu0 0.0
      %860 = vmatmul.mubr.f32.gmra.mxu0 %v355
      %v861 = vpop.f32.mrf.mxu0
      %v862 = vadd.f32 0.0, %v861
      %v863 = vpop.f32.mrf.mxu0
      %864 = vmatprep.mubr.f32.mxu0 0.0
      %865 = vmatmul.mubr.f32.gmra.mxu0 %v356
      %v866 = vpop.f32.mrf.mxu0
      %v867 = vadd.f32 0.0, %v866
      %v868 = vpop.f32.mrf.mxu0
      %869 = vmatprep.mubr.f32.mxu0 0.0
      %870 = vmatmul.mubr.f32.gmra.mxu0 %v357
      %v871 = vpop.f32.mrf.mxu0
      %v872 = vadd.f32 0.0, %v871
      %v873 = vpop.f32.mrf.mxu0
      %874 = vmatprep.mubr.f32.mxu0 0.0
      %875 = vmatmul.mubr.f32.gmra.mxu0 %v358
      %v876 = vpop.f32.mrf.mxu0
      %v877 = vadd.f32 0.0, %v876
      %v878 = vpop.f32.mrf.mxu0
      %879 = vmatprep.mubr.f32.mxu0 0.0
      %880 = vmatmul.mubr.f32.gmra.mxu0 %v359
      %v881 = vpop.f32.mrf.mxu0
      %v882 = vadd.f32 0.0, %v881
      %v883 = vpop.f32.mrf.mxu0
      %884 = vmatprep.mubr.f32.mxu0 0.0
      %885 = vmatmul.mubr.f32.gmra.mxu0 %v360
      %v886 = vpop.f32.mrf.mxu0
      %v887 = vadd.f32 0.0, %v886
      %v888 = vpop.f32.mrf.mxu0
      %889 = vmatprep.mubr.f32.mxu0 0.0
      %890 = vmatmul.mubr.f32.gmra.mxu0 %v361
      %v891 = vpop.f32.mrf.mxu0
      %v892 = vadd.f32 0.0, %v891
      %v893 = vpop.f32.mrf.mxu0
      %894 = vmatprep.mubr.f32.mxu0 0.0
      %895 = vmatmul.mubr.f32.gmra.mxu0 %v362
      %v896 = vpop.f32.mrf.mxu0
      %v897 = vadd.f32 0.0, %v896
      %v898 = vpop.f32.mrf.mxu0
      %899 = vmatprep.mubr.f32.mxu0 0.0
      %900 = vmatmul.mubr.f32.gmra.mxu0 %v363
      %v901 = vpop.f32.mrf.mxu0
      %v902 = vadd.f32 0.0, %v901
      %v903 = vpop.f32.mrf.mxu0
      %904 = vmatprep.mubr.f32.mxu0 0.0
      %905 = vmatmul.mubr.f32.gmra.mxu0 %v364
      %v906 = vpop.f32.mrf.mxu0
      %v907 = vadd.f32 0.0, %v906
      %v908 = vpop.f32.mrf.mxu0
      %909 = vmatprep.mubr.f32.mxu0 0.0
      %910 = vmatmul.mubr.f32.gmra.mxu0 %v365
      %v911 = vpop.f32.mrf.mxu0
      %v912 = vadd.f32 0.0, %v911
      %v913 = vpop.f32.mrf.mxu0
      %914 = vmatprep.mubr.f32.mxu0 0.0
      %915 = vmatmul.mubr.f32.gmra.mxu0 %v366
      %v916 = vpop.f32.mrf.mxu0
      %v917 = vadd.f32 0.0, %v916
      %v918 = vpop.f32.mrf.mxu0
      %919 = vmatprep.mubr.f32.mxu0 0.0
      %920 = vmatmul.mubr.f32.gmra.mxu0 %v367
      %v921 = vpop.f32.mrf.mxu0
      %v922 = vadd.f32 0.0, %v921
      %v923 = vpop.f32.mrf.mxu0
      %924 = vmatprep.mubr.f32.mxu0 0.0
      %925 = vmatmul.mubr.f32.gmra.mxu0 %v368
      %v926 = vpop.f32.mrf.mxu0
      %v927 = vadd.f32 0.0, %v926
      %v928 = vpop.f32.mrf.mxu0
      %929 = vmatprep.mubr.f32.mxu0 0.0
      %930 = vmatmul.mubr.f32.gmra.mxu0 %v369
      %v931 = vpop.f32.mrf.mxu0
      %v932 = vadd.f32 0.0, %v931
      %v933 = vpop.f32.mrf.mxu0
      %934 = vmatprep.mubr.f32.mxu0 0.0
      %935 = vmatmul.mubr.f32.gmra.mxu0 %v370
      %v936 = vpop.f32.mrf.mxu0
      %v937 = vadd.f32 0.0, %v936
      %v938 = vpop.f32.mrf.mxu0
      %939 = vmatprep.mubr.f32.mxu0 0.0
      %940 = vmatmul.mubr.f32.gmra.mxu0 %v371
      %v941 = vpop.f32.mrf.mxu0
      %v942 = vadd.f32 0.0, %v941
      %v943 = vpop.f32.mrf.mxu0
      %944 = vmatprep.mubr.f32.mxu0 0.0
      %945 = vmatmul.mubr.f32.gmra.mxu0 %v372
      %v946 = vpop.f32.mrf.mxu0
      %v947 = vadd.f32 0.0, %v946
      %v948 = vpop.f32.mrf.mxu0
      %949 = vmatprep.mubr.f32.mxu0 0.0
      %950 = vmatmul.mubr.f32.gmra.mxu0 %v373
      %v951 = vpop.f32.mrf.mxu0
      %v952 = vadd.f32 0.0, %v951
      %v953 = vpop.f32.mrf.mxu0
      %954 = vmatprep.mubr.f32.mxu0 0.0
      %955 = vmatmul.mubr.f32.gmra.mxu0 %v374
      %v956 = vpop.f32.mrf.mxu0
      %v957 = vadd.f32 0.0, %v956
      %v958 = vpop.f32.mrf.mxu0
      %959 = vmatprep.mubr.f32.mxu0 0.0
      %960 = vmatmul.mubr.f32.gmra.mxu0 %v375
      %v961 = vpop.f32.mrf.mxu0
      %v962 = vadd.f32 0.0, %v961
      %v963 = vpop.f32.mrf.mxu0
      %964 = vmatprep.mubr.f32.mxu0 0.0
      %965 = vmatmul.mubr.f32.gmra.mxu0 %v376
      %v966 = vpop.f32.mrf.mxu0
      %v967 = vadd.f32 0.0, %v966
      %v968 = vpop.f32.mrf.mxu0
      %969 = vmatprep.mubr.f32.mxu0 0.0
      %970 = vmatmul.mubr.f32.gmra.mxu0 %v377
      %v971 = vpop.f32.mrf.mxu0
      %v972 = vadd.f32 0.0, %v971
      %v973 = vpop.f32.mrf.mxu0
      %974 = vmatprep.mubr.f32.mxu0 0.0
      %975 = vmatmul.mubr.f32.gmra.mxu0 %v378
      %v976 = vpop.f32.mrf.mxu0
      %v977 = vadd.f32 0.0, %v976
      %v978 = vpop.f32.mrf.mxu0
      %979 = vmatprep.mubr.f32.mxu0 0.0
      %980 = vmatmul.mubr.f32.gmra.mxu0 %v379
      %v981 = vpop.f32.mrf.mxu0
      %v982 = vadd.f32 0.0, %v981
      %v983 = vpop.f32.mrf.mxu0
      %984 = vmatprep.mubr.f32.mxu0 0.0
      %985 = vmatmul.mubr.f32.gmra.mxu0 %v380
      %v986 = vpop.f32.mrf.mxu0
      %v987 = vadd.f32 0.0, %v986
      %v988 = vpop.f32.mrf.mxu0
      %989 = vmatprep.mubr.f32.mxu0 0.0
      %990 = vmatmul.mubr.f32.gmra.mxu0 %v381
      %v991 = vpop.f32.mrf.mxu0
      %v992 = vadd.f32 0.0, %v991
      %v993 = vpop.f32.mrf.mxu0
      %994 = vmatprep.mubr.f32.mxu0 0.0
      %995 = vmatmul.mubr.f32.gmra.mxu0 %v382
      %v996 = vpop.f32.mrf.mxu0
      %v997 = vadd.f32 0.0, %v996
      %v998 = vpop.f32.mrf.mxu0
      %999 = vmatprep.mubr.f32.mxu0 0.0
      %1000 = vmatmul.mubr.f32.gmra.mxu0 %v383
      %v1001 = vpop.f32.mrf.mxu0
      %v1002 = vadd.f32 0.0, %v1001
      %v1003 = vpop.f32.mrf.mxu0
      %1004 = vmatprep.mubr.f32.mxu0 0.0
      %1005 = vmatmul.mubr.f32.gmra.mxu0 %v384
      %v1006 = vpop.f32.mrf.mxu0
      %v1007 = vadd.f32 0.0, %v1006
      %v1008 = vpop.f32.mrf.mxu0
      %1009 = vmatprep.mubr.f32.mxu0 0.0
      %1010 = vmatmul.mubr.f32.gmra.mxu0 %v385
      %v1011 = vpop.f32.mrf.mxu0
      %v1012 = vadd.f32 0.0, %v1011
      %v1013 = vpop.f32.mrf.mxu0
      %1014 = vmatprep.mubr.f32.mxu0 0.0
      %1015 = vmatmul.mubr.f32.gmra.mxu0 %v386
      %v1016 = vpop.f32.mrf.mxu0
      %v1017 = vadd.f32 0.0, %v1016
      %v1018 = vpop.f32.mrf.mxu0
      %1019 = vmatprep.mubr.f32.mxu0 0.0
      %1020 = vmatmul.mubr.f32.gmra.mxu0 %v387
      %v1021 = vpop.f32.mrf.mxu0
      %v1022 = vadd.f32 0.0, %v1021
      %v1023 = vpop.f32.mrf.mxu0
      %1024 = vmatprep.mubr.f32.mxu0 0.0
      %1025 = vmatmul.mubr.f32.gmra.mxu0 %v388
      %v1026 = vpop.f32.mrf.mxu0
      %v1027 = vadd.f32 0.0, %v1026
      %v1028 = vpop.f32.mrf.mxu0
      %1029 = vmatprep.mubr.f32.mxu0 0.0
      %1030 = vmatmul.mubr.f32.gmra.mxu0 %v389
      %v1031 = vpop.f32.mrf.mxu0
      %v1032 = vadd.f32 0.0, %v1031
      %v1033 = vpop.f32.mrf.mxu0
      %1034 = vmatprep.mubr.f32.mxu0 0.0
      %1035 = vmatmul.mubr.f32.gmra.mxu0 %v390
      %v1036 = vpop.f32.mrf.mxu0
      %v1037 = vadd.f32 0.0, %v1036
      %v1038 = vpop.f32.mrf.mxu0
      %1039 = vmatprep.mubr.f32.mxu0 0.0
      %1040 = vmatmul.mubr.f32.gmra.mxu0 %v391
      %v1041 = vpop.f32.mrf.mxu0
      %v1042 = vadd.f32 0.0, %v1041
      %v1043 = vpop.f32.mrf.mxu0
      %1044 = vmatprep.mubr.f32.mxu0 0.0
      %1045 = vmatmul.mubr.f32.gmra.mxu0 %v392
      %v1046 = vpop.f32.mrf.mxu0
      %v1047 = vadd.f32 0.0, %v1046
      %v1048 = vpop.f32.mrf.mxu0
      %1049 = vmatprep.mubr.f32.mxu0 0.0
      %1050 = vmatmul.mubr.f32.gmra.mxu0 %v393
      %v1051 = vpop.f32.mrf.mxu0
      %v1052 = vadd.f32 0.0, %v1051
      %v1053 = vpop.f32.mrf.mxu0
      %1054 = vmatprep.mubr.f32.mxu0 0.0
      %1055 = vmatmul.mubr.f32.gmra.mxu0 %v394
      %v1056 = vpop.f32.mrf.mxu0
      %v1057 = vadd.f32 0.0, %v1056
      %v1058 = vpop.f32.mrf.mxu0
      %1059 = vmatprep.mubr.f32.mxu0 0.0
      %1060 = vmatmul.mubr.f32.gmra.mxu0 %v395
      %v1061 = vpop.f32.mrf.mxu0
      %v1062 = vadd.f32 0.0, %v1061
      %v1063 = vpop.f32.mrf.mxu0
      %1064 = vmatprep.mubr.f32.mxu0 0.0
      %1065 = vmatmul.mubr.f32.gmra.mxu0 %v396
      %v1066 = vpop.f32.mrf.mxu0
      %v1067 = vadd.f32 0.0, %v1066
      %v1068 = vpop.f32.mrf.mxu0
      %1069 = vmatprep.mubr.f32.mxu0 0.0
      %1070 = vmatmul.mubr.f32.gmra.mxu0 %v397
      %v1071 = vpop.f32.mrf.mxu0
      %v1072 = vadd.f32 0.0, %v1071
      %v1073 = vpop.f32.mrf.mxu0
      %1074 = vmatprep.mubr.f32.mxu0 0.0
      %1075 = vmatmul.mubr.f32.gmra.mxu0 %v398
      %v1076 = vpop.f32.mrf.mxu0
      %v1077 = vadd.f32 0.0, %v1076
      %v1078 = vpop.f32.mrf.mxu0
      %1079 = vmatprep.mubr.f32.mxu0 0.0
      %1080 = vmatmul.mubr.f32.gmra.mxu0 %v399
      %v1081 = vpop.f32.mrf.mxu0
      %v1082 = vadd.f32 0.0, %v1081
      %v1083 = vpop.f32.mrf.mxu0
      %1084 = vmatprep.mubr.f32.mxu0 0.0
      %1085 = vmatmul.mubr.f32.gmra.mxu0 %v400
      %v1086 = vpop.f32.mrf.mxu0
      %v1087 = vadd.f32 0.0, %v1086
      %v1088 = vpop.f32.mrf.mxu0
      %1089 = vmatprep.mubr.f32.mxu0 0.0
      %1090 = vmatmul.mubr.f32.gmra.mxu0 %v401
      %v1091 = vpop.f32.mrf.mxu0
      %v1092 = vadd.f32 0.0, %v1091
      %v1093 = vpop.f32.mrf.mxu0
      %1094 = vmatprep.mubr.f32.mxu0 0.0
      %1095 = vmatmul.mubr.f32.gmra.mxu0 %v402
      %v1096 = vpop.f32.mrf.mxu0
      %v1097 = vadd.f32 0.0, %v1096
      %v1098 = vpop.f32.mrf.mxu0
      %1099 = vmatprep.mubr.f32.mxu0 0.0
      %1100 = vmatmul.mubr.f32.gmra.mxu0 %v403
      %v1101 = vpop.f32.mrf.mxu0
      %v1102 = vadd.f32 0.0, %v1101
      %v1103 = vpop.f32.mrf.mxu0
      %1104 = vmatprep.mubr.f32.mxu0 0.0
      %1105 = vmatmul.mubr.f32.gmra.mxu0 %v404
      %v1106 = vpop.f32.mrf.mxu0
      %v1107 = vadd.f32 0.0, %v1106
      %v1108 = vpop.f32.mrf.mxu0
      %1109 = vmatprep.mubr.f32.mxu0 0.0
      %1110 = vmatmul.mubr.f32.gmra.mxu0 %v405
      %v1111 = vpop.f32.mrf.mxu0
      %v1112 = vadd.f32 0.0, %v1111
      %v1113 = vpop.f32.mrf.mxu0
      %1114 = vmatprep.mubr.f32.mxu0 0.0
      %1115 = vmatmul.mubr.f32.gmra.mxu0 %v406
      %v1116 = vpop.f32.mrf.mxu0
      %v1117 = vadd.f32 0.0, %v1116
      %v1118 = vpop.f32.mrf.mxu0
      %1119 = vmatprep.mubr.f32.mxu0 0.0
      %1120 = vmatmul.mubr.f32.gmra.mxu0 %v407
      %v1121 = vpop.f32.mrf.mxu0
      %v1122 = vadd.f32 0.0, %v1121
      %v1123 = vpop.f32.mrf.mxu0
      %1124 = vmatprep.mubr.f32.mxu0 0.0
      %1125 = vmatmul.mubr.f32.gmra.mxu0 %v408
      %v1126 = vpop.f32.mrf.mxu0
      %v1127 = vadd.f32 0.0, %v1126
      %v1128 = vpop.f32.mrf.mxu0
      %1129 = vmatprep.mubr.f32.mxu0 0.0
      %1130 = vmatmul.mubr.f32.gmra.mxu0 %v409
      %v1131 = vpop.f32.mrf.mxu0
      %v1132 = vadd.f32 0.0, %v1131
      %v1133 = vpop.f32.mrf.mxu0
      %1134 = vmatprep.mubr.f32.mxu0 0.0
      %1135 = vmatmul.mubr.f32.gmra.mxu0 %v410
      %v1136 = vpop.f32.mrf.mxu0
      %v1137 = vadd.f32 0.0, %v1136
      %v1138 = vpop.f32.mrf.mxu0
      %1139 = vmatprep.mubr.f32.mxu0 0.0
      %1140 = vmatmul.mubr.f32.gmra.mxu0 %v411
      %v1141 = vpop.f32.mrf.mxu0
      %v1142 = vadd.f32 0.0, %v1141
      %v1143 = vpop.f32.mrf.mxu0
      %1144 = vmatprep.mubr.f32.mxu0 0.0
      %1145 = vmatmul.mubr.f32.gmra.mxu0 %v412
      %v1146 = vpop.f32.mrf.mxu0
      %v1147 = vadd.f32 0.0, %v1146
      %v1148 = vpop.f32.mrf.mxu0
      %1149 = vmatprep.mubr.f32.mxu0 0.0
      %1150 = vmatmul.mubr.f32.gmra.mxu0 %v413
      %v1151 = vpop.f32.mrf.mxu0
      %v1152 = vadd.f32 0.0, %v1151
      %v1153 = vpop.f32.mrf.mxu0
      %1154 = vmatprep.mubr.f32.mxu0 0.0
      %1155 = vmatmul.mubr.f32.gmra.mxu0 %v414
      %v1156 = vpop.f32.mrf.mxu0
      %v1157 = vadd.f32 0.0, %v1156
      %v1158 = vpop.f32.mrf.mxu0
      %1159 = vmatprep.mubr.f32.mxu0 0.0
      %1160 = vmatmul.mubr.f32.gmra.mxu0 %v415
      %v1161 = vpop.f32.mrf.mxu0
      %v1162 = vadd.f32 0.0, %v1161
      %v1163 = vpop.f32.mrf.mxu0
      %1164 = vmatprep.mubr.f32.mxu0 0.0
      %1165 = vmatmul.mubr.f32.gmra.mxu0 %v416
      %v1166 = vpop.f32.mrf.mxu0
      %v1167 = vadd.f32 0.0, %v1166
      %v1168 = vpop.f32.mrf.mxu0
      %1169 = vmatprep.mubr.f32.mxu0 0.0
      %1170 = vmatmul.mubr.f32.gmra.mxu0 %v417
      %v1171 = vpop.f32.mrf.mxu0
      %v1172 = vadd.f32 0.0, %v1171
      %v1173 = vpop.f32.mrf.mxu0
      %1174 = vmatprep.mubr.f32.mxu0 0.0
      %1175 = vmatmul.mubr.f32.gmra.mxu0 %v418
      %v1176 = vpop.f32.mrf.mxu0
      %v1177 = vadd.f32 0.0, %v1176
      %v1178 = vpop.f32.mrf.mxu0
      %1179 = vmatprep.mubr.f32.mxu0 0.0
      %1180 = vmatmul.mubr.f32.gmra.mxu0 %v419
      %v1181 = vpop.f32.mrf.mxu0
      %v1182 = vadd.f32 0.0, %v1181
      %v1183 = vpop.f32.mrf.mxu0
      %1184 = vmatprep.mubr.f32.mxu0 0.0
      %1185 = vmatmul.mubr.f32.gmra.mxu0 %v420
      %v1186 = vpop.f32.mrf.mxu0
      %v1187 = vadd.f32 0.0, %v1186
      %v1188 = vpop.f32.mrf.mxu0
      %1189 = vmatprep.mubr.f32.mxu0 0.0
      %1190 = vmatmul.mubr.f32.gmra.mxu0 %v421
      %v1191 = vpop.f32.mrf.mxu0
      %v1192 = vadd.f32 0.0, %v1191
      %v1193 = vpop.f32.mrf.mxu0
      %1194 = vmatprep.mubr.f32.mxu0 0.0
      %1195 = vmatmul.mubr.f32.gmra.mxu0 %v422
      %v1196 = vpop.f32.mrf.mxu0
      %v1197 = vadd.f32 0.0, %v1196
      %v1198 = vpop.f32.mrf.mxu0
      %1199 = vmatprep.mubr.f32.mxu0 0.0
      %1200 = vmatmul.mubr.f32.gmra.mxu0 %v423
      %v1201 = vpop.f32.mrf.mxu0
      %v1202 = vadd.f32 0.0, %v1201
      %v1203 = vpop.f32.mrf.mxu0
      %1204 = vmatprep.mubr.f32.mxu0 0.0
      %1205 = vmatmul.mubr.f32.gmra.mxu0 %v424
      %v1206 = vpop.f32.mrf.mxu0
      %v1207 = vadd.f32 0.0, %v1206
      %v1208 = vpop.f32.mrf.mxu0
      %1209 = vmatprep.mubr.f32.mxu0 0.0
      %1210 = vmatmul.mubr.f32.gmra.mxu0 %v425
      %v1211 = vpop.f32.mrf.mxu0
      %v1212 = vadd.f32 0.0, %v1211
      %v1213 = vpop.f32.mrf.mxu0
      %1214 = vmatprep.mubr.f32.mxu0 0.0
      %1215 = vmatmul.mubr.f32.gmra.mxu0 %v426
      %v1216 = vpop.f32.mrf.mxu0
      %v1217 = vadd.f32 0.0, %v1216
      %v1218 = vpop.f32.mrf.mxu0
      %1219 = vmatprep.mubr.f32.mxu0 0.0
      %1220 = vmatmul.mubr.f32.gmra.mxu0 %v427
      %v1221 = vpop.f32.mrf.mxu0
      %v1222 = vadd.f32 0.0, %v1221
      %v1223 = vpop.f32.mrf.mxu0
      %1224 = vmatprep.mubr.f32.mxu0 0.0
      %1225 = vmatmul.mubr.f32.gmra.mxu0 %v428
      %v1226 = vpop.f32.mrf.mxu0
      %v1227 = vadd.f32 0.0, %v1226
      %v1228 = vpop.f32.mrf.mxu0
      %1229 = vmatprep.mubr.f32.mxu0 0.0
      %1230 = vmatmul.mubr.f32.gmra.mxu0 %v429
      %v1231 = vpop.f32.mrf.mxu0
      %v1232 = vadd.f32 0.0, %v1231
      %v1233 = vpop.f32.mrf.mxu0
      %1234 = vmatprep.mubr.f32.mxu0 0.0
      %1235 = vmatmul.mubr.f32.gmra.mxu0 %v430
      %v1236 = vpop.f32.mrf.mxu0
      %v1237 = vadd.f32 0.0, %v1236
      %v1238 = vpop.f32.mrf.mxu0
      %1239 = vmatprep.mubr.f32.mxu0 0.0
      %1240 = vmatmul.mubr.f32.gmra.mxu0 %v431
      %v1241 = vpop.f32.mrf.mxu0
      %v1242 = vadd.f32 0.0, %v1241
      %v1243 = vpop.f32.mrf.mxu0
      %1244 = vmatprep.mubr.f32.mxu0 0.0
      %1245 = vmatmul.mubr.f32.gmra.mxu0 %v432
      %v1246 = vpop.f32.mrf.mxu0
      %v1247 = vadd.f32 0.0, %v1246
      %v1248 = vpop.f32.mrf.mxu0
      %1249 = vmatprep.mubr.f32.mxu0 0.0
      %1250 = vmatmul.mubr.f32.gmra.mxu0 %v433
      %v1251 = vpop.f32.mrf.mxu0
      %v1252 = vadd.f32 0.0, %v1251
      %v1253 = vpop.f32.mrf.mxu0
      %1254 = vmatprep.mubr.f32.mxu0 0.0
      %1255 = vmatmul.mubr.f32.gmra.mxu0 %v434
      %v1256 = vpop.f32.mrf.mxu0
      %v1257 = vadd.f32 0.0, %v1256
      %v1258 = vpop.f32.mrf.mxu0
      %1259 = vmatprep.mubr.f32.mxu0 0.0
      %1260 = vmatmul.mubr.f32.gmra.mxu0 %v435
      %v1261 = vpop.f32.mrf.mxu0
      %v1262 = vadd.f32 0.0, %v1261
      %v1263 = vpop.f32.mrf.mxu0
      %1264 = vmatprep.mubr.f32.mxu0 0.0
      %1265 = vmatmul.mubr.f32.gmra.mxu0 %v436
      %v1266 = vpop.f32.mrf.mxu0
      %v1267 = vadd.f32 0.0, %v1266
      %v1268 = vpop.f32.mrf.mxu0
      %1269 = vmatprep.mubr.f32.mxu0 0.0
      %1270 = vmatmul.mubr.f32.gmra.mxu0 %v437
      %v1271 = vpop.f32.mrf.mxu0
      %v1272 = vadd.f32 0.0, %v1271
      %v1273 = vpop.f32.mrf.mxu0
      %1274 = vmatprep.mubr.f32.mxu0 0.0
      %1275 = vmatmul.mubr.f32.gmra.mxu0 %v438
      %v1276 = vpop.f32.mrf.mxu0
      %v1277 = vadd.f32 0.0, %v1276
      %v1278 = vpop.f32.mrf.mxu0
      %1279 = vmatprep.mubr.f32.mxu0 0.0
      %1280 = vmatmul.mubr.f32.gmra.mxu0 %v439
      %v1281 = vpop.f32.mrf.mxu0
      %v1282 = vadd.f32 0.0, %v1281
      %v1283 = vpop.f32.mrf.mxu0
      %1284 = vmatprep.mubr.f32.mxu0 0.0
      %1285 = vmatmul.mubr.f32.gmra.mxu0 %v440
      %v1286 = vpop.f32.mrf.mxu0
      %v1287 = vadd.f32 0.0, %v1286
      %v1288 = vpop.f32.mrf.mxu0
      %1289 = vmatprep.mubr.f32.mxu0 0.0
      %1290 = vmatmul.mubr.f32.gmra.mxu0 %v441
      %v1291 = vpop.f32.mrf.mxu0
      %v1292 = vadd.f32 0.0, %v1291
      %v1293 = vpop.f32.mrf.mxu0
      %1294 = vmatprep.mubr.f32.mxu0 0.0
      %1295 = vmatmul.mubr.f32.gmra.mxu0 %v442
      %v1296 = vpop.f32.mrf.mxu0
      %v1297 = vadd.f32 0.0, %v1296
      %v1298 = vpop.f32.mrf.mxu0
      %1299 = vmatprep.mubr.f32.mxu0 0.0
      %1300 = vmatmul.mubr.f32.gmra.mxu0 %v443
      %v1301 = vpop.f32.mrf.mxu0
      %v1302 = vadd.f32 0.0, %v1301
      %v1303 = vpop.f32.mrf.mxu0
      %1304 = vmatprep.mubr.f32.mxu0 0.0
      %1305 = vmatmul.mubr.f32.gmra.mxu0 %v444
      %v1306 = vpop.f32.mrf.mxu0
      %v1307 = vadd.f32 0.0, %v1306
      %v1308 = vpop.f32.mrf.mxu0
      %1309 = vmatprep.mubr.f32.mxu0 0.0
      %1310 = vmatmul.mubr.f32.gmra.mxu0 %v445
      %v1311 = vpop.f32.mrf.mxu0
      %v1312 = vadd.f32 0.0, %v1311
      %v1313 = vpop.f32.mrf.mxu0
      %1314 = vmatprep.mubr.f32.mxu0 0.0
      %1315 = vmatmul.mubr.f32.gmra.mxu0 %v446
      %v1316 = vpop.f32.mrf.mxu0
      %v1317 = vadd.f32 0.0, %v1316
      %v1318 = vpop.f32.mrf.mxu0
      %1319 = vmatprep.mubr.f32.mxu0 0.0
      %1320 = vmatmul.mubr.f32.gmra.mxu0 %v447
      %v1321 = vpop.f32.mrf.mxu0
      %v1322 = vadd.f32 0.0, %v1321
      %v1323 = vpop.f32.mrf.mxu0
      %1324 = vmatprep.mubr.f32.mxu0 0.0
      %1325 = vmatmul.mubr.f32.gmra.mxu0 %v448
      %v1326 = vpop.f32.mrf.mxu0
      %v1327 = vadd.f32 0.0, %v1326
      %v1328 = vpop.f32.mrf.mxu0
      %1329 = vmatprep.mubr.f32.mxu0 0.0
      %1330 = vmatmul.mubr.f32.gmra.mxu0 %v449
      %v1331 = vpop.f32.mrf.mxu0
      %v1332 = vadd.f32 0.0, %v1331
      %v1333 = vpop.f32.mrf.mxu0
      %1334 = vmatprep.mubr.f32.mxu0 0.0
      %1335 = vmatmul.mubr.f32.gmra.mxu0 %v450
      %v1336 = vpop.f32.mrf.mxu0
      %v1337 = vadd.f32 0.0, %v1336
      %v1338 = vpop.f32.mrf.mxu0
      %1339 = vmatprep.mubr.f32.mxu0 0.0
      %1340 = vmatmul.mubr.f32.gmra.mxu0 %v451
      %v1341 = vpop.f32.mrf.mxu0
      %v1342 = vadd.f32 0.0, %v1341
      %v1343 = vpop.f32.mrf.mxu0
      %1344 = vmatprep.mubr.f32.mxu0 0.0
      %1345 = vmatmul.mubr.f32.gmra.mxu0 %v452
      %v1346 = vpop.f32.mrf.mxu0
      %v1347 = vadd.f32 0.0, %v1346
      %v1348 = vpop.f32.mrf.mxu0
      %1349 = vmatprep.mubr.f32.mxu0 0.0
      %1350 = vmatmul.mubr.f32.gmra.mxu0 %v453
      %v1351 = vpop.f32.mrf.mxu0
      %v1352 = vadd.f32 0.0, %v1351
      %v1353 = vpop.f32.mrf.mxu0
      %1354 = vmatprep.mubr.f32.mxu0 0.0
      %1355 = vmatmul.mubr.f32.gmra.mxu0 %v454
      %v1356 = vpop.f32.mrf.mxu0
      %v1357 = vadd.f32 0.0, %v1356
      %v1358 = vpop.f32.mrf.mxu0
      %1359 = vmatprep.mubr.f32.mxu0 0.0
      %1360 = vmatmul.mubr.f32.gmra.mxu0 %v455
      %v1361 = vpop.f32.mrf.mxu0
      %v1362 = vadd.f32 0.0, %v1361
      %v1363 = vpop.f32.mrf.mxu0
      %1364 = vmatprep.mubr.f32.mxu0 0.0
      %1365 = vmatmul.mubr.f32.gmra.mxu0 %v456
      %v1366 = vpop.f32.mrf.mxu0
      %v1367 = vadd.f32 0.0, %v1366
      %v1368 = vpop.f32.mrf.mxu0
      %1369 = vmatprep.mubr.f32.mxu0 0.0
      %1370 = vmatmul.mubr.f32.gmra.mxu0 %v457
      %v1371 = vpop.f32.mrf.mxu0
      %v1372 = vadd.f32 0.0, %v1371
      %v1373 = vpop.f32.mrf.mxu0
      %1374 = vmatprep.mubr.f32.mxu0 0.0
      %1375 = vmatmul.mubr.f32.gmra.mxu0 %v458
      %v1376 = vpop.f32.mrf.mxu0
      %v1377 = vadd.f32 0.0, %v1376
      %v1378 = vpop.f32.mrf.mxu0
      %1379 = vmatprep.mubr.f32.mxu0 0.0
      %1380 = vmatmul.mubr.f32.gmra.mxu0 %v459
      %v1381 = vpop.f32.mrf.mxu0
      %v1382 = vadd.f32 0.0, %v1381
      %v1383 = vpop.f32.mrf.mxu0
      %1384 = vmatprep.mubr.f32.mxu0 0.0
      %1385 = vmatmul.mubr.f32.gmra.mxu0 %v460
      %v1386 = vpop.f32.mrf.mxu0
      %v1387 = vadd.f32 0.0, %v1386
      %v1388 = vpop.f32.mrf.mxu0
      %1389 = vmatprep.mubr.f32.mxu0 0.0
      %1390 = vmatmul.mubr.f32.gmra.mxu0 %v461
      %v1391 = vpop.f32.mrf.mxu0
      %v1392 = vadd.f32 0.0, %v1391
      %v1393 = vpop.f32.mrf.mxu0
      %1394 = vmatprep.mubr.f32.mxu0 0.0
      %1395 = vmatmul.mubr.f32.gmra.mxu0 %v462
      %v1396 = vpop.f32.mrf.mxu0
      %v1397 = vadd.f32 0.0, %v1396
      %v1398 = vpop.f32.mrf.mxu0
      %1399 = vmatprep.mubr.f32.mxu0 0.0
      %1400 = vmatmul.mubr.f32.gmra.mxu0 %v463
      %v1401 = vpop.f32.mrf.mxu0
      %v1402 = vadd.f32 0.0, %v1401
      %v1403 = vpop.f32.mrf.mxu0
      %1404 = vmatprep.mubr.f32.mxu0 0.0
      %1405 = vmatmul.mubr.f32.gmra.mxu0 %v464
      %v1406 = vpop.f32.mrf.mxu0
      %v1407 = vadd.f32 0.0, %v1406
      %v1408 = vpop.f32.mrf.mxu0
      %1409 = vmatprep.mubr.f32.mxu0 0.0
      %1410 = vmatmul.mubr.f32.gmra.mxu0 %v465
      %v1411 = vpop.f32.mrf.mxu0
      %v1412 = vadd.f32 0.0, %v1411
      %v1413 = vpop.f32.mrf.mxu0
      %1414 = vmatprep.mubr.f32.mxu0 0.0
      %1415 = vmatmul.mubr.f32.gmra.mxu0 %v466
      %v1416 = vpop.f32.mrf.mxu0
      %v1417 = vadd.f32 0.0, %v1416
      %v1418 = vpop.f32.mrf.mxu0
      %1419 = vmatprep.mubr.f32.mxu0 0.0
      %1420 = vmatmul.mubr.f32.gmra.mxu0 %v467
      %v1421 = vpop.f32.mrf.mxu0
      %v1422 = vadd.f32 0.0, %v1421
      %v1423 = vpop.f32.mrf.mxu0
      %1424 = vmatprep.mubr.f32.mxu0 0.0
      %1425 = vmatmul.mubr.f32.gmra.mxu0 %v468
      %v1426 = vpop.f32.mrf.mxu0
      %v1427 = vadd.f32 0.0, %v1426
      %v1428 = vpop.f32.mrf.mxu0
      %1429 = vmatprep.mubr.f32.mxu0 0.0
      %1430 = vmatmul.mubr.f32.gmra.mxu0 %v469
      %v1431 = vpop.f32.mrf.mxu0
      %v1432 = vadd.f32 0.0, %v1431
      %v1433 = vpop.f32.mrf.mxu0
      %1434 = vmatprep.mubr.f32.mxu0 0.0
      %1435 = vmatmul.mubr.f32.gmra.mxu0 %v470
      %v1436 = vpop.f32.mrf.mxu0
      %v1437 = vadd.f32 0.0, %v1436
      %v1438 = vpop.f32.mrf.mxu0
      %1439 = vmatprep.mubr.f32.mxu0 0.0
      %1440 = vmatmul.mubr.f32.gmra.mxu0 %v471
      %v1441 = vpop.f32.mrf.mxu0
      %v1442 = vadd.f32 0.0, %v1441
      %v1443 = vpop.f32.mrf.mxu0
      %1444 = vmatprep.mubr.f32.mxu0 0.0
      %1445 = vmatmul.mubr.f32.gmra.mxu0 %v472
      %v1446 = vpop.f32.mrf.mxu0
      %v1447 = vadd.f32 0.0, %v1446
      %v1448 = vpop.f32.mrf.mxu0
      %1449 = vmatprep.mubr.f32.mxu0 0.0
      %1450 = vmatmul.mubr.f32.gmra.mxu0 %v473
      %v1451 = vpop.f32.mrf.mxu0
      %v1452 = vadd.f32 0.0, %v1451
      %v1453 = vpop.f32.mrf.mxu0
      %1454 = vmatprep.mubr.f32.mxu0 0.0
      %1455 = vmatmul.mubr.f32.gmra.mxu0 %v474
      %v1456 = vpop.f32.mrf.mxu0
      %v1457 = vadd.f32 0.0, %v1456
      %v1458 = vpop.f32.mrf.mxu0
      %1459 = vmatprep.mubr.f32.mxu0 0.0
      %1460 = vmatmul.mubr.f32.gmra.mxu0 %v475
      %v1461 = vpop.f32.mrf.mxu0
      %v1462 = vadd.f32 0.0, %v1461
      %v1463 = vpop.f32.mrf.mxu0
      %1464 = vmatprep.mubr.f32.mxu0 0.0
      %1465 = vmatmul.mubr.f32.gmra.mxu0 %v476
      %v1466 = vpop.f32.mrf.mxu0
      %v1467 = vadd.f32 0.0, %v1466
      %v1468 = vpop.f32.mrf.mxu0
      %1469 = vmatprep.mubr.f32.mxu0 0.0
      %1470 = vmatmul.mubr.f32.gmra.mxu0 %v477
      %v1471 = vpop.f32.mrf.mxu0
      %v1472 = vadd.f32 0.0, %v1471
      %v1473 = vpop.f32.mrf.mxu0
      %1474 = vmatprep.mubr.f32.mxu0 0.0
      %1475 = vmatmul.mubr.f32.gmra.mxu0 %v478
      %v1476 = vpop.f32.mrf.mxu0
      %v1477 = vadd.f32 0.0, %v1476
      %v1478 = vpop.f32.mrf.mxu0
      %1479 = vmatprep.mubr.f32.mxu0 0.0
      %1480 = vmatmul.mubr.f32.gmra.mxu0 %v479
      %v1481 = vpop.f32.mrf.mxu0
      %v1482 = vadd.f32 0.0, %v1481
      %v1483 = vpop.f32.mrf.mxu0
      %1484 = vmatprep.mubr.f32.mxu0 0.0
      %1485 = vmatmul.mubr.f32.gmra.mxu0 %v480
      %v1486 = vpop.f32.mrf.mxu0
      %v1487 = vadd.f32 0.0, %v1486
      %v1488 = vpop.f32.mrf.mxu0
      %1489 = vmatprep.mubr.f32.mxu0 0.0
      %1490 = vmatmul.mubr.f32.gmra.mxu0 %v481
      %v1491 = vpop.f32.mrf.mxu0
      %v1492 = vadd.f32 0.0, %v1491
      %v1493 = vpop.f32.mrf.mxu0
      %1494 = vmatprep.mubr.f32.mxu0 0.0
      %1495 = vmatmul.mubr.f32.gmra.mxu0 %v482
      %v1496 = vpop.f32.mrf.mxu0
      %v1497 = vadd.f32 0.0, %v1496
      %v1498 = vpop.f32.mrf.mxu0
      %1499 = vmatprep.mubr.f32.mxu0 0.0
      %1500 = vmatmul.mubr.f32.gmra.mxu0 %v483
      %v1501 = vpop.f32.mrf.mxu0
      %v1502 = vadd.f32 0.0, %v1501
      %v1503 = vpop.f32.mrf.mxu0
      %1504 = vmatprep.mubr.f32.mxu0 0.0
      %1505 = vmatmul.mubr.f32.gmra.mxu0 %v484
      %v1506 = vpop.f32.mrf.mxu0
      %v1507 = vadd.f32 0.0, %v1506
      %v1508 = vpop.f32.mrf.mxu0
      %1509 = vmatprep.mubr.f32.mxu0 0.0
      %1510 = vmatmul.mubr.f32.gmra.mxu0 %v485
      %v1511 = vpop.f32.mrf.mxu0
      %v1512 = vadd.f32 0.0, %v1511
      %v1513 = vpop.f32.mrf.mxu0
      %1514 = vmatprep.mubr.f32.mxu0 0.0
      %1515 = vmatmul.mubr.f32.gmra.mxu0 %v486
      %v1516 = vpop.f32.mrf.mxu0
      %v1517 = vadd.f32 0.0, %v1516
      %v1518 = vpop.f32.mrf.mxu0
      %1519 = vmatprep.mubr.f32.mxu0 0.0
      %1520 = vmatmul.mubr.f32.gmra.mxu0 %v487
      %v1521 = vpop.f32.mrf.mxu0
      %v1522 = vadd.f32 0.0, %v1521
      %v1523 = vpop.f32.mrf.mxu0
      %1524 = vmatprep.mubr.f32.mxu0 0.0
      %1525 = vmatmul.mubr.f32.gmra.mxu0 %v488
      %v1526 = vpop.f32.mrf.mxu0
      %v1527 = vadd.f32 0.0, %v1526
      %v1528 = vpop.f32.mrf.mxu0
      %1529 = vmatprep.mubr.f32.mxu0 0.0
      %1530 = vmatmul.mubr.f32.gmra.mxu0 %v489
      %v1531 = vpop.f32.mrf.mxu0
      %v1532 = vadd.f32 0.0, %v1531
      %v1533 = vpop.f32.mrf.mxu0
      %1534 = vmatprep.mubr.f32.mxu0 0.0
      %1535 = vmatmul.mubr.f32.gmra.mxu0 %v490
      %v1536 = vpop.f32.mrf.mxu0
      %v1537 = vadd.f32 0.0, %v1536
      %v1538 = vpop.f32.mrf.mxu0
      %1539 = vmatprep.mubr.f32.mxu0 0.0
      %1540 = vmatmul.mubr.f32.gmra.mxu0 %v491
      %v1541 = vpop.f32.mrf.mxu0
      %v1542 = vadd.f32 0.0, %v1541
      %v1543 = vpop.f32.mrf.mxu0
      %1544 = vmatprep.mubr.f32.mxu0 0.0
      %1545 = vmatmul.mubr.f32.gmra.mxu0 %v492
      %v1546 = vpop.f32.mrf.mxu0
      %v1547 = vadd.f32 0.0, %v1546
      %v1548 = vpop.f32.mrf.mxu0
      %1549 = vmatprep.mubr.f32.mxu0 0.0
      %1550 = vmatmul.mubr.f32.gmra.mxu0 %v493
      %v1551 = vpop.f32.mrf.mxu0
      %v1552 = vadd.f32 0.0, %v1551
      %v1553 = vpop.f32.mrf.mxu0
      %1554 = vmatprep.mubr.f32.mxu0 0.0
      %1555 = vmatmul.mubr.f32.gmra.mxu0 %v494
      %v1556 = vpop.f32.mrf.mxu0
      %v1557 = vadd.f32 0.0, %v1556
      %v1558 = vpop.f32.mrf.mxu0
      %1559 = vdwg.mxu0
      %v1560 = vld [vmem:[%s3] sm:$0xff]
      %v1561 = vld [vmem:[%s3 + $0x8] sm:$0xff]
      %v1562 = vld [vmem:[%s3 + $0x10] sm:$0xff]
      %v1563 = vld [vmem:[%s3 + $0x18] sm:$0xff]
      %v1564 = vld [vmem:[%s3 + $0x20] sm:$0xff]
      %v1565 = vld [vmem:[%s3 + $0x28] sm:$0xff]
      %v1566 = vld [vmem:[%s3 + $0x30] sm:$0xff]
      %v1567 = vld [vmem:[%s3 + $0x38] sm:$0xff]
      %1569 = vset.pattern.permute.xlu0 0
      %1570 = vperm.xlu0 %1569, %v1560
      %v1571 = vpop.permute.xlu0 %1570
      %1574 = vset.pattern.permute.xlu0 0
      %1575 = vperm.xlu0 %1574, %v1561
      %v1576 = vpop.permute.xlu0 %1575
      %1579 = vset.pattern.permute.xlu0 0
      %1580 = vperm.xlu0 %1579, %v1562
      %v1581 = vpop.permute.xlu0 %1580
      %1584 = vset.pattern.permute.xlu0 0
      %1585 = vperm.xlu0 %1584, %v1563
      %v1586 = vpop.permute.xlu0 %1585
      %1589 = vset.pattern.permute.xlu0 0
      %1590 = vperm.xlu0 %1589, %v1564
      %v1591 = vpop.permute.xlu0 %1590
      %1594 = vset.pattern.permute.xlu0 0
      %1595 = vperm.xlu0 %1594, %v1565
      %v1596 = vpop.permute.xlu0 %1595
      %1599 = vset.pattern.permute.xlu0 0
      %1600 = vperm.xlu0 %1599, %v1566
      %v1601 = vpop.permute.xlu0 %1600
      %1604 = vset.pattern.permute.xlu0 0
      %1605 = vperm.xlu0 %1604, %v1567
      %v1606 = vpop.permute.xlu0 %1605
      %v1608 = vld [vmem:[%s1] sm:$0xff]
      %v1609 = vld [vmem:[%s1 + $0x8] sm:$0xff]
      %v1610 = vld [vmem:[%s1 + $0x10] sm:$0xff]
      %v1611 = vld [vmem:[%s1 + $0x18] sm:$0xff]
      %v1612 = vld [vmem:[%s1 + $0x20] sm:$0xff]
      %v1613 = vld [vmem:[%s1 + $0x28] sm:$0xff]
      %v1614 = vld [vmem:[%s1 + $0x30] sm:$0xff]
      %v1615 = vld [vmem:[%s1 + $0x38] sm:$0xff]
      %v1616 = vld [vmem:[%s1 + $0x40] sm:$0xff]
      %v1617 = vld [vmem:[%s1 + $0x48] sm:$0xff]
      %v1618 = vld [vmem:[%s1 + $0x50] sm:$0xff]
      %v1619 = vld [vmem:[%s1 + $0x58] sm:$0xff]
      %v1620 = vld [vmem:[%s1 + $0x60] sm:$0x1]
      %v1621 = vld [vmem:[%s1 + $0x68] sm:$0x1]
      %vm1622 = vcmask 400384
      %v1624 = vsel %vm1622, %v562, 0
      %v1627 = vsel %vm1622, %v567, 0
      %v1630 = vsel %vm1622, %v572, 0
      %v1633 = vsel %vm1622, %v577, 0
      %v1636 = vsel %vm1622, %v582, 0
      %v1639 = vsel %vm1622, %v587, 0
      %v1642 = vsel %vm1622, %v592, 0
      %v1645 = vsel %vm1622, %v597, 0
      %vm1647 = vcmask 1040384
      %v1649 = vsel %vm1647, %v1620, 0
      %v1652 = vsel %vm1647, %v1621, 0
      %1654 = vmatprep.subr.mxu0 0.0
      %1655 = vmatpush1.msra.mxu0 0.0
      %1656 = vmatprep.subr.mxu0 0.0
      %1657 = vmatpush1.msra.mxu0 0.0
      %1658 = vmatprep.subr.mxu0 0.0
      %1659 = vmatpush1.msra.mxu0 0.0
      %1660 = vmatprep.subr.mxu0 0.0
      %1661 = vmatpush1.msra.mxu0 0.0
      %1662 = vmatprep.subr.mxu0 0.0
      %1663 = vmatpush1.msra.mxu0 0.0
      %1664 = vmatprep.subr.mxu0 0.0
      %1665 = vmatpush1.msra.mxu0 0.0
      %1666 = vmatprep.subr.mxu0 0.0
      %1667 = vmatpush1.msra.mxu0 0.0
      %1668 = vmatprep.subr.mxu0 0.0
      %1669 = vmatpush1.msra.mxu0 0.0
      %1670 = vmatprep.subr.mxu0 0.0
      %1671 = vmatpush1.msra.mxu0 0.0
      %1672 = vmatprep.subr.mxu0 %v1652
      %1673 = vmatpush1.msra.mxu0 %v1649
      %1674 = vmatprep.subr.mxu0 %v1619
      %1675 = vmatpush1.msra.mxu0 %v1618
      %1676 = vmatprep.subr.mxu0 %v1617
      %1677 = vmatpush1.msra.mxu0 %v1616
      %1678 = vmatprep.subr.mxu0 %v1615
      %1679 = vmatpush1.msra.mxu0 %v1614
      %1680 = vmatprep.subr.mxu0 %v1613
      %1681 = vmatpush1.msra.mxu0 %v1612
      %1682 = vmatprep.subr.mxu0 %v1611
      %1683 = vmatpush1.msra.mxu0 %v1610
      %1684 = vmatprep.subr.mxu0 %v1609
      %1685 = vmatpush1.msra.mxu0 %v1608
      %1686 = vmatprep.subr.mxu0 0.0
      %1687 = vmatpush2.msra.mxu0 0.0
      %1688 = vmatprep.subr.mxu0 0.0
      %1689 = vmatpush2.msra.mxu0 0.0
      %1690 = vmatprep.subr.mxu0 0.0
      %1691 = vmatpush2.msra.mxu0 0.0
      %1692 = vmatprep.subr.mxu0 0.0
      %1693 = vmatpush2.msra.mxu0 0.0
      %1694 = vmatprep.subr.mxu0 0.0
      %1695 = vmatpush2.msra.mxu0 0.0
      %1696 = vmatprep.subr.mxu0 0.0
      %1697 = vmatpush2.msra.mxu0 0.0
      %1698 = vmatprep.subr.mxu0 0.0
      %1699 = vmatpush2.msra.mxu0 0.0
      %1700 = vmatprep.subr.mxu0 0.0
      %1701 = vmatpush2.msra.mxu0 0.0
      %1702 = vmatprep.subr.mxu0 0.0
      %1703 = vmatpush2.msra.mxu0 0.0
      %1704 = vmatprep.subr.mxu0 0.0
      %1705 = vmatpush2.msra.mxu0 0.0
      %1706 = vmatprep.subr.mxu0 0.0
      %1707 = vmatpush2.msra.mxu0 0.0
      %1708 = vmatprep.subr.mxu0 0.0
      %1709 = vmatpush2.msra.mxu0 0.0
      %1710 = vmatprep.subr.mxu0 0.0
      %1711 = vmatpush2.msra.mxu0 0.0
      %1712 = vmatprep.subr.mxu0 0.0
      %1713 = vmatpush2.msra.mxu0 0.0
      %1714 = vmatprep.subr.mxu0 0.0
      %1715 = vmatpush2.msra.mxu0 0.0
      %1716 = vmatprep.subr.mxu0 0.0
      %1717 = vmatpush2.msra.mxu0 0.0
      %1718 = vmatprep.mubr.f32.mxu0 0.0
      %1719 = vmatmul.mubr.f32.gmra.mxu0 %v1624
      %v1720 = vpop.f32.mrf.mxu0
      %v1721 = vadd.f32 0.0, %v1720
      %v1722 = vpop.f32.mrf.mxu0
      %v1723 = vadd.f32 0.0, %v1722
      %1724 = vmatprep.mubr.f32.mxu0 0.0
      %1725 = vmatmul.mubr.f32.gmra.mxu0 %v1627
      %v1726 = vpop.f32.mrf.mxu0
      %v1727 = vadd.f32 0.0, %v1726
      %v1728 = vpop.f32.mrf.mxu0
      %v1729 = vadd.f32 0.0, %v1728
      %1730 = vmatprep.mubr.f32.mxu0 0.0
      %1731 = vmatmul.mubr.f32.gmra.mxu0 %v1630
      %v1732 = vpop.f32.mrf.mxu0
      %v1733 = vadd.f32 0.0, %v1732
      %v1734 = vpop.f32.mrf.mxu0
      %v1735 = vadd.f32 0.0, %v1734
      %1736 = vmatprep.mubr.f32.mxu0 0.0
      %1737 = vmatmul.mubr.f32.gmra.mxu0 %v1633
      %v1738 = vpop.f32.mrf.mxu0
      %v1739 = vadd.f32 0.0, %v1738
      %v1740 = vpop.f32.mrf.mxu0
      %v1741 = vadd.f32 0.0, %v1740
      %1742 = vmatprep.mubr.f32.mxu0 0.0
      %1743 = vmatmul.mubr.f32.gmra.mxu0 %v1636
      %v1744 = vpop.f32.mrf.mxu0
      %v1745 = vadd.f32 0.0, %v1744
      %v1746 = vpop.f32.mrf.mxu0
      %v1747 = vadd.f32 0.0, %v1746
      %1748 = vmatprep.mubr.f32.mxu0 0.0
      %1749 = vmatmul.mubr.f32.gmra.mxu0 %v1639
      %v1750 = vpop.f32.mrf.mxu0
      %v1751 = vadd.f32 0.0, %v1750
      %v1752 = vpop.f32.mrf.mxu0
      %v1753 = vadd.f32 0.0, %v1752
      %1754 = vmatprep.mubr.f32.mxu0 0.0
      %1755 = vmatmul.mubr.f32.gmra.mxu0 %v1642
      %v1756 = vpop.f32.mrf.mxu0
      %v1757 = vadd.f32 0.0, %v1756
      %v1758 = vpop.f32.mrf.mxu0
      %v1759 = vadd.f32 0.0, %v1758
      %1760 = vmatprep.mubr.f32.mxu0 0.0
      %1761 = vmatmul.mubr.f32.gmra.mxu0 %v1645
      %v1762 = vpop.f32.mrf.mxu0
      %v1763 = vadd.f32 0.0, %v1762
      %v1764 = vpop.f32.mrf.mxu0
      %v1765 = vadd.f32 0.0, %v1764
      %1766 = vdwg.mxu0
      %v1767 = vadd.f32 %v1571, %v1721
      %v1768 = vadd.f32 %v1571, %v1723
      %v1769 = vadd.f32 %v1576, %v1727
      %v1770 = vadd.f32 %v1576, %v1729
      %v1771 = vadd.f32 %v1581, %v1733
      %v1772 = vadd.f32 %v1581, %v1735
      %v1773 = vadd.f32 %v1586, %v1739
      %v1774 = vadd.f32 %v1586, %v1741
      %v1775 = vadd.f32 %v1591, %v1745
      %v1776 = vadd.f32 %v1591, %v1747
      %v1777 = vadd.f32 %v1596, %v1751
      %v1778 = vadd.f32 %v1596, %v1753
      %v1779 = vadd.f32 %v1601, %v1757
      %v1780 = vadd.f32 %v1601, %v1759
      %v1781 = vadd.f32 %v1606, %v1763
      %v1782 = vadd.f32 %v1606, %v1765
      %s1783 = scalar_lea.vmem %s1, 112
      %v1784 = vld [vmem:[%s1783] sm:$0xff]
      %v1785 = vld [vmem:[%s1783 + $0x8] sm:$0xff]
      %v1786 = vld [vmem:[%s1783 + $0x10] sm:$0xff]
      %v1787 = vld [vmem:[%s1783 + $0x18] sm:$0xff]
      %v1788 = vld [vmem:[%s1783 + $0x20] sm:$0xff]
      %v1789 = vld [vmem:[%s1783 + $0x28] sm:$0xff]
      %v1790 = vld [vmem:[%s1783 + $0x30] sm:$0xff]
      %v1791 = vld [vmem:[%s1783 + $0x38] sm:$0xff]
      %v1792 = vld [vmem:[%s1783 + $0x40] sm:$0xff]
      %v1793 = vld [vmem:[%s1783 + $0x48] sm:$0xff]
      %v1794 = vld [vmem:[%s1783 + $0x50] sm:$0xff]
      %v1795 = vld [vmem:[%s1783 + $0x58] sm:$0xff]
      %v1796 = vld [vmem:[%s1783 + $0x60] sm:$0x1]
      %v1797 = vld [vmem:[%s1783 + $0x68] sm:$0x1]
      %v1799 = vsel %vm1622, %v602, 0
      %v1802 = vsel %vm1622, %v607, 0
      %v1805 = vsel %vm1622, %v612, 0
      %v1808 = vsel %vm1622, %v617, 0
      %v1811 = vsel %vm1622, %v622, 0
      %v1814 = vsel %vm1622, %v627, 0
      %v1817 = vsel %vm1622, %v632, 0
      %v1820 = vsel %vm1622, %v637, 0
      %v1823 = vsel %vm1647, %v1796, 0
      %v1826 = vsel %vm1647, %v1797, 0
      %1828 = vmatprep.subr.mxu0 0.0
      %1829 = vmatpush1.msra.mxu0 0.0
      %1830 = vmatprep.subr.mxu0 0.0
      %1831 = vmatpush1.msra.mxu0 0.0
      %1832 = vmatprep.subr.mxu0 0.0
      %1833 = vmatpush1.msra.mxu0 0.0
      %1834 = vmatprep.subr.mxu0 0.0
      %1835 = vmatpush1.msra.mxu0 0.0
      %1836 = vmatprep.subr.mxu0 0.0
      %1837 = vmatpush1.msra.mxu0 0.0
      %1838 = vmatprep.subr.mxu0 0.0
      %1839 = vmatpush1.msra.mxu0 0.0
      %1840 = vmatprep.subr.mxu0 0.0
      %1841 = vmatpush1.msra.mxu0 0.0
      %1842 = vmatprep.subr.mxu0 0.0
      %1843 = vmatpush1.msra.mxu0 0.0
      %1844 = vmatprep.subr.mxu0 0.0
      %1845 = vmatpush1.msra.mxu0 0.0
      %1846 = vmatprep.subr.mxu0 %v1826
      %1847 = vmatpush1.msra.mxu0 %v1823
      %1848 = vmatprep.subr.mxu0 %v1795
      %1849 = vmatpush1.msra.mxu0 %v1794
      %1850 = vmatprep.subr.mxu0 %v1793
      %1851 = vmatpush1.msra.mxu0 %v1792
      %1852 = vmatprep.subr.mxu0 %v1791
      %1853 = vmatpush1.msra.mxu0 %v1790
      %1854 = vmatprep.subr.mxu0 %v1789
      %1855 = vmatpush1.msra.mxu0 %v1788
      %1856 = vmatprep.subr.mxu0 %v1787
      %1857 = vmatpush1.msra.mxu0 %v1786
      %1858 = vmatprep.subr.mxu0 %v1785
      %1859 = vmatpush1.msra.mxu0 %v1784
      %1860 = vmatprep.subr.mxu0 0.0
      %1861 = vmatpush2.msra.mxu0 0.0
      %1862 = vmatprep.subr.mxu0 0.0
      %1863 = vmatpush2.msra.mxu0 0.0
      %1864 = vmatprep.subr.mxu0 0.0
      %1865 = vmatpush2.msra.mxu0 0.0
      %1866 = vmatprep.subr.mxu0 0.0
      %1867 = vmatpush2.msra.mxu0 0.0
      %1868 = vmatprep.subr.mxu0 0.0
      %1869 = vmatpush2.msra.mxu0 0.0
      %1870 = vmatprep.subr.mxu0 0.0
      %1871 = vmatpush2.msra.mxu0 0.0
      %1872 = vmatprep.subr.mxu0 0.0
      %1873 = vmatpush2.msra.mxu0 0.0
      %1874 = vmatprep.subr.mxu0 0.0
      %1875 = vmatpush2.msra.mxu0 0.0
      %1876 = vmatprep.subr.mxu0 0.0
      %1877 = vmatpush2.msra.mxu0 0.0
      %1878 = vmatprep.subr.mxu0 0.0
      %1879 = vmatpush2.msra.mxu0 0.0
      %1880 = vmatprep.subr.mxu0 0.0
      %1881 = vmatpush2.msra.mxu0 0.0
      %1882 = vmatprep.subr.mxu0 0.0
      %1883 = vmatpush2.msra.mxu0 0.0
      %1884 = vmatprep.subr.mxu0 0.0
      %1885 = vmatpush2.msra.mxu0 0.0
      %1886 = vmatprep.subr.mxu0 0.0
      %1887 = vmatpush2.msra.mxu0 0.0
      %1888 = vmatprep.subr.mxu0 0.0
      %1889 = vmatpush2.msra.mxu0 0.0
      %1890 = vmatprep.subr.mxu0 0.0
      %1891 = vmatpush2.msra.mxu0 0.0
      %1892 = vmatprep.mubr.f32.mxu0 0.0
      %1893 = vmatmul.mubr.f32.gmra.mxu0 %v1799
      %v1894 = vpop.f32.mrf.mxu0
      %v1895 = vadd.f32 0.0, %v1894
      %v1896 = vpop.f32.mrf.mxu0
      %v1897 = vadd.f32 0.0, %v1896
      %1898 = vmatprep.mubr.f32.mxu0 0.0
      %1899 = vmatmul.mubr.f32.gmra.mxu0 %v1802
      %v1900 = vpop.f32.mrf.mxu0
      %v1901 = vadd.f32 0.0, %v1900
      %v1902 = vpop.f32.mrf.mxu0
      %v1903 = vadd.f32 0.0, %v1902
      %1904 = vmatprep.mubr.f32.mxu0 0.0
      %1905 = vmatmul.mubr.f32.gmra.mxu0 %v1805
      %v1906 = vpop.f32.mrf.mxu0
      %v1907 = vadd.f32 0.0, %v1906
      %v1908 = vpop.f32.mrf.mxu0
      %v1909 = vadd.f32 0.0, %v1908
      %1910 = vmatprep.mubr.f32.mxu0 0.0
      %1911 = vmatmul.mubr.f32.gmra.mxu0 %v1808
      %v1912 = vpop.f32.mrf.mxu0
      %v1913 = vadd.f32 0.0, %v1912
      %v1914 = vpop.f32.mrf.mxu0
      %v1915 = vadd.f32 0.0, %v1914
      %1916 = vmatprep.mubr.f32.mxu0 0.0
      %1917 = vmatmul.mubr.f32.gmra.mxu0 %v1811
      %v1918 = vpop.f32.mrf.mxu0
      %v1919 = vadd.f32 0.0, %v1918
      %v1920 = vpop.f32.mrf.mxu0
      %v1921 = vadd.f32 0.0, %v1920
      %1922 = vmatprep.mubr.f32.mxu0 0.0
      %1923 = vmatmul.mubr.f32.gmra.mxu0 %v1814
      %v1924 = vpop.f32.mrf.mxu0
      %v1925 = vadd.f32 0.0, %v1924
      %v1926 = vpop.f32.mrf.mxu0
      %v1927 = vadd.f32 0.0, %v1926
      %1928 = vmatprep.mubr.f32.mxu0 0.0
      %1929 = vmatmul.mubr.f32.gmra.mxu0 %v1817
      %v1930 = vpop.f32.mrf.mxu0
      %v1931 = vadd.f32 0.0, %v1930
      %v1932 = vpop.f32.mrf.mxu0
      %v1933 = vadd.f32 0.0, %v1932
      %1934 = vmatprep.mubr.f32.mxu0 0.0
      %1935 = vmatmul.mubr.f32.gmra.mxu0 %v1820
      %v1936 = vpop.f32.mrf.mxu0
      %v1937 = vadd.f32 0.0, %v1936
      %v1938 = vpop.f32.mrf.mxu0
      %v1939 = vadd.f32 0.0, %v1938
      %1940 = vdwg.mxu0
      %v1941 = vadd.f32 %v1767, %v1895
      %v1942 = vadd.f32 %v1768, %v1897
      %v1943 = vadd.f32 %v1769, %v1901
      %v1944 = vadd.f32 %v1770, %v1903
      %v1945 = vadd.f32 %v1771, %v1907
      %v1946 = vadd.f32 %v1772, %v1909
      %v1947 = vadd.f32 %v1773, %v1913
      %v1948 = vadd.f32 %v1774, %v1915
      %v1949 = vadd.f32 %v1775, %v1919
      %v1950 = vadd.f32 %v1776, %v1921
      %v1951 = vadd.f32 %v1777, %v1925
      %v1952 = vadd.f32 %v1778, %v1927
      %v1953 = vadd.f32 %v1779, %v1931
      %v1954 = vadd.f32 %v1780, %v1933
      %v1955 = vadd.f32 %v1781, %v1937
      %v1956 = vadd.f32 %v1782, %v1939
      %s1957 = scalar_lea.vmem %s1, 224
      %v1958 = vld [vmem:[%s1957] sm:$0xff]
      %v1959 = vld [vmem:[%s1957 + $0x8] sm:$0xff]
      %v1960 = vld [vmem:[%s1957 + $0x10] sm:$0xff]
      %v1961 = vld [vmem:[%s1957 + $0x18] sm:$0xff]
      %v1962 = vld [vmem:[%s1957 + $0x20] sm:$0xff]
      %v1963 = vld [vmem:[%s1957 + $0x28] sm:$0xff]
      %v1964 = vld [vmem:[%s1957 + $0x30] sm:$0xff]
      %v1965 = vld [vmem:[%s1957 + $0x38] sm:$0xff]
      %v1966 = vld [vmem:[%s1957 + $0x40] sm:$0xff]
      %v1967 = vld [vmem:[%s1957 + $0x48] sm:$0xff]
      %v1968 = vld [vmem:[%s1957 + $0x50] sm:$0xff]
      %v1969 = vld [vmem:[%s1957 + $0x58] sm:$0xff]
      %v1970 = vld [vmem:[%s1957 + $0x60] sm:$0x1]
      %v1971 = vld [vmem:[%s1957 + $0x68] sm:$0x1]
      %v1973 = vsel %vm1622, %v642, 0
      %v1976 = vsel %vm1622, %v647, 0
      %v1979 = vsel %vm1622, %v652, 0
      %v1982 = vsel %vm1622, %v657, 0
      %v1985 = vsel %vm1622, %v662, 0
      %v1988 = vsel %vm1622, %v667, 0
      %v1991 = vsel %vm1622, %v672, 0
      %v1994 = vsel %vm1622, %v677, 0
      %v1997 = vsel %vm1647, %v1970, 0
      %v2000 = vsel %vm1647, %v1971, 0
      %2002 = vmatprep.subr.mxu0 0.0
      %2003 = vmatpush1.msra.mxu0 0.0
      %2004 = vmatprep.subr.mxu0 0.0
      %2005 = vmatpush1.msra.mxu0 0.0
      %2006 = vmatprep.subr.mxu0 0.0
      %2007 = vmatpush1.msra.mxu0 0.0
      %2008 = vmatprep.subr.mxu0 0.0
      %2009 = vmatpush1.msra.mxu0 0.0
      %2010 = vmatprep.subr.mxu0 0.0
      %2011 = vmatpush1.msra.mxu0 0.0
      %2012 = vmatprep.subr.mxu0 0.0
      %2013 = vmatpush1.msra.mxu0 0.0
      %2014 = vmatprep.subr.mxu0 0.0
      %2015 = vmatpush1.msra.mxu0 0.0
      %2016 = vmatprep.subr.mxu0 0.0
      %2017 = vmatpush1.msra.mxu0 0.0
      %2018 = vmatprep.subr.mxu0 0.0
      %2019 = vmatpush1.msra.mxu0 0.0
      %2020 = vmatprep.subr.mxu0 %v2000
      %2021 = vmatpush1.msra.mxu0 %v1997
      %2022 = vmatprep.subr.mxu0 %v1969
      %2023 = vmatpush1.msra.mxu0 %v1968
      %2024 = vmatprep.subr.mxu0 %v1967
      %2025 = vmatpush1.msra.mxu0 %v1966
      %2026 = vmatprep.subr.mxu0 %v1965
      %2027 = vmatpush1.msra.mxu0 %v1964
      %2028 = vmatprep.subr.mxu0 %v1963
      %2029 = vmatpush1.msra.mxu0 %v1962
      %2030 = vmatprep.subr.mxu0 %v1961
      %2031 = vmatpush1.msra.mxu0 %v1960
      %2032 = vmatprep.subr.mxu0 %v1959
      %2033 = vmatpush1.msra.mxu0 %v1958
      %2034 = vmatprep.subr.mxu0 0.0
      %2035 = vmatpush2.msra.mxu0 0.0
      %2036 = vmatprep.subr.mxu0 0.0
      %2037 = vmatpush2.msra.mxu0 0.0
      %2038 = vmatprep.subr.mxu0 0.0
      %2039 = vmatpush2.msra.mxu0 0.0
      %2040 = vmatprep.subr.mxu0 0.0
      %2041 = vmatpush2.msra.mxu0 0.0
      %2042 = vmatprep.subr.mxu0 0.0
      %2043 = vmatpush2.msra.mxu0 0.0
      %2044 = vmatprep.subr.mxu0 0.0
      %2045 = vmatpush2.msra.mxu0 0.0
      %2046 = vmatprep.subr.mxu0 0.0
      %2047 = vmatpush2.msra.mxu0 0.0
      %2048 = vmatprep.subr.mxu0 0.0
      %2049 = vmatpush2.msra.mxu0 0.0
      %2050 = vmatprep.subr.mxu0 0.0
      %2051 = vmatpush2.msra.mxu0 0.0
      %2052 = vmatprep.subr.mxu0 0.0
      %2053 = vmatpush2.msra.mxu0 0.0
      %2054 = vmatprep.subr.mxu0 0.0
      %2055 = vmatpush2.msra.mxu0 0.0
      %2056 = vmatprep.subr.mxu0 0.0
      %2057 = vmatpush2.msra.mxu0 0.0
      %2058 = vmatprep.subr.mxu0 0.0
      %2059 = vmatpush2.msra.mxu0 0.0
      %2060 = vmatprep.subr.mxu0 0.0
      %2061 = vmatpush2.msra.mxu0 0.0
      %2062 = vmatprep.subr.mxu0 0.0
      %2063 = vmatpush2.msra.mxu0 0.0
      %2064 = vmatprep.subr.mxu0 0.0
      %2065 = vmatpush2.msra.mxu0 0.0
      %2066 = vmatprep.mubr.f32.mxu0 0.0
      %2067 = vmatmul.mubr.f32.gmra.mxu0 %v1973
      %v2068 = vpop.f32.mrf.mxu0
      %v2069 = vadd.f32 0.0, %v2068
      %v2070 = vpop.f32.mrf.mxu0
      %v2071 = vadd.f32 0.0, %v2070
      %2072 = vmatprep.mubr.f32.mxu0 0.0
      %2073 = vmatmul.mubr.f32.gmra.mxu0 %v1976
      %v2074 = vpop.f32.mrf.mxu0
      %v2075 = vadd.f32 0.0, %v2074
      %v2076 = vpop.f32.mrf.mxu0
      %v2077 = vadd.f32 0.0, %v2076
      %2078 = vmatprep.mubr.f32.mxu0 0.0
      %2079 = vmatmul.mubr.f32.gmra.mxu0 %v1979
      %v2080 = vpop.f32.mrf.mxu0
      %v2081 = vadd.f32 0.0, %v2080
      %v2082 = vpop.f32.mrf.mxu0
      %v2083 = vadd.f32 0.0, %v2082
      %2084 = vmatprep.mubr.f32.mxu0 0.0
      %2085 = vmatmul.mubr.f32.gmra.mxu0 %v1982
      %v2086 = vpop.f32.mrf.mxu0
      %v2087 = vadd.f32 0.0, %v2086
      %v2088 = vpop.f32.mrf.mxu0
      %v2089 = vadd.f32 0.0, %v2088
      %2090 = vmatprep.mubr.f32.mxu0 0.0
      %2091 = vmatmul.mubr.f32.gmra.mxu0 %v1985
      %v2092 = vpop.f32.mrf.mxu0
      %v2093 = vadd.f32 0.0, %v2092
      %v2094 = vpop.f32.mrf.mxu0
      %v2095 = vadd.f32 0.0, %v2094
      %2096 = vmatprep.mubr.f32.mxu0 0.0
      %2097 = vmatmul.mubr.f32.gmra.mxu0 %v1988
      %v2098 = vpop.f32.mrf.mxu0
      %v2099 = vadd.f32 0.0, %v2098
      %v2100 = vpop.f32.mrf.mxu0
      %v2101 = vadd.f32 0.0, %v2100
      %2102 = vmatprep.mubr.f32.mxu0 0.0
      %2103 = vmatmul.mubr.f32.gmra.mxu0 %v1991
      %v2104 = vpop.f32.mrf.mxu0
      %v2105 = vadd.f32 0.0, %v2104
      %v2106 = vpop.f32.mrf.mxu0
      %v2107 = vadd.f32 0.0, %v2106
      %2108 = vmatprep.mubr.f32.mxu0 0.0
      %2109 = vmatmul.mubr.f32.gmra.mxu0 %v1994
      %v2110 = vpop.f32.mrf.mxu0
      %v2111 = vadd.f32 0.0, %v2110
      %v2112 = vpop.f32.mrf.mxu0
      %v2113 = vadd.f32 0.0, %v2112
      %2114 = vdwg.mxu0
      %v2115 = vadd.f32 %v1941, %v2069
      %v2116 = vadd.f32 %v1942, %v2071
      %v2117 = vadd.f32 %v1943, %v2075
      %v2118 = vadd.f32 %v1944, %v2077
      %v2119 = vadd.f32 %v1945, %v2081
      %v2120 = vadd.f32 %v1946, %v2083
      %v2121 = vadd.f32 %v1947, %v2087
      %v2122 = vadd.f32 %v1948, %v2089
      %v2123 = vadd.f32 %v1949, %v2093
      %v2124 = vadd.f32 %v1950, %v2095
      %v2125 = vadd.f32 %v1951, %v2099
      %v2126 = vadd.f32 %v1952, %v2101
      %v2127 = vadd.f32 %v1953, %v2105
      %v2128 = vadd.f32 %v1954, %v2107
      %v2129 = vadd.f32 %v1955, %v2111
      %v2130 = vadd.f32 %v1956, %v2113
      %s2131 = scalar_lea.vmem %s1, 336
      %v2132 = vld [vmem:[%s2131] sm:$0xff]
      %v2133 = vld [vmem:[%s2131 + $0x8] sm:$0xff]
      %v2134 = vld [vmem:[%s2131 + $0x10] sm:$0xff]
      %v2135 = vld [vmem:[%s2131 + $0x18] sm:$0xff]
      %v2136 = vld [vmem:[%s2131 + $0x20] sm:$0xff]
      %v2137 = vld [vmem:[%s2131 + $0x28] sm:$0xff]
      %v2138 = vld [vmem:[%s2131 + $0x30] sm:$0xff]
      %v2139 = vld [vmem:[%s2131 + $0x38] sm:$0xff]
      %v2140 = vld [vmem:[%s2131 + $0x40] sm:$0xff]
      %v2141 = vld [vmem:[%s2131 + $0x48] sm:$0xff]
      %v2142 = vld [vmem:[%s2131 + $0x50] sm:$0xff]
      %v2143 = vld [vmem:[%s2131 + $0x58] sm:$0xff]
      %v2144 = vld [vmem:[%s2131 + $0x60] sm:$0x1]
      %v2145 = vld [vmem:[%s2131 + $0x68] sm:$0x1]
      %v2147 = vsel %vm1622, %v682, 0
      %v2150 = vsel %vm1622, %v687, 0
      %v2153 = vsel %vm1622, %v692, 0
      %v2156 = vsel %vm1622, %v697, 0
      %v2159 = vsel %vm1622, %v702, 0
      %v2162 = vsel %vm1622, %v707, 0
      %v2165 = vsel %vm1622, %v712, 0
      %v2168 = vsel %vm1622, %v717, 0
      %v2171 = vsel %vm1647, %v2144, 0
      %v2174 = vsel %vm1647, %v2145, 0
      %2176 = vmatprep.subr.mxu0 0.0
      %2177 = vmatpush1.msra.mxu0 0.0
      %2178 = vmatprep.subr.mxu0 0.0
      %2179 = vmatpush1.msra.mxu0 0.0
      %2180 = vmatprep.subr.mxu0 0.0
      %2181 = vmatpush1.msra.mxu0 0.0
      %2182 = vmatprep.subr.mxu0 0.0
      %2183 = vmatpush1.msra.mxu0 0.0
      %2184 = vmatprep.subr.mxu0 0.0
      %2185 = vmatpush1.msra.mxu0 0.0
      %2186 = vmatprep.subr.mxu0 0.0
      %2187 = vmatpush1.msra.mxu0 0.0
      %2188 = vmatprep.subr.mxu0 0.0
      %2189 = vmatpush1.msra.mxu0 0.0
      %2190 = vmatprep.subr.mxu0 0.0
      %2191 = vmatpush1.msra.mxu0 0.0
      %2192 = vmatprep.subr.mxu0 0.0
      %2193 = vmatpush1.msra.mxu0 0.0
      %2194 = vmatprep.subr.mxu0 %v2174
      %2195 = vmatpush1.msra.mxu0 %v2171
      %2196 = vmatprep.subr.mxu0 %v2143
      %2197 = vmatpush1.msra.mxu0 %v2142
      %2198 = vmatprep.subr.mxu0 %v2141
      %2199 = vmatpush1.msra.mxu0 %v2140
      %2200 = vmatprep.subr.mxu0 %v2139
      %2201 = vmatpush1.msra.mxu0 %v2138
      %2202 = vmatprep.subr.mxu0 %v2137
      %2203 = vmatpush1.msra.mxu0 %v2136
      %2204 = vmatprep.subr.mxu0 %v2135
      %2205 = vmatpush1.msra.mxu0 %v2134
      %2206 = vmatprep.subr.mxu0 %v2133
      %2207 = vmatpush1.msra.mxu0 %v2132
      %2208 = vmatprep.subr.mxu0 0.0
      %2209 = vmatpush2.msra.mxu0 0.0
      %2210 = vmatprep.subr.mxu0 0.0
      %2211 = vmatpush2.msra.mxu0 0.0
      %2212 = vmatprep.subr.mxu0 0.0
      %2213 = vmatpush2.msra.mxu0 0.0
      %2214 = vmatprep.subr.mxu0 0.0
      %2215 = vmatpush2.msra.mxu0 0.0
      %2216 = vmatprep.subr.mxu0 0.0
      %2217 = vmatpush2.msra.mxu0 0.0
      %2218 = vmatprep.subr.mxu0 0.0
      %2219 = vmatpush2.msra.mxu0 0.0
      %2220 = vmatprep.subr.mxu0 0.0
      %2221 = vmatpush2.msra.mxu0 0.0
      %2222 = vmatprep.subr.mxu0 0.0
      %2223 = vmatpush2.msra.mxu0 0.0
      %2224 = vmatprep.subr.mxu0 0.0
      %2225 = vmatpush2.msra.mxu0 0.0
      %2226 = vmatprep.subr.mxu0 0.0
      %2227 = vmatpush2.msra.mxu0 0.0
      %2228 = vmatprep.subr.mxu0 0.0
      %2229 = vmatpush2.msra.mxu0 0.0
      %2230 = vmatprep.subr.mxu0 0.0
      %2231 = vmatpush2.msra.mxu0 0.0
      %2232 = vmatprep.subr.mxu0 0.0
      %2233 = vmatpush2.msra.mxu0 0.0
      %2234 = vmatprep.subr.mxu0 0.0
      %2235 = vmatpush2.msra.mxu0 0.0
      %2236 = vmatprep.subr.mxu0 0.0
      %2237 = vmatpush2.msra.mxu0 0.0
      %2238 = vmatprep.subr.mxu0 0.0
      %2239 = vmatpush2.msra.mxu0 0.0
      %2240 = vmatprep.mubr.f32.mxu0 0.0
      %2241 = vmatmul.mubr.f32.gmra.mxu0 %v2147
      %v2242 = vpop.f32.mrf.mxu0
      %v2243 = vadd.f32 0.0, %v2242
      %v2244 = vpop.f32.mrf.mxu0
      %v2245 = vadd.f32 0.0, %v2244
      %2246 = vmatprep.mubr.f32.mxu0 0.0
      %2247 = vmatmul.mubr.f32.gmra.mxu0 %v2150
      %v2248 = vpop.f32.mrf.mxu0
      %v2249 = vadd.f32 0.0, %v2248
      %v2250 = vpop.f32.mrf.mxu0
      %v2251 = vadd.f32 0.0, %v2250
      %2252 = vmatprep.mubr.f32.mxu0 0.0
      %2253 = vmatmul.mubr.f32.gmra.mxu0 %v2153
      %v2254 = vpop.f32.mrf.mxu0
      %v2255 = vadd.f32 0.0, %v2254
      %v2256 = vpop.f32.mrf.mxu0
      %v2257 = vadd.f32 0.0, %v2256
      %2258 = vmatprep.mubr.f32.mxu0 0.0
      %2259 = vmatmul.mubr.f32.gmra.mxu0 %v2156
      %v2260 = vpop.f32.mrf.mxu0
      %v2261 = vadd.f32 0.0, %v2260
      %v2262 = vpop.f32.mrf.mxu0
      %v2263 = vadd.f32 0.0, %v2262
      %2264 = vmatprep.mubr.f32.mxu0 0.0
      %2265 = vmatmul.mubr.f32.gmra.mxu0 %v2159
      %v2266 = vpop.f32.mrf.mxu0
      %v2267 = vadd.f32 0.0, %v2266
      %v2268 = vpop.f32.mrf.mxu0
      %v2269 = vadd.f32 0.0, %v2268
      %2270 = vmatprep.mubr.f32.mxu0 0.0
      %2271 = vmatmul.mubr.f32.gmra.mxu0 %v2162
      %v2272 = vpop.f32.mrf.mxu0
      %v2273 = vadd.f32 0.0, %v2272
      %v2274 = vpop.f32.mrf.mxu0
      %v2275 = vadd.f32 0.0, %v2274
      %2276 = vmatprep.mubr.f32.mxu0 0.0
      %2277 = vmatmul.mubr.f32.gmra.mxu0 %v2165
      %v2278 = vpop.f32.mrf.mxu0
      %v2279 = vadd.f32 0.0, %v2278
      %v2280 = vpop.f32.mrf.mxu0
      %v2281 = vadd.f32 0.0, %v2280
      %2282 = vmatprep.mubr.f32.mxu0 0.0
      %2283 = vmatmul.mubr.f32.gmra.mxu0 %v2168
      %v2284 = vpop.f32.mrf.mxu0
      %v2285 = vadd.f32 0.0, %v2284
      %v2286 = vpop.f32.mrf.mxu0
      %v2287 = vadd.f32 0.0, %v2286
      %2288 = vdwg.mxu0
      %v2289 = vadd.f32 %v2115, %v2243
      %v2290 = vadd.f32 %v2116, %v2245
      %v2291 = vadd.f32 %v2117, %v2249
      %v2292 = vadd.f32 %v2118, %v2251
      %v2293 = vadd.f32 %v2119, %v2255
      %v2294 = vadd.f32 %v2120, %v2257
      %v2295 = vadd.f32 %v2121, %v2261
      %v2296 = vadd.f32 %v2122, %v2263
      %v2297 = vadd.f32 %v2123, %v2267
      %v2298 = vadd.f32 %v2124, %v2269
      %v2299 = vadd.f32 %v2125, %v2273
      %v2300 = vadd.f32 %v2126, %v2275
      %v2301 = vadd.f32 %v2127, %v2279
      %v2302 = vadd.f32 %v2128, %v2281
      %v2303 = vadd.f32 %v2129, %v2285
      %v2304 = vadd.f32 %v2130, %v2287
      %s2305 = scalar_lea.vmem %s1, 448
      %v2306 = vld [vmem:[%s2305] sm:$0xff]
      %v2307 = vld [vmem:[%s2305 + $0x8] sm:$0xff]
      %v2308 = vld [vmem:[%s2305 + $0x10] sm:$0xff]
      %v2309 = vld [vmem:[%s2305 + $0x18] sm:$0xff]
      %v2310 = vld [vmem:[%s2305 + $0x20] sm:$0xff]
      %v2311 = vld [vmem:[%s2305 + $0x28] sm:$0xff]
      %v2312 = vld [vmem:[%s2305 + $0x30] sm:$0xff]
      %v2313 = vld [vmem:[%s2305 + $0x38] sm:$0xff]
      %v2314 = vld [vmem:[%s2305 + $0x40] sm:$0xff]
      %v2315 = vld [vmem:[%s2305 + $0x48] sm:$0xff]
      %v2316 = vld [vmem:[%s2305 + $0x50] sm:$0xff]
      %v2317 = vld [vmem:[%s2305 + $0x58] sm:$0xff]
      %v2318 = vld [vmem:[%s2305 + $0x60] sm:$0x1]
      %v2319 = vld [vmem:[%s2305 + $0x68] sm:$0x1]
      %v2321 = vsel %vm1622, %v722, 0
      %v2324 = vsel %vm1622, %v727, 0
      %v2327 = vsel %vm1622, %v732, 0
      %v2330 = vsel %vm1622, %v737, 0
      %v2333 = vsel %vm1622, %v742, 0
      %v2336 = vsel %vm1622, %v747, 0
      %v2339 = vsel %vm1622, %v752, 0
      %v2342 = vsel %vm1622, %v757, 0
      %v2345 = vsel %vm1647, %v2318, 0
      %v2348 = vsel %vm1647, %v2319, 0
      %2350 = vmatprep.subr.mxu0 0.0
      %2351 = vmatpush1.msra.mxu0 0.0
      %2352 = vmatprep.subr.mxu0 0.0
      %2353 = vmatpush1.msra.mxu0 0.0
      %2354 = vmatprep.subr.mxu0 0.0
      %2355 = vmatpush1.msra.mxu0 0.0
      %2356 = vmatprep.subr.mxu0 0.0
      %2357 = vmatpush1.msra.mxu0 0.0
      %2358 = vmatprep.subr.mxu0 0.0
      %2359 = vmatpush1.msra.mxu0 0.0
      %2360 = vmatprep.subr.mxu0 0.0
      %2361 = vmatpush1.msra.mxu0 0.0
      %2362 = vmatprep.subr.mxu0 0.0
      %2363 = vmatpush1.msra.mxu0 0.0
      %2364 = vmatprep.subr.mxu0 0.0
      %2365 = vmatpush1.msra.mxu0 0.0
      %2366 = vmatprep.subr.mxu0 0.0
      %2367 = vmatpush1.msra.mxu0 0.0
      %2368 = vmatprep.subr.mxu0 %v2348
      %2369 = vmatpush1.msra.mxu0 %v2345
      %2370 = vmatprep.subr.mxu0 %v2317
      %2371 = vmatpush1.msra.mxu0 %v2316
      %2372 = vmatprep.subr.mxu0 %v2315
      %2373 = vmatpush1.msra.mxu0 %v2314
      %2374 = vmatprep.subr.mxu0 %v2313
      %2375 = vmatpush1.msra.mxu0 %v2312
      %2376 = vmatprep.subr.mxu0 %v2311
      %2377 = vmatpush1.msra.mxu0 %v2310
      %2378 = vmatprep.subr.mxu0 %v2309
      %2379 = vmatpush1.msra.mxu0 %v2308
      %2380 = vmatprep.subr.mxu0 %v2307
      %2381 = vmatpush1.msra.mxu0 %v2306
      %2382 = vmatprep.subr.mxu0 0.0
      %2383 = vmatpush2.msra.mxu0 0.0
      %2384 = vmatprep.subr.mxu0 0.0
      %2385 = vmatpush2.msra.mxu0 0.0
      %2386 = vmatprep.subr.mxu0 0.0
      %2387 = vmatpush2.msra.mxu0 0.0
      %2388 = vmatprep.subr.mxu0 0.0
      %2389 = vmatpush2.msra.mxu0 0.0
      %2390 = vmatprep.subr.mxu0 0.0
      %2391 = vmatpush2.msra.mxu0 0.0
      %2392 = vmatprep.subr.mxu0 0.0
      %2393 = vmatpush2.msra.mxu0 0.0
      %2394 = vmatprep.subr.mxu0 0.0
      %2395 = vmatpush2.msra.mxu0 0.0
      %2396 = vmatprep.subr.mxu0 0.0
      %2397 = vmatpush2.msra.mxu0 0.0
      %2398 = vmatprep.subr.mxu0 0.0
      %2399 = vmatpush2.msra.mxu0 0.0
      %2400 = vmatprep.subr.mxu0 0.0
      %2401 = vmatpush2.msra.mxu0 0.0
      %2402 = vmatprep.subr.mxu0 0.0
      %2403 = vmatpush2.msra.mxu0 0.0
      %2404 = vmatprep.subr.mxu0 0.0
      %2405 = vmatpush2.msra.mxu0 0.0
      %2406 = vmatprep.subr.mxu0 0.0
      %2407 = vmatpush2.msra.mxu0 0.0
      %2408 = vmatprep.subr.mxu0 0.0
      %2409 = vmatpush2.msra.mxu0 0.0
      %2410 = vmatprep.subr.mxu0 0.0
      %2411 = vmatpush2.msra.mxu0 0.0
      %2412 = vmatprep.subr.mxu0 0.0
      %2413 = vmatpush2.msra.mxu0 0.0
      %2414 = vmatprep.mubr.f32.mxu0 0.0
      %2415 = vmatmul.mubr.f32.gmra.mxu0 %v2321
      %v2416 = vpop.f32.mrf.mxu0
      %v2417 = vadd.f32 0.0, %v2416
      %v2418 = vpop.f32.mrf.mxu0
      %v2419 = vadd.f32 0.0, %v2418
      %2420 = vmatprep.mubr.f32.mxu0 0.0
      %2421 = vmatmul.mubr.f32.gmra.mxu0 %v2324
      %v2422 = vpop.f32.mrf.mxu0
      %v2423 = vadd.f32 0.0, %v2422
      %v2424 = vpop.f32.mrf.mxu0
      %v2425 = vadd.f32 0.0, %v2424
      %2426 = vmatprep.mubr.f32.mxu0 0.0
      %2427 = vmatmul.mubr.f32.gmra.mxu0 %v2327
      %v2428 = vpop.f32.mrf.mxu0
      %v2429 = vadd.f32 0.0, %v2428
      %v2430 = vpop.f32.mrf.mxu0
      %v2431 = vadd.f32 0.0, %v2430
      %2432 = vmatprep.mubr.f32.mxu0 0.0
      %2433 = vmatmul.mubr.f32.gmra.mxu0 %v2330
      %v2434 = vpop.f32.mrf.mxu0
      %v2435 = vadd.f32 0.0, %v2434
      %v2436 = vpop.f32.mrf.mxu0
      %v2437 = vadd.f32 0.0, %v2436
      %2438 = vmatprep.mubr.f32.mxu0 0.0
      %2439 = vmatmul.mubr.f32.gmra.mxu0 %v2333
      %v2440 = vpop.f32.mrf.mxu0
      %v2441 = vadd.f32 0.0, %v2440
      %v2442 = vpop.f32.mrf.mxu0
      %v2443 = vadd.f32 0.0, %v2442
      %2444 = vmatprep.mubr.f32.mxu0 0.0
      %2445 = vmatmul.mubr.f32.gmra.mxu0 %v2336
      %v2446 = vpop.f32.mrf.mxu0
      %v2447 = vadd.f32 0.0, %v2446
      %v2448 = vpop.f32.mrf.mxu0
      %v2449 = vadd.f32 0.0, %v2448
      %2450 = vmatprep.mubr.f32.mxu0 0.0
      %2451 = vmatmul.mubr.f32.gmra.mxu0 %v2339
      %v2452 = vpop.f32.mrf.mxu0
      %v2453 = vadd.f32 0.0, %v2452
      %v2454 = vpop.f32.mrf.mxu0
      %v2455 = vadd.f32 0.0, %v2454
      %2456 = vmatprep.mubr.f32.mxu0 0.0
      %2457 = vmatmul.mubr.f32.gmra.mxu0 %v2342
      %v2458 = vpop.f32.mrf.mxu0
      %v2459 = vadd.f32 0.0, %v2458
      %v2460 = vpop.f32.mrf.mxu0
      %v2461 = vadd.f32 0.0, %v2460
      %2462 = vdwg.mxu0
      %v2463 = vadd.f32 %v2289, %v2417
      %v2464 = vadd.f32 %v2290, %v2419
      %v2465 = vadd.f32 %v2291, %v2423
      %v2466 = vadd.f32 %v2292, %v2425
      %v2467 = vadd.f32 %v2293, %v2429
      %v2468 = vadd.f32 %v2294, %v2431
      %v2469 = vadd.f32 %v2295, %v2435
      %v2470 = vadd.f32 %v2296, %v2437
      %v2471 = vadd.f32 %v2297, %v2441
      %v2472 = vadd.f32 %v2298, %v2443
      %v2473 = vadd.f32 %v2299, %v2447
      %v2474 = vadd.f32 %v2300, %v2449
      %v2475 = vadd.f32 %v2301, %v2453
      %v2476 = vadd.f32 %v2302, %v2455
      %v2477 = vadd.f32 %v2303, %v2459
      %v2478 = vadd.f32 %v2304, %v2461
      %s2479 = scalar_lea.vmem %s1, 560
      %v2480 = vld [vmem:[%s2479] sm:$0xff]
      %v2481 = vld [vmem:[%s2479 + $0x8] sm:$0xff]
      %v2482 = vld [vmem:[%s2479 + $0x10] sm:$0xff]
      %v2483 = vld [vmem:[%s2479 + $0x18] sm:$0xff]
      %v2484 = vld [vmem:[%s2479 + $0x20] sm:$0xff]
      %v2485 = vld [vmem:[%s2479 + $0x28] sm:$0xff]
      %v2486 = vld [vmem:[%s2479 + $0x30] sm:$0xff]
      %v2487 = vld [vmem:[%s2479 + $0x38] sm:$0xff]
      %v2488 = vld [vmem:[%s2479 + $0x40] sm:$0xff]
      %v2489 = vld [vmem:[%s2479 + $0x48] sm:$0xff]
      %v2490 = vld [vmem:[%s2479 + $0x50] sm:$0xff]
      %v2491 = vld [vmem:[%s2479 + $0x58] sm:$0xff]
      %v2492 = vld [vmem:[%s2479 + $0x60] sm:$0x1]
      %v2493 = vld [vmem:[%s2479 + $0x68] sm:$0x1]
      %v2495 = vsel %vm1622, %v762, 0
      %v2498 = vsel %vm1622, %v767, 0
      %v2501 = vsel %vm1622, %v772, 0
      %v2504 = vsel %vm1622, %v777, 0
      %v2507 = vsel %vm1622, %v782, 0
      %v2510 = vsel %vm1622, %v787, 0
      %v2513 = vsel %vm1622, %v792, 0
      %v2516 = vsel %vm1622, %v797, 0
      %v2519 = vsel %vm1647, %v2492, 0
      %v2522 = vsel %vm1647, %v2493, 0
      %2524 = vmatprep.subr.mxu0 0.0
      %2525 = vmatpush1.msra.mxu0 0.0
      %2526 = vmatprep.subr.mxu0 0.0
      %2527 = vmatpush1.msra.mxu0 0.0
      %2528 = vmatprep.subr.mxu0 0.0
      %2529 = vmatpush1.msra.mxu0 0.0
      %2530 = vmatprep.subr.mxu0 0.0
      %2531 = vmatpush1.msra.mxu0 0.0
      %2532 = vmatprep.subr.mxu0 0.0
      %2533 = vmatpush1.msra.mxu0 0.0
      %2534 = vmatprep.subr.mxu0 0.0
      %2535 = vmatpush1.msra.mxu0 0.0
      %2536 = vmatprep.subr.mxu0 0.0
      %2537 = vmatpush1.msra.mxu0 0.0
      %2538 = vmatprep.subr.mxu0 0.0
      %2539 = vmatpush1.msra.mxu0 0.0
      %2540 = vmatprep.subr.mxu0 0.0
      %2541 = vmatpush1.msra.mxu0 0.0
      %2542 = vmatprep.subr.mxu0 %v2522
      %2543 = vmatpush1.msra.mxu0 %v2519
      %2544 = vmatprep.subr.mxu0 %v2491
      %2545 = vmatpush1.msra.mxu0 %v2490
      %2546 = vmatprep.subr.mxu0 %v2489
      %2547 = vmatpush1.msra.mxu0 %v2488
      %2548 = vmatprep.subr.mxu0 %v2487
      %2549 = vmatpush1.msra.mxu0 %v2486
      %2550 = vmatprep.subr.mxu0 %v2485
      %2551 = vmatpush1.msra.mxu0 %v2484
      %2552 = vmatprep.subr.mxu0 %v2483
      %2553 = vmatpush1.msra.mxu0 %v2482
      %2554 = vmatprep.subr.mxu0 %v2481
      %2555 = vmatpush1.msra.mxu0 %v2480
      %2556 = vmatprep.subr.mxu0 0.0
      %2557 = vmatpush2.msra.mxu0 0.0
      %2558 = vmatprep.subr.mxu0 0.0
      %2559 = vmatpush2.msra.mxu0 0.0
      %2560 = vmatprep.subr.mxu0 0.0
      %2561 = vmatpush2.msra.mxu0 0.0
      %2562 = vmatprep.subr.mxu0 0.0
      %2563 = vmatpush2.msra.mxu0 0.0
      %2564 = vmatprep.subr.mxu0 0.0
      %2565 = vmatpush2.msra.mxu0 0.0
      %2566 = vmatprep.subr.mxu0 0.0
      %2567 = vmatpush2.msra.mxu0 0.0
      %2568 = vmatprep.subr.mxu0 0.0
      %2569 = vmatpush2.msra.mxu0 0.0
      %2570 = vmatprep.subr.mxu0 0.0
      %2571 = vmatpush2.msra.mxu0 0.0
      %2572 = vmatprep.subr.mxu0 0.0
      %2573 = vmatpush2.msra.mxu0 0.0
      %2574 = vmatprep.subr.mxu0 0.0
      %2575 = vmatpush2.msra.mxu0 0.0
      %2576 = vmatprep.subr.mxu0 0.0
      %2577 = vmatpush2.msra.mxu0 0.0
      %2578 = vmatprep.subr.mxu0 0.0
      %2579 = vmatpush2.msra.mxu0 0.0
      %2580 = vmatprep.subr.mxu0 0.0
      %2581 = vmatpush2.msra.mxu0 0.0
      %2582 = vmatprep.subr.mxu0 0.0
      %2583 = vmatpush2.msra.mxu0 0.0
      %2584 = vmatprep.subr.mxu0 0.0
      %2585 = vmatpush2.msra.mxu0 0.0
      %2586 = vmatprep.subr.mxu0 0.0
      %2587 = vmatpush2.msra.mxu0 0.0
      %2588 = vmatprep.mubr.f32.mxu0 0.0
      %2589 = vmatmul.mubr.f32.gmra.mxu0 %v2495
      %v2590 = vpop.f32.mrf.mxu0
      %v2591 = vadd.f32 0.0, %v2590
      %v2592 = vpop.f32.mrf.mxu0
      %v2593 = vadd.f32 0.0, %v2592
      %2594 = vmatprep.mubr.f32.mxu0 0.0
      %2595 = vmatmul.mubr.f32.gmra.mxu0 %v2498
      %v2596 = vpop.f32.mrf.mxu0
      %v2597 = vadd.f32 0.0, %v2596
      %v2598 = vpop.f32.mrf.mxu0
      %v2599 = vadd.f32 0.0, %v2598
      %2600 = vmatprep.mubr.f32.mxu0 0.0
      %2601 = vmatmul.mubr.f32.gmra.mxu0 %v2501
      %v2602 = vpop.f32.mrf.mxu0
      %v2603 = vadd.f32 0.0, %v2602
      %v2604 = vpop.f32.mrf.mxu0
      %v2605 = vadd.f32 0.0, %v2604
      %2606 = vmatprep.mubr.f32.mxu0 0.0
      %2607 = vmatmul.mubr.f32.gmra.mxu0 %v2504
      %v2608 = vpop.f32.mrf.mxu0
      %v2609 = vadd.f32 0.0, %v2608
      %v2610 = vpop.f32.mrf.mxu0
      %v2611 = vadd.f32 0.0, %v2610
      %2612 = vmatprep.mubr.f32.mxu0 0.0
      %2613 = vmatmul.mubr.f32.gmra.mxu0 %v2507
      %v2614 = vpop.f32.mrf.mxu0
      %v2615 = vadd.f32 0.0, %v2614
      %v2616 = vpop.f32.mrf.mxu0
      %v2617 = vadd.f32 0.0, %v2616
      %2618 = vmatprep.mubr.f32.mxu0 0.0
      %2619 = vmatmul.mubr.f32.gmra.mxu0 %v2510
      %v2620 = vpop.f32.mrf.mxu0
      %v2621 = vadd.f32 0.0, %v2620
      %v2622 = vpop.f32.mrf.mxu0
      %v2623 = vadd.f32 0.0, %v2622
      %2624 = vmatprep.mubr.f32.mxu0 0.0
      %2625 = vmatmul.mubr.f32.gmra.mxu0 %v2513
      %v2626 = vpop.f32.mrf.mxu0
      %v2627 = vadd.f32 0.0, %v2626
      %v2628 = vpop.f32.mrf.mxu0
      %v2629 = vadd.f32 0.0, %v2628
      %2630 = vmatprep.mubr.f32.mxu0 0.0
      %2631 = vmatmul.mubr.f32.gmra.mxu0 %v2516
      %v2632 = vpop.f32.mrf.mxu0
      %v2633 = vadd.f32 0.0, %v2632
      %v2634 = vpop.f32.mrf.mxu0
      %v2635 = vadd.f32 0.0, %v2634
      %2636 = vdwg.mxu0
      %v2637 = vadd.f32 %v2463, %v2591
      %v2638 = vadd.f32 %v2464, %v2593
      %v2639 = vadd.f32 %v2465, %v2597
      %v2640 = vadd.f32 %v2466, %v2599
      %v2641 = vadd.f32 %v2467, %v2603
      %v2642 = vadd.f32 %v2468, %v2605
      %v2643 = vadd.f32 %v2469, %v2609
      %v2644 = vadd.f32 %v2470, %v2611
      %v2645 = vadd.f32 %v2471, %v2615
      %v2646 = vadd.f32 %v2472, %v2617
      %v2647 = vadd.f32 %v2473, %v2621
      %v2648 = vadd.f32 %v2474, %v2623
      %v2649 = vadd.f32 %v2475, %v2627
      %v2650 = vadd.f32 %v2476, %v2629
      %v2651 = vadd.f32 %v2477, %v2633
      %v2652 = vadd.f32 %v2478, %v2635
      %s2653 = scalar_lea.vmem %s1, 672
      %v2654 = vld [vmem:[%s2653] sm:$0xff]
      %v2655 = vld [vmem:[%s2653 + $0x8] sm:$0xff]
      %v2656 = vld [vmem:[%s2653 + $0x10] sm:$0xff]
      %v2657 = vld [vmem:[%s2653 + $0x18] sm:$0xff]
      %v2658 = vld [vmem:[%s2653 + $0x20] sm:$0xff]
      %v2659 = vld [vmem:[%s2653 + $0x28] sm:$0xff]
      %v2660 = vld [vmem:[%s2653 + $0x30] sm:$0xff]
      %v2661 = vld [vmem:[%s2653 + $0x38] sm:$0xff]
      %v2662 = vld [vmem:[%s2653 + $0x40] sm:$0xff]
      %v2663 = vld [vmem:[%s2653 + $0x48] sm:$0xff]
      %v2664 = vld [vmem:[%s2653 + $0x50] sm:$0xff]
      %v2665 = vld [vmem:[%s2653 + $0x58] sm:$0xff]
      %v2666 = vld [vmem:[%s2653 + $0x60] sm:$0x1]
      %v2667 = vld [vmem:[%s2653 + $0x68] sm:$0x1]
      %v2669 = vsel %vm1622, %v802, 0
      %v2672 = vsel %vm1622, %v807, 0
      %v2675 = vsel %vm1622, %v812, 0
      %v2678 = vsel %vm1622, %v817, 0
      %v2681 = vsel %vm1622, %v822, 0
      %v2684 = vsel %vm1622, %v827, 0
      %v2687 = vsel %vm1622, %v832, 0
      %v2690 = vsel %vm1622, %v837, 0
      %v2693 = vsel %vm1647, %v2666, 0
      %v2696 = vsel %vm1647, %v2667, 0
      %2698 = vmatprep.subr.mxu0 0.0
      %2699 = vmatpush1.msra.mxu0 0.0
      %2700 = vmatprep.subr.mxu0 0.0
      %2701 = vmatpush1.msra.mxu0 0.0
      %2702 = vmatprep.subr.mxu0 0.0
      %2703 = vmatpush1.msra.mxu0 0.0
      %2704 = vmatprep.subr.mxu0 0.0
      %2705 = vmatpush1.msra.mxu0 0.0
      %2706 = vmatprep.subr.mxu0 0.0
      %2707 = vmatpush1.msra.mxu0 0.0
      %2708 = vmatprep.subr.mxu0 0.0
      %2709 = vmatpush1.msra.mxu0 0.0
      %2710 = vmatprep.subr.mxu0 0.0
      %2711 = vmatpush1.msra.mxu0 0.0
      %2712 = vmatprep.subr.mxu0 0.0
      %2713 = vmatpush1.msra.mxu0 0.0
      %2714 = vmatprep.subr.mxu0 0.0
      %2715 = vmatpush1.msra.mxu0 0.0
      %2716 = vmatprep.subr.mxu0 %v2696
      %2717 = vmatpush1.msra.mxu0 %v2693
      %2718 = vmatprep.subr.mxu0 %v2665
      %2719 = vmatpush1.msra.mxu0 %v2664
      %2720 = vmatprep.subr.mxu0 %v2663
      %2721 = vmatpush1.msra.mxu0 %v2662
      %2722 = vmatprep.subr.mxu0 %v2661
      %2723 = vmatpush1.msra.mxu0 %v2660
      %2724 = vmatprep.subr.mxu0 %v2659
      %2725 = vmatpush1.msra.mxu0 %v2658
      %2726 = vmatprep.subr.mxu0 %v2657
      %2727 = vmatpush1.msra.mxu0 %v2656
      %2728 = vmatprep.subr.mxu0 %v2655
      %2729 = vmatpush1.msra.mxu0 %v2654
      %2730 = vmatprep.subr.mxu0 0.0
      %2731 = vmatpush2.msra.mxu0 0.0
      %2732 = vmatprep.subr.mxu0 0.0
      %2733 = vmatpush2.msra.mxu0 0.0
      %2734 = vmatprep.subr.mxu0 0.0
      %2735 = vmatpush2.msra.mxu0 0.0
      %2736 = vmatprep.subr.mxu0 0.0
      %2737 = vmatpush2.msra.mxu0 0.0
      %2738 = vmatprep.subr.mxu0 0.0
      %2739 = vmatpush2.msra.mxu0 0.0
      %2740 = vmatprep.subr.mxu0 0.0
      %2741 = vmatpush2.msra.mxu0 0.0
      %2742 = vmatprep.subr.mxu0 0.0
      %2743 = vmatpush2.msra.mxu0 0.0
      %2744 = vmatprep.subr.mxu0 0.0
      %2745 = vmatpush2.msra.mxu0 0.0
      %2746 = vmatprep.subr.mxu0 0.0
      %2747 = vmatpush2.msra.mxu0 0.0
      %2748 = vmatprep.subr.mxu0 0.0
      %2749 = vmatpush2.msra.mxu0 0.0
      %2750 = vmatprep.subr.mxu0 0.0
      %2751 = vmatpush2.msra.mxu0 0.0
      %2752 = vmatprep.subr.mxu0 0.0
      %2753 = vmatpush2.msra.mxu0 0.0
      %2754 = vmatprep.subr.mxu0 0.0
      %2755 = vmatpush2.msra.mxu0 0.0
      %2756 = vmatprep.subr.mxu0 0.0
      %2757 = vmatpush2.msra.mxu0 0.0
      %2758 = vmatprep.subr.mxu0 0.0
      %2759 = vmatpush2.msra.mxu0 0.0
      %2760 = vmatprep.subr.mxu0 0.0
      %2761 = vmatpush2.msra.mxu0 0.0
      %2762 = vmatprep.mubr.f32.mxu0 0.0
      %2763 = vmatmul.mubr.f32.gmra.mxu0 %v2669
      %v2764 = vpop.f32.mrf.mxu0
      %v2765 = vadd.f32 0.0, %v2764
      %v2766 = vpop.f32.mrf.mxu0
      %v2767 = vadd.f32 0.0, %v2766
      %2768 = vmatprep.mubr.f32.mxu0 0.0
      %2769 = vmatmul.mubr.f32.gmra.mxu0 %v2672
      %v2770 = vpop.f32.mrf.mxu0
      %v2771 = vadd.f32 0.0, %v2770
      %v2772 = vpop.f32.mrf.mxu0
      %v2773 = vadd.f32 0.0, %v2772
      %2774 = vmatprep.mubr.f32.mxu0 0.0
      %2775 = vmatmul.mubr.f32.gmra.mxu0 %v2675
      %v2776 = vpop.f32.mrf.mxu0
      %v2777 = vadd.f32 0.0, %v2776
      %v2778 = vpop.f32.mrf.mxu0
      %v2779 = vadd.f32 0.0, %v2778
      %2780 = vmatprep.mubr.f32.mxu0 0.0
      %2781 = vmatmul.mubr.f32.gmra.mxu0 %v2678
      %v2782 = vpop.f32.mrf.mxu0
      %v2783 = vadd.f32 0.0, %v2782
      %v2784 = vpop.f32.mrf.mxu0
      %v2785 = vadd.f32 0.0, %v2784
      %2786 = vmatprep.mubr.f32.mxu0 0.0
      %2787 = vmatmul.mubr.f32.gmra.mxu0 %v2681
      %v2788 = vpop.f32.mrf.mxu0
      %v2789 = vadd.f32 0.0, %v2788
      %v2790 = vpop.f32.mrf.mxu0
      %v2791 = vadd.f32 0.0, %v2790
      %2792 = vmatprep.mubr.f32.mxu0 0.0
      %2793 = vmatmul.mubr.f32.gmra.mxu0 %v2684
      %v2794 = vpop.f32.mrf.mxu0
      %v2795 = vadd.f32 0.0, %v2794
      %v2796 = vpop.f32.mrf.mxu0
      %v2797 = vadd.f32 0.0, %v2796
      %2798 = vmatprep.mubr.f32.mxu0 0.0
      %2799 = vmatmul.mubr.f32.gmra.mxu0 %v2687
      %v2800 = vpop.f32.mrf.mxu0
      %v2801 = vadd.f32 0.0, %v2800
      %v2802 = vpop.f32.mrf.mxu0
      %v2803 = vadd.f32 0.0, %v2802
      %2804 = vmatprep.mubr.f32.mxu0 0.0
      %2805 = vmatmul.mubr.f32.gmra.mxu0 %v2690
      %v2806 = vpop.f32.mrf.mxu0
      %v2807 = vadd.f32 0.0, %v2806
      %v2808 = vpop.f32.mrf.mxu0
      %v2809 = vadd.f32 0.0, %v2808
      %2810 = vdwg.mxu0
      %v2811 = vadd.f32 %v2637, %v2765
      %v2812 = vadd.f32 %v2638, %v2767
      %v2813 = vadd.f32 %v2639, %v2771
      %v2814 = vadd.f32 %v2640, %v2773
      %v2815 = vadd.f32 %v2641, %v2777
      %v2816 = vadd.f32 %v2642, %v2779
      %v2817 = vadd.f32 %v2643, %v2783
      %v2818 = vadd.f32 %v2644, %v2785
      %v2819 = vadd.f32 %v2645, %v2789
      %v2820 = vadd.f32 %v2646, %v2791
      %v2821 = vadd.f32 %v2647, %v2795
      %v2822 = vadd.f32 %v2648, %v2797
      %v2823 = vadd.f32 %v2649, %v2801
      %v2824 = vadd.f32 %v2650, %v2803
      %v2825 = vadd.f32 %v2651, %v2807
      %v2826 = vadd.f32 %v2652, %v2809
      %s2827 = scalar_lea.vmem %s1, 784
      %v2828 = vld [vmem:[%s2827] sm:$0xff]
      %v2829 = vld [vmem:[%s2827 + $0x8] sm:$0xff]
      %v2830 = vld [vmem:[%s2827 + $0x10] sm:$0xff]
      %v2831 = vld [vmem:[%s2827 + $0x18] sm:$0xff]
      %v2832 = vld [vmem:[%s2827 + $0x20] sm:$0xff]
      %v2833 = vld [vmem:[%s2827 + $0x28] sm:$0xff]
      %v2834 = vld [vmem:[%s2827 + $0x30] sm:$0xff]
      %v2835 = vld [vmem:[%s2827 + $0x38] sm:$0xff]
      %v2836 = vld [vmem:[%s2827 + $0x40] sm:$0xff]
      %v2837 = vld [vmem:[%s2827 + $0x48] sm:$0xff]
      %v2838 = vld [vmem:[%s2827 + $0x50] sm:$0xff]
      %v2839 = vld [vmem:[%s2827 + $0x58] sm:$0xff]
      %v2840 = vld [vmem:[%s2827 + $0x60] sm:$0x1]
      %v2841 = vld [vmem:[%s2827 + $0x68] sm:$0x1]
      %v2843 = vsel %vm1622, %v842, 0
      %v2846 = vsel %vm1622, %v847, 0
      %v2849 = vsel %vm1622, %v852, 0
      %v2852 = vsel %vm1622, %v857, 0
      %v2855 = vsel %vm1622, %v862, 0
      %v2858 = vsel %vm1622, %v867, 0
      %v2861 = vsel %vm1622, %v872, 0
      %v2864 = vsel %vm1622, %v877, 0
      %v2867 = vsel %vm1647, %v2840, 0
      %v2870 = vsel %vm1647, %v2841, 0
      %2872 = vmatprep.subr.mxu0 0.0
      %2873 = vmatpush1.msra.mxu0 0.0
      %2874 = vmatprep.subr.mxu0 0.0
      %2875 = vmatpush1.msra.mxu0 0.0
      %2876 = vmatprep.subr.mxu0 0.0
      %2877 = vmatpush1.msra.mxu0 0.0
      %2878 = vmatprep.subr.mxu0 0.0
      %2879 = vmatpush1.msra.mxu0 0.0
      %2880 = vmatprep.subr.mxu0 0.0
      %2881 = vmatpush1.msra.mxu0 0.0
      %2882 = vmatprep.subr.mxu0 0.0
      %2883 = vmatpush1.msra.mxu0 0.0
      %2884 = vmatprep.subr.mxu0 0.0
      %2885 = vmatpush1.msra.mxu0 0.0
      %2886 = vmatprep.subr.mxu0 0.0
      %2887 = vmatpush1.msra.mxu0 0.0
      %2888 = vmatprep.subr.mxu0 0.0
      %2889 = vmatpush1.msra.mxu0 0.0
      %2890 = vmatprep.subr.mxu0 %v2870
      %2891 = vmatpush1.msra.mxu0 %v2867
      %2892 = vmatprep.subr.mxu0 %v2839
      %2893 = vmatpush1.msra.mxu0 %v2838
      %2894 = vmatprep.subr.mxu0 %v2837
      %2895 = vmatpush1.msra.mxu0 %v2836
      %2896 = vmatprep.subr.mxu0 %v2835
      %2897 = vmatpush1.msra.mxu0 %v2834
      %2898 = vmatprep.subr.mxu0 %v2833
      %2899 = vmatpush1.msra.mxu0 %v2832
      %2900 = vmatprep.subr.mxu0 %v2831
      %2901 = vmatpush1.msra.mxu0 %v2830
      %2902 = vmatprep.subr.mxu0 %v2829
      %2903 = vmatpush1.msra.mxu0 %v2828
      %2904 = vmatprep.subr.mxu0 0.0
      %2905 = vmatpush2.msra.mxu0 0.0
      %2906 = vmatprep.subr.mxu0 0.0
      %2907 = vmatpush2.msra.mxu0 0.0
      %2908 = vmatprep.subr.mxu0 0.0
      %2909 = vmatpush2.msra.mxu0 0.0
      %2910 = vmatprep.subr.mxu0 0.0
      %2911 = vmatpush2.msra.mxu0 0.0
      %2912 = vmatprep.subr.mxu0 0.0
      %2913 = vmatpush2.msra.mxu0 0.0
      %2914 = vmatprep.subr.mxu0 0.0
      %2915 = vmatpush2.msra.mxu0 0.0
      %2916 = vmatprep.subr.mxu0 0.0
      %2917 = vmatpush2.msra.mxu0 0.0
      %2918 = vmatprep.subr.mxu0 0.0
      %2919 = vmatpush2.msra.mxu0 0.0
      %2920 = vmatprep.subr.mxu0 0.0
      %2921 = vmatpush2.msra.mxu0 0.0
      %2922 = vmatprep.subr.mxu0 0.0
      %2923 = vmatpush2.msra.mxu0 0.0
      %2924 = vmatprep.subr.mxu0 0.0
      %2925 = vmatpush2.msra.mxu0 0.0
      %2926 = vmatprep.subr.mxu0 0.0
      %2927 = vmatpush2.msra.mxu0 0.0
      %2928 = vmatprep.subr.mxu0 0.0
      %2929 = vmatpush2.msra.mxu0 0.0
      %2930 = vmatprep.subr.mxu0 0.0
      %2931 = vmatpush2.msra.mxu0 0.0
      %2932 = vmatprep.subr.mxu0 0.0
      %2933 = vmatpush2.msra.mxu0 0.0
      %2934 = vmatprep.subr.mxu0 0.0
      %2935 = vmatpush2.msra.mxu0 0.0
      %2936 = vmatprep.mubr.f32.mxu0 0.0
      %2937 = vmatmul.mubr.f32.gmra.mxu0 %v2843
      %v2938 = vpop.f32.mrf.mxu0
      %v2939 = vadd.f32 0.0, %v2938
      %v2940 = vpop.f32.mrf.mxu0
      %v2941 = vadd.f32 0.0, %v2940
      %2942 = vmatprep.mubr.f32.mxu0 0.0
      %2943 = vmatmul.mubr.f32.gmra.mxu0 %v2846
      %v2944 = vpop.f32.mrf.mxu0
      %v2945 = vadd.f32 0.0, %v2944
      %v2946 = vpop.f32.mrf.mxu0
      %v2947 = vadd.f32 0.0, %v2946
      %2948 = vmatprep.mubr.f32.mxu0 0.0
      %2949 = vmatmul.mubr.f32.gmra.mxu0 %v2849
      %v2950 = vpop.f32.mrf.mxu0
      %v2951 = vadd.f32 0.0, %v2950
      %v2952 = vpop.f32.mrf.mxu0
      %v2953 = vadd.f32 0.0, %v2952
      %2954 = vmatprep.mubr.f32.mxu0 0.0
      %2955 = vmatmul.mubr.f32.gmra.mxu0 %v2852
      %v2956 = vpop.f32.mrf.mxu0
      %v2957 = vadd.f32 0.0, %v2956
      %v2958 = vpop.f32.mrf.mxu0
      %v2959 = vadd.f32 0.0, %v2958
      %2960 = vmatprep.mubr.f32.mxu0 0.0
      %2961 = vmatmul.mubr.f32.gmra.mxu0 %v2855
      %v2962 = vpop.f32.mrf.mxu0
      %v2963 = vadd.f32 0.0, %v2962
      %v2964 = vpop.f32.mrf.mxu0
      %v2965 = vadd.f32 0.0, %v2964
      %2966 = vmatprep.mubr.f32.mxu0 0.0
      %2967 = vmatmul.mubr.f32.gmra.mxu0 %v2858
      %v2968 = vpop.f32.mrf.mxu0
      %v2969 = vadd.f32 0.0, %v2968
      %v2970 = vpop.f32.mrf.mxu0
      %v2971 = vadd.f32 0.0, %v2970
      %2972 = vmatprep.mubr.f32.mxu0 0.0
      %2973 = vmatmul.mubr.f32.gmra.mxu0 %v2861
      %v2974 = vpop.f32.mrf.mxu0
      %v2975 = vadd.f32 0.0, %v2974
      %v2976 = vpop.f32.mrf.mxu0
      %v2977 = vadd.f32 0.0, %v2976
      %2978 = vmatprep.mubr.f32.mxu0 0.0
      %2979 = vmatmul.mubr.f32.gmra.mxu0 %v2864
      %v2980 = vpop.f32.mrf.mxu0
      %v2981 = vadd.f32 0.0, %v2980
      %v2982 = vpop.f32.mrf.mxu0
      %v2983 = vadd.f32 0.0, %v2982
      %2984 = vdwg.mxu0
      %v2985 = vadd.f32 %v2811, %v2939
      %v2986 = vadd.f32 %v2812, %v2941
      %v2987 = vadd.f32 %v2813, %v2945
      %v2988 = vadd.f32 %v2814, %v2947
      %v2989 = vadd.f32 %v2815, %v2951
      %v2990 = vadd.f32 %v2816, %v2953
      %v2991 = vadd.f32 %v2817, %v2957
      %v2992 = vadd.f32 %v2818, %v2959
      %v2993 = vadd.f32 %v2819, %v2963
      %v2994 = vadd.f32 %v2820, %v2965
      %v2995 = vadd.f32 %v2821, %v2969
      %v2996 = vadd.f32 %v2822, %v2971
      %v2997 = vadd.f32 %v2823, %v2975
      %v2998 = vadd.f32 %v2824, %v2977
      %v2999 = vadd.f32 %v2825, %v2981
      %v3000 = vadd.f32 %v2826, %v2983
      %s3001 = scalar_lea.vmem %s1, 896
      %v3002 = vld [vmem:[%s3001] sm:$0xff]
      %v3003 = vld [vmem:[%s3001 + $0x8] sm:$0xff]
      %v3004 = vld [vmem:[%s3001 + $0x10] sm:$0xff]
      %v3005 = vld [vmem:[%s3001 + $0x18] sm:$0xff]
      %v3006 = vld [vmem:[%s3001 + $0x20] sm:$0xff]
      %v3007 = vld [vmem:[%s3001 + $0x28] sm:$0xff]
      %v3008 = vld [vmem:[%s3001 + $0x30] sm:$0xff]
      %v3009 = vld [vmem:[%s3001 + $0x38] sm:$0xff]
      %v3010 = vld [vmem:[%s3001 + $0x40] sm:$0xff]
      %v3011 = vld [vmem:[%s3001 + $0x48] sm:$0xff]
      %v3012 = vld [vmem:[%s3001 + $0x50] sm:$0xff]
      %v3013 = vld [vmem:[%s3001 + $0x58] sm:$0xff]
      %v3014 = vld [vmem:[%s3001 + $0x60] sm:$0x1]
      %v3015 = vld [vmem:[%s3001 + $0x68] sm:$0x1]
      %v3017 = vsel %vm1622, %v882, 0
      %v3020 = vsel %vm1622, %v887, 0
      %v3023 = vsel %vm1622, %v892, 0
      %v3026 = vsel %vm1622, %v897, 0
      %v3029 = vsel %vm1622, %v902, 0
      %v3032 = vsel %vm1622, %v907, 0
      %v3035 = vsel %vm1622, %v912, 0
      %v3038 = vsel %vm1622, %v917, 0
      %v3041 = vsel %vm1647, %v3014, 0
      %v3044 = vsel %vm1647, %v3015, 0
      %3046 = vmatprep.subr.mxu0 0.0
      %3047 = vmatpush1.msra.mxu0 0.0
      %3048 = vmatprep.subr.mxu0 0.0
      %3049 = vmatpush1.msra.mxu0 0.0
      %3050 = vmatprep.subr.mxu0 0.0
      %3051 = vmatpush1.msra.mxu0 0.0
      %3052 = vmatprep.subr.mxu0 0.0
      %3053 = vmatpush1.msra.mxu0 0.0
      %3054 = vmatprep.subr.mxu0 0.0
      %3055 = vmatpush1.msra.mxu0 0.0
      %3056 = vmatprep.subr.mxu0 0.0
      %3057 = vmatpush1.msra.mxu0 0.0
      %3058 = vmatprep.subr.mxu0 0.0
      %3059 = vmatpush1.msra.mxu0 0.0
      %3060 = vmatprep.subr.mxu0 0.0
      %3061 = vmatpush1.msra.mxu0 0.0
      %3062 = vmatprep.subr.mxu0 0.0
      %3063 = vmatpush1.msra.mxu0 0.0
      %3064 = vmatprep.subr.mxu0 %v3044
      %3065 = vmatpush1.msra.mxu0 %v3041
      %3066 = vmatprep.subr.mxu0 %v3013
      %3067 = vmatpush1.msra.mxu0 %v3012
      %3068 = vmatprep.subr.mxu0 %v3011
      %3069 = vmatpush1.msra.mxu0 %v3010
      %3070 = vmatprep.subr.mxu0 %v3009
      %3071 = vmatpush1.msra.mxu0 %v3008
      %3072 = vmatprep.subr.mxu0 %v3007
      %3073 = vmatpush1.msra.mxu0 %v3006
      %3074 = vmatprep.subr.mxu0 %v3005
      %3075 = vmatpush1.msra.mxu0 %v3004
      %3076 = vmatprep.subr.mxu0 %v3003
      %3077 = vmatpush1.msra.mxu0 %v3002
      %3078 = vmatprep.subr.mxu0 0.0
      %3079 = vmatpush2.msra.mxu0 0.0
      %3080 = vmatprep.subr.mxu0 0.0
      %3081 = vmatpush2.msra.mxu0 0.0
      %3082 = vmatprep.subr.mxu0 0.0
      %3083 = vmatpush2.msra.mxu0 0.0
      %3084 = vmatprep.subr.mxu0 0.0
      %3085 = vmatpush2.msra.mxu0 0.0
      %3086 = vmatprep.subr.mxu0 0.0
      %3087 = vmatpush2.msra.mxu0 0.0
      %3088 = vmatprep.subr.mxu0 0.0
      %3089 = vmatpush2.msra.mxu0 0.0
      %3090 = vmatprep.subr.mxu0 0.0
      %3091 = vmatpush2.msra.mxu0 0.0
      %3092 = vmatprep.subr.mxu0 0.0
      %3093 = vmatpush2.msra.mxu0 0.0
      %3094 = vmatprep.subr.mxu0 0.0
      %3095 = vmatpush2.msra.mxu0 0.0
      %3096 = vmatprep.subr.mxu0 0.0
      %3097 = vmatpush2.msra.mxu0 0.0
      %3098 = vmatprep.subr.mxu0 0.0
      %3099 = vmatpush2.msra.mxu0 0.0
      %3100 = vmatprep.subr.mxu0 0.0
      %3101 = vmatpush2.msra.mxu0 0.0
      %3102 = vmatprep.subr.mxu0 0.0
      %3103 = vmatpush2.msra.mxu0 0.0
      %3104 = vmatprep.subr.mxu0 0.0
      %3105 = vmatpush2.msra.mxu0 0.0
      %3106 = vmatprep.subr.mxu0 0.0
      %3107 = vmatpush2.msra.mxu0 0.0
      %3108 = vmatprep.subr.mxu0 0.0
      %3109 = vmatpush2.msra.mxu0 0.0
      %3110 = vmatprep.mubr.f32.mxu0 0.0
      %3111 = vmatmul.mubr.f32.gmra.mxu0 %v3017
      %v3112 = vpop.f32.mrf.mxu0
      %v3113 = vadd.f32 0.0, %v3112
      %v3114 = vpop.f32.mrf.mxu0
      %v3115 = vadd.f32 0.0, %v3114
      %3116 = vmatprep.mubr.f32.mxu0 0.0
      %3117 = vmatmul.mubr.f32.gmra.mxu0 %v3020
      %v3118 = vpop.f32.mrf.mxu0
      %v3119 = vadd.f32 0.0, %v3118
      %v3120 = vpop.f32.mrf.mxu0
      %v3121 = vadd.f32 0.0, %v3120
      %3122 = vmatprep.mubr.f32.mxu0 0.0
      %3123 = vmatmul.mubr.f32.gmra.mxu0 %v3023
      %v3124 = vpop.f32.mrf.mxu0
      %v3125 = vadd.f32 0.0, %v3124
      %v3126 = vpop.f32.mrf.mxu0
      %v3127 = vadd.f32 0.0, %v3126
      %3128 = vmatprep.mubr.f32.mxu0 0.0
      %3129 = vmatmul.mubr.f32.gmra.mxu0 %v3026
      %v3130 = vpop.f32.mrf.mxu0
      %v3131 = vadd.f32 0.0, %v3130
      %v3132 = vpop.f32.mrf.mxu0
      %v3133 = vadd.f32 0.0, %v3132
      %3134 = vmatprep.mubr.f32.mxu0 0.0
      %3135 = vmatmul.mubr.f32.gmra.mxu0 %v3029
      %v3136 = vpop.f32.mrf.mxu0
      %v3137 = vadd.f32 0.0, %v3136
      %v3138 = vpop.f32.mrf.mxu0
      %v3139 = vadd.f32 0.0, %v3138
      %3140 = vmatprep.mubr.f32.mxu0 0.0
      %3141 = vmatmul.mubr.f32.gmra.mxu0 %v3032
      %v3142 = vpop.f32.mrf.mxu0
      %v3143 = vadd.f32 0.0, %v3142
      %v3144 = vpop.f32.mrf.mxu0
      %v3145 = vadd.f32 0.0, %v3144
      %3146 = vmatprep.mubr.f32.mxu0 0.0
      %3147 = vmatmul.mubr.f32.gmra.mxu0 %v3035
      %v3148 = vpop.f32.mrf.mxu0
      %v3149 = vadd.f32 0.0, %v3148
      %v3150 = vpop.f32.mrf.mxu0
      %v3151 = vadd.f32 0.0, %v3150
      %3152 = vmatprep.mubr.f32.mxu0 0.0
      %3153 = vmatmul.mubr.f32.gmra.mxu0 %v3038
      %v3154 = vpop.f32.mrf.mxu0
      %v3155 = vadd.f32 0.0, %v3154
      %v3156 = vpop.f32.mrf.mxu0
      %v3157 = vadd.f32 0.0, %v3156
      %3158 = vdwg.mxu0
      %v3159 = vadd.f32 %v2985, %v3113
      %v3160 = vadd.f32 %v2986, %v3115
      %v3161 = vadd.f32 %v2987, %v3119
      %v3162 = vadd.f32 %v2988, %v3121
      %v3163 = vadd.f32 %v2989, %v3125
      %v3164 = vadd.f32 %v2990, %v3127
      %v3165 = vadd.f32 %v2991, %v3131
      %v3166 = vadd.f32 %v2992, %v3133
      %v3167 = vadd.f32 %v2993, %v3137
      %v3168 = vadd.f32 %v2994, %v3139
      %v3169 = vadd.f32 %v2995, %v3143
      %v3170 = vadd.f32 %v2996, %v3145
      %v3171 = vadd.f32 %v2997, %v3149
      %v3172 = vadd.f32 %v2998, %v3151
      %v3173 = vadd.f32 %v2999, %v3155
      %v3174 = vadd.f32 %v3000, %v3157
      %s3175 = scalar_lea.vmem %s1, 1008
      %v3176 = vld [vmem:[%s3175] sm:$0xff]
      %v3177 = vld [vmem:[%s3175 + $0x8] sm:$0xff]
      %v3178 = vld [vmem:[%s3175 + $0x10] sm:$0xff]
      %v3179 = vld [vmem:[%s3175 + $0x18] sm:$0xff]
      %v3180 = vld [vmem:[%s3175 + $0x20] sm:$0xff]
      %v3181 = vld [vmem:[%s3175 + $0x28] sm:$0xff]
      %v3182 = vld [vmem:[%s3175 + $0x30] sm:$0xff]
      %v3183 = vld [vmem:[%s3175 + $0x38] sm:$0xff]
      %v3184 = vld [vmem:[%s3175 + $0x40] sm:$0xff]
      %v3185 = vld [vmem:[%s3175 + $0x48] sm:$0xff]
      %v3186 = vld [vmem:[%s3175 + $0x50] sm:$0xff]
      %v3187 = vld [vmem:[%s3175 + $0x58] sm:$0xff]
      %v3188 = vld [vmem:[%s3175 + $0x60] sm:$0x1]
      %v3189 = vld [vmem:[%s3175 + $0x68] sm:$0x1]
      %v3191 = vsel %vm1622, %v922, 0
      %v3194 = vsel %vm1622, %v927, 0
      %v3197 = vsel %vm1622, %v932, 0
      %v3200 = vsel %vm1622, %v937, 0
      %v3203 = vsel %vm1622, %v942, 0
      %v3206 = vsel %vm1622, %v947, 0
      %v3209 = vsel %vm1622, %v952, 0
      %v3212 = vsel %vm1622, %v957, 0
      %v3215 = vsel %vm1647, %v3188, 0
      %v3218 = vsel %vm1647, %v3189, 0
      %3220 = vmatprep.subr.mxu0 0.0
      %3221 = vmatpush1.msra.mxu0 0.0
      %3222 = vmatprep.subr.mxu0 0.0
      %3223 = vmatpush1.msra.mxu0 0.0
      %3224 = vmatprep.subr.mxu0 0.0
      %3225 = vmatpush1.msra.mxu0 0.0
      %3226 = vmatprep.subr.mxu0 0.0
      %3227 = vmatpush1.msra.mxu0 0.0
      %3228 = vmatprep.subr.mxu0 0.0
      %3229 = vmatpush1.msra.mxu0 0.0
      %3230 = vmatprep.subr.mxu0 0.0
      %3231 = vmatpush1.msra.mxu0 0.0
      %3232 = vmatprep.subr.mxu0 0.0
      %3233 = vmatpush1.msra.mxu0 0.0
      %3234 = vmatprep.subr.mxu0 0.0
      %3235 = vmatpush1.msra.mxu0 0.0
      %3236 = vmatprep.subr.mxu0 0.0
      %3237 = vmatpush1.msra.mxu0 0.0
      %3238 = vmatprep.subr.mxu0 %v3218
      %3239 = vmatpush1.msra.mxu0 %v3215
      %3240 = vmatprep.subr.mxu0 %v3187
      %3241 = vmatpush1.msra.mxu0 %v3186
      %3242 = vmatprep.subr.mxu0 %v3185
      %3243 = vmatpush1.msra.mxu0 %v3184
      %3244 = vmatprep.subr.mxu0 %v3183
      %3245 = vmatpush1.msra.mxu0 %v3182
      %3246 = vmatprep.subr.mxu0 %v3181
      %3247 = vmatpush1.msra.mxu0 %v3180
      %3248 = vmatprep.subr.mxu0 %v3179
      %3249 = vmatpush1.msra.mxu0 %v3178
      %3250 = vmatprep.subr.mxu0 %v3177
      %3251 = vmatpush1.msra.mxu0 %v3176
      %3252 = vmatprep.subr.mxu0 0.0
      %3253 = vmatpush2.msra.mxu0 0.0
      %3254 = vmatprep.subr.mxu0 0.0
      %3255 = vmatpush2.msra.mxu0 0.0
      %3256 = vmatprep.subr.mxu0 0.0
      %3257 = vmatpush2.msra.mxu0 0.0
      %3258 = vmatprep.subr.mxu0 0.0
      %3259 = vmatpush2.msra.mxu0 0.0
      %3260 = vmatprep.subr.mxu0 0.0
      %3261 = vmatpush2.msra.mxu0 0.0
      %3262 = vmatprep.subr.mxu0 0.0
      %3263 = vmatpush2.msra.mxu0 0.0
      %3264 = vmatprep.subr.mxu0 0.0
      %3265 = vmatpush2.msra.mxu0 0.0
      %3266 = vmatprep.subr.mxu0 0.0
      %3267 = vmatpush2.msra.mxu0 0.0
      %3268 = vmatprep.subr.mxu0 0.0
      %3269 = vmatpush2.msra.mxu0 0.0
      %3270 = vmatprep.subr.mxu0 0.0
      %3271 = vmatpush2.msra.mxu0 0.0
      %3272 = vmatprep.subr.mxu0 0.0
      %3273 = vmatpush2.msra.mxu0 0.0
      %3274 = vmatprep.subr.mxu0 0.0
      %3275 = vmatpush2.msra.mxu0 0.0
      %3276 = vmatprep.subr.mxu0 0.0
      %3277 = vmatpush2.msra.mxu0 0.0
      %3278 = vmatprep.subr.mxu0 0.0
      %3279 = vmatpush2.msra.mxu0 0.0
      %3280 = vmatprep.subr.mxu0 0.0
      %3281 = vmatpush2.msra.mxu0 0.0
      %3282 = vmatprep.subr.mxu0 0.0
      %3283 = vmatpush2.msra.mxu0 0.0
      %3284 = vmatprep.mubr.f32.mxu0 0.0
      %3285 = vmatmul.mubr.f32.gmra.mxu0 %v3191
      %v3286 = vpop.f32.mrf.mxu0
      %v3287 = vadd.f32 0.0, %v3286
      %v3288 = vpop.f32.mrf.mxu0
      %v3289 = vadd.f32 0.0, %v3288
      %3290 = vmatprep.mubr.f32.mxu0 0.0
      %3291 = vmatmul.mubr.f32.gmra.mxu0 %v3194
      %v3292 = vpop.f32.mrf.mxu0
      %v3293 = vadd.f32 0.0, %v3292
      %v3294 = vpop.f32.mrf.mxu0
      %v3295 = vadd.f32 0.0, %v3294
      %3296 = vmatprep.mubr.f32.mxu0 0.0
      %3297 = vmatmul.mubr.f32.gmra.mxu0 %v3197
      %v3298 = vpop.f32.mrf.mxu0
      %v3299 = vadd.f32 0.0, %v3298
      %v3300 = vpop.f32.mrf.mxu0
      %v3301 = vadd.f32 0.0, %v3300
      %3302 = vmatprep.mubr.f32.mxu0 0.0
      %3303 = vmatmul.mubr.f32.gmra.mxu0 %v3200
      %v3304 = vpop.f32.mrf.mxu0
      %v3305 = vadd.f32 0.0, %v3304
      %v3306 = vpop.f32.mrf.mxu0
      %v3307 = vadd.f32 0.0, %v3306
      %3308 = vmatprep.mubr.f32.mxu0 0.0
      %3309 = vmatmul.mubr.f32.gmra.mxu0 %v3203
      %v3310 = vpop.f32.mrf.mxu0
      %v3311 = vadd.f32 0.0, %v3310
      %v3312 = vpop.f32.mrf.mxu0
      %v3313 = vadd.f32 0.0, %v3312
      %3314 = vmatprep.mubr.f32.mxu0 0.0
      %3315 = vmatmul.mubr.f32.gmra.mxu0 %v3206
      %v3316 = vpop.f32.mrf.mxu0
      %v3317 = vadd.f32 0.0, %v3316
      %v3318 = vpop.f32.mrf.mxu0
      %v3319 = vadd.f32 0.0, %v3318
      %3320 = vmatprep.mubr.f32.mxu0 0.0
      %3321 = vmatmul.mubr.f32.gmra.mxu0 %v3209
      %v3322 = vpop.f32.mrf.mxu0
      %v3323 = vadd.f32 0.0, %v3322
      %v3324 = vpop.f32.mrf.mxu0
      %v3325 = vadd.f32 0.0, %v3324
      %3326 = vmatprep.mubr.f32.mxu0 0.0
      %3327 = vmatmul.mubr.f32.gmra.mxu0 %v3212
      %v3328 = vpop.f32.mrf.mxu0
      %v3329 = vadd.f32 0.0, %v3328
      %v3330 = vpop.f32.mrf.mxu0
      %v3331 = vadd.f32 0.0, %v3330
      %3332 = vdwg.mxu0
      %v3333 = vadd.f32 %v3159, %v3287
      %v3334 = vadd.f32 %v3160, %v3289
      %v3335 = vadd.f32 %v3161, %v3293
      %v3336 = vadd.f32 %v3162, %v3295
      %v3337 = vadd.f32 %v3163, %v3299
      %v3338 = vadd.f32 %v3164, %v3301
      %v3339 = vadd.f32 %v3165, %v3305
      %v3340 = vadd.f32 %v3166, %v3307
      %v3341 = vadd.f32 %v3167, %v3311
      %v3342 = vadd.f32 %v3168, %v3313
      %v3343 = vadd.f32 %v3169, %v3317
      %v3344 = vadd.f32 %v3170, %v3319
      %v3345 = vadd.f32 %v3171, %v3323
      %v3346 = vadd.f32 %v3172, %v3325
      %v3347 = vadd.f32 %v3173, %v3329
      %v3348 = vadd.f32 %v3174, %v3331
      %s3349 = scalar_lea.vmem %s1, 1120
      %v3350 = vld [vmem:[%s3349] sm:$0xff]
      %v3351 = vld [vmem:[%s3349 + $0x8] sm:$0xff]
      %v3352 = vld [vmem:[%s3349 + $0x10] sm:$0xff]
      %v3353 = vld [vmem:[%s3349 + $0x18] sm:$0xff]
      %v3354 = vld [vmem:[%s3349 + $0x20] sm:$0xff]
      %v3355 = vld [vmem:[%s3349 + $0x28] sm:$0xff]
      %v3356 = vld [vmem:[%s3349 + $0x30] sm:$0xff]
      %v3357 = vld [vmem:[%s3349 + $0x38] sm:$0xff]
      %v3358 = vld [vmem:[%s3349 + $0x40] sm:$0xff]
      %v3359 = vld [vmem:[%s3349 + $0x48] sm:$0xff]
      %v3360 = vld [vmem:[%s3349 + $0x50] sm:$0xff]
      %v3361 = vld [vmem:[%s3349 + $0x58] sm:$0xff]
      %v3362 = vld [vmem:[%s3349 + $0x60] sm:$0x1]
      %v3363 = vld [vmem:[%s3349 + $0x68] sm:$0x1]
      %v3365 = vsel %vm1622, %v962, 0
      %v3368 = vsel %vm1622, %v967, 0
      %v3371 = vsel %vm1622, %v972, 0
      %v3374 = vsel %vm1622, %v977, 0
      %v3377 = vsel %vm1622, %v982, 0
      %v3380 = vsel %vm1622, %v987, 0
      %v3383 = vsel %vm1622, %v992, 0
      %v3386 = vsel %vm1622, %v997, 0
      %v3389 = vsel %vm1647, %v3362, 0
      %v3392 = vsel %vm1647, %v3363, 0
      %3394 = vmatprep.subr.mxu0 0.0
      %3395 = vmatpush1.msra.mxu0 0.0
      %3396 = vmatprep.subr.mxu0 0.0
      %3397 = vmatpush1.msra.mxu0 0.0
      %3398 = vmatprep.subr.mxu0 0.0
      %3399 = vmatpush1.msra.mxu0 0.0
      %3400 = vmatprep.subr.mxu0 0.0
      %3401 = vmatpush1.msra.mxu0 0.0
      %3402 = vmatprep.subr.mxu0 0.0
      %3403 = vmatpush1.msra.mxu0 0.0
      %3404 = vmatprep.subr.mxu0 0.0
      %3405 = vmatpush1.msra.mxu0 0.0
      %3406 = vmatprep.subr.mxu0 0.0
      %3407 = vmatpush1.msra.mxu0 0.0
      %3408 = vmatprep.subr.mxu0 0.0
      %3409 = vmatpush1.msra.mxu0 0.0
      %3410 = vmatprep.subr.mxu0 0.0
      %3411 = vmatpush1.msra.mxu0 0.0
      %3412 = vmatprep.subr.mxu0 %v3392
      %3413 = vmatpush1.msra.mxu0 %v3389
      %3414 = vmatprep.subr.mxu0 %v3361
      %3415 = vmatpush1.msra.mxu0 %v3360
      %3416 = vmatprep.subr.mxu0 %v3359
      %3417 = vmatpush1.msra.mxu0 %v3358
      %3418 = vmatprep.subr.mxu0 %v3357
      %3419 = vmatpush1.msra.mxu0 %v3356
      %3420 = vmatprep.subr.mxu0 %v3355
      %3421 = vmatpush1.msra.mxu0 %v3354
      %3422 = vmatprep.subr.mxu0 %v3353
      %3423 = vmatpush1.msra.mxu0 %v3352
      %3424 = vmatprep.subr.mxu0 %v3351
      %3425 = vmatpush1.msra.mxu0 %v3350
      %3426 = vmatprep.subr.mxu0 0.0
      %3427 = vmatpush2.msra.mxu0 0.0
      %3428 = vmatprep.subr.mxu0 0.0
      %3429 = vmatpush2.msra.mxu0 0.0
      %3430 = vmatprep.subr.mxu0 0.0
      %3431 = vmatpush2.msra.mxu0 0.0
      %3432 = vmatprep.subr.mxu0 0.0
      %3433 = vmatpush2.msra.mxu0 0.0
      %3434 = vmatprep.subr.mxu0 0.0
      %3435 = vmatpush2.msra.mxu0 0.0
      %3436 = vmatprep.subr.mxu0 0.0
      %3437 = vmatpush2.msra.mxu0 0.0
      %3438 = vmatprep.subr.mxu0 0.0
      %3439 = vmatpush2.msra.mxu0 0.0
      %3440 = vmatprep.subr.mxu0 0.0
      %3441 = vmatpush2.msra.mxu0 0.0
      %3442 = vmatprep.subr.mxu0 0.0
      %3443 = vmatpush2.msra.mxu0 0.0
      %3444 = vmatprep.subr.mxu0 0.0
      %3445 = vmatpush2.msra.mxu0 0.0
      %3446 = vmatprep.subr.mxu0 0.0
      %3447 = vmatpush2.msra.mxu0 0.0
      %3448 = vmatprep.subr.mxu0 0.0
      %3449 = vmatpush2.msra.mxu0 0.0
      %3450 = vmatprep.subr.mxu0 0.0
      %3451 = vmatpush2.msra.mxu0 0.0
      %3452 = vmatprep.subr.mxu0 0.0
      %3453 = vmatpush2.msra.mxu0 0.0
      %3454 = vmatprep.subr.mxu0 0.0
      %3455 = vmatpush2.msra.mxu0 0.0
      %3456 = vmatprep.subr.mxu0 0.0
      %3457 = vmatpush2.msra.mxu0 0.0
      %3458 = vmatprep.mubr.f32.mxu0 0.0
      %3459 = vmatmul.mubr.f32.gmra.mxu0 %v3365
      %v3460 = vpop.f32.mrf.mxu0
      %v3461 = vadd.f32 0.0, %v3460
      %v3462 = vpop.f32.mrf.mxu0
      %v3463 = vadd.f32 0.0, %v3462
      %3464 = vmatprep.mubr.f32.mxu0 0.0
      %3465 = vmatmul.mubr.f32.gmra.mxu0 %v3368
      %v3466 = vpop.f32.mrf.mxu0
      %v3467 = vadd.f32 0.0, %v3466
      %v3468 = vpop.f32.mrf.mxu0
      %v3469 = vadd.f32 0.0, %v3468
      %3470 = vmatprep.mubr.f32.mxu0 0.0
      %3471 = vmatmul.mubr.f32.gmra.mxu0 %v3371
      %v3472 = vpop.f32.mrf.mxu0
      %v3473 = vadd.f32 0.0, %v3472
      %v3474 = vpop.f32.mrf.mxu0
      %v3475 = vadd.f32 0.0, %v3474
      %3476 = vmatprep.mubr.f32.mxu0 0.0
      %3477 = vmatmul.mubr.f32.gmra.mxu0 %v3374
      %v3478 = vpop.f32.mrf.mxu0
      %v3479 = vadd.f32 0.0, %v3478
      %v3480 = vpop.f32.mrf.mxu0
      %v3481 = vadd.f32 0.0, %v3480
      %3482 = vmatprep.mubr.f32.mxu0 0.0
      %3483 = vmatmul.mubr.f32.gmra.mxu0 %v3377
      %v3484 = vpop.f32.mrf.mxu0
      %v3485 = vadd.f32 0.0, %v3484
      %v3486 = vpop.f32.mrf.mxu0
      %v3487 = vadd.f32 0.0, %v3486
      %3488 = vmatprep.mubr.f32.mxu0 0.0
      %3489 = vmatmul.mubr.f32.gmra.mxu0 %v3380
      %v3490 = vpop.f32.mrf.mxu0
      %v3491 = vadd.f32 0.0, %v3490
      %v3492 = vpop.f32.mrf.mxu0
      %v3493 = vadd.f32 0.0, %v3492
      %3494 = vmatprep.mubr.f32.mxu0 0.0
      %3495 = vmatmul.mubr.f32.gmra.mxu0 %v3383
      %v3496 = vpop.f32.mrf.mxu0
      %v3497 = vadd.f32 0.0, %v3496
      %v3498 = vpop.f32.mrf.mxu0
      %v3499 = vadd.f32 0.0, %v3498
      %3500 = vmatprep.mubr.f32.mxu0 0.0
      %3501 = vmatmul.mubr.f32.gmra.mxu0 %v3386
      %v3502 = vpop.f32.mrf.mxu0
      %v3503 = vadd.f32 0.0, %v3502
      %v3504 = vpop.f32.mrf.mxu0
      %v3505 = vadd.f32 0.0, %v3504
      %3506 = vdwg.mxu0
      %v3507 = vadd.f32 %v3333, %v3461
      %v3508 = vadd.f32 %v3334, %v3463
      %v3509 = vadd.f32 %v3335, %v3467
      %v3510 = vadd.f32 %v3336, %v3469
      %v3511 = vadd.f32 %v3337, %v3473
      %v3512 = vadd.f32 %v3338, %v3475
      %v3513 = vadd.f32 %v3339, %v3479
      %v3514 = vadd.f32 %v3340, %v3481
      %v3515 = vadd.f32 %v3341, %v3485
      %v3516 = vadd.f32 %v3342, %v3487
      %v3517 = vadd.f32 %v3343, %v3491
      %v3518 = vadd.f32 %v3344, %v3493
      %v3519 = vadd.f32 %v3345, %v3497
      %v3520 = vadd.f32 %v3346, %v3499
      %v3521 = vadd.f32 %v3347, %v3503
      %v3522 = vadd.f32 %v3348, %v3505
      %s3523 = scalar_lea.vmem %s1, 1232
      %v3524 = vld [vmem:[%s3523] sm:$0xff]
      %v3525 = vld [vmem:[%s3523 + $0x8] sm:$0xff]
      %v3526 = vld [vmem:[%s3523 + $0x10] sm:$0xff]
      %v3527 = vld [vmem:[%s3523 + $0x18] sm:$0xff]
      %v3528 = vld [vmem:[%s3523 + $0x20] sm:$0xff]
      %v3529 = vld [vmem:[%s3523 + $0x28] sm:$0xff]
      %v3530 = vld [vmem:[%s3523 + $0x30] sm:$0xff]
      %v3531 = vld [vmem:[%s3523 + $0x38] sm:$0xff]
      %v3532 = vld [vmem:[%s3523 + $0x40] sm:$0xff]
      %v3533 = vld [vmem:[%s3523 + $0x48] sm:$0xff]
      %v3534 = vld [vmem:[%s3523 + $0x50] sm:$0xff]
      %v3535 = vld [vmem:[%s3523 + $0x58] sm:$0xff]
      %v3536 = vld [vmem:[%s3523 + $0x60] sm:$0x1]
      %v3537 = vld [vmem:[%s3523 + $0x68] sm:$0x1]
      %v3539 = vsel %vm1622, %v1002, 0
      %v3542 = vsel %vm1622, %v1007, 0
      %v3545 = vsel %vm1622, %v1012, 0
      %v3548 = vsel %vm1622, %v1017, 0
      %v3551 = vsel %vm1622, %v1022, 0
      %v3554 = vsel %vm1622, %v1027, 0
      %v3557 = vsel %vm1622, %v1032, 0
      %v3560 = vsel %vm1622, %v1037, 0
      %v3563 = vsel %vm1647, %v3536, 0
      %v3566 = vsel %vm1647, %v3537, 0
      %3568 = vmatprep.subr.mxu0 0.0
      %3569 = vmatpush1.msra.mxu0 0.0
      %3570 = vmatprep.subr.mxu0 0.0
      %3571 = vmatpush1.msra.mxu0 0.0
      %3572 = vmatprep.subr.mxu0 0.0
      %3573 = vmatpush1.msra.mxu0 0.0
      %3574 = vmatprep.subr.mxu0 0.0
      %3575 = vmatpush1.msra.mxu0 0.0
      %3576 = vmatprep.subr.mxu0 0.0
      %3577 = vmatpush1.msra.mxu0 0.0
      %3578 = vmatprep.subr.mxu0 0.0
      %3579 = vmatpush1.msra.mxu0 0.0
      %3580 = vmatprep.subr.mxu0 0.0
      %3581 = vmatpush1.msra.mxu0 0.0
      %3582 = vmatprep.subr.mxu0 0.0
      %3583 = vmatpush1.msra.mxu0 0.0
      %3584 = vmatprep.subr.mxu0 0.0
      %3585 = vmatpush1.msra.mxu0 0.0
      %3586 = vmatprep.subr.mxu0 %v3566
      %3587 = vmatpush1.msra.mxu0 %v3563
      %3588 = vmatprep.subr.mxu0 %v3535
      %3589 = vmatpush1.msra.mxu0 %v3534
      %3590 = vmatprep.subr.mxu0 %v3533
      %3591 = vmatpush1.msra.mxu0 %v3532
      %3592 = vmatprep.subr.mxu0 %v3531
      %3593 = vmatpush1.msra.mxu0 %v3530
      %3594 = vmatprep.subr.mxu0 %v3529
      %3595 = vmatpush1.msra.mxu0 %v3528
      %3596 = vmatprep.subr.mxu0 %v3527
      %3597 = vmatpush1.msra.mxu0 %v3526
      %3598 = vmatprep.subr.mxu0 %v3525
      %3599 = vmatpush1.msra.mxu0 %v3524
      %3600 = vmatprep.subr.mxu0 0.0
      %3601 = vmatpush2.msra.mxu0 0.0
      %3602 = vmatprep.subr.mxu0 0.0
      %3603 = vmatpush2.msra.mxu0 0.0
      %3604 = vmatprep.subr.mxu0 0.0
      %3605 = vmatpush2.msra.mxu0 0.0
      %3606 = vmatprep.subr.mxu0 0.0
      %3607 = vmatpush2.msra.mxu0 0.0
      %3608 = vmatprep.subr.mxu0 0.0
      %3609 = vmatpush2.msra.mxu0 0.0
      %3610 = vmatprep.subr.mxu0 0.0
      %3611 = vmatpush2.msra.mxu0 0.0
      %3612 = vmatprep.subr.mxu0 0.0
      %3613 = vmatpush2.msra.mxu0 0.0
      %3614 = vmatprep.subr.mxu0 0.0
      %3615 = vmatpush2.msra.mxu0 0.0
      %3616 = vmatprep.subr.mxu0 0.0
      %3617 = vmatpush2.msra.mxu0 0.0
      %3618 = vmatprep.subr.mxu0 0.0
      %3619 = vmatpush2.msra.mxu0 0.0
      %3620 = vmatprep.subr.mxu0 0.0
      %3621 = vmatpush2.msra.mxu0 0.0
      %3622 = vmatprep.subr.mxu0 0.0
      %3623 = vmatpush2.msra.mxu0 0.0
      %3624 = vmatprep.subr.mxu0 0.0
      %3625 = vmatpush2.msra.mxu0 0.0
      %3626 = vmatprep.subr.mxu0 0.0
      %3627 = vmatpush2.msra.mxu0 0.0
      %3628 = vmatprep.subr.mxu0 0.0
      %3629 = vmatpush2.msra.mxu0 0.0
      %3630 = vmatprep.subr.mxu0 0.0
      %3631 = vmatpush2.msra.mxu0 0.0
      %3632 = vmatprep.mubr.f32.mxu0 0.0
      %3633 = vmatmul.mubr.f32.gmra.mxu0 %v3539
      %v3634 = vpop.f32.mrf.mxu0
      %v3635 = vadd.f32 0.0, %v3634
      %v3636 = vpop.f32.mrf.mxu0
      %v3637 = vadd.f32 0.0, %v3636
      %3638 = vmatprep.mubr.f32.mxu0 0.0
      %3639 = vmatmul.mubr.f32.gmra.mxu0 %v3542
      %v3640 = vpop.f32.mrf.mxu0
      %v3641 = vadd.f32 0.0, %v3640
      %v3642 = vpop.f32.mrf.mxu0
      %v3643 = vadd.f32 0.0, %v3642
      %3644 = vmatprep.mubr.f32.mxu0 0.0
      %3645 = vmatmul.mubr.f32.gmra.mxu0 %v3545
      %v3646 = vpop.f32.mrf.mxu0
      %v3647 = vadd.f32 0.0, %v3646
      %v3648 = vpop.f32.mrf.mxu0
      %v3649 = vadd.f32 0.0, %v3648
      %3650 = vmatprep.mubr.f32.mxu0 0.0
      %3651 = vmatmul.mubr.f32.gmra.mxu0 %v3548
      %v3652 = vpop.f32.mrf.mxu0
      %v3653 = vadd.f32 0.0, %v3652
      %v3654 = vpop.f32.mrf.mxu0
      %v3655 = vadd.f32 0.0, %v3654
      %3656 = vmatprep.mubr.f32.mxu0 0.0
      %3657 = vmatmul.mubr.f32.gmra.mxu0 %v3551
      %v3658 = vpop.f32.mrf.mxu0
      %v3659 = vadd.f32 0.0, %v3658
      %v3660 = vpop.f32.mrf.mxu0
      %v3661 = vadd.f32 0.0, %v3660
      %3662 = vmatprep.mubr.f32.mxu0 0.0
      %3663 = vmatmul.mubr.f32.gmra.mxu0 %v3554
      %v3664 = vpop.f32.mrf.mxu0
      %v3665 = vadd.f32 0.0, %v3664
      %v3666 = vpop.f32.mrf.mxu0
      %v3667 = vadd.f32 0.0, %v3666
      %3668 = vmatprep.mubr.f32.mxu0 0.0
      %3669 = vmatmul.mubr.f32.gmra.mxu0 %v3557
      %v3670 = vpop.f32.mrf.mxu0
      %v3671 = vadd.f32 0.0, %v3670
      %v3672 = vpop.f32.mrf.mxu0
      %v3673 = vadd.f32 0.0, %v3672
      %3674 = vmatprep.mubr.f32.mxu0 0.0
      %3675 = vmatmul.mubr.f32.gmra.mxu0 %v3560
      %v3676 = vpop.f32.mrf.mxu0
      %v3677 = vadd.f32 0.0, %v3676
      %v3678 = vpop.f32.mrf.mxu0
      %v3679 = vadd.f32 0.0, %v3678
      %3680 = vdwg.mxu0
      %v3681 = vadd.f32 %v3507, %v3635
      %v3682 = vadd.f32 %v3508, %v3637
      %v3683 = vadd.f32 %v3509, %v3641
      %v3684 = vadd.f32 %v3510, %v3643
      %v3685 = vadd.f32 %v3511, %v3647
      %v3686 = vadd.f32 %v3512, %v3649
      %v3687 = vadd.f32 %v3513, %v3653
      %v3688 = vadd.f32 %v3514, %v3655
      %v3689 = vadd.f32 %v3515, %v3659
      %v3690 = vadd.f32 %v3516, %v3661
      %v3691 = vadd.f32 %v3517, %v3665
      %v3692 = vadd.f32 %v3518, %v3667
      %v3693 = vadd.f32 %v3519, %v3671
      %v3694 = vadd.f32 %v3520, %v3673
      %v3695 = vadd.f32 %v3521, %v3677
      %v3696 = vadd.f32 %v3522, %v3679
      %s3697 = scalar_lea.vmem %s1, 1344
      %v3698 = vld [vmem:[%s3697] sm:$0xff]
      %v3699 = vld [vmem:[%s3697 + $0x8] sm:$0xff]
      %v3700 = vld [vmem:[%s3697 + $0x10] sm:$0xff]
      %v3701 = vld [vmem:[%s3697 + $0x18] sm:$0xff]
      %v3702 = vld [vmem:[%s3697 + $0x20] sm:$0xff]
      %v3703 = vld [vmem:[%s3697 + $0x28] sm:$0xff]
      %v3704 = vld [vmem:[%s3697 + $0x30] sm:$0xff]
      %v3705 = vld [vmem:[%s3697 + $0x38] sm:$0xff]
      %v3706 = vld [vmem:[%s3697 + $0x40] sm:$0xff]
      %v3707 = vld [vmem:[%s3697 + $0x48] sm:$0xff]
      %v3708 = vld [vmem:[%s3697 + $0x50] sm:$0xff]
      %v3709 = vld [vmem:[%s3697 + $0x58] sm:$0xff]
      %v3710 = vld [vmem:[%s3697 + $0x60] sm:$0x1]
      %v3711 = vld [vmem:[%s3697 + $0x68] sm:$0x1]
      %v3713 = vsel %vm1622, %v1042, 0
      %v3716 = vsel %vm1622, %v1047, 0
      %v3719 = vsel %vm1622, %v1052, 0
      %v3722 = vsel %vm1622, %v1057, 0
      %v3725 = vsel %vm1622, %v1062, 0
      %v3728 = vsel %vm1622, %v1067, 0
      %v3731 = vsel %vm1622, %v1072, 0
      %v3734 = vsel %vm1622, %v1077, 0
      %v3737 = vsel %vm1647, %v3710, 0
      %v3740 = vsel %vm1647, %v3711, 0
      %3742 = vmatprep.subr.mxu0 0.0
      %3743 = vmatpush1.msra.mxu0 0.0
      %3744 = vmatprep.subr.mxu0 0.0
      %3745 = vmatpush1.msra.mxu0 0.0
      %3746 = vmatprep.subr.mxu0 0.0
      %3747 = vmatpush1.msra.mxu0 0.0
      %3748 = vmatprep.subr.mxu0 0.0
      %3749 = vmatpush1.msra.mxu0 0.0
      %3750 = vmatprep.subr.mxu0 0.0
      %3751 = vmatpush1.msra.mxu0 0.0
      %3752 = vmatprep.subr.mxu0 0.0
      %3753 = vmatpush1.msra.mxu0 0.0
      %3754 = vmatprep.subr.mxu0 0.0
      %3755 = vmatpush1.msra.mxu0 0.0
      %3756 = vmatprep.subr.mxu0 0.0
      %3757 = vmatpush1.msra.mxu0 0.0
      %3758 = vmatprep.subr.mxu0 0.0
      %3759 = vmatpush1.msra.mxu0 0.0
      %3760 = vmatprep.subr.mxu0 %v3740
      %3761 = vmatpush1.msra.mxu0 %v3737
      %3762 = vmatprep.subr.mxu0 %v3709
      %3763 = vmatpush1.msra.mxu0 %v3708
      %3764 = vmatprep.subr.mxu0 %v3707
      %3765 = vmatpush1.msra.mxu0 %v3706
      %3766 = vmatprep.subr.mxu0 %v3705
      %3767 = vmatpush1.msra.mxu0 %v3704
      %3768 = vmatprep.subr.mxu0 %v3703
      %3769 = vmatpush1.msra.mxu0 %v3702
      %3770 = vmatprep.subr.mxu0 %v3701
      %3771 = vmatpush1.msra.mxu0 %v3700
      %3772 = vmatprep.subr.mxu0 %v3699
      %3773 = vmatpush1.msra.mxu0 %v3698
      %3774 = vmatprep.subr.mxu0 0.0
      %3775 = vmatpush2.msra.mxu0 0.0
      %3776 = vmatprep.subr.mxu0 0.0
      %3777 = vmatpush2.msra.mxu0 0.0
      %3778 = vmatprep.subr.mxu0 0.0
      %3779 = vmatpush2.msra.mxu0 0.0
      %3780 = vmatprep.subr.mxu0 0.0
      %3781 = vmatpush2.msra.mxu0 0.0
      %3782 = vmatprep.subr.mxu0 0.0
      %3783 = vmatpush2.msra.mxu0 0.0
      %3784 = vmatprep.subr.mxu0 0.0
      %3785 = vmatpush2.msra.mxu0 0.0
      %3786 = vmatprep.subr.mxu0 0.0
      %3787 = vmatpush2.msra.mxu0 0.0
      %3788 = vmatprep.subr.mxu0 0.0
      %3789 = vmatpush2.msra.mxu0 0.0
      %3790 = vmatprep.subr.mxu0 0.0
      %3791 = vmatpush2.msra.mxu0 0.0
      %3792 = vmatprep.subr.mxu0 0.0
      %3793 = vmatpush2.msra.mxu0 0.0
      %3794 = vmatprep.subr.mxu0 0.0
      %3795 = vmatpush2.msra.mxu0 0.0
      %3796 = vmatprep.subr.mxu0 0.0
      %3797 = vmatpush2.msra.mxu0 0.0
      %3798 = vmatprep.subr.mxu0 0.0
      %3799 = vmatpush2.msra.mxu0 0.0
      %3800 = vmatprep.subr.mxu0 0.0
      %3801 = vmatpush2.msra.mxu0 0.0
      %3802 = vmatprep.subr.mxu0 0.0
      %3803 = vmatpush2.msra.mxu0 0.0
      %3804 = vmatprep.subr.mxu0 0.0
      %3805 = vmatpush2.msra.mxu0 0.0
      %3806 = vmatprep.mubr.f32.mxu0 0.0
      %3807 = vmatmul.mubr.f32.gmra.mxu0 %v3713
      %v3808 = vpop.f32.mrf.mxu0
      %v3809 = vadd.f32 0.0, %v3808
      %v3810 = vpop.f32.mrf.mxu0
      %v3811 = vadd.f32 0.0, %v3810
      %3812 = vmatprep.mubr.f32.mxu0 0.0
      %3813 = vmatmul.mubr.f32.gmra.mxu0 %v3716
      %v3814 = vpop.f32.mrf.mxu0
      %v3815 = vadd.f32 0.0, %v3814
      %v3816 = vpop.f32.mrf.mxu0
      %v3817 = vadd.f32 0.0, %v3816
      %3818 = vmatprep.mubr.f32.mxu0 0.0
      %3819 = vmatmul.mubr.f32.gmra.mxu0 %v3719
      %v3820 = vpop.f32.mrf.mxu0
      %v3821 = vadd.f32 0.0, %v3820
      %v3822 = vpop.f32.mrf.mxu0
      %v3823 = vadd.f32 0.0, %v3822
      %3824 = vmatprep.mubr.f32.mxu0 0.0
      %3825 = vmatmul.mubr.f32.gmra.mxu0 %v3722
      %v3826 = vpop.f32.mrf.mxu0
      %v3827 = vadd.f32 0.0, %v3826
      %v3828 = vpop.f32.mrf.mxu0
      %v3829 = vadd.f32 0.0, %v3828
      %3830 = vmatprep.mubr.f32.mxu0 0.0
      %3831 = vmatmul.mubr.f32.gmra.mxu0 %v3725
      %v3832 = vpop.f32.mrf.mxu0
      %v3833 = vadd.f32 0.0, %v3832
      %v3834 = vpop.f32.mrf.mxu0
      %v3835 = vadd.f32 0.0, %v3834
      %3836 = vmatprep.mubr.f32.mxu0 0.0
      %3837 = vmatmul.mubr.f32.gmra.mxu0 %v3728
      %v3838 = vpop.f32.mrf.mxu0
      %v3839 = vadd.f32 0.0, %v3838
      %v3840 = vpop.f32.mrf.mxu0
      %v3841 = vadd.f32 0.0, %v3840
      %3842 = vmatprep.mubr.f32.mxu0 0.0
      %3843 = vmatmul.mubr.f32.gmra.mxu0 %v3731
      %v3844 = vpop.f32.mrf.mxu0
      %v3845 = vadd.f32 0.0, %v3844
      %v3846 = vpop.f32.mrf.mxu0
      %v3847 = vadd.f32 0.0, %v3846
      %3848 = vmatprep.mubr.f32.mxu0 0.0
      %3849 = vmatmul.mubr.f32.gmra.mxu0 %v3734
      %v3850 = vpop.f32.mrf.mxu0
      %v3851 = vadd.f32 0.0, %v3850
      %v3852 = vpop.f32.mrf.mxu0
      %v3853 = vadd.f32 0.0, %v3852
      %3854 = vdwg.mxu0
      %v3855 = vadd.f32 %v3681, %v3809
      %v3856 = vadd.f32 %v3682, %v3811
      %v3857 = vadd.f32 %v3683, %v3815
      %v3858 = vadd.f32 %v3684, %v3817
      %v3859 = vadd.f32 %v3685, %v3821
      %v3860 = vadd.f32 %v3686, %v3823
      %v3861 = vadd.f32 %v3687, %v3827
      %v3862 = vadd.f32 %v3688, %v3829
      %v3863 = vadd.f32 %v3689, %v3833
      %v3864 = vadd.f32 %v3690, %v3835
      %v3865 = vadd.f32 %v3691, %v3839
      %v3866 = vadd.f32 %v3692, %v3841
      %v3867 = vadd.f32 %v3693, %v3845
      %v3868 = vadd.f32 %v3694, %v3847
      %v3869 = vadd.f32 %v3695, %v3851
      %v3870 = vadd.f32 %v3696, %v3853
      %s3871 = scalar_lea.vmem %s1, 1456
      %v3872 = vld [vmem:[%s3871] sm:$0xff]
      %v3873 = vld [vmem:[%s3871 + $0x8] sm:$0xff]
      %v3874 = vld [vmem:[%s3871 + $0x10] sm:$0xff]
      %v3875 = vld [vmem:[%s3871 + $0x18] sm:$0xff]
      %v3876 = vld [vmem:[%s3871 + $0x20] sm:$0xff]
      %v3877 = vld [vmem:[%s3871 + $0x28] sm:$0xff]
      %v3878 = vld [vmem:[%s3871 + $0x30] sm:$0xff]
      %v3879 = vld [vmem:[%s3871 + $0x38] sm:$0xff]
      %v3880 = vld [vmem:[%s3871 + $0x40] sm:$0xff]
      %v3881 = vld [vmem:[%s3871 + $0x48] sm:$0xff]
      %v3882 = vld [vmem:[%s3871 + $0x50] sm:$0xff]
      %v3883 = vld [vmem:[%s3871 + $0x58] sm:$0xff]
      %v3884 = vld [vmem:[%s3871 + $0x60] sm:$0x1]
      %v3885 = vld [vmem:[%s3871 + $0x68] sm:$0x1]
      %v3887 = vsel %vm1622, %v1082, 0
      %v3890 = vsel %vm1622, %v1087, 0
      %v3893 = vsel %vm1622, %v1092, 0
      %v3896 = vsel %vm1622, %v1097, 0
      %v3899 = vsel %vm1622, %v1102, 0
      %v3902 = vsel %vm1622, %v1107, 0
      %v3905 = vsel %vm1622, %v1112, 0
      %v3908 = vsel %vm1622, %v1117, 0
      %v3911 = vsel %vm1647, %v3884, 0
      %v3914 = vsel %vm1647, %v3885, 0
      %3916 = vmatprep.subr.mxu0 0.0
      %3917 = vmatpush1.msra.mxu0 0.0
      %3918 = vmatprep.subr.mxu0 0.0
      %3919 = vmatpush1.msra.mxu0 0.0
      %3920 = vmatprep.subr.mxu0 0.0
      %3921 = vmatpush1.msra.mxu0 0.0
      %3922 = vmatprep.subr.mxu0 0.0
      %3923 = vmatpush1.msra.mxu0 0.0
      %3924 = vmatprep.subr.mxu0 0.0
      %3925 = vmatpush1.msra.mxu0 0.0
      %3926 = vmatprep.subr.mxu0 0.0
      %3927 = vmatpush1.msra.mxu0 0.0
      %3928 = vmatprep.subr.mxu0 0.0
      %3929 = vmatpush1.msra.mxu0 0.0
      %3930 = vmatprep.subr.mxu0 0.0
      %3931 = vmatpush1.msra.mxu0 0.0
      %3932 = vmatprep.subr.mxu0 0.0
      %3933 = vmatpush1.msra.mxu0 0.0
      %3934 = vmatprep.subr.mxu0 %v3914
      %3935 = vmatpush1.msra.mxu0 %v3911
      %3936 = vmatprep.subr.mxu0 %v3883
      %3937 = vmatpush1.msra.mxu0 %v3882
      %3938 = vmatprep.subr.mxu0 %v3881
      %3939 = vmatpush1.msra.mxu0 %v3880
      %3940 = vmatprep.subr.mxu0 %v3879
      %3941 = vmatpush1.msra.mxu0 %v3878
      %3942 = vmatprep.subr.mxu0 %v3877
      %3943 = vmatpush1.msra.mxu0 %v3876
      %3944 = vmatprep.subr.mxu0 %v3875
      %3945 = vmatpush1.msra.mxu0 %v3874
      %3946 = vmatprep.subr.mxu0 %v3873
      %3947 = vmatpush1.msra.mxu0 %v3872
      %3948 = vmatprep.subr.mxu0 0.0
      %3949 = vmatpush2.msra.mxu0 0.0
      %3950 = vmatprep.subr.mxu0 0.0
      %3951 = vmatpush2.msra.mxu0 0.0
      %3952 = vmatprep.subr.mxu0 0.0
      %3953 = vmatpush2.msra.mxu0 0.0
      %3954 = vmatprep.subr.mxu0 0.0
      %3955 = vmatpush2.msra.mxu0 0.0
      %3956 = vmatprep.subr.mxu0 0.0
      %3957 = vmatpush2.msra.mxu0 0.0
      %3958 = vmatprep.subr.mxu0 0.0
      %3959 = vmatpush2.msra.mxu0 0.0
      %3960 = vmatprep.subr.mxu0 0.0
      %3961 = vmatpush2.msra.mxu0 0.0
      %3962 = vmatprep.subr.mxu0 0.0
      %3963 = vmatpush2.msra.mxu0 0.0
      %3964 = vmatprep.subr.mxu0 0.0
      %3965 = vmatpush2.msra.mxu0 0.0
      %3966 = vmatprep.subr.mxu0 0.0
      %3967 = vmatpush2.msra.mxu0 0.0
      %3968 = vmatprep.subr.mxu0 0.0
      %3969 = vmatpush2.msra.mxu0 0.0
      %3970 = vmatprep.subr.mxu0 0.0
      %3971 = vmatpush2.msra.mxu0 0.0
      %3972 = vmatprep.subr.mxu0 0.0
      %3973 = vmatpush2.msra.mxu0 0.0
      %3974 = vmatprep.subr.mxu0 0.0
      %3975 = vmatpush2.msra.mxu0 0.0
      %3976 = vmatprep.subr.mxu0 0.0
      %3977 = vmatpush2.msra.mxu0 0.0
      %3978 = vmatprep.subr.mxu0 0.0
      %3979 = vmatpush2.msra.mxu0 0.0
      %3980 = vmatprep.mubr.f32.mxu0 0.0
      %3981 = vmatmul.mubr.f32.gmra.mxu0 %v3887
      %v3982 = vpop.f32.mrf.mxu0
      %v3983 = vadd.f32 0.0, %v3982
      %v3984 = vpop.f32.mrf.mxu0
      %v3985 = vadd.f32 0.0, %v3984
      %3986 = vmatprep.mubr.f32.mxu0 0.0
      %3987 = vmatmul.mubr.f32.gmra.mxu0 %v3890
      %v3988 = vpop.f32.mrf.mxu0
      %v3989 = vadd.f32 0.0, %v3988
      %v3990 = vpop.f32.mrf.mxu0
      %v3991 = vadd.f32 0.0, %v3990
      %3992 = vmatprep.mubr.f32.mxu0 0.0
      %3993 = vmatmul.mubr.f32.gmra.mxu0 %v3893
      %v3994 = vpop.f32.mrf.mxu0
      %v3995 = vadd.f32 0.0, %v3994
      %v3996 = vpop.f32.mrf.mxu0
      %v3997 = vadd.f32 0.0, %v3996
      %3998 = vmatprep.mubr.f32.mxu0 0.0
      %3999 = vmatmul.mubr.f32.gmra.mxu0 %v3896
      %v4000 = vpop.f32.mrf.mxu0
      %v4001 = vadd.f32 0.0, %v4000
      %v4002 = vpop.f32.mrf.mxu0
      %v4003 = vadd.f32 0.0, %v4002
      %4004 = vmatprep.mubr.f32.mxu0 0.0
      %4005 = vmatmul.mubr.f32.gmra.mxu0 %v3899
      %v4006 = vpop.f32.mrf.mxu0
      %v4007 = vadd.f32 0.0, %v4006
      %v4008 = vpop.f32.mrf.mxu0
      %v4009 = vadd.f32 0.0, %v4008
      %4010 = vmatprep.mubr.f32.mxu0 0.0
      %4011 = vmatmul.mubr.f32.gmra.mxu0 %v3902
      %v4012 = vpop.f32.mrf.mxu0
      %v4013 = vadd.f32 0.0, %v4012
      %v4014 = vpop.f32.mrf.mxu0
      %v4015 = vadd.f32 0.0, %v4014
      %4016 = vmatprep.mubr.f32.mxu0 0.0
      %4017 = vmatmul.mubr.f32.gmra.mxu0 %v3905
      %v4018 = vpop.f32.mrf.mxu0
      %v4019 = vadd.f32 0.0, %v4018
      %v4020 = vpop.f32.mrf.mxu0
      %v4021 = vadd.f32 0.0, %v4020
      %4022 = vmatprep.mubr.f32.mxu0 0.0
      %4023 = vmatmul.mubr.f32.gmra.mxu0 %v3908
      %v4024 = vpop.f32.mrf.mxu0
      %v4025 = vadd.f32 0.0, %v4024
      %v4026 = vpop.f32.mrf.mxu0
      %v4027 = vadd.f32 0.0, %v4026
      %4028 = vdwg.mxu0
      %v4029 = vadd.f32 %v3855, %v3983
      %v4030 = vadd.f32 %v3856, %v3985
      %v4031 = vadd.f32 %v3857, %v3989
      %v4032 = vadd.f32 %v3858, %v3991
      %v4033 = vadd.f32 %v3859, %v3995
      %v4034 = vadd.f32 %v3860, %v3997
      %v4035 = vadd.f32 %v3861, %v4001
      %v4036 = vadd.f32 %v3862, %v4003
      %v4037 = vadd.f32 %v3863, %v4007
      %v4038 = vadd.f32 %v3864, %v4009
      %v4039 = vadd.f32 %v3865, %v4013
      %v4040 = vadd.f32 %v3866, %v4015
      %v4041 = vadd.f32 %v3867, %v4019
      %v4042 = vadd.f32 %v3868, %v4021
      %v4043 = vadd.f32 %v3869, %v4025
      %v4044 = vadd.f32 %v3870, %v4027
      %s4045 = scalar_lea.vmem %s1, 1568
      %v4046 = vld [vmem:[%s4045] sm:$0xff]
      %v4047 = vld [vmem:[%s4045 + $0x8] sm:$0xff]
      %v4048 = vld [vmem:[%s4045 + $0x10] sm:$0xff]
      %v4049 = vld [vmem:[%s4045 + $0x18] sm:$0xff]
      %v4050 = vld [vmem:[%s4045 + $0x20] sm:$0xff]
      %v4051 = vld [vmem:[%s4045 + $0x28] sm:$0xff]
      %v4052 = vld [vmem:[%s4045 + $0x30] sm:$0xff]
      %v4053 = vld [vmem:[%s4045 + $0x38] sm:$0xff]
      %v4054 = vld [vmem:[%s4045 + $0x40] sm:$0xff]
      %v4055 = vld [vmem:[%s4045 + $0x48] sm:$0xff]
      %v4056 = vld [vmem:[%s4045 + $0x50] sm:$0xff]
      %v4057 = vld [vmem:[%s4045 + $0x58] sm:$0xff]
      %v4058 = vld [vmem:[%s4045 + $0x60] sm:$0x1]
      %v4059 = vld [vmem:[%s4045 + $0x68] sm:$0x1]
      %v4061 = vsel %vm1622, %v1122, 0
      %v4064 = vsel %vm1622, %v1127, 0
      %v4067 = vsel %vm1622, %v1132, 0
      %v4070 = vsel %vm1622, %v1137, 0
      %v4073 = vsel %vm1622, %v1142, 0
      %v4076 = vsel %vm1622, %v1147, 0
      %v4079 = vsel %vm1622, %v1152, 0
      %v4082 = vsel %vm1622, %v1157, 0
      %v4085 = vsel %vm1647, %v4058, 0
      %v4088 = vsel %vm1647, %v4059, 0
      %4090 = vmatprep.subr.mxu0 0.0
      %4091 = vmatpush1.msra.mxu0 0.0
      %4092 = vmatprep.subr.mxu0 0.0
      %4093 = vmatpush1.msra.mxu0 0.0
      %4094 = vmatprep.subr.mxu0 0.0
      %4095 = vmatpush1.msra.mxu0 0.0
      %4096 = vmatprep.subr.mxu0 0.0
      %4097 = vmatpush1.msra.mxu0 0.0
      %4098 = vmatprep.subr.mxu0 0.0
      %4099 = vmatpush1.msra.mxu0 0.0
      %4100 = vmatprep.subr.mxu0 0.0
      %4101 = vmatpush1.msra.mxu0 0.0
      %4102 = vmatprep.subr.mxu0 0.0
      %4103 = vmatpush1.msra.mxu0 0.0
      %4104 = vmatprep.subr.mxu0 0.0
      %4105 = vmatpush1.msra.mxu0 0.0
      %4106 = vmatprep.subr.mxu0 0.0
      %4107 = vmatpush1.msra.mxu0 0.0
      %4108 = vmatprep.subr.mxu0 %v4088
      %4109 = vmatpush1.msra.mxu0 %v4085
      %4110 = vmatprep.subr.mxu0 %v4057
      %4111 = vmatpush1.msra.mxu0 %v4056
      %4112 = vmatprep.subr.mxu0 %v4055
      %4113 = vmatpush1.msra.mxu0 %v4054
      %4114 = vmatprep.subr.mxu0 %v4053
      %4115 = vmatpush1.msra.mxu0 %v4052
      %4116 = vmatprep.subr.mxu0 %v4051
      %4117 = vmatpush1.msra.mxu0 %v4050
      %4118 = vmatprep.subr.mxu0 %v4049
      %4119 = vmatpush1.msra.mxu0 %v4048
      %4120 = vmatprep.subr.mxu0 %v4047
      %4121 = vmatpush1.msra.mxu0 %v4046
      %4122 = vmatprep.subr.mxu0 0.0
      %4123 = vmatpush2.msra.mxu0 0.0
      %4124 = vmatprep.subr.mxu0 0.0
      %4125 = vmatpush2.msra.mxu0 0.0
      %4126 = vmatprep.subr.mxu0 0.0
      %4127 = vmatpush2.msra.mxu0 0.0
      %4128 = vmatprep.subr.mxu0 0.0
      %4129 = vmatpush2.msra.mxu0 0.0
      %4130 = vmatprep.subr.mxu0 0.0
      %4131 = vmatpush2.msra.mxu0 0.0
      %4132 = vmatprep.subr.mxu0 0.0
      %4133 = vmatpush2.msra.mxu0 0.0
      %4134 = vmatprep.subr.mxu0 0.0
      %4135 = vmatpush2.msra.mxu0 0.0
      %4136 = vmatprep.subr.mxu0 0.0
      %4137 = vmatpush2.msra.mxu0 0.0
      %4138 = vmatprep.subr.mxu0 0.0
      %4139 = vmatpush2.msra.mxu0 0.0
      %4140 = vmatprep.subr.mxu0 0.0
      %4141 = vmatpush2.msra.mxu0 0.0
      %4142 = vmatprep.subr.mxu0 0.0
      %4143 = vmatpush2.msra.mxu0 0.0
      %4144 = vmatprep.subr.mxu0 0.0
      %4145 = vmatpush2.msra.mxu0 0.0
      %4146 = vmatprep.subr.mxu0 0.0
      %4147 = vmatpush2.msra.mxu0 0.0
      %4148 = vmatprep.subr.mxu0 0.0
      %4149 = vmatpush2.msra.mxu0 0.0
      %4150 = vmatprep.subr.mxu0 0.0
      %4151 = vmatpush2.msra.mxu0 0.0
      %4152 = vmatprep.subr.mxu0 0.0
      %4153 = vmatpush2.msra.mxu0 0.0
      %4154 = vmatprep.mubr.f32.mxu0 0.0
      %4155 = vmatmul.mubr.f32.gmra.mxu0 %v4061
      %v4156 = vpop.f32.mrf.mxu0
      %v4157 = vadd.f32 0.0, %v4156
      %v4158 = vpop.f32.mrf.mxu0
      %v4159 = vadd.f32 0.0, %v4158
      %4160 = vmatprep.mubr.f32.mxu0 0.0
      %4161 = vmatmul.mubr.f32.gmra.mxu0 %v4064
      %v4162 = vpop.f32.mrf.mxu0
      %v4163 = vadd.f32 0.0, %v4162
      %v4164 = vpop.f32.mrf.mxu0
      %v4165 = vadd.f32 0.0, %v4164
      %4166 = vmatprep.mubr.f32.mxu0 0.0
      %4167 = vmatmul.mubr.f32.gmra.mxu0 %v4067
      %v4168 = vpop.f32.mrf.mxu0
      %v4169 = vadd.f32 0.0, %v4168
      %v4170 = vpop.f32.mrf.mxu0
      %v4171 = vadd.f32 0.0, %v4170
      %4172 = vmatprep.mubr.f32.mxu0 0.0
      %4173 = vmatmul.mubr.f32.gmra.mxu0 %v4070
      %v4174 = vpop.f32.mrf.mxu0
      %v4175 = vadd.f32 0.0, %v4174
      %v4176 = vpop.f32.mrf.mxu0
      %v4177 = vadd.f32 0.0, %v4176
      %4178 = vmatprep.mubr.f32.mxu0 0.0
      %4179 = vmatmul.mubr.f32.gmra.mxu0 %v4073
      %v4180 = vpop.f32.mrf.mxu0
      %v4181 = vadd.f32 0.0, %v4180
      %v4182 = vpop.f32.mrf.mxu0
      %v4183 = vadd.f32 0.0, %v4182
      %4184 = vmatprep.mubr.f32.mxu0 0.0
      %4185 = vmatmul.mubr.f32.gmra.mxu0 %v4076
      %v4186 = vpop.f32.mrf.mxu0
      %v4187 = vadd.f32 0.0, %v4186
      %v4188 = vpop.f32.mrf.mxu0
      %v4189 = vadd.f32 0.0, %v4188
      %4190 = vmatprep.mubr.f32.mxu0 0.0
      %4191 = vmatmul.mubr.f32.gmra.mxu0 %v4079
      %v4192 = vpop.f32.mrf.mxu0
      %v4193 = vadd.f32 0.0, %v4192
      %v4194 = vpop.f32.mrf.mxu0
      %v4195 = vadd.f32 0.0, %v4194
      %4196 = vmatprep.mubr.f32.mxu0 0.0
      %4197 = vmatmul.mubr.f32.gmra.mxu0 %v4082
      %v4198 = vpop.f32.mrf.mxu0
      %v4199 = vadd.f32 0.0, %v4198
      %v4200 = vpop.f32.mrf.mxu0
      %v4201 = vadd.f32 0.0, %v4200
      %4202 = vdwg.mxu0
      %v4203 = vadd.f32 %v4029, %v4157
      %v4204 = vadd.f32 %v4030, %v4159
      %v4205 = vadd.f32 %v4031, %v4163
      %v4206 = vadd.f32 %v4032, %v4165
      %v4207 = vadd.f32 %v4033, %v4169
      %v4208 = vadd.f32 %v4034, %v4171
      %v4209 = vadd.f32 %v4035, %v4175
      %v4210 = vadd.f32 %v4036, %v4177
      %v4211 = vadd.f32 %v4037, %v4181
      %v4212 = vadd.f32 %v4038, %v4183
      %v4213 = vadd.f32 %v4039, %v4187
      %v4214 = vadd.f32 %v4040, %v4189
      %v4215 = vadd.f32 %v4041, %v4193
      %v4216 = vadd.f32 %v4042, %v4195
      %v4217 = vadd.f32 %v4043, %v4199
      %v4218 = vadd.f32 %v4044, %v4201
      %s4219 = scalar_lea.vmem %s1, 1680
      %v4220 = vld [vmem:[%s4219] sm:$0xff]
      %v4221 = vld [vmem:[%s4219 + $0x8] sm:$0xff]
      %v4222 = vld [vmem:[%s4219 + $0x10] sm:$0xff]
      %v4223 = vld [vmem:[%s4219 + $0x18] sm:$0xff]
      %v4224 = vld [vmem:[%s4219 + $0x20] sm:$0xff]
      %v4225 = vld [vmem:[%s4219 + $0x28] sm:$0xff]
      %v4226 = vld [vmem:[%s4219 + $0x30] sm:$0xff]
      %v4227 = vld [vmem:[%s4219 + $0x38] sm:$0xff]
      %v4228 = vld [vmem:[%s4219 + $0x40] sm:$0xff]
      %v4229 = vld [vmem:[%s4219 + $0x48] sm:$0xff]
      %v4230 = vld [vmem:[%s4219 + $0x50] sm:$0xff]
      %v4231 = vld [vmem:[%s4219 + $0x58] sm:$0xff]
      %v4232 = vld [vmem:[%s4219 + $0x60] sm:$0x1]
      %v4233 = vld [vmem:[%s4219 + $0x68] sm:$0x1]
      %v4235 = vsel %vm1622, %v1162, 0
      %v4238 = vsel %vm1622, %v1167, 0
      %v4241 = vsel %vm1622, %v1172, 0
      %v4244 = vsel %vm1622, %v1177, 0
      %v4247 = vsel %vm1622, %v1182, 0
      %v4250 = vsel %vm1622, %v1187, 0
      %v4253 = vsel %vm1622, %v1192, 0
      %v4256 = vsel %vm1622, %v1197, 0
      %v4259 = vsel %vm1647, %v4232, 0
      %v4262 = vsel %vm1647, %v4233, 0
      %4264 = vmatprep.subr.mxu0 0.0
      %4265 = vmatpush1.msra.mxu0 0.0
      %4266 = vmatprep.subr.mxu0 0.0
      %4267 = vmatpush1.msra.mxu0 0.0
      %4268 = vmatprep.subr.mxu0 0.0
      %4269 = vmatpush1.msra.mxu0 0.0
      %4270 = vmatprep.subr.mxu0 0.0
      %4271 = vmatpush1.msra.mxu0 0.0
      %4272 = vmatprep.subr.mxu0 0.0
      %4273 = vmatpush1.msra.mxu0 0.0
      %4274 = vmatprep.subr.mxu0 0.0
      %4275 = vmatpush1.msra.mxu0 0.0
      %4276 = vmatprep.subr.mxu0 0.0
      %4277 = vmatpush1.msra.mxu0 0.0
      %4278 = vmatprep.subr.mxu0 0.0
      %4279 = vmatpush1.msra.mxu0 0.0
      %4280 = vmatprep.subr.mxu0 0.0
      %4281 = vmatpush1.msra.mxu0 0.0
      %4282 = vmatprep.subr.mxu0 %v4262
      %4283 = vmatpush1.msra.mxu0 %v4259
      %4284 = vmatprep.subr.mxu0 %v4231
      %4285 = vmatpush1.msra.mxu0 %v4230
      %4286 = vmatprep.subr.mxu0 %v4229
      %4287 = vmatpush1.msra.mxu0 %v4228
      %4288 = vmatprep.subr.mxu0 %v4227
      %4289 = vmatpush1.msra.mxu0 %v4226
      %4290 = vmatprep.subr.mxu0 %v4225
      %4291 = vmatpush1.msra.mxu0 %v4224
      %4292 = vmatprep.subr.mxu0 %v4223
      %4293 = vmatpush1.msra.mxu0 %v4222
      %4294 = vmatprep.subr.mxu0 %v4221
      %4295 = vmatpush1.msra.mxu0 %v4220
      %4296 = vmatprep.subr.mxu0 0.0
      %4297 = vmatpush2.msra.mxu0 0.0
      %4298 = vmatprep.subr.mxu0 0.0
      %4299 = vmatpush2.msra.mxu0 0.0
      %4300 = vmatprep.subr.mxu0 0.0
      %4301 = vmatpush2.msra.mxu0 0.0
      %4302 = vmatprep.subr.mxu0 0.0
      %4303 = vmatpush2.msra.mxu0 0.0
      %4304 = vmatprep.subr.mxu0 0.0
      %4305 = vmatpush2.msra.mxu0 0.0
      %4306 = vmatprep.subr.mxu0 0.0
      %4307 = vmatpush2.msra.mxu0 0.0
      %4308 = vmatprep.subr.mxu0 0.0
      %4309 = vmatpush2.msra.mxu0 0.0
      %4310 = vmatprep.subr.mxu0 0.0
      %4311 = vmatpush2.msra.mxu0 0.0
      %4312 = vmatprep.subr.mxu0 0.0
      %4313 = vmatpush2.msra.mxu0 0.0
      %4314 = vmatprep.subr.mxu0 0.0
      %4315 = vmatpush2.msra.mxu0 0.0
      %4316 = vmatprep.subr.mxu0 0.0
      %4317 = vmatpush2.msra.mxu0 0.0
      %4318 = vmatprep.subr.mxu0 0.0
      %4319 = vmatpush2.msra.mxu0 0.0
      %4320 = vmatprep.subr.mxu0 0.0
      %4321 = vmatpush2.msra.mxu0 0.0
      %4322 = vmatprep.subr.mxu0 0.0
      %4323 = vmatpush2.msra.mxu0 0.0
      %4324 = vmatprep.subr.mxu0 0.0
      %4325 = vmatpush2.msra.mxu0 0.0
      %4326 = vmatprep.subr.mxu0 0.0
      %4327 = vmatpush2.msra.mxu0 0.0
      %4328 = vmatprep.mubr.f32.mxu0 0.0
      %4329 = vmatmul.mubr.f32.gmra.mxu0 %v4235
      %v4330 = vpop.f32.mrf.mxu0
      %v4331 = vadd.f32 0.0, %v4330
      %v4332 = vpop.f32.mrf.mxu0
      %v4333 = vadd.f32 0.0, %v4332
      %4334 = vmatprep.mubr.f32.mxu0 0.0
      %4335 = vmatmul.mubr.f32.gmra.mxu0 %v4238
      %v4336 = vpop.f32.mrf.mxu0
      %v4337 = vadd.f32 0.0, %v4336
      %v4338 = vpop.f32.mrf.mxu0
      %v4339 = vadd.f32 0.0, %v4338
      %4340 = vmatprep.mubr.f32.mxu0 0.0
      %4341 = vmatmul.mubr.f32.gmra.mxu0 %v4241
      %v4342 = vpop.f32.mrf.mxu0
      %v4343 = vadd.f32 0.0, %v4342
      %v4344 = vpop.f32.mrf.mxu0
      %v4345 = vadd.f32 0.0, %v4344
      %4346 = vmatprep.mubr.f32.mxu0 0.0
      %4347 = vmatmul.mubr.f32.gmra.mxu0 %v4244
      %v4348 = vpop.f32.mrf.mxu0
      %v4349 = vadd.f32 0.0, %v4348
      %v4350 = vpop.f32.mrf.mxu0
      %v4351 = vadd.f32 0.0, %v4350
      %4352 = vmatprep.mubr.f32.mxu0 0.0
      %4353 = vmatmul.mubr.f32.gmra.mxu0 %v4247
      %v4354 = vpop.f32.mrf.mxu0
      %v4355 = vadd.f32 0.0, %v4354
      %v4356 = vpop.f32.mrf.mxu0
      %v4357 = vadd.f32 0.0, %v4356
      %4358 = vmatprep.mubr.f32.mxu0 0.0
      %4359 = vmatmul.mubr.f32.gmra.mxu0 %v4250
      %v4360 = vpop.f32.mrf.mxu0
      %v4361 = vadd.f32 0.0, %v4360
      %v4362 = vpop.f32.mrf.mxu0
      %v4363 = vadd.f32 0.0, %v4362
      %4364 = vmatprep.mubr.f32.mxu0 0.0
      %4365 = vmatmul.mubr.f32.gmra.mxu0 %v4253
      %v4366 = vpop.f32.mrf.mxu0
      %v4367 = vadd.f32 0.0, %v4366
      %v4368 = vpop.f32.mrf.mxu0
      %v4369 = vadd.f32 0.0, %v4368
      %4370 = vmatprep.mubr.f32.mxu0 0.0
      %4371 = vmatmul.mubr.f32.gmra.mxu0 %v4256
      %v4372 = vpop.f32.mrf.mxu0
      %v4373 = vadd.f32 0.0, %v4372
      %v4374 = vpop.f32.mrf.mxu0
      %v4375 = vadd.f32 0.0, %v4374
      %4376 = vdwg.mxu0
      %v4377 = vadd.f32 %v4203, %v4331
      %v4378 = vadd.f32 %v4204, %v4333
      %v4379 = vadd.f32 %v4205, %v4337
      %v4380 = vadd.f32 %v4206, %v4339
      %v4381 = vadd.f32 %v4207, %v4343
      %v4382 = vadd.f32 %v4208, %v4345
      %v4383 = vadd.f32 %v4209, %v4349
      %v4384 = vadd.f32 %v4210, %v4351
      %v4385 = vadd.f32 %v4211, %v4355
      %v4386 = vadd.f32 %v4212, %v4357
      %v4387 = vadd.f32 %v4213, %v4361
      %v4388 = vadd.f32 %v4214, %v4363
      %v4389 = vadd.f32 %v4215, %v4367
      %v4390 = vadd.f32 %v4216, %v4369
      %v4391 = vadd.f32 %v4217, %v4373
      %v4392 = vadd.f32 %v4218, %v4375
      %s4393 = scalar_lea.vmem %s1, 1792
      %v4394 = vld [vmem:[%s4393] sm:$0xff]
      %v4395 = vld [vmem:[%s4393 + $0x8] sm:$0xff]
      %v4396 = vld [vmem:[%s4393 + $0x10] sm:$0xff]
      %v4397 = vld [vmem:[%s4393 + $0x18] sm:$0xff]
      %v4398 = vld [vmem:[%s4393 + $0x20] sm:$0xff]
      %v4399 = vld [vmem:[%s4393 + $0x28] sm:$0xff]
      %v4400 = vld [vmem:[%s4393 + $0x30] sm:$0xff]
      %v4401 = vld [vmem:[%s4393 + $0x38] sm:$0xff]
      %v4402 = vld [vmem:[%s4393 + $0x40] sm:$0xff]
      %v4403 = vld [vmem:[%s4393 + $0x48] sm:$0xff]
      %v4404 = vld [vmem:[%s4393 + $0x50] sm:$0xff]
      %v4405 = vld [vmem:[%s4393 + $0x58] sm:$0xff]
      %v4406 = vld [vmem:[%s4393 + $0x60] sm:$0x1]
      %v4407 = vld [vmem:[%s4393 + $0x68] sm:$0x1]
      %v4409 = vsel %vm1622, %v1202, 0
      %v4412 = vsel %vm1622, %v1207, 0
      %v4415 = vsel %vm1622, %v1212, 0
      %v4418 = vsel %vm1622, %v1217, 0
      %v4421 = vsel %vm1622, %v1222, 0
      %v4424 = vsel %vm1622, %v1227, 0
      %v4427 = vsel %vm1622, %v1232, 0
      %v4430 = vsel %vm1622, %v1237, 0
      %v4433 = vsel %vm1647, %v4406, 0
      %v4436 = vsel %vm1647, %v4407, 0
      %4438 = vmatprep.subr.mxu0 0.0
      %4439 = vmatpush1.msra.mxu0 0.0
      %4440 = vmatprep.subr.mxu0 0.0
      %4441 = vmatpush1.msra.mxu0 0.0
      %4442 = vmatprep.subr.mxu0 0.0
      %4443 = vmatpush1.msra.mxu0 0.0
      %4444 = vmatprep.subr.mxu0 0.0
      %4445 = vmatpush1.msra.mxu0 0.0
      %4446 = vmatprep.subr.mxu0 0.0
      %4447 = vmatpush1.msra.mxu0 0.0
      %4448 = vmatprep.subr.mxu0 0.0
      %4449 = vmatpush1.msra.mxu0 0.0
      %4450 = vmatprep.subr.mxu0 0.0
      %4451 = vmatpush1.msra.mxu0 0.0
      %4452 = vmatprep.subr.mxu0 0.0
      %4453 = vmatpush1.msra.mxu0 0.0
      %4454 = vmatprep.subr.mxu0 0.0
      %4455 = vmatpush1.msra.mxu0 0.0
      %4456 = vmatprep.subr.mxu0 %v4436
      %4457 = vmatpush1.msra.mxu0 %v4433
      %4458 = vmatprep.subr.mxu0 %v4405
      %4459 = vmatpush1.msra.mxu0 %v4404
      %4460 = vmatprep.subr.mxu0 %v4403
      %4461 = vmatpush1.msra.mxu0 %v4402
      %4462 = vmatprep.subr.mxu0 %v4401
      %4463 = vmatpush1.msra.mxu0 %v4400
      %4464 = vmatprep.subr.mxu0 %v4399
      %4465 = vmatpush1.msra.mxu0 %v4398
      %4466 = vmatprep.subr.mxu0 %v4397
      %4467 = vmatpush1.msra.mxu0 %v4396
      %4468 = vmatprep.subr.mxu0 %v4395
      %4469 = vmatpush1.msra.mxu0 %v4394
      %4470 = vmatprep.subr.mxu0 0.0
      %4471 = vmatpush2.msra.mxu0 0.0
      %4472 = vmatprep.subr.mxu0 0.0
      %4473 = vmatpush2.msra.mxu0 0.0
      %4474 = vmatprep.subr.mxu0 0.0
      %4475 = vmatpush2.msra.mxu0 0.0
      %4476 = vmatprep.subr.mxu0 0.0
      %4477 = vmatpush2.msra.mxu0 0.0
      %4478 = vmatprep.subr.mxu0 0.0
      %4479 = vmatpush2.msra.mxu0 0.0
      %4480 = vmatprep.subr.mxu0 0.0
      %4481 = vmatpush2.msra.mxu0 0.0
      %4482 = vmatprep.subr.mxu0 0.0
      %4483 = vmatpush2.msra.mxu0 0.0
      %4484 = vmatprep.subr.mxu0 0.0
      %4485 = vmatpush2.msra.mxu0 0.0
      %4486 = vmatprep.subr.mxu0 0.0
      %4487 = vmatpush2.msra.mxu0 0.0
      %4488 = vmatprep.subr.mxu0 0.0
      %4489 = vmatpush2.msra.mxu0 0.0
      %4490 = vmatprep.subr.mxu0 0.0
      %4491 = vmatpush2.msra.mxu0 0.0
      %4492 = vmatprep.subr.mxu0 0.0
      %4493 = vmatpush2.msra.mxu0 0.0
      %4494 = vmatprep.subr.mxu0 0.0
      %4495 = vmatpush2.msra.mxu0 0.0
      %4496 = vmatprep.subr.mxu0 0.0
      %4497 = vmatpush2.msra.mxu0 0.0
      %4498 = vmatprep.subr.mxu0 0.0
      %4499 = vmatpush2.msra.mxu0 0.0
      %4500 = vmatprep.subr.mxu0 0.0
      %4501 = vmatpush2.msra.mxu0 0.0
      %4502 = vmatprep.mubr.f32.mxu0 0.0
      %4503 = vmatmul.mubr.f32.gmra.mxu0 %v4409
      %v4504 = vpop.f32.mrf.mxu0
      %v4505 = vadd.f32 0.0, %v4504
      %v4506 = vpop.f32.mrf.mxu0
      %v4507 = vadd.f32 0.0, %v4506
      %4508 = vmatprep.mubr.f32.mxu0 0.0
      %4509 = vmatmul.mubr.f32.gmra.mxu0 %v4412
      %v4510 = vpop.f32.mrf.mxu0
      %v4511 = vadd.f32 0.0, %v4510
      %v4512 = vpop.f32.mrf.mxu0
      %v4513 = vadd.f32 0.0, %v4512
      %4514 = vmatprep.mubr.f32.mxu0 0.0
      %4515 = vmatmul.mubr.f32.gmra.mxu0 %v4415
      %v4516 = vpop.f32.mrf.mxu0
      %v4517 = vadd.f32 0.0, %v4516
      %v4518 = vpop.f32.mrf.mxu0
      %v4519 = vadd.f32 0.0, %v4518
      %4520 = vmatprep.mubr.f32.mxu0 0.0
      %4521 = vmatmul.mubr.f32.gmra.mxu0 %v4418
      %v4522 = vpop.f32.mrf.mxu0
      %v4523 = vadd.f32 0.0, %v4522
      %v4524 = vpop.f32.mrf.mxu0
      %v4525 = vadd.f32 0.0, %v4524
      %4526 = vmatprep.mubr.f32.mxu0 0.0
      %4527 = vmatmul.mubr.f32.gmra.mxu0 %v4421
      %v4528 = vpop.f32.mrf.mxu0
      %v4529 = vadd.f32 0.0, %v4528
      %v4530 = vpop.f32.mrf.mxu0
      %v4531 = vadd.f32 0.0, %v4530
      %4532 = vmatprep.mubr.f32.mxu0 0.0
      %4533 = vmatmul.mubr.f32.gmra.mxu0 %v4424
      %v4534 = vpop.f32.mrf.mxu0
      %v4535 = vadd.f32 0.0, %v4534
      %v4536 = vpop.f32.mrf.mxu0
      %v4537 = vadd.f32 0.0, %v4536
      %4538 = vmatprep.mubr.f32.mxu0 0.0
      %4539 = vmatmul.mubr.f32.gmra.mxu0 %v4427
      %v4540 = vpop.f32.mrf.mxu0
      %v4541 = vadd.f32 0.0, %v4540
      %v4542 = vpop.f32.mrf.mxu0
      %v4543 = vadd.f32 0.0, %v4542
      %4544 = vmatprep.mubr.f32.mxu0 0.0
      %4545 = vmatmul.mubr.f32.gmra.mxu0 %v4430
      %v4546 = vpop.f32.mrf.mxu0
      %v4547 = vadd.f32 0.0, %v4546
      %v4548 = vpop.f32.mrf.mxu0
      %v4549 = vadd.f32 0.0, %v4548
      %4550 = vdwg.mxu0
      %v4551 = vadd.f32 %v4377, %v4505
      %v4552 = vadd.f32 %v4378, %v4507
      %v4553 = vadd.f32 %v4379, %v4511
      %v4554 = vadd.f32 %v4380, %v4513
      %v4555 = vadd.f32 %v4381, %v4517
      %v4556 = vadd.f32 %v4382, %v4519
      %v4557 = vadd.f32 %v4383, %v4523
      %v4558 = vadd.f32 %v4384, %v4525
      %v4559 = vadd.f32 %v4385, %v4529
      %v4560 = vadd.f32 %v4386, %v4531
      %v4561 = vadd.f32 %v4387, %v4535
      %v4562 = vadd.f32 %v4388, %v4537
      %v4563 = vadd.f32 %v4389, %v4541
      %v4564 = vadd.f32 %v4390, %v4543
      %v4565 = vadd.f32 %v4391, %v4547
      %v4566 = vadd.f32 %v4392, %v4549
      %s4567 = scalar_lea.vmem %s1, 1904
      %v4568 = vld [vmem:[%s4567] sm:$0xff]
      %v4569 = vld [vmem:[%s4567 + $0x8] sm:$0xff]
      %v4570 = vld [vmem:[%s4567 + $0x10] sm:$0xff]
      %v4571 = vld [vmem:[%s4567 + $0x18] sm:$0xff]
      %v4572 = vld [vmem:[%s4567 + $0x20] sm:$0xff]
      %v4573 = vld [vmem:[%s4567 + $0x28] sm:$0xff]
      %v4574 = vld [vmem:[%s4567 + $0x30] sm:$0xff]
      %v4575 = vld [vmem:[%s4567 + $0x38] sm:$0xff]
      %v4576 = vld [vmem:[%s4567 + $0x40] sm:$0xff]
      %v4577 = vld [vmem:[%s4567 + $0x48] sm:$0xff]
      %v4578 = vld [vmem:[%s4567 + $0x50] sm:$0xff]
      %v4579 = vld [vmem:[%s4567 + $0x58] sm:$0xff]
      %v4580 = vld [vmem:[%s4567 + $0x60] sm:$0x1]
      %v4581 = vld [vmem:[%s4567 + $0x68] sm:$0x1]
      %v4583 = vsel %vm1622, %v1242, 0
      %v4586 = vsel %vm1622, %v1247, 0
      %v4589 = vsel %vm1622, %v1252, 0
      %v4592 = vsel %vm1622, %v1257, 0
      %v4595 = vsel %vm1622, %v1262, 0
      %v4598 = vsel %vm1622, %v1267, 0
      %v4601 = vsel %vm1622, %v1272, 0
      %v4604 = vsel %vm1622, %v1277, 0
      %v4607 = vsel %vm1647, %v4580, 0
      %v4610 = vsel %vm1647, %v4581, 0
      %4612 = vmatprep.subr.mxu0 0.0
      %4613 = vmatpush1.msra.mxu0 0.0
      %4614 = vmatprep.subr.mxu0 0.0
      %4615 = vmatpush1.msra.mxu0 0.0
      %4616 = vmatprep.subr.mxu0 0.0
      %4617 = vmatpush1.msra.mxu0 0.0
      %4618 = vmatprep.subr.mxu0 0.0
      %4619 = vmatpush1.msra.mxu0 0.0
      %4620 = vmatprep.subr.mxu0 0.0
      %4621 = vmatpush1.msra.mxu0 0.0
      %4622 = vmatprep.subr.mxu0 0.0
      %4623 = vmatpush1.msra.mxu0 0.0
      %4624 = vmatprep.subr.mxu0 0.0
      %4625 = vmatpush1.msra.mxu0 0.0
      %4626 = vmatprep.subr.mxu0 0.0
      %4627 = vmatpush1.msra.mxu0 0.0
      %4628 = vmatprep.subr.mxu0 0.0
      %4629 = vmatpush1.msra.mxu0 0.0
      %4630 = vmatprep.subr.mxu0 %v4610
      %4631 = vmatpush1.msra.mxu0 %v4607
      %4632 = vmatprep.subr.mxu0 %v4579
      %4633 = vmatpush1.msra.mxu0 %v4578
      %4634 = vmatprep.subr.mxu0 %v4577
      %4635 = vmatpush1.msra.mxu0 %v4576
      %4636 = vmatprep.subr.mxu0 %v4575
      %4637 = vmatpush1.msra.mxu0 %v4574
      %4638 = vmatprep.subr.mxu0 %v4573
      %4639 = vmatpush1.msra.mxu0 %v4572
      %4640 = vmatprep.subr.mxu0 %v4571
      %4641 = vmatpush1.msra.mxu0 %v4570
      %4642 = vmatprep.subr.mxu0 %v4569
      %4643 = vmatpush1.msra.mxu0 %v4568
      %4644 = vmatprep.subr.mxu0 0.0
      %4645 = vmatpush2.msra.mxu0 0.0
      %4646 = vmatprep.subr.mxu0 0.0
      %4647 = vmatpush2.msra.mxu0 0.0
      %4648 = vmatprep.subr.mxu0 0.0
      %4649 = vmatpush2.msra.mxu0 0.0
      %4650 = vmatprep.subr.mxu0 0.0
      %4651 = vmatpush2.msra.mxu0 0.0
      %4652 = vmatprep.subr.mxu0 0.0
      %4653 = vmatpush2.msra.mxu0 0.0
      %4654 = vmatprep.subr.mxu0 0.0
      %4655 = vmatpush2.msra.mxu0 0.0
      %4656 = vmatprep.subr.mxu0 0.0
      %4657 = vmatpush2.msra.mxu0 0.0
      %4658 = vmatprep.subr.mxu0 0.0
      %4659 = vmatpush2.msra.mxu0 0.0
      %4660 = vmatprep.subr.mxu0 0.0
      %4661 = vmatpush2.msra.mxu0 0.0
      %4662 = vmatprep.subr.mxu0 0.0
      %4663 = vmatpush2.msra.mxu0 0.0
      %4664 = vmatprep.subr.mxu0 0.0
      %4665 = vmatpush2.msra.mxu0 0.0
      %4666 = vmatprep.subr.mxu0 0.0
      %4667 = vmatpush2.msra.mxu0 0.0
      %4668 = vmatprep.subr.mxu0 0.0
      %4669 = vmatpush2.msra.mxu0 0.0
      %4670 = vmatprep.subr.mxu0 0.0
      %4671 = vmatpush2.msra.mxu0 0.0
      %4672 = vmatprep.subr.mxu0 0.0
      %4673 = vmatpush2.msra.mxu0 0.0
      %4674 = vmatprep.subr.mxu0 0.0
      %4675 = vmatpush2.msra.mxu0 0.0
      %4676 = vmatprep.mubr.f32.mxu0 0.0
      %4677 = vmatmul.mubr.f32.gmra.mxu0 %v4583
      %v4678 = vpop.f32.mrf.mxu0
      %v4679 = vadd.f32 0.0, %v4678
      %v4680 = vpop.f32.mrf.mxu0
      %v4681 = vadd.f32 0.0, %v4680
      %4682 = vmatprep.mubr.f32.mxu0 0.0
      %4683 = vmatmul.mubr.f32.gmra.mxu0 %v4586
      %v4684 = vpop.f32.mrf.mxu0
      %v4685 = vadd.f32 0.0, %v4684
      %v4686 = vpop.f32.mrf.mxu0
      %v4687 = vadd.f32 0.0, %v4686
      %4688 = vmatprep.mubr.f32.mxu0 0.0
      %4689 = vmatmul.mubr.f32.gmra.mxu0 %v4589
      %v4690 = vpop.f32.mrf.mxu0
      %v4691 = vadd.f32 0.0, %v4690
      %v4692 = vpop.f32.mrf.mxu0
      %v4693 = vadd.f32 0.0, %v4692
      %4694 = vmatprep.mubr.f32.mxu0 0.0
      %4695 = vmatmul.mubr.f32.gmra.mxu0 %v4592
      %v4696 = vpop.f32.mrf.mxu0
      %v4697 = vadd.f32 0.0, %v4696
      %v4698 = vpop.f32.mrf.mxu0
      %v4699 = vadd.f32 0.0, %v4698
      %4700 = vmatprep.mubr.f32.mxu0 0.0
      %4701 = vmatmul.mubr.f32.gmra.mxu0 %v4595
      %v4702 = vpop.f32.mrf.mxu0
      %v4703 = vadd.f32 0.0, %v4702
      %v4704 = vpop.f32.mrf.mxu0
      %v4705 = vadd.f32 0.0, %v4704
      %4706 = vmatprep.mubr.f32.mxu0 0.0
      %4707 = vmatmul.mubr.f32.gmra.mxu0 %v4598
      %v4708 = vpop.f32.mrf.mxu0
      %v4709 = vadd.f32 0.0, %v4708
      %v4710 = vpop.f32.mrf.mxu0
      %v4711 = vadd.f32 0.0, %v4710
      %4712 = vmatprep.mubr.f32.mxu0 0.0
      %4713 = vmatmul.mubr.f32.gmra.mxu0 %v4601
      %v4714 = vpop.f32.mrf.mxu0
      %v4715 = vadd.f32 0.0, %v4714
      %v4716 = vpop.f32.mrf.mxu0
      %v4717 = vadd.f32 0.0, %v4716
      %4718 = vmatprep.mubr.f32.mxu0 0.0
      %4719 = vmatmul.mubr.f32.gmra.mxu0 %v4604
      %v4720 = vpop.f32.mrf.mxu0
      %v4721 = vadd.f32 0.0, %v4720
      %v4722 = vpop.f32.mrf.mxu0
      %v4723 = vadd.f32 0.0, %v4722
      %4724 = vdwg.mxu0
      %v4725 = vadd.f32 %v4551, %v4679
      %v4726 = vadd.f32 %v4552, %v4681
      %v4727 = vadd.f32 %v4553, %v4685
      %v4728 = vadd.f32 %v4554, %v4687
      %v4729 = vadd.f32 %v4555, %v4691
      %v4730 = vadd.f32 %v4556, %v4693
      %v4731 = vadd.f32 %v4557, %v4697
      %v4732 = vadd.f32 %v4558, %v4699
      %v4733 = vadd.f32 %v4559, %v4703
      %v4734 = vadd.f32 %v4560, %v4705
      %v4735 = vadd.f32 %v4561, %v4709
      %v4736 = vadd.f32 %v4562, %v4711
      %v4737 = vadd.f32 %v4563, %v4715
      %v4738 = vadd.f32 %v4564, %v4717
      %v4739 = vadd.f32 %v4565, %v4721
      %v4740 = vadd.f32 %v4566, %v4723
      %s4741 = scalar_lea.vmem %s1, 2016
      %v4742 = vld [vmem:[%s4741] sm:$0xff]
      %v4743 = vld [vmem:[%s4741 + $0x8] sm:$0xff]
      %v4744 = vld [vmem:[%s4741 + $0x10] sm:$0xff]
      %v4745 = vld [vmem:[%s4741 + $0x18] sm:$0xff]
      %v4746 = vld [vmem:[%s4741 + $0x20] sm:$0xff]
      %v4747 = vld [vmem:[%s4741 + $0x28] sm:$0xff]
      %v4748 = vld [vmem:[%s4741 + $0x30] sm:$0xff]
      %v4749 = vld [vmem:[%s4741 + $0x38] sm:$0xff]
      %v4750 = vld [vmem:[%s4741 + $0x40] sm:$0xff]
      %v4751 = vld [vmem:[%s4741 + $0x48] sm:$0xff]
      %v4752 = vld [vmem:[%s4741 + $0x50] sm:$0xff]
      %v4753 = vld [vmem:[%s4741 + $0x58] sm:$0xff]
      %v4754 = vld [vmem:[%s4741 + $0x60] sm:$0x1]
      %v4755 = vld [vmem:[%s4741 + $0x68] sm:$0x1]
      %v4757 = vsel %vm1622, %v1282, 0
      %v4760 = vsel %vm1622, %v1287, 0
      %v4763 = vsel %vm1622, %v1292, 0
      %v4766 = vsel %vm1622, %v1297, 0
      %v4769 = vsel %vm1622, %v1302, 0
      %v4772 = vsel %vm1622, %v1307, 0
      %v4775 = vsel %vm1622, %v1312, 0
      %v4778 = vsel %vm1622, %v1317, 0
      %v4781 = vsel %vm1647, %v4754, 0
      %v4784 = vsel %vm1647, %v4755, 0
      %4786 = vmatprep.subr.mxu0 0.0
      %4787 = vmatpush1.msra.mxu0 0.0
      %4788 = vmatprep.subr.mxu0 0.0
      %4789 = vmatpush1.msra.mxu0 0.0
      %4790 = vmatprep.subr.mxu0 0.0
      %4791 = vmatpush1.msra.mxu0 0.0
      %4792 = vmatprep.subr.mxu0 0.0
      %4793 = vmatpush1.msra.mxu0 0.0
      %4794 = vmatprep.subr.mxu0 0.0
      %4795 = vmatpush1.msra.mxu0 0.0
      %4796 = vmatprep.subr.mxu0 0.0
      %4797 = vmatpush1.msra.mxu0 0.0
      %4798 = vmatprep.subr.mxu0 0.0
      %4799 = vmatpush1.msra.mxu0 0.0
      %4800 = vmatprep.subr.mxu0 0.0
      %4801 = vmatpush1.msra.mxu0 0.0
      %4802 = vmatprep.subr.mxu0 0.0
      %4803 = vmatpush1.msra.mxu0 0.0
      %4804 = vmatprep.subr.mxu0 %v4784
      %4805 = vmatpush1.msra.mxu0 %v4781
      %4806 = vmatprep.subr.mxu0 %v4753
      %4807 = vmatpush1.msra.mxu0 %v4752
      %4808 = vmatprep.subr.mxu0 %v4751
      %4809 = vmatpush1.msra.mxu0 %v4750
      %4810 = vmatprep.subr.mxu0 %v4749
      %4811 = vmatpush1.msra.mxu0 %v4748
      %4812 = vmatprep.subr.mxu0 %v4747
      %4813 = vmatpush1.msra.mxu0 %v4746
      %4814 = vmatprep.subr.mxu0 %v4745
      %4815 = vmatpush1.msra.mxu0 %v4744
      %4816 = vmatprep.subr.mxu0 %v4743
      %4817 = vmatpush1.msra.mxu0 %v4742
      %4818 = vmatprep.subr.mxu0 0.0
      %4819 = vmatpush2.msra.mxu0 0.0
      %4820 = vmatprep.subr.mxu0 0.0
      %4821 = vmatpush2.msra.mxu0 0.0
      %4822 = vmatprep.subr.mxu0 0.0
      %4823 = vmatpush2.msra.mxu0 0.0
      %4824 = vmatprep.subr.mxu0 0.0
      %4825 = vmatpush2.msra.mxu0 0.0
      %4826 = vmatprep.subr.mxu0 0.0
      %4827 = vmatpush2.msra.mxu0 0.0
      %4828 = vmatprep.subr.mxu0 0.0
      %4829 = vmatpush2.msra.mxu0 0.0
      %4830 = vmatprep.subr.mxu0 0.0
      %4831 = vmatpush2.msra.mxu0 0.0
      %4832 = vmatprep.subr.mxu0 0.0
      %4833 = vmatpush2.msra.mxu0 0.0
      %4834 = vmatprep.subr.mxu0 0.0
      %4835 = vmatpush2.msra.mxu0 0.0
      %4836 = vmatprep.subr.mxu0 0.0
      %4837 = vmatpush2.msra.mxu0 0.0
      %4838 = vmatprep.subr.mxu0 0.0
      %4839 = vmatpush2.msra.mxu0 0.0
      %4840 = vmatprep.subr.mxu0 0.0
      %4841 = vmatpush2.msra.mxu0 0.0
      %4842 = vmatprep.subr.mxu0 0.0
      %4843 = vmatpush2.msra.mxu0 0.0
      %4844 = vmatprep.subr.mxu0 0.0
      %4845 = vmatpush2.msra.mxu0 0.0
      %4846 = vmatprep.subr.mxu0 0.0
      %4847 = vmatpush2.msra.mxu0 0.0
      %4848 = vmatprep.subr.mxu0 0.0
      %4849 = vmatpush2.msra.mxu0 0.0
      %4850 = vmatprep.mubr.f32.mxu0 0.0
      %4851 = vmatmul.mubr.f32.gmra.mxu0 %v4757
      %v4852 = vpop.f32.mrf.mxu0
      %v4853 = vadd.f32 0.0, %v4852
      %v4854 = vpop.f32.mrf.mxu0
      %v4855 = vadd.f32 0.0, %v4854
      %4856 = vmatprep.mubr.f32.mxu0 0.0
      %4857 = vmatmul.mubr.f32.gmra.mxu0 %v4760
      %v4858 = vpop.f32.mrf.mxu0
      %v4859 = vadd.f32 0.0, %v4858
      %v4860 = vpop.f32.mrf.mxu0
      %v4861 = vadd.f32 0.0, %v4860
      %4862 = vmatprep.mubr.f32.mxu0 0.0
      %4863 = vmatmul.mubr.f32.gmra.mxu0 %v4763
      %v4864 = vpop.f32.mrf.mxu0
      %v4865 = vadd.f32 0.0, %v4864
      %v4866 = vpop.f32.mrf.mxu0
      %v4867 = vadd.f32 0.0, %v4866
      %4868 = vmatprep.mubr.f32.mxu0 0.0
      %4869 = vmatmul.mubr.f32.gmra.mxu0 %v4766
      %v4870 = vpop.f32.mrf.mxu0
      %v4871 = vadd.f32 0.0, %v4870
      %v4872 = vpop.f32.mrf.mxu0
      %v4873 = vadd.f32 0.0, %v4872
      %4874 = vmatprep.mubr.f32.mxu0 0.0
      %4875 = vmatmul.mubr.f32.gmra.mxu0 %v4769
      %v4876 = vpop.f32.mrf.mxu0
      %v4877 = vadd.f32 0.0, %v4876
      %v4878 = vpop.f32.mrf.mxu0
      %v4879 = vadd.f32 0.0, %v4878
      %4880 = vmatprep.mubr.f32.mxu0 0.0
      %4881 = vmatmul.mubr.f32.gmra.mxu0 %v4772
      %v4882 = vpop.f32.mrf.mxu0
      %v4883 = vadd.f32 0.0, %v4882
      %v4884 = vpop.f32.mrf.mxu0
      %v4885 = vadd.f32 0.0, %v4884
      %4886 = vmatprep.mubr.f32.mxu0 0.0
      %4887 = vmatmul.mubr.f32.gmra.mxu0 %v4775
      %v4888 = vpop.f32.mrf.mxu0
      %v4889 = vadd.f32 0.0, %v4888
      %v4890 = vpop.f32.mrf.mxu0
      %v4891 = vadd.f32 0.0, %v4890
      %4892 = vmatprep.mubr.f32.mxu0 0.0
      %4893 = vmatmul.mubr.f32.gmra.mxu0 %v4778
      %v4894 = vpop.f32.mrf.mxu0
      %v4895 = vadd.f32 0.0, %v4894
      %v4896 = vpop.f32.mrf.mxu0
      %v4897 = vadd.f32 0.0, %v4896
      %4898 = vdwg.mxu0
      %v4899 = vadd.f32 %v4725, %v4853
      %v4900 = vadd.f32 %v4726, %v4855
      %v4901 = vadd.f32 %v4727, %v4859
      %v4902 = vadd.f32 %v4728, %v4861
      %v4903 = vadd.f32 %v4729, %v4865
      %v4904 = vadd.f32 %v4730, %v4867
      %v4905 = vadd.f32 %v4731, %v4871
      %v4906 = vadd.f32 %v4732, %v4873
      %v4907 = vadd.f32 %v4733, %v4877
      %v4908 = vadd.f32 %v4734, %v4879
      %v4909 = vadd.f32 %v4735, %v4883
      %v4910 = vadd.f32 %v4736, %v4885
      %v4911 = vadd.f32 %v4737, %v4889
      %v4912 = vadd.f32 %v4738, %v4891
      %v4913 = vadd.f32 %v4739, %v4895
      %v4914 = vadd.f32 %v4740, %v4897
      %s4915 = scalar_lea.vmem %s1, 2128
      %v4916 = vld [vmem:[%s4915] sm:$0xff]
      %v4917 = vld [vmem:[%s4915 + $0x8] sm:$0xff]
      %v4918 = vld [vmem:[%s4915 + $0x10] sm:$0xff]
      %v4919 = vld [vmem:[%s4915 + $0x18] sm:$0xff]
      %v4920 = vld [vmem:[%s4915 + $0x20] sm:$0xff]
      %v4921 = vld [vmem:[%s4915 + $0x28] sm:$0xff]
      %v4922 = vld [vmem:[%s4915 + $0x30] sm:$0xff]
      %v4923 = vld [vmem:[%s4915 + $0x38] sm:$0xff]
      %v4924 = vld [vmem:[%s4915 + $0x40] sm:$0xff]
      %v4925 = vld [vmem:[%s4915 + $0x48] sm:$0xff]
      %v4926 = vld [vmem:[%s4915 + $0x50] sm:$0xff]
      %v4927 = vld [vmem:[%s4915 + $0x58] sm:$0xff]
      %v4928 = vld [vmem:[%s4915 + $0x60] sm:$0x1]
      %v4929 = vld [vmem:[%s4915 + $0x68] sm:$0x1]
      %v4931 = vsel %vm1622, %v1322, 0
      %v4934 = vsel %vm1622, %v1327, 0
      %v4937 = vsel %vm1622, %v1332, 0
      %v4940 = vsel %vm1622, %v1337, 0
      %v4943 = vsel %vm1622, %v1342, 0
      %v4946 = vsel %vm1622, %v1347, 0
      %v4949 = vsel %vm1622, %v1352, 0
      %v4952 = vsel %vm1622, %v1357, 0
      %v4955 = vsel %vm1647, %v4928, 0
      %v4958 = vsel %vm1647, %v4929, 0
      %4960 = vmatprep.subr.mxu0 0.0
      %4961 = vmatpush1.msra.mxu0 0.0
      %4962 = vmatprep.subr.mxu0 0.0
      %4963 = vmatpush1.msra.mxu0 0.0
      %4964 = vmatprep.subr.mxu0 0.0
      %4965 = vmatpush1.msra.mxu0 0.0
      %4966 = vmatprep.subr.mxu0 0.0
      %4967 = vmatpush1.msra.mxu0 0.0
      %4968 = vmatprep.subr.mxu0 0.0
      %4969 = vmatpush1.msra.mxu0 0.0
      %4970 = vmatprep.subr.mxu0 0.0
      %4971 = vmatpush1.msra.mxu0 0.0
      %4972 = vmatprep.subr.mxu0 0.0
      %4973 = vmatpush1.msra.mxu0 0.0
      %4974 = vmatprep.subr.mxu0 0.0
      %4975 = vmatpush1.msra.mxu0 0.0
      %4976 = vmatprep.subr.mxu0 0.0
      %4977 = vmatpush1.msra.mxu0 0.0
      %4978 = vmatprep.subr.mxu0 %v4958
      %4979 = vmatpush1.msra.mxu0 %v4955
      %4980 = vmatprep.subr.mxu0 %v4927
      %4981 = vmatpush1.msra.mxu0 %v4926
      %4982 = vmatprep.subr.mxu0 %v4925
      %4983 = vmatpush1.msra.mxu0 %v4924
      %4984 = vmatprep.subr.mxu0 %v4923
      %4985 = vmatpush1.msra.mxu0 %v4922
      %4986 = vmatprep.subr.mxu0 %v4921
      %4987 = vmatpush1.msra.mxu0 %v4920
      %4988 = vmatprep.subr.mxu0 %v4919
      %4989 = vmatpush1.msra.mxu0 %v4918
      %4990 = vmatprep.subr.mxu0 %v4917
      %4991 = vmatpush1.msra.mxu0 %v4916
      %4992 = vmatprep.subr.mxu0 0.0
      %4993 = vmatpush2.msra.mxu0 0.0
      %4994 = vmatprep.subr.mxu0 0.0
      %4995 = vmatpush2.msra.mxu0 0.0
      %4996 = vmatprep.subr.mxu0 0.0
      %4997 = vmatpush2.msra.mxu0 0.0
      %4998 = vmatprep.subr.mxu0 0.0
      %4999 = vmatpush2.msra.mxu0 0.0
      %5000 = vmatprep.subr.mxu0 0.0
      %5001 = vmatpush2.msra.mxu0 0.0
      %5002 = vmatprep.subr.mxu0 0.0
      %5003 = vmatpush2.msra.mxu0 0.0
      %5004 = vmatprep.subr.mxu0 0.0
      %5005 = vmatpush2.msra.mxu0 0.0
      %5006 = vmatprep.subr.mxu0 0.0
      %5007 = vmatpush2.msra.mxu0 0.0
      %5008 = vmatprep.subr.mxu0 0.0
      %5009 = vmatpush2.msra.mxu0 0.0
      %5010 = vmatprep.subr.mxu0 0.0
      %5011 = vmatpush2.msra.mxu0 0.0
      %5012 = vmatprep.subr.mxu0 0.0
      %5013 = vmatpush2.msra.mxu0 0.0
      %5014 = vmatprep.subr.mxu0 0.0
      %5015 = vmatpush2.msra.mxu0 0.0
      %5016 = vmatprep.subr.mxu0 0.0
      %5017 = vmatpush2.msra.mxu0 0.0
      %5018 = vmatprep.subr.mxu0 0.0
      %5019 = vmatpush2.msra.mxu0 0.0
      %5020 = vmatprep.subr.mxu0 0.0
      %5021 = vmatpush2.msra.mxu0 0.0
      %5022 = vmatprep.subr.mxu0 0.0
      %5023 = vmatpush2.msra.mxu0 0.0
      %5024 = vmatprep.mubr.f32.mxu0 0.0
      %5025 = vmatmul.mubr.f32.gmra.mxu0 %v4931
      %v5026 = vpop.f32.mrf.mxu0
      %v5027 = vadd.f32 0.0, %v5026
      %v5028 = vpop.f32.mrf.mxu0
      %v5029 = vadd.f32 0.0, %v5028
      %5030 = vmatprep.mubr.f32.mxu0 0.0
      %5031 = vmatmul.mubr.f32.gmra.mxu0 %v4934
      %v5032 = vpop.f32.mrf.mxu0
      %v5033 = vadd.f32 0.0, %v5032
      %v5034 = vpop.f32.mrf.mxu0
      %v5035 = vadd.f32 0.0, %v5034
      %5036 = vmatprep.mubr.f32.mxu0 0.0
      %5037 = vmatmul.mubr.f32.gmra.mxu0 %v4937
      %v5038 = vpop.f32.mrf.mxu0
      %v5039 = vadd.f32 0.0, %v5038
      %v5040 = vpop.f32.mrf.mxu0
      %v5041 = vadd.f32 0.0, %v5040
      %5042 = vmatprep.mubr.f32.mxu0 0.0
      %5043 = vmatmul.mubr.f32.gmra.mxu0 %v4940
      %v5044 = vpop.f32.mrf.mxu0
      %v5045 = vadd.f32 0.0, %v5044
      %v5046 = vpop.f32.mrf.mxu0
      %v5047 = vadd.f32 0.0, %v5046
      %5048 = vmatprep.mubr.f32.mxu0 0.0
      %5049 = vmatmul.mubr.f32.gmra.mxu0 %v4943
      %v5050 = vpop.f32.mrf.mxu0
      %v5051 = vadd.f32 0.0, %v5050
      %v5052 = vpop.f32.mrf.mxu0
      %v5053 = vadd.f32 0.0, %v5052
      %5054 = vmatprep.mubr.f32.mxu0 0.0
      %5055 = vmatmul.mubr.f32.gmra.mxu0 %v4946
      %v5056 = vpop.f32.mrf.mxu0
      %v5057 = vadd.f32 0.0, %v5056
      %v5058 = vpop.f32.mrf.mxu0
      %v5059 = vadd.f32 0.0, %v5058
      %5060 = vmatprep.mubr.f32.mxu0 0.0
      %5061 = vmatmul.mubr.f32.gmra.mxu0 %v4949
      %v5062 = vpop.f32.mrf.mxu0
      %v5063 = vadd.f32 0.0, %v5062
      %v5064 = vpop.f32.mrf.mxu0
      %v5065 = vadd.f32 0.0, %v5064
      %5066 = vmatprep.mubr.f32.mxu0 0.0
      %5067 = vmatmul.mubr.f32.gmra.mxu0 %v4952
      %v5068 = vpop.f32.mrf.mxu0
      %v5069 = vadd.f32 0.0, %v5068
      %v5070 = vpop.f32.mrf.mxu0
      %v5071 = vadd.f32 0.0, %v5070
      %5072 = vdwg.mxu0
      %v5073 = vadd.f32 %v4899, %v5027
      %v5074 = vadd.f32 %v4900, %v5029
      %v5075 = vadd.f32 %v4901, %v5033
      %v5076 = vadd.f32 %v4902, %v5035
      %v5077 = vadd.f32 %v4903, %v5039
      %v5078 = vadd.f32 %v4904, %v5041
      %v5079 = vadd.f32 %v4905, %v5045
      %v5080 = vadd.f32 %v4906, %v5047
      %v5081 = vadd.f32 %v4907, %v5051
      %v5082 = vadd.f32 %v4908, %v5053
      %v5083 = vadd.f32 %v4909, %v5057
      %v5084 = vadd.f32 %v4910, %v5059
      %v5085 = vadd.f32 %v4911, %v5063
      %v5086 = vadd.f32 %v4912, %v5065
      %v5087 = vadd.f32 %v4913, %v5069
      %v5088 = vadd.f32 %v4914, %v5071
      %s5089 = scalar_lea.vmem %s1, 2240
      %v5090 = vld [vmem:[%s5089] sm:$0xff]
      %v5091 = vld [vmem:[%s5089 + $0x8] sm:$0xff]
      %v5092 = vld [vmem:[%s5089 + $0x10] sm:$0xff]
      %v5093 = vld [vmem:[%s5089 + $0x18] sm:$0xff]
      %v5094 = vld [vmem:[%s5089 + $0x20] sm:$0xff]
      %v5095 = vld [vmem:[%s5089 + $0x28] sm:$0xff]
      %v5096 = vld [vmem:[%s5089 + $0x30] sm:$0xff]
      %v5097 = vld [vmem:[%s5089 + $0x38] sm:$0xff]
      %v5098 = vld [vmem:[%s5089 + $0x40] sm:$0xff]
      %v5099 = vld [vmem:[%s5089 + $0x48] sm:$0xff]
      %v5100 = vld [vmem:[%s5089 + $0x50] sm:$0xff]
      %v5101 = vld [vmem:[%s5089 + $0x58] sm:$0xff]
      %v5102 = vld [vmem:[%s5089 + $0x60] sm:$0x1]
      %v5103 = vld [vmem:[%s5089 + $0x68] sm:$0x1]
      %v5105 = vsel %vm1622, %v1362, 0
      %v5108 = vsel %vm1622, %v1367, 0
      %v5111 = vsel %vm1622, %v1372, 0
      %v5114 = vsel %vm1622, %v1377, 0
      %v5117 = vsel %vm1622, %v1382, 0
      %v5120 = vsel %vm1622, %v1387, 0
      %v5123 = vsel %vm1622, %v1392, 0
      %v5126 = vsel %vm1622, %v1397, 0
      %v5129 = vsel %vm1647, %v5102, 0
      %v5132 = vsel %vm1647, %v5103, 0
      %5134 = vmatprep.subr.mxu0 0.0
      %5135 = vmatpush1.msra.mxu0 0.0
      %5136 = vmatprep.subr.mxu0 0.0
      %5137 = vmatpush1.msra.mxu0 0.0
      %5138 = vmatprep.subr.mxu0 0.0
      %5139 = vmatpush1.msra.mxu0 0.0
      %5140 = vmatprep.subr.mxu0 0.0
      %5141 = vmatpush1.msra.mxu0 0.0
      %5142 = vmatprep.subr.mxu0 0.0
      %5143 = vmatpush1.msra.mxu0 0.0
      %5144 = vmatprep.subr.mxu0 0.0
      %5145 = vmatpush1.msra.mxu0 0.0
      %5146 = vmatprep.subr.mxu0 0.0
      %5147 = vmatpush1.msra.mxu0 0.0
      %5148 = vmatprep.subr.mxu0 0.0
      %5149 = vmatpush1.msra.mxu0 0.0
      %5150 = vmatprep.subr.mxu0 0.0
      %5151 = vmatpush1.msra.mxu0 0.0
      %5152 = vmatprep.subr.mxu0 %v5132
      %5153 = vmatpush1.msra.mxu0 %v5129
      %5154 = vmatprep.subr.mxu0 %v5101
      %5155 = vmatpush1.msra.mxu0 %v5100
      %5156 = vmatprep.subr.mxu0 %v5099
      %5157 = vmatpush1.msra.mxu0 %v5098
      %5158 = vmatprep.subr.mxu0 %v5097
      %5159 = vmatpush1.msra.mxu0 %v5096
      %5160 = vmatprep.subr.mxu0 %v5095
      %5161 = vmatpush1.msra.mxu0 %v5094
      %5162 = vmatprep.subr.mxu0 %v5093
      %5163 = vmatpush1.msra.mxu0 %v5092
      %5164 = vmatprep.subr.mxu0 %v5091
      %5165 = vmatpush1.msra.mxu0 %v5090
      %5166 = vmatprep.subr.mxu0 0.0
      %5167 = vmatpush2.msra.mxu0 0.0
      %5168 = vmatprep.subr.mxu0 0.0
      %5169 = vmatpush2.msra.mxu0 0.0
      %5170 = vmatprep.subr.mxu0 0.0
      %5171 = vmatpush2.msra.mxu0 0.0
      %5172 = vmatprep.subr.mxu0 0.0
      %5173 = vmatpush2.msra.mxu0 0.0
      %5174 = vmatprep.subr.mxu0 0.0
      %5175 = vmatpush2.msra.mxu0 0.0
      %5176 = vmatprep.subr.mxu0 0.0
      %5177 = vmatpush2.msra.mxu0 0.0
      %5178 = vmatprep.subr.mxu0 0.0
      %5179 = vmatpush2.msra.mxu0 0.0
      %5180 = vmatprep.subr.mxu0 0.0
      %5181 = vmatpush2.msra.mxu0 0.0
      %5182 = vmatprep.subr.mxu0 0.0
      %5183 = vmatpush2.msra.mxu0 0.0
      %5184 = vmatprep.subr.mxu0 0.0
      %5185 = vmatpush2.msra.mxu0 0.0
      %5186 = vmatprep.subr.mxu0 0.0
      %5187 = vmatpush2.msra.mxu0 0.0
      %5188 = vmatprep.subr.mxu0 0.0
      %5189 = vmatpush2.msra.mxu0 0.0
      %5190 = vmatprep.subr.mxu0 0.0
      %5191 = vmatpush2.msra.mxu0 0.0
      %5192 = vmatprep.subr.mxu0 0.0
      %5193 = vmatpush2.msra.mxu0 0.0
      %5194 = vmatprep.subr.mxu0 0.0
      %5195 = vmatpush2.msra.mxu0 0.0
      %5196 = vmatprep.subr.mxu0 0.0
      %5197 = vmatpush2.msra.mxu0 0.0
      %5198 = vmatprep.mubr.f32.mxu0 0.0
      %5199 = vmatmul.mubr.f32.gmra.mxu0 %v5105
      %v5200 = vpop.f32.mrf.mxu0
      %v5201 = vadd.f32 0.0, %v5200
      %v5202 = vpop.f32.mrf.mxu0
      %v5203 = vadd.f32 0.0, %v5202
      %5204 = vmatprep.mubr.f32.mxu0 0.0
      %5205 = vmatmul.mubr.f32.gmra.mxu0 %v5108
      %v5206 = vpop.f32.mrf.mxu0
      %v5207 = vadd.f32 0.0, %v5206
      %v5208 = vpop.f32.mrf.mxu0
      %v5209 = vadd.f32 0.0, %v5208
      %5210 = vmatprep.mubr.f32.mxu0 0.0
      %5211 = vmatmul.mubr.f32.gmra.mxu0 %v5111
      %v5212 = vpop.f32.mrf.mxu0
      %v5213 = vadd.f32 0.0, %v5212
      %v5214 = vpop.f32.mrf.mxu0
      %v5215 = vadd.f32 0.0, %v5214
      %5216 = vmatprep.mubr.f32.mxu0 0.0
      %5217 = vmatmul.mubr.f32.gmra.mxu0 %v5114
      %v5218 = vpop.f32.mrf.mxu0
      %v5219 = vadd.f32 0.0, %v5218
      %v5220 = vpop.f32.mrf.mxu0
      %v5221 = vadd.f32 0.0, %v5220
      %5222 = vmatprep.mubr.f32.mxu0 0.0
      %5223 = vmatmul.mubr.f32.gmra.mxu0 %v5117
      %v5224 = vpop.f32.mrf.mxu0
      %v5225 = vadd.f32 0.0, %v5224
      %v5226 = vpop.f32.mrf.mxu0
      %v5227 = vadd.f32 0.0, %v5226
      %5228 = vmatprep.mubr.f32.mxu0 0.0
      %5229 = vmatmul.mubr.f32.gmra.mxu0 %v5120
      %v5230 = vpop.f32.mrf.mxu0
      %v5231 = vadd.f32 0.0, %v5230
      %v5232 = vpop.f32.mrf.mxu0
      %v5233 = vadd.f32 0.0, %v5232
      %5234 = vmatprep.mubr.f32.mxu0 0.0
      %5235 = vmatmul.mubr.f32.gmra.mxu0 %v5123
      %v5236 = vpop.f32.mrf.mxu0
      %v5237 = vadd.f32 0.0, %v5236
      %v5238 = vpop.f32.mrf.mxu0
      %v5239 = vadd.f32 0.0, %v5238
      %5240 = vmatprep.mubr.f32.mxu0 0.0
      %5241 = vmatmul.mubr.f32.gmra.mxu0 %v5126
      %v5242 = vpop.f32.mrf.mxu0
      %v5243 = vadd.f32 0.0, %v5242
      %v5244 = vpop.f32.mrf.mxu0
      %v5245 = vadd.f32 0.0, %v5244
      %5246 = vdwg.mxu0
      %v5247 = vadd.f32 %v5073, %v5201
      %v5248 = vadd.f32 %v5074, %v5203
      %v5249 = vadd.f32 %v5075, %v5207
      %v5250 = vadd.f32 %v5076, %v5209
      %v5251 = vadd.f32 %v5077, %v5213
      %v5252 = vadd.f32 %v5078, %v5215
      %v5253 = vadd.f32 %v5079, %v5219
      %v5254 = vadd.f32 %v5080, %v5221
      %v5255 = vadd.f32 %v5081, %v5225
      %v5256 = vadd.f32 %v5082, %v5227
      %v5257 = vadd.f32 %v5083, %v5231
      %v5258 = vadd.f32 %v5084, %v5233
      %v5259 = vadd.f32 %v5085, %v5237
      %v5260 = vadd.f32 %v5086, %v5239
      %v5261 = vadd.f32 %v5087, %v5243
      %v5262 = vadd.f32 %v5088, %v5245
      %s5263 = scalar_lea.vmem %s1, 2352
      %v5264 = vld [vmem:[%s5263] sm:$0xff]
      %v5265 = vld [vmem:[%s5263 + $0x8] sm:$0xff]
      %v5266 = vld [vmem:[%s5263 + $0x10] sm:$0xff]
      %v5267 = vld [vmem:[%s5263 + $0x18] sm:$0xff]
      %v5268 = vld [vmem:[%s5263 + $0x20] sm:$0xff]
      %v5269 = vld [vmem:[%s5263 + $0x28] sm:$0xff]
      %v5270 = vld [vmem:[%s5263 + $0x30] sm:$0xff]
      %v5271 = vld [vmem:[%s5263 + $0x38] sm:$0xff]
      %v5272 = vld [vmem:[%s5263 + $0x40] sm:$0xff]
      %v5273 = vld [vmem:[%s5263 + $0x48] sm:$0xff]
      %v5274 = vld [vmem:[%s5263 + $0x50] sm:$0xff]
      %v5275 = vld [vmem:[%s5263 + $0x58] sm:$0xff]
      %v5276 = vld [vmem:[%s5263 + $0x60] sm:$0x1]
      %v5277 = vld [vmem:[%s5263 + $0x68] sm:$0x1]
      %v5279 = vsel %vm1622, %v1402, 0
      %v5282 = vsel %vm1622, %v1407, 0
      %v5285 = vsel %vm1622, %v1412, 0
      %v5288 = vsel %vm1622, %v1417, 0
      %v5291 = vsel %vm1622, %v1422, 0
      %v5294 = vsel %vm1622, %v1427, 0
      %v5297 = vsel %vm1622, %v1432, 0
      %v5300 = vsel %vm1622, %v1437, 0
      %v5303 = vsel %vm1647, %v5276, 0
      %v5306 = vsel %vm1647, %v5277, 0
      %5308 = vmatprep.subr.mxu0 0.0
      %5309 = vmatpush1.msra.mxu0 0.0
      %5310 = vmatprep.subr.mxu0 0.0
      %5311 = vmatpush1.msra.mxu0 0.0
      %5312 = vmatprep.subr.mxu0 0.0
      %5313 = vmatpush1.msra.mxu0 0.0
      %5314 = vmatprep.subr.mxu0 0.0
      %5315 = vmatpush1.msra.mxu0 0.0
      %5316 = vmatprep.subr.mxu0 0.0
      %5317 = vmatpush1.msra.mxu0 0.0
      %5318 = vmatprep.subr.mxu0 0.0
      %5319 = vmatpush1.msra.mxu0 0.0
      %5320 = vmatprep.subr.mxu0 0.0
      %5321 = vmatpush1.msra.mxu0 0.0
      %5322 = vmatprep.subr.mxu0 0.0
      %5323 = vmatpush1.msra.mxu0 0.0
      %5324 = vmatprep.subr.mxu0 0.0
      %5325 = vmatpush1.msra.mxu0 0.0
      %5326 = vmatprep.subr.mxu0 %v5306
      %5327 = vmatpush1.msra.mxu0 %v5303
      %5328 = vmatprep.subr.mxu0 %v5275
      %5329 = vmatpush1.msra.mxu0 %v5274
      %5330 = vmatprep.subr.mxu0 %v5273
      %5331 = vmatpush1.msra.mxu0 %v5272
      %5332 = vmatprep.subr.mxu0 %v5271
      %5333 = vmatpush1.msra.mxu0 %v5270
      %5334 = vmatprep.subr.mxu0 %v5269
      %5335 = vmatpush1.msra.mxu0 %v5268
      %5336 = vmatprep.subr.mxu0 %v5267
      %5337 = vmatpush1.msra.mxu0 %v5266
      %5338 = vmatprep.subr.mxu0 %v5265
      %5339 = vmatpush1.msra.mxu0 %v5264
      %5340 = vmatprep.subr.mxu0 0.0
      %5341 = vmatpush2.msra.mxu0 0.0
      %5342 = vmatprep.subr.mxu0 0.0
      %5343 = vmatpush2.msra.mxu0 0.0
      %5344 = vmatprep.subr.mxu0 0.0
      %5345 = vmatpush2.msra.mxu0 0.0
      %5346 = vmatprep.subr.mxu0 0.0
      %5347 = vmatpush2.msra.mxu0 0.0
      %5348 = vmatprep.subr.mxu0 0.0
      %5349 = vmatpush2.msra.mxu0 0.0
      %5350 = vmatprep.subr.mxu0 0.0
      %5351 = vmatpush2.msra.mxu0 0.0
      %5352 = vmatprep.subr.mxu0 0.0
      %5353 = vmatpush2.msra.mxu0 0.0
      %5354 = vmatprep.subr.mxu0 0.0
      %5355 = vmatpush2.msra.mxu0 0.0
      %5356 = vmatprep.subr.mxu0 0.0
      %5357 = vmatpush2.msra.mxu0 0.0
      %5358 = vmatprep.subr.mxu0 0.0
      %5359 = vmatpush2.msra.mxu0 0.0
      %5360 = vmatprep.subr.mxu0 0.0
      %5361 = vmatpush2.msra.mxu0 0.0
      %5362 = vmatprep.subr.mxu0 0.0
      %5363 = vmatpush2.msra.mxu0 0.0
      %5364 = vmatprep.subr.mxu0 0.0
      %5365 = vmatpush2.msra.mxu0 0.0
      %5366 = vmatprep.subr.mxu0 0.0
      %5367 = vmatpush2.msra.mxu0 0.0
      %5368 = vmatprep.subr.mxu0 0.0
      %5369 = vmatpush2.msra.mxu0 0.0
      %5370 = vmatprep.subr.mxu0 0.0
      %5371 = vmatpush2.msra.mxu0 0.0
      %5372 = vmatprep.mubr.f32.mxu0 0.0
      %5373 = vmatmul.mubr.f32.gmra.mxu0 %v5279
      %v5374 = vpop.f32.mrf.mxu0
      %v5375 = vadd.f32 0.0, %v5374
      %v5376 = vpop.f32.mrf.mxu0
      %v5377 = vadd.f32 0.0, %v5376
      %5378 = vmatprep.mubr.f32.mxu0 0.0
      %5379 = vmatmul.mubr.f32.gmra.mxu0 %v5282
      %v5380 = vpop.f32.mrf.mxu0
      %v5381 = vadd.f32 0.0, %v5380
      %v5382 = vpop.f32.mrf.mxu0
      %v5383 = vadd.f32 0.0, %v5382
      %5384 = vmatprep.mubr.f32.mxu0 0.0
      %5385 = vmatmul.mubr.f32.gmra.mxu0 %v5285
      %v5386 = vpop.f32.mrf.mxu0
      %v5387 = vadd.f32 0.0, %v5386
      %v5388 = vpop.f32.mrf.mxu0
      %v5389 = vadd.f32 0.0, %v5388
      %5390 = vmatprep.mubr.f32.mxu0 0.0
      %5391 = vmatmul.mubr.f32.gmra.mxu0 %v5288
      %v5392 = vpop.f32.mrf.mxu0
      %v5393 = vadd.f32 0.0, %v5392
      %v5394 = vpop.f32.mrf.mxu0
      %v5395 = vadd.f32 0.0, %v5394
      %5396 = vmatprep.mubr.f32.mxu0 0.0
      %5397 = vmatmul.mubr.f32.gmra.mxu0 %v5291
      %v5398 = vpop.f32.mrf.mxu0
      %v5399 = vadd.f32 0.0, %v5398
      %v5400 = vpop.f32.mrf.mxu0
      %v5401 = vadd.f32 0.0, %v5400
      %5402 = vmatprep.mubr.f32.mxu0 0.0
      %5403 = vmatmul.mubr.f32.gmra.mxu0 %v5294
      %v5404 = vpop.f32.mrf.mxu0
      %v5405 = vadd.f32 0.0, %v5404
      %v5406 = vpop.f32.mrf.mxu0
      %v5407 = vadd.f32 0.0, %v5406
      %5408 = vmatprep.mubr.f32.mxu0 0.0
      %5409 = vmatmul.mubr.f32.gmra.mxu0 %v5297
      %v5410 = vpop.f32.mrf.mxu0
      %v5411 = vadd.f32 0.0, %v5410
      %v5412 = vpop.f32.mrf.mxu0
      %v5413 = vadd.f32 0.0, %v5412
      %5414 = vmatprep.mubr.f32.mxu0 0.0
      %5415 = vmatmul.mubr.f32.gmra.mxu0 %v5300
      %v5416 = vpop.f32.mrf.mxu0
      %v5417 = vadd.f32 0.0, %v5416
      %v5418 = vpop.f32.mrf.mxu0
      %v5419 = vadd.f32 0.0, %v5418
      %5420 = vdwg.mxu0
      %v5421 = vadd.f32 %v5247, %v5375
      %v5422 = vadd.f32 %v5248, %v5377
      %v5423 = vadd.f32 %v5249, %v5381
      %v5424 = vadd.f32 %v5250, %v5383
      %v5425 = vadd.f32 %v5251, %v5387
      %v5426 = vadd.f32 %v5252, %v5389
      %v5427 = vadd.f32 %v5253, %v5393
      %v5428 = vadd.f32 %v5254, %v5395
      %v5429 = vadd.f32 %v5255, %v5399
      %v5430 = vadd.f32 %v5256, %v5401
      %v5431 = vadd.f32 %v5257, %v5405
      %v5432 = vadd.f32 %v5258, %v5407
      %v5433 = vadd.f32 %v5259, %v5411
      %v5434 = vadd.f32 %v5260, %v5413
      %v5435 = vadd.f32 %v5261, %v5417
      %v5436 = vadd.f32 %v5262, %v5419
      %s5437 = scalar_lea.vmem %s1, 2464
      %v5438 = vld [vmem:[%s5437] sm:$0xff]
      %v5439 = vld [vmem:[%s5437 + $0x8] sm:$0xff]
      %v5440 = vld [vmem:[%s5437 + $0x10] sm:$0xff]
      %v5441 = vld [vmem:[%s5437 + $0x18] sm:$0xff]
      %v5442 = vld [vmem:[%s5437 + $0x20] sm:$0xff]
      %v5443 = vld [vmem:[%s5437 + $0x28] sm:$0xff]
      %v5444 = vld [vmem:[%s5437 + $0x30] sm:$0xff]
      %v5445 = vld [vmem:[%s5437 + $0x38] sm:$0xff]
      %v5446 = vld [vmem:[%s5437 + $0x40] sm:$0xff]
      %v5447 = vld [vmem:[%s5437 + $0x48] sm:$0xff]
      %v5448 = vld [vmem:[%s5437 + $0x50] sm:$0xff]
      %v5449 = vld [vmem:[%s5437 + $0x58] sm:$0xff]
      %v5450 = vld [vmem:[%s5437 + $0x60] sm:$0x1]
      %v5451 = vld [vmem:[%s5437 + $0x68] sm:$0x1]
      %v5453 = vsel %vm1622, %v1442, 0
      %v5456 = vsel %vm1622, %v1447, 0
      %v5459 = vsel %vm1622, %v1452, 0
      %v5462 = vsel %vm1622, %v1457, 0
      %v5465 = vsel %vm1622, %v1462, 0
      %v5468 = vsel %vm1622, %v1467, 0
      %v5471 = vsel %vm1622, %v1472, 0
      %v5474 = vsel %vm1622, %v1477, 0
      %v5477 = vsel %vm1647, %v5450, 0
      %v5480 = vsel %vm1647, %v5451, 0
      %5482 = vmatprep.subr.mxu0 0.0
      %5483 = vmatpush1.msra.mxu0 0.0
      %5484 = vmatprep.subr.mxu0 0.0
      %5485 = vmatpush1.msra.mxu0 0.0
      %5486 = vmatprep.subr.mxu0 0.0
      %5487 = vmatpush1.msra.mxu0 0.0
      %5488 = vmatprep.subr.mxu0 0.0
      %5489 = vmatpush1.msra.mxu0 0.0
      %5490 = vmatprep.subr.mxu0 0.0
      %5491 = vmatpush1.msra.mxu0 0.0
      %5492 = vmatprep.subr.mxu0 0.0
      %5493 = vmatpush1.msra.mxu0 0.0
      %5494 = vmatprep.subr.mxu0 0.0
      %5495 = vmatpush1.msra.mxu0 0.0
      %5496 = vmatprep.subr.mxu0 0.0
      %5497 = vmatpush1.msra.mxu0 0.0
      %5498 = vmatprep.subr.mxu0 0.0
      %5499 = vmatpush1.msra.mxu0 0.0
      %5500 = vmatprep.subr.mxu0 %v5480
      %5501 = vmatpush1.msra.mxu0 %v5477
      %5502 = vmatprep.subr.mxu0 %v5449
      %5503 = vmatpush1.msra.mxu0 %v5448
      %5504 = vmatprep.subr.mxu0 %v5447
      %5505 = vmatpush1.msra.mxu0 %v5446
      %5506 = vmatprep.subr.mxu0 %v5445
      %5507 = vmatpush1.msra.mxu0 %v5444
      %5508 = vmatprep.subr.mxu0 %v5443
      %5509 = vmatpush1.msra.mxu0 %v5442
      %5510 = vmatprep.subr.mxu0 %v5441
      %5511 = vmatpush1.msra.mxu0 %v5440
      %5512 = vmatprep.subr.mxu0 %v5439
      %5513 = vmatpush1.msra.mxu0 %v5438
      %5514 = vmatprep.subr.mxu0 0.0
      %5515 = vmatpush2.msra.mxu0 0.0
      %5516 = vmatprep.subr.mxu0 0.0
      %5517 = vmatpush2.msra.mxu0 0.0
      %5518 = vmatprep.subr.mxu0 0.0
      %5519 = vmatpush2.msra.mxu0 0.0
      %5520 = vmatprep.subr.mxu0 0.0
      %5521 = vmatpush2.msra.mxu0 0.0
      %5522 = vmatprep.subr.mxu0 0.0
      %5523 = vmatpush2.msra.mxu0 0.0
      %5524 = vmatprep.subr.mxu0 0.0
      %5525 = vmatpush2.msra.mxu0 0.0
      %5526 = vmatprep.subr.mxu0 0.0
      %5527 = vmatpush2.msra.mxu0 0.0
      %5528 = vmatprep.subr.mxu0 0.0
      %5529 = vmatpush2.msra.mxu0 0.0
      %5530 = vmatprep.subr.mxu0 0.0
      %5531 = vmatpush2.msra.mxu0 0.0
      %5532 = vmatprep.subr.mxu0 0.0
      %5533 = vmatpush2.msra.mxu0 0.0
      %5534 = vmatprep.subr.mxu0 0.0
      %5535 = vmatpush2.msra.mxu0 0.0
      %5536 = vmatprep.subr.mxu0 0.0
      %5537 = vmatpush2.msra.mxu0 0.0
      %5538 = vmatprep.subr.mxu0 0.0
      %5539 = vmatpush2.msra.mxu0 0.0
      %5540 = vmatprep.subr.mxu0 0.0
      %5541 = vmatpush2.msra.mxu0 0.0
      %5542 = vmatprep.subr.mxu0 0.0
      %5543 = vmatpush2.msra.mxu0 0.0
      %5544 = vmatprep.subr.mxu0 0.0
      %5545 = vmatpush2.msra.mxu0 0.0
      %5546 = vmatprep.mubr.f32.mxu0 0.0
      %5547 = vmatmul.mubr.f32.gmra.mxu0 %v5453
      %v5548 = vpop.f32.mrf.mxu0
      %v5549 = vadd.f32 0.0, %v5548
      %v5550 = vpop.f32.mrf.mxu0
      %v5551 = vadd.f32 0.0, %v5550
      %5552 = vmatprep.mubr.f32.mxu0 0.0
      %5553 = vmatmul.mubr.f32.gmra.mxu0 %v5456
      %v5554 = vpop.f32.mrf.mxu0
      %v5555 = vadd.f32 0.0, %v5554
      %v5556 = vpop.f32.mrf.mxu0
      %v5557 = vadd.f32 0.0, %v5556
      %5558 = vmatprep.mubr.f32.mxu0 0.0
      %5559 = vmatmul.mubr.f32.gmra.mxu0 %v5459
      %v5560 = vpop.f32.mrf.mxu0
      %v5561 = vadd.f32 0.0, %v5560
      %v5562 = vpop.f32.mrf.mxu0
      %v5563 = vadd.f32 0.0, %v5562
      %5564 = vmatprep.mubr.f32.mxu0 0.0
      %5565 = vmatmul.mubr.f32.gmra.mxu0 %v5462
      %v5566 = vpop.f32.mrf.mxu0
      %v5567 = vadd.f32 0.0, %v5566
      %v5568 = vpop.f32.mrf.mxu0
      %v5569 = vadd.f32 0.0, %v5568
      %5570 = vmatprep.mubr.f32.mxu0 0.0
      %5571 = vmatmul.mubr.f32.gmra.mxu0 %v5465
      %v5572 = vpop.f32.mrf.mxu0
      %v5573 = vadd.f32 0.0, %v5572
      %v5574 = vpop.f32.mrf.mxu0
      %v5575 = vadd.f32 0.0, %v5574
      %5576 = vmatprep.mubr.f32.mxu0 0.0
      %5577 = vmatmul.mubr.f32.gmra.mxu0 %v5468
      %v5578 = vpop.f32.mrf.mxu0
      %v5579 = vadd.f32 0.0, %v5578
      %v5580 = vpop.f32.mrf.mxu0
      %v5581 = vadd.f32 0.0, %v5580
      %5582 = vmatprep.mubr.f32.mxu0 0.0
      %5583 = vmatmul.mubr.f32.gmra.mxu0 %v5471
      %v5584 = vpop.f32.mrf.mxu0
      %v5585 = vadd.f32 0.0, %v5584
      %v5586 = vpop.f32.mrf.mxu0
      %v5587 = vadd.f32 0.0, %v5586
      %5588 = vmatprep.mubr.f32.mxu0 0.0
      %5589 = vmatmul.mubr.f32.gmra.mxu0 %v5474
      %v5590 = vpop.f32.mrf.mxu0
      %v5591 = vadd.f32 0.0, %v5590
      %v5592 = vpop.f32.mrf.mxu0
      %v5593 = vadd.f32 0.0, %v5592
      %5594 = vdwg.mxu0
      %v5595 = vadd.f32 %v5421, %v5549
      %v5596 = vadd.f32 %v5422, %v5551
      %v5597 = vadd.f32 %v5423, %v5555
      %v5598 = vadd.f32 %v5424, %v5557
      %v5599 = vadd.f32 %v5425, %v5561
      %v5600 = vadd.f32 %v5426, %v5563
      %v5601 = vadd.f32 %v5427, %v5567
      %v5602 = vadd.f32 %v5428, %v5569
      %v5603 = vadd.f32 %v5429, %v5573
      %v5604 = vadd.f32 %v5430, %v5575
      %v5605 = vadd.f32 %v5431, %v5579
      %v5606 = vadd.f32 %v5432, %v5581
      %v5607 = vadd.f32 %v5433, %v5585
      %v5608 = vadd.f32 %v5434, %v5587
      %v5609 = vadd.f32 %v5435, %v5591
      %v5610 = vadd.f32 %v5436, %v5593
      %s5611 = scalar_lea.vmem %s1, 2576
      %v5612 = vld [vmem:[%s5611] sm:$0xff]
      %v5613 = vld [vmem:[%s5611 + $0x8] sm:$0xff]
      %v5614 = vld [vmem:[%s5611 + $0x10] sm:$0xff]
      %v5615 = vld [vmem:[%s5611 + $0x18] sm:$0xff]
      %v5616 = vld [vmem:[%s5611 + $0x20] sm:$0xff]
      %v5617 = vld [vmem:[%s5611 + $0x28] sm:$0xff]
      %v5618 = vld [vmem:[%s5611 + $0x30] sm:$0xff]
      %v5619 = vld [vmem:[%s5611 + $0x38] sm:$0xff]
      %v5620 = vld [vmem:[%s5611 + $0x40] sm:$0xff]
      %v5621 = vld [vmem:[%s5611 + $0x48] sm:$0xff]
      %v5622 = vld [vmem:[%s5611 + $0x50] sm:$0xff]
      %v5623 = vld [vmem:[%s5611 + $0x58] sm:$0xff]
      %v5624 = vld [vmem:[%s5611 + $0x60] sm:$0x1]
      %v5625 = vld [vmem:[%s5611 + $0x68] sm:$0x1]
      %v5627 = vsel %vm1622, %v1482, 0
      %v5630 = vsel %vm1622, %v1487, 0
      %v5633 = vsel %vm1622, %v1492, 0
      %v5636 = vsel %vm1622, %v1497, 0
      %v5639 = vsel %vm1622, %v1502, 0
      %v5642 = vsel %vm1622, %v1507, 0
      %v5645 = vsel %vm1622, %v1512, 0
      %v5648 = vsel %vm1622, %v1517, 0
      %v5651 = vsel %vm1647, %v5624, 0
      %v5654 = vsel %vm1647, %v5625, 0
      %5656 = vmatprep.subr.mxu0 0.0
      %5657 = vmatpush1.msra.mxu0 0.0
      %5658 = vmatprep.subr.mxu0 0.0
      %5659 = vmatpush1.msra.mxu0 0.0
      %5660 = vmatprep.subr.mxu0 0.0
      %5661 = vmatpush1.msra.mxu0 0.0
      %5662 = vmatprep.subr.mxu0 0.0
      %5663 = vmatpush1.msra.mxu0 0.0
      %5664 = vmatprep.subr.mxu0 0.0
      %5665 = vmatpush1.msra.mxu0 0.0
      %5666 = vmatprep.subr.mxu0 0.0
      %5667 = vmatpush1.msra.mxu0 0.0
      %5668 = vmatprep.subr.mxu0 0.0
      %5669 = vmatpush1.msra.mxu0 0.0
      %5670 = vmatprep.subr.mxu0 0.0
      %5671 = vmatpush1.msra.mxu0 0.0
      %5672 = vmatprep.subr.mxu0 0.0
      %5673 = vmatpush1.msra.mxu0 0.0
      %5674 = vmatprep.subr.mxu0 %v5654
      %5675 = vmatpush1.msra.mxu0 %v5651
      %5676 = vmatprep.subr.mxu0 %v5623
      %5677 = vmatpush1.msra.mxu0 %v5622
      %5678 = vmatprep.subr.mxu0 %v5621
      %5679 = vmatpush1.msra.mxu0 %v5620
      %5680 = vmatprep.subr.mxu0 %v5619
      %5681 = vmatpush1.msra.mxu0 %v5618
      %5682 = vmatprep.subr.mxu0 %v5617
      %5683 = vmatpush1.msra.mxu0 %v5616
      %5684 = vmatprep.subr.mxu0 %v5615
      %5685 = vmatpush1.msra.mxu0 %v5614
      %5686 = vmatprep.subr.mxu0 %v5613
      %5687 = vmatpush1.msra.mxu0 %v5612
      %5688 = vmatprep.subr.mxu0 0.0
      %5689 = vmatpush2.msra.mxu0 0.0
      %5690 = vmatprep.subr.mxu0 0.0
      %5691 = vmatpush2.msra.mxu0 0.0
      %5692 = vmatprep.subr.mxu0 0.0
      %5693 = vmatpush2.msra.mxu0 0.0
      %5694 = vmatprep.subr.mxu0 0.0
      %5695 = vmatpush2.msra.mxu0 0.0
      %5696 = vmatprep.subr.mxu0 0.0
      %5697 = vmatpush2.msra.mxu0 0.0
      %5698 = vmatprep.subr.mxu0 0.0
      %5699 = vmatpush2.msra.mxu0 0.0
      %5700 = vmatprep.subr.mxu0 0.0
      %5701 = vmatpush2.msra.mxu0 0.0
      %5702 = vmatprep.subr.mxu0 0.0
      %5703 = vmatpush2.msra.mxu0 0.0
      %5704 = vmatprep.subr.mxu0 0.0
      %5705 = vmatpush2.msra.mxu0 0.0
      %5706 = vmatprep.subr.mxu0 0.0
      %5707 = vmatpush2.msra.mxu0 0.0
      %5708 = vmatprep.subr.mxu0 0.0
      %5709 = vmatpush2.msra.mxu0 0.0
      %5710 = vmatprep.subr.mxu0 0.0
      %5711 = vmatpush2.msra.mxu0 0.0
      %5712 = vmatprep.subr.mxu0 0.0
      %5713 = vmatpush2.msra.mxu0 0.0
      %5714 = vmatprep.subr.mxu0 0.0
      %5715 = vmatpush2.msra.mxu0 0.0
      %5716 = vmatprep.subr.mxu0 0.0
      %5717 = vmatpush2.msra.mxu0 0.0
      %5718 = vmatprep.subr.mxu0 0.0
      %5719 = vmatpush2.msra.mxu0 0.0
      %5720 = vmatprep.mubr.f32.mxu0 0.0
      %5721 = vmatmul.mubr.f32.gmra.mxu0 %v5627
      %v5722 = vpop.f32.mrf.mxu0
      %v5723 = vadd.f32 0.0, %v5722
      %v5724 = vpop.f32.mrf.mxu0
      %v5725 = vadd.f32 0.0, %v5724
      %5726 = vmatprep.mubr.f32.mxu0 0.0
      %5727 = vmatmul.mubr.f32.gmra.mxu0 %v5630
      %v5728 = vpop.f32.mrf.mxu0
      %v5729 = vadd.f32 0.0, %v5728
      %v5730 = vpop.f32.mrf.mxu0
      %v5731 = vadd.f32 0.0, %v5730
      %5732 = vmatprep.mubr.f32.mxu0 0.0
      %5733 = vmatmul.mubr.f32.gmra.mxu0 %v5633
      %v5734 = vpop.f32.mrf.mxu0
      %v5735 = vadd.f32 0.0, %v5734
      %v5736 = vpop.f32.mrf.mxu0
      %v5737 = vadd.f32 0.0, %v5736
      %5738 = vmatprep.mubr.f32.mxu0 0.0
      %5739 = vmatmul.mubr.f32.gmra.mxu0 %v5636
      %v5740 = vpop.f32.mrf.mxu0
      %v5741 = vadd.f32 0.0, %v5740
      %v5742 = vpop.f32.mrf.mxu0
      %v5743 = vadd.f32 0.0, %v5742
      %5744 = vmatprep.mubr.f32.mxu0 0.0
      %5745 = vmatmul.mubr.f32.gmra.mxu0 %v5639
      %v5746 = vpop.f32.mrf.mxu0
      %v5747 = vadd.f32 0.0, %v5746
      %v5748 = vpop.f32.mrf.mxu0
      %v5749 = vadd.f32 0.0, %v5748
      %5750 = vmatprep.mubr.f32.mxu0 0.0
      %5751 = vmatmul.mubr.f32.gmra.mxu0 %v5642
      %v5752 = vpop.f32.mrf.mxu0
      %v5753 = vadd.f32 0.0, %v5752
      %v5754 = vpop.f32.mrf.mxu0
      %v5755 = vadd.f32 0.0, %v5754
      %5756 = vmatprep.mubr.f32.mxu0 0.0
      %5757 = vmatmul.mubr.f32.gmra.mxu0 %v5645
      %v5758 = vpop.f32.mrf.mxu0
      %v5759 = vadd.f32 0.0, %v5758
      %v5760 = vpop.f32.mrf.mxu0
      %v5761 = vadd.f32 0.0, %v5760
      %5762 = vmatprep.mubr.f32.mxu0 0.0
      %5763 = vmatmul.mubr.f32.gmra.mxu0 %v5648
      %v5764 = vpop.f32.mrf.mxu0
      %v5765 = vadd.f32 0.0, %v5764
      %v5766 = vpop.f32.mrf.mxu0
      %v5767 = vadd.f32 0.0, %v5766
      %5768 = vdwg.mxu0
      %v5769 = vadd.f32 %v5595, %v5723
      %v5770 = vadd.f32 %v5596, %v5725
      %v5771 = vadd.f32 %v5597, %v5729
      %v5772 = vadd.f32 %v5598, %v5731
      %v5773 = vadd.f32 %v5599, %v5735
      %v5774 = vadd.f32 %v5600, %v5737
      %v5775 = vadd.f32 %v5601, %v5741
      %v5776 = vadd.f32 %v5602, %v5743
      %v5777 = vadd.f32 %v5603, %v5747
      %v5778 = vadd.f32 %v5604, %v5749
      %v5779 = vadd.f32 %v5605, %v5753
      %v5780 = vadd.f32 %v5606, %v5755
      %v5781 = vadd.f32 %v5607, %v5759
      %v5782 = vadd.f32 %v5608, %v5761
      %v5783 = vadd.f32 %v5609, %v5765
      %v5784 = vadd.f32 %v5610, %v5767
      %s5785 = scalar_lea.vmem %s1, 2688
      %v5786 = vld [vmem:[%s5785] sm:$0xff]
      %v5787 = vld [vmem:[%s5785 + $0x8] sm:$0xff]
      %v5788 = vld [vmem:[%s5785 + $0x10] sm:$0xff]
      %v5789 = vld [vmem:[%s5785 + $0x18] sm:$0xff]
      %v5790 = vld [vmem:[%s5785 + $0x20] sm:$0xff]
      %v5791 = vld [vmem:[%s5785 + $0x28] sm:$0xff]
      %v5792 = vld [vmem:[%s5785 + $0x30] sm:$0xff]
      %v5793 = vld [vmem:[%s5785 + $0x38] sm:$0xff]
      %v5794 = vld [vmem:[%s5785 + $0x40] sm:$0xff]
      %v5795 = vld [vmem:[%s5785 + $0x48] sm:$0xff]
      %v5796 = vld [vmem:[%s5785 + $0x50] sm:$0xff]
      %v5797 = vld [vmem:[%s5785 + $0x58] sm:$0xff]
      %v5798 = vld [vmem:[%s5785 + $0x60] sm:$0x1]
      %v5799 = vld [vmem:[%s5785 + $0x68] sm:$0x1]
      %v5801 = vsel %vm1622, %v1522, 0
      %v5804 = vsel %vm1622, %v1527, 0
      %v5807 = vsel %vm1622, %v1532, 0
      %v5810 = vsel %vm1622, %v1537, 0
      %v5813 = vsel %vm1622, %v1542, 0
      %v5816 = vsel %vm1622, %v1547, 0
      %v5819 = vsel %vm1622, %v1552, 0
      %v5822 = vsel %vm1622, %v1557, 0
      %v5825 = vsel %vm1647, %v5798, 0
      %v5828 = vsel %vm1647, %v5799, 0
      %5830 = vmatprep.subr.mxu0 0.0
      %5831 = vmatpush1.msra.mxu0 0.0
      %5832 = vmatprep.subr.mxu0 0.0
      %5833 = vmatpush1.msra.mxu0 0.0
      %5834 = vmatprep.subr.mxu0 0.0
      %5835 = vmatpush1.msra.mxu0 0.0
      %5836 = vmatprep.subr.mxu0 0.0
      %5837 = vmatpush1.msra.mxu0 0.0
      %5838 = vmatprep.subr.mxu0 0.0
      %5839 = vmatpush1.msra.mxu0 0.0
      %5840 = vmatprep.subr.mxu0 0.0
      %5841 = vmatpush1.msra.mxu0 0.0
      %5842 = vmatprep.subr.mxu0 0.0
      %5843 = vmatpush1.msra.mxu0 0.0
      %5844 = vmatprep.subr.mxu0 0.0
      %5845 = vmatpush1.msra.mxu0 0.0
      %5846 = vmatprep.subr.mxu0 0.0
      %5847 = vmatpush1.msra.mxu0 0.0
      %5848 = vmatprep.subr.mxu0 %v5828
      %5849 = vmatpush1.msra.mxu0 %v5825
      %5850 = vmatprep.subr.mxu0 %v5797
      %5851 = vmatpush1.msra.mxu0 %v5796
      %5852 = vmatprep.subr.mxu0 %v5795
      %5853 = vmatpush1.msra.mxu0 %v5794
      %5854 = vmatprep.subr.mxu0 %v5793
      %5855 = vmatpush1.msra.mxu0 %v5792
      %5856 = vmatprep.subr.mxu0 %v5791
      %5857 = vmatpush1.msra.mxu0 %v5790
      %5858 = vmatprep.subr.mxu0 %v5789
      %5859 = vmatpush1.msra.mxu0 %v5788
      %5860 = vmatprep.subr.mxu0 %v5787
      %5861 = vmatpush1.msra.mxu0 %v5786
      %5862 = vmatprep.subr.mxu0 0.0
      %5863 = vmatpush2.msra.mxu0 0.0
      %5864 = vmatprep.subr.mxu0 0.0
      %5865 = vmatpush2.msra.mxu0 0.0
      %5866 = vmatprep.subr.mxu0 0.0
      %5867 = vmatpush2.msra.mxu0 0.0
      %5868 = vmatprep.subr.mxu0 0.0
      %5869 = vmatpush2.msra.mxu0 0.0
      %5870 = vmatprep.subr.mxu0 0.0
      %5871 = vmatpush2.msra.mxu0 0.0
      %5872 = vmatprep.subr.mxu0 0.0
      %5873 = vmatpush2.msra.mxu0 0.0
      %5874 = vmatprep.subr.mxu0 0.0
      %5875 = vmatpush2.msra.mxu0 0.0
      %5876 = vmatprep.subr.mxu0 0.0
      %5877 = vmatpush2.msra.mxu0 0.0
      %5878 = vmatprep.subr.mxu0 0.0
      %5879 = vmatpush2.msra.mxu0 0.0
      %5880 = vmatprep.subr.mxu0 0.0
      %5881 = vmatpush2.msra.mxu0 0.0
      %5882 = vmatprep.subr.mxu0 0.0
      %5883 = vmatpush2.msra.mxu0 0.0
      %5884 = vmatprep.subr.mxu0 0.0
      %5885 = vmatpush2.msra.mxu0 0.0
      %5886 = vmatprep.subr.mxu0 0.0
      %5887 = vmatpush2.msra.mxu0 0.0
      %5888 = vmatprep.subr.mxu0 0.0
      %5889 = vmatpush2.msra.mxu0 0.0
      %5890 = vmatprep.subr.mxu0 0.0
      %5891 = vmatpush2.msra.mxu0 0.0
      %5892 = vmatprep.subr.mxu0 0.0
      %5893 = vmatpush2.msra.mxu0 0.0
      %5894 = vmatprep.mubr.f32.mxu0 0.0
      %5895 = vmatmul.mubr.f32.gmra.mxu0 %v5801
      %v5896 = vpop.f32.mrf.mxu0
      %v5897 = vadd.f32 0.0, %v5896
      %v5898 = vpop.f32.mrf.mxu0
      %v5899 = vadd.f32 0.0, %v5898
      %5900 = vmatprep.mubr.f32.mxu0 0.0
      %5901 = vmatmul.mubr.f32.gmra.mxu0 %v5804
      %v5902 = vpop.f32.mrf.mxu0
      %v5903 = vadd.f32 0.0, %v5902
      %v5904 = vpop.f32.mrf.mxu0
      %v5905 = vadd.f32 0.0, %v5904
      %5906 = vmatprep.mubr.f32.mxu0 0.0
      %5907 = vmatmul.mubr.f32.gmra.mxu0 %v5807
      %v5908 = vpop.f32.mrf.mxu0
      %v5909 = vadd.f32 0.0, %v5908
      %v5910 = vpop.f32.mrf.mxu0
      %v5911 = vadd.f32 0.0, %v5910
      %5912 = vmatprep.mubr.f32.mxu0 0.0
      %5913 = vmatmul.mubr.f32.gmra.mxu0 %v5810
      %v5914 = vpop.f32.mrf.mxu0
      %v5915 = vadd.f32 0.0, %v5914
      %v5916 = vpop.f32.mrf.mxu0
      %v5917 = vadd.f32 0.0, %v5916
      %5918 = vmatprep.mubr.f32.mxu0 0.0
      %5919 = vmatmul.mubr.f32.gmra.mxu0 %v5813
      %v5920 = vpop.f32.mrf.mxu0
      %v5921 = vadd.f32 0.0, %v5920
      %v5922 = vpop.f32.mrf.mxu0
      %v5923 = vadd.f32 0.0, %v5922
      %5924 = vmatprep.mubr.f32.mxu0 0.0
      %5925 = vmatmul.mubr.f32.gmra.mxu0 %v5816
      %v5926 = vpop.f32.mrf.mxu0
      %v5927 = vadd.f32 0.0, %v5926
      %v5928 = vpop.f32.mrf.mxu0
      %v5929 = vadd.f32 0.0, %v5928
      %5930 = vmatprep.mubr.f32.mxu0 0.0
      %5931 = vmatmul.mubr.f32.gmra.mxu0 %v5819
      %v5932 = vpop.f32.mrf.mxu0
      %v5933 = vadd.f32 0.0, %v5932
      %v5934 = vpop.f32.mrf.mxu0
      %v5935 = vadd.f32 0.0, %v5934
      %5936 = vmatprep.mubr.f32.mxu0 0.0
      %5937 = vmatmul.mubr.f32.gmra.mxu0 %v5822
      %v5938 = vpop.f32.mrf.mxu0
      %v5939 = vadd.f32 0.0, %v5938
      %v5940 = vpop.f32.mrf.mxu0
      %v5941 = vadd.f32 0.0, %v5940
      %5942 = vdwg.mxu0
      %v5943 = vadd.f32 %v5769, %v5897
      %v5944 = vadd.f32 %v5770, %v5899
      %v5945 = vadd.f32 %v5771, %v5903
      %v5946 = vadd.f32 %v5772, %v5905
      %v5947 = vadd.f32 %v5773, %v5909
      %v5948 = vadd.f32 %v5774, %v5911
      %v5949 = vadd.f32 %v5775, %v5915
      %v5950 = vadd.f32 %v5776, %v5917
      %v5951 = vadd.f32 %v5777, %v5921
      %v5952 = vadd.f32 %v5778, %v5923
      %v5953 = vadd.f32 %v5779, %v5927
      %v5954 = vadd.f32 %v5780, %v5929
      %v5955 = vadd.f32 %v5781, %v5933
      %v5956 = vadd.f32 %v5782, %v5935
      %v5957 = vadd.f32 %v5783, %v5939
      %v5958 = vadd.f32 %v5784, %v5941
      %vm5959 = vcmp.gt.f32.partialorder %v5943, 0.0
      %vm5960 = vcmp.gt.f32.partialorder %v5944, 0.0
      %vm5961 = vcmp.gt.f32.partialorder %v5945, 0.0
      %vm5962 = vcmp.gt.f32.partialorder %v5946, 0.0
      %vm5963 = vcmp.gt.f32.partialorder %v5947, 0.0
      %vm5964 = vcmp.gt.f32.partialorder %v5948, 0.0
      %vm5965 = vcmp.gt.f32.partialorder %v5949, 0.0
      %vm5966 = vcmp.gt.f32.partialorder %v5950, 0.0
      %vm5967 = vcmp.gt.f32.partialorder %v5951, 0.0
      %vm5968 = vcmp.gt.f32.partialorder %v5952, 0.0
      %vm5969 = vcmp.gt.f32.partialorder %v5953, 0.0
      %vm5970 = vcmp.gt.f32.partialorder %v5954, 0.0
      %vm5971 = vcmp.gt.f32.partialorder %v5955, 0.0
      %vm5972 = vcmp.gt.f32.partialorder %v5956, 0.0
      %vm5973 = vcmp.gt.f32.partialorder %v5957, 0.0
      %vm5974 = vcmp.gt.f32.partialorder %v5958, 0.0
      %v5975 = vmul.f32 %v5943, 0.2
      %v5976 = vmul.f32 %v5944, 0.2
      %v5977 = vmul.f32 %v5945, 0.2
      %v5978 = vmul.f32 %v5946, 0.2
      %v5979 = vmul.f32 %v5947, 0.2
      %v5980 = vmul.f32 %v5948, 0.2
      %v5981 = vmul.f32 %v5949, 0.2
      %v5982 = vmul.f32 %v5950, 0.2
      %v5983 = vmul.f32 %v5951, 0.2
      %v5984 = vmul.f32 %v5952, 0.2
      %v5985 = vmul.f32 %v5953, 0.2
      %v5986 = vmul.f32 %v5954, 0.2
      %v5987 = vmul.f32 %v5955, 0.2
      %v5988 = vmul.f32 %v5956, 0.2
      %v5989 = vmul.f32 %v5957, 0.2
      %v5990 = vmul.f32 %v5958, 0.2
      %v5991 = vsel %vm5959, %v5943, %v5975
      %v5992 = vsel %vm5960, %v5944, %v5976
      %v5993 = vsel %vm5961, %v5945, %v5977
      %v5994 = vsel %vm5962, %v5946, %v5978
      %v5995 = vsel %vm5963, %v5947, %v5979
      %v5996 = vsel %vm5964, %v5948, %v5980
      %v5997 = vsel %vm5965, %v5949, %v5981
      %v5998 = vsel %vm5966, %v5950, %v5982
      %v5999 = vsel %vm5967, %v5951, %v5983
      %v6000 = vsel %vm5968, %v5952, %v5984
      %v6001 = vsel %vm5969, %v5953, %v5985
      %v6002 = vsel %vm5970, %v5954, %v5986
      %v6003 = vsel %vm5971, %v5955, %v5987
      %v6004 = vsel %vm5972, %v5956, %v5988
      %v6005 = vsel %vm5973, %v5957, %v5989
      %v6006 = vsel %vm5974, %v5958, %v5990
      %v6007 = vld [vmem:[%s5] sm:$0xff]
      %v6008 = vld [vmem:[%s5 + $0x8] sm:$0xff]
      %v6009 = vld [vmem:[%s5 + $0x10] sm:$0xff]
      %v6010 = vld [vmem:[%s5 + $0x18] sm:$0x1]
      %vm6011 = vcmask 523264
      %v6013 = vsel %vm6011, %v6007, 0
      %v6016 = vsel %vm6011, %v6008, 0
      %v6019 = vsel %vm6011, %v6009, 0
      %v6022 = vsel %vm6011, %v6010, 0
      %6024 = vmatprep.subr.mxu0 0.0
      %6025 = vmatpush1.msra.mxu0 0.0
      %6026 = vmatprep.subr.mxu0 0.0
      %6027 = vmatpush1.msra.mxu0 0.0
      %6028 = vmatprep.subr.mxu0 0.0
      %6029 = vmatpush1.msra.mxu0 0.0
      %6030 = vmatprep.subr.mxu0 0.0
      %6031 = vmatpush1.msra.mxu0 0.0
      %6032 = vmatprep.subr.mxu0 0.0
      %6033 = vmatpush1.msra.mxu0 0.0
      %6034 = vmatprep.subr.mxu0 0.0
      %6035 = vmatpush1.msra.mxu0 0.0
      %6036 = vmatprep.subr.mxu0 0.0
      %6037 = vmatpush1.msra.mxu0 0.0
      %6038 = vmatprep.subr.mxu0 0.0
      %6039 = vmatpush1.msra.mxu0 0.0
      %6040 = vmatprep.subr.mxu0 %v6006
      %6041 = vmatpush1.msra.mxu0 %v6005
      %6042 = vmatprep.subr.mxu0 %v6004
      %6043 = vmatpush1.msra.mxu0 %v6003
      %6044 = vmatprep.subr.mxu0 %v6002
      %6045 = vmatpush1.msra.mxu0 %v6001
      %6046 = vmatprep.subr.mxu0 %v6000
      %6047 = vmatpush1.msra.mxu0 %v5999
      %6048 = vmatprep.subr.mxu0 %v5998
      %6049 = vmatpush1.msra.mxu0 %v5997
      %6050 = vmatprep.subr.mxu0 %v5996
      %6051 = vmatpush1.msra.mxu0 %v5995
      %6052 = vmatprep.subr.mxu0 %v5994
      %6053 = vmatpush1.msra.mxu0 %v5993
      %6054 = vmatprep.subr.mxu0 %v5992
      %6055 = vmatpush1.msra.mxu0 %v5991
      %6056 = vmatprep.subr.mxu0 0.0
      %6057 = vmatpush2.msra.mxu0 0.0
      %6058 = vmatprep.subr.mxu0 0.0
      %6059 = vmatpush2.msra.mxu0 0.0
      %6060 = vmatprep.subr.mxu0 0.0
      %6061 = vmatpush2.msra.mxu0 0.0
      %6062 = vmatprep.subr.mxu0 0.0
      %6063 = vmatpush2.msra.mxu0 0.0
      %6064 = vmatprep.subr.mxu0 0.0
      %6065 = vmatpush2.msra.mxu0 0.0
      %6066 = vmatprep.subr.mxu0 0.0
      %6067 = vmatpush2.msra.mxu0 0.0
      %6068 = vmatprep.subr.mxu0 0.0
      %6069 = vmatpush2.msra.mxu0 0.0
      %6070 = vmatprep.subr.mxu0 0.0
      %6071 = vmatpush2.msra.mxu0 0.0
      %6072 = vmatprep.subr.mxu0 0.0
      %6073 = vmatpush2.msra.mxu0 0.0
      %6074 = vmatprep.subr.mxu0 0.0
      %6075 = vmatpush2.msra.mxu0 0.0
      %6076 = vmatprep.subr.mxu0 0.0
      %6077 = vmatpush2.msra.mxu0 0.0
      %6078 = vmatprep.subr.mxu0 0.0
      %6079 = vmatpush2.msra.mxu0 0.0
      %6080 = vmatprep.subr.mxu0 0.0
      %6081 = vmatpush2.msra.mxu0 0.0
      %6082 = vmatprep.subr.mxu0 0.0
      %6083 = vmatpush2.msra.mxu0 0.0
      %6084 = vmatprep.subr.mxu0 0.0
      %6085 = vmatpush2.msra.mxu0 0.0
      %6086 = vmatprep.subr.mxu0 0.0
      %6087 = vmatpush2.msra.mxu0 0.0
      %6088 = vmatprep.mubr.f32.mxu0 0.0
      %6089 = vmatmul.mubr.f32.gmra.mxu0 %v6013
      %v6090 = vpop.f32.mrf.mxu0
      %v6091 = vadd.f32 0.0, %v6090
      %v6092 = vpop.f32.mrf.mxu0
      %v6093 = vadd.f32 0.0, %v6092
      %6094 = vmatprep.mubr.f32.mxu0 0.0
      %6095 = vmatmul.mubr.f32.gmra.mxu0 %v6016
      %v6096 = vpop.f32.mrf.mxu0
      %v6097 = vadd.f32 0.0, %v6096
      %v6098 = vpop.f32.mrf.mxu0
      %v6099 = vadd.f32 0.0, %v6098
      %6100 = vmatprep.mubr.f32.mxu0 0.0
      %6101 = vmatmul.mubr.f32.gmra.mxu0 %v6019
      %v6102 = vpop.f32.mrf.mxu0
      %v6103 = vadd.f32 0.0, %v6102
      %v6104 = vpop.f32.mrf.mxu0
      %v6105 = vadd.f32 0.0, %v6104
      %6106 = vmatprep.mubr.f32.mxu0 0.0
      %6107 = vmatmul.mubr.f32.gmra.mxu0 %v6022
      %v6108 = vpop.f32.mrf.mxu0
      %v6109 = vadd.f32 0.0, %v6108
      %v6110 = vpop.f32.mrf.mxu0
      %v6111 = vadd.f32 0.0, %v6110
      %6112 = vdwg.mxu0
      %v6113 = vld [vmem:[%s4] sm:$0xff]
      %v6114 = vld [vmem:[%s4 + $0x8] sm:$0xff]
      %v6115 = vld [vmem:[%s4 + $0x10] sm:$0xff]
      %v6116 = vld [vmem:[%s4 + $0x18] sm:$0xff]
      %v6117 = vld [vmem:[%s4 + $0x20] sm:$0xff]
      %v6118 = vld [vmem:[%s4 + $0x28] sm:$0xff]
      %v6119 = vld [vmem:[%s4 + $0x30] sm:$0xff]
      %v6120 = vld [vmem:[%s4 + $0x38] sm:$0xff]
      %v6121 = vld [vmem:[%s4 + $0x40] sm:$0xff]
      %v6122 = vld [vmem:[%s4 + $0x48] sm:$0xff]
      %v6123 = vld [vmem:[%s4 + $0x50] sm:$0xff]
      %v6124 = vld [vmem:[%s4 + $0x58] sm:$0xff]
      %v6125 = vld [vmem:[%s4 + $0x60] sm:$0xff]
      %v6126 = vld [vmem:[%s4 + $0x68] sm:$0xff]
      %v6127 = vld [vmem:[%s4 + $0x70] sm:$0xff]
      %v6128 = vld [vmem:[%s4 + $0x78] sm:$0xff]
      %v6129 = vld [vmem:[%s4 + $0x80] sm:$0xff]
      %v6130 = vld [vmem:[%s4 + $0x88] sm:$0xff]
      %v6131 = vld [vmem:[%s4 + $0x90] sm:$0xff]
      %v6132 = vld [vmem:[%s4 + $0x98] sm:$0xff]
      %v6133 = vld [vmem:[%s4 + $0xa0] sm:$0xff]
      %v6134 = vld [vmem:[%s4 + $0xa8] sm:$0xff]
      %v6135 = vld [vmem:[%s4 + $0xb0] sm:$0xff]
      %v6136 = vld [vmem:[%s4 + $0xb8] sm:$0xff]
      %v6137 = vld [vmem:[%s4 + $0xc0] sm:$0xff]
      %v6138 = vld [vmem:[%s4 + $0xc8] sm:$0xff]
      %v6139 = vld [vmem:[%s4 + $0xd0] sm:$0xff]
      %v6140 = vld [vmem:[%s4 + $0xd8] sm:$0xff]
      %v6141 = vld [vmem:[%s4 + $0xe0] sm:$0xff]
      %v6142 = vld [vmem:[%s4 + $0xe8] sm:$0xff]
      %v6143 = vld [vmem:[%s4 + $0xf0] sm:$0xff]
      %v6144 = vld [vmem:[%s4 + $0xf8] sm:$0xff]
      %v6145 = vld [vmem:[%s4 + $0x100] sm:$0xff]
      %v6146 = vld [vmem:[%s4 + $0x108] sm:$0xff]
      %v6147 = vld [vmem:[%s4 + $0x110] sm:$0xff]
      %v6148 = vld [vmem:[%s4 + $0x118] sm:$0xff]
      %v6149 = vld [vmem:[%s4 + $0x120] sm:$0xff]
      %v6150 = vld [vmem:[%s4 + $0x128] sm:$0xff]
      %v6151 = vld [vmem:[%s4 + $0x130] sm:$0xff]
      %v6152 = vld [vmem:[%s4 + $0x138] sm:$0xff]
      %v6153 = vld [vmem:[%s4 + $0x140] sm:$0xff]
      %v6154 = vld [vmem:[%s4 + $0x148] sm:$0xff]
      %v6155 = vld [vmem:[%s4 + $0x150] sm:$0xff]
      %v6156 = vld [vmem:[%s4 + $0x158] sm:$0xff]
      %v6157 = vld [vmem:[%s4 + $0x160] sm:$0xff]
      %v6158 = vld [vmem:[%s4 + $0x168] sm:$0xff]
      %v6159 = vld [vmem:[%s4 + $0x170] sm:$0xff]
      %v6160 = vld [vmem:[%s4 + $0x178] sm:$0xff]
      %v6161 = vld [vmem:[%s4 + $0x180] sm:$0xff]
      %v6162 = vld [vmem:[%s4 + $0x188] sm:$0xff]
      %v6163 = vld [vmem:[%s4 + $0x190] sm:$0xff]
      %v6164 = vld [vmem:[%s4 + $0x198] sm:$0xff]
      %v6165 = vld [vmem:[%s4 + $0x1a0] sm:$0xff]
      %v6166 = vld [vmem:[%s4 + $0x1a8] sm:$0xff]
      %v6167 = vld [vmem:[%s4 + $0x1b0] sm:$0xff]
      %v6168 = vld [vmem:[%s4 + $0x1b8] sm:$0xff]
      %v6169 = vld [vmem:[%s4 + $0x1c0] sm:$0xff]
      %v6170 = vld [vmem:[%s4 + $0x1c8] sm:$0xff]
      %v6171 = vld [vmem:[%s4 + $0x1d0] sm:$0xff]
      %v6172 = vld [vmem:[%s4 + $0x1d8] sm:$0xff]
      %v6173 = vld [vmem:[%s4 + $0x1e0] sm:$0xff]
      %v6174 = vld [vmem:[%s4 + $0x1e8] sm:$0xff]
      %v6175 = vld [vmem:[%s4 + $0x1f0] sm:$0xff]
      %v6176 = vld [vmem:[%s4 + $0x1f8] sm:$0xff]
      %v6177 = vld [vmem:[%s4 + $0x200] sm:$0xff]
      %v6178 = vld [vmem:[%s4 + $0x208] sm:$0xff]
      %v6179 = vld [vmem:[%s4 + $0x210] sm:$0xff]
      %v6180 = vld [vmem:[%s4 + $0x218] sm:$0xff]
      %v6181 = vld [vmem:[%s4 + $0x220] sm:$0xff]
      %v6182 = vld [vmem:[%s4 + $0x228] sm:$0xff]
      %v6183 = vld [vmem:[%s4 + $0x230] sm:$0xff]
      %v6184 = vld [vmem:[%s4 + $0x238] sm:$0xff]
      %v6185 = vld [vmem:[%s4 + $0x240] sm:$0xff]
      %v6186 = vld [vmem:[%s4 + $0x248] sm:$0xff]
      %v6187 = vld [vmem:[%s4 + $0x250] sm:$0xff]
      %v6188 = vld [vmem:[%s4 + $0x258] sm:$0xff]
      %v6189 = vld [vmem:[%s4 + $0x260] sm:$0xff]
      %v6190 = vld [vmem:[%s4 + $0x268] sm:$0xff]
      %v6191 = vld [vmem:[%s4 + $0x270] sm:$0xff]
      %v6192 = vld [vmem:[%s4 + $0x278] sm:$0xff]
      %v6193 = vld [vmem:[%s4 + $0x280] sm:$0xff]
      %v6194 = vld [vmem:[%s4 + $0x288] sm:$0xff]
      %v6195 = vld [vmem:[%s4 + $0x290] sm:$0xff]
      %v6196 = vld [vmem:[%s4 + $0x298] sm:$0xff]
      %v6197 = vld [vmem:[%s4 + $0x2a0] sm:$0xff]
      %v6198 = vld [vmem:[%s4 + $0x2a8] sm:$0xff]
      %v6199 = vld [vmem:[%s4 + $0x2b0] sm:$0xff]
      %v6200 = vld [vmem:[%s4 + $0x2b8] sm:$0xff]
      %v6201 = vld [vmem:[%s4 + $0x2c0] sm:$0xff]
      %v6202 = vld [vmem:[%s4 + $0x2c8] sm:$0xff]
      %v6203 = vld [vmem:[%s4 + $0x2d0] sm:$0xff]
      %v6204 = vld [vmem:[%s4 + $0x2d8] sm:$0xff]
      %v6205 = vld [vmem:[%s4 + $0x2e0] sm:$0xff]
      %v6206 = vld [vmem:[%s4 + $0x2e8] sm:$0xff]
      %v6207 = vld [vmem:[%s4 + $0x2f0] sm:$0xff]
      %v6208 = vld [vmem:[%s4 + $0x2f8] sm:$0xff]
      %v6209 = vld [vmem:[%s4 + $0x300] sm:$0xff]
      %v6210 = vld [vmem:[%s4 + $0x308] sm:$0xff]
      %v6211 = vld [vmem:[%s4 + $0x310] sm:$0xff]
      %v6212 = vld [vmem:[%s4 + $0x318] sm:$0xff]
      %v6213 = vld [vmem:[%s4 + $0x320] sm:$0xff]
      %v6214 = vld [vmem:[%s4 + $0x328] sm:$0xff]
      %v6215 = vld [vmem:[%s4 + $0x330] sm:$0xff]
      %v6216 = vld [vmem:[%s4 + $0x338] sm:$0xff]
      %v6217 = vld [vmem:[%s4 + $0x340] sm:$0xff]
      %v6218 = vld [vmem:[%s4 + $0x348] sm:$0xff]
      %v6219 = vld [vmem:[%s4 + $0x350] sm:$0xff]
      %v6220 = vld [vmem:[%s4 + $0x358] sm:$0xff]
      %v6221 = vld [vmem:[%s4 + $0x360] sm:$0xff]
      %v6222 = vld [vmem:[%s4 + $0x368] sm:$0xff]
      %v6223 = vld [vmem:[%s4 + $0x370] sm:$0xff]
      %v6224 = vld [vmem:[%s4 + $0x378] sm:$0xff]
      %v6225 = vld [vmem:[%s4 + $0x380] sm:$0xff]
      %v6226 = vld [vmem:[%s4 + $0x388] sm:$0xff]
      %v6227 = vld [vmem:[%s4 + $0x390] sm:$0xff]
      %v6228 = vld [vmem:[%s4 + $0x398] sm:$0xff]
      %v6229 = vld [vmem:[%s4 + $0x3a0] sm:$0xff]
      %v6230 = vld [vmem:[%s4 + $0x3a8] sm:$0xff]
      %v6231 = vld [vmem:[%s4 + $0x3b0] sm:$0xff]
      %v6232 = vld [vmem:[%s4 + $0x3b8] sm:$0xff]
      %v6233 = vld [vmem:[%s4 + $0x3c0] sm:$0xff]
      %v6234 = vld [vmem:[%s4 + $0x3c8] sm:$0xff]
      %v6235 = vld [vmem:[%s4 + $0x3d0] sm:$0xff]
      %v6236 = vld [vmem:[%s4 + $0x3d8] sm:$0xff]
      %v6237 = vld [vmem:[%s4 + $0x3e0] sm:$0xff]
      %v6238 = vld [vmem:[%s4 + $0x3e8] sm:$0xff]
      %v6239 = vld [vmem:[%s4 + $0x3f0] sm:$0xff]
      %v6240 = vld [vmem:[%s4 + $0x3f8] sm:$0xff]
      %v6241 = vld [vmem:[%s4 + $0x400] sm:$0xff]
      %v6242 = vld [vmem:[%s4 + $0x408] sm:$0xff]
      %v6243 = vld [vmem:[%s4 + $0x410] sm:$0xff]
      %v6244 = vld [vmem:[%s4 + $0x418] sm:$0xff]
      %v6245 = vld [vmem:[%s4 + $0x420] sm:$0xff]
      %v6246 = vld [vmem:[%s4 + $0x428] sm:$0xff]
      %v6247 = vld [vmem:[%s4 + $0x430] sm:$0xff]
      %v6248 = vld [vmem:[%s4 + $0x438] sm:$0xff]
      %v6249 = vld [vmem:[%s4 + $0x440] sm:$0xff]
      %v6250 = vld [vmem:[%s4 + $0x448] sm:$0xff]
      %v6251 = vld [vmem:[%s4 + $0x450] sm:$0xff]
      %v6252 = vld [vmem:[%s4 + $0x458] sm:$0xff]
      %v6253 = vld [vmem:[%s4 + $0x460] sm:$0xff]
      %v6254 = vld [vmem:[%s4 + $0x468] sm:$0xff]
      %v6255 = vld [vmem:[%s4 + $0x470] sm:$0xff]
      %v6256 = vld [vmem:[%s4 + $0x478] sm:$0xff]
      %v6257 = vld [vmem:[%s4 + $0x480] sm:$0xff]
      %v6258 = vld [vmem:[%s4 + $0x488] sm:$0xff]
      %v6259 = vld [vmem:[%s4 + $0x490] sm:$0xff]
      %v6260 = vld [vmem:[%s4 + $0x498] sm:$0xff]
      %v6261 = vld [vmem:[%s4 + $0x4a0] sm:$0xff]
      %v6262 = vld [vmem:[%s4 + $0x4a8] sm:$0xff]
      %v6263 = vld [vmem:[%s4 + $0x4b0] sm:$0xff]
      %v6264 = vld [vmem:[%s4 + $0x4b8] sm:$0xff]
      %v6265 = vld [vmem:[%s4 + $0x4c0] sm:$0xff]
      %v6266 = vld [vmem:[%s4 + $0x4c8] sm:$0xff]
      %v6267 = vld [vmem:[%s4 + $0x4d0] sm:$0xff]
      %v6268 = vld [vmem:[%s4 + $0x4d8] sm:$0xff]
      %v6269 = vld [vmem:[%s4 + $0x4e0] sm:$0xff]
      %v6270 = vld [vmem:[%s4 + $0x4e8] sm:$0xff]
      %v6271 = vld [vmem:[%s4 + $0x4f0] sm:$0xff]
      %v6272 = vld [vmem:[%s4 + $0x4f8] sm:$0xff]
      %v6273 = vld [vmem:[%s4 + $0x500] sm:$0xff]
      %v6274 = vld [vmem:[%s4 + $0x508] sm:$0xff]
      %v6275 = vld [vmem:[%s4 + $0x510] sm:$0xff]
      %v6276 = vld [vmem:[%s4 + $0x518] sm:$0xff]
      %v6277 = vld [vmem:[%s4 + $0x520] sm:$0xff]
      %v6278 = vld [vmem:[%s4 + $0x528] sm:$0xff]
      %v6279 = vld [vmem:[%s4 + $0x530] sm:$0xff]
      %v6280 = vld [vmem:[%s4 + $0x538] sm:$0xff]
      %v6281 = vld [vmem:[%s4 + $0x540] sm:$0xff]
      %v6282 = vld [vmem:[%s4 + $0x548] sm:$0xff]
      %v6283 = vld [vmem:[%s4 + $0x550] sm:$0xff]
      %v6284 = vld [vmem:[%s4 + $0x558] sm:$0xff]
      %v6285 = vld [vmem:[%s4 + $0x560] sm:$0xff]
      %v6286 = vld [vmem:[%s4 + $0x568] sm:$0xff]
      %v6287 = vld [vmem:[%s4 + $0x570] sm:$0xff]
      %v6288 = vld [vmem:[%s4 + $0x578] sm:$0xff]
      %v6289 = vld [vmem:[%s4 + $0x580] sm:$0xff]
      %v6290 = vld [vmem:[%s4 + $0x588] sm:$0xff]
      %v6291 = vld [vmem:[%s4 + $0x590] sm:$0xff]
      %v6292 = vld [vmem:[%s4 + $0x598] sm:$0xff]
      %v6293 = vld [vmem:[%s4 + $0x5a0] sm:$0xff]
      %v6294 = vld [vmem:[%s4 + $0x5a8] sm:$0xff]
      %v6295 = vld [vmem:[%s4 + $0x5b0] sm:$0xff]
      %v6296 = vld [vmem:[%s4 + $0x5b8] sm:$0xff]
      %v6297 = vld [vmem:[%s4 + $0x5c0] sm:$0xff]
      %v6298 = vld [vmem:[%s4 + $0x5c8] sm:$0xff]
      %v6299 = vld [vmem:[%s4 + $0x5d0] sm:$0xff]
      %v6300 = vld [vmem:[%s4 + $0x5d8] sm:$0xff]
      %v6301 = vld [vmem:[%s4 + $0x5e0] sm:$0xff]
      %v6302 = vld [vmem:[%s4 + $0x5e8] sm:$0xff]
      %v6303 = vld [vmem:[%s4 + $0x5f0] sm:$0xff]
      %v6304 = vld [vmem:[%s4 + $0x5f8] sm:$0xff]
      %v6305 = vld [vmem:[%s4 + $0x600] sm:$0xff]
      %v6306 = vld [vmem:[%s4 + $0x608] sm:$0xff]
      %v6307 = vld [vmem:[%s4 + $0x610] sm:$0xff]
      %v6308 = vld [vmem:[%s4 + $0x618] sm:$0xff]
      %v6309 = vld [vmem:[%s4 + $0x620] sm:$0xff]
      %v6310 = vld [vmem:[%s4 + $0x628] sm:$0xff]
      %v6311 = vld [vmem:[%s4 + $0x630] sm:$0xff]
      %v6312 = vld [vmem:[%s4 + $0x638] sm:$0xff]
      %v6313 = vld [vmem:[%s4 + $0x640] sm:$0xff]
      %v6314 = vld [vmem:[%s4 + $0x648] sm:$0xff]
      %v6315 = vld [vmem:[%s4 + $0x650] sm:$0xff]
      %v6316 = vld [vmem:[%s4 + $0x658] sm:$0xff]
      %v6317 = vld [vmem:[%s4 + $0x660] sm:$0xff]
      %v6318 = vld [vmem:[%s4 + $0x668] sm:$0xff]
      %v6319 = vld [vmem:[%s4 + $0x670] sm:$0xff]
      %v6320 = vld [vmem:[%s4 + $0x678] sm:$0xff]
      %v6321 = vld [vmem:[%s4 + $0x680] sm:$0xff]
      %v6322 = vld [vmem:[%s4 + $0x688] sm:$0xff]
      %v6323 = vld [vmem:[%s4 + $0x690] sm:$0xff]
      %v6324 = vld [vmem:[%s4 + $0x698] sm:$0xff]
      %v6325 = vld [vmem:[%s4 + $0x6a0] sm:$0xff]
      %v6326 = vld [vmem:[%s4 + $0x6a8] sm:$0xff]
      %v6327 = vld [vmem:[%s4 + $0x6b0] sm:$0xff]
      %v6328 = vld [vmem:[%s4 + $0x6b8] sm:$0xff]
      %v6329 = vld [vmem:[%s4 + $0x6c0] sm:$0xf]
      %v6330 = vld [vmem:[%s4 + $0x6c8] sm:$0xf]
      %v6331 = vld [vmem:[%s4 + $0x6d0] sm:$0xf]
      %v6332 = vld [vmem:[%s4 + $0x6d8] sm:$0xf]
      %v6333 = vld [vmem:[%s4 + $0x6e0] sm:$0xf]
      %v6334 = vld [vmem:[%s4 + $0x6e8] sm:$0xf]
      %v6335 = vld [vmem:[%s4 + $0x6f0] sm:$0xf]
      %v6336 = vld [vmem:[%s4 + $0x6f8] sm:$0xf]
      %v6337 = vld [vmem:[%s4 + $0x700] sm:$0xf]
      %vm6338 = vcmask 556032
      %v6340 = vsel %vm6338, %v6093, 0
      %v6343 = vsel %vm6338, %v6099, 0
      %v6346 = vsel %vm6338, %v6105, 0
      %v6349 = vsel %vm6338, %v6111, 0
      %vm6351 = vcmask 1043456
      %v6353 = vsel %vm6351, %v6329, 0
      %v6356 = vsel %vm6351, %v6330, 0
      %v6359 = vsel %vm6351, %v6331, 0
      %v6362 = vsel %vm6351, %v6332, 0
      %v6365 = vsel %vm6351, %v6333, 0
      %v6368 = vsel %vm6351, %v6334, 0
      %v6371 = vsel %vm6351, %v6335, 0
      %v6374 = vsel %vm6351, %v6336, 0
      %v6377 = vsel %vm6351, %v6337, 0
      %6379 = vmatprep.subr.mxu0 %v6249
      %6380 = vmatpush1.msra.mxu0 %v6248
      %6381 = vmatprep.subr.mxu0 %v6240
      %6382 = vmatpush1.msra.mxu0 %v6239
      %6383 = vmatprep.subr.mxu0 %v6231
      %6384 = vmatpush1.msra.mxu0 %v6230
      %6385 = vmatprep.subr.mxu0 %v6222
      %6386 = vmatpush1.msra.mxu0 %v6221
      %6387 = vmatprep.subr.mxu0 %v6213
      %6388 = vmatpush1.msra.mxu0 %v6212
      %6389 = vmatprep.subr.mxu0 %v6204
      %6390 = vmatpush1.msra.mxu0 %v6203
      %6391 = vmatprep.subr.mxu0 %v6195
      %6392 = vmatpush1.msra.mxu0 %v6194
      %6393 = vmatprep.subr.mxu0 %v6186
      %6394 = vmatpush1.msra.mxu0 %v6185
      %6395 = vmatprep.subr.mxu0 %v6177
      %6396 = vmatpush1.msra.mxu0 %v6176
      %6397 = vmatprep.subr.mxu0 %v6168
      %6398 = vmatpush1.msra.mxu0 %v6167
      %6399 = vmatprep.subr.mxu0 %v6159
      %6400 = vmatpush1.msra.mxu0 %v6158
      %6401 = vmatprep.subr.mxu0 %v6150
      %6402 = vmatpush1.msra.mxu0 %v6149
      %6403 = vmatprep.subr.mxu0 %v6141
      %6404 = vmatpush1.msra.mxu0 %v6140
      %6405 = vmatprep.subr.mxu0 %v6132
      %6406 = vmatpush1.msra.mxu0 %v6131
      %6407 = vmatprep.subr.mxu0 %v6123
      %6408 = vmatpush1.msra.mxu0 %v6122
      %6409 = vmatprep.subr.mxu0 %v6114
      %6410 = vmatpush1.msra.mxu0 %v6113
      %6411 = vmatprep.subr.mxu0 0.0
      %6412 = vmatpush2.msra.mxu0 0.0
      %6413 = vmatprep.subr.mxu0 0.0
      %6414 = vmatpush2.msra.mxu0 0.0
      %6415 = vmatprep.subr.mxu0 0.0
      %6416 = vmatpush2.msra.mxu0 0.0
      %6417 = vmatprep.subr.mxu0 0.0
      %6418 = vmatpush2.msra.mxu0 0.0
      %6419 = vmatprep.subr.mxu0 0.0
      %6420 = vmatpush2.msra.mxu0 0.0
      %6421 = vmatprep.subr.mxu0 0.0
      %6422 = vmatpush2.msra.mxu0 0.0
      %6423 = vmatprep.subr.mxu0 0.0
      %6424 = vmatpush2.msra.mxu0 0.0
      %6425 = vmatprep.subr.mxu0 %v6356
      %6426 = vmatpush2.msra.mxu0 %v6353
      %6427 = vmatprep.subr.mxu0 %v6321
      %6428 = vmatpush2.msra.mxu0 %v6320
      %6429 = vmatprep.subr.mxu0 %v6312
      %6430 = vmatpush2.msra.mxu0 %v6311
      %6431 = vmatprep.subr.mxu0 %v6303
      %6432 = vmatpush2.msra.mxu0 %v6302
      %6433 = vmatprep.subr.mxu0 %v6294
      %6434 = vmatpush2.msra.mxu0 %v6293
      %6435 = vmatprep.subr.mxu0 %v6285
      %6436 = vmatpush2.msra.mxu0 %v6284
      %6437 = vmatprep.subr.mxu0 %v6276
      %6438 = vmatpush2.msra.mxu0 %v6275
      %6439 = vmatprep.subr.mxu0 %v6267
      %6440 = vmatpush2.msra.mxu0 %v6266
      %6441 = vmatprep.subr.mxu0 %v6258
      %6442 = vmatpush2.msra.mxu0 %v6257
      %6443 = vmatprep.mubr.f32.mxu0 %v6340
      %6444 = vmatmul.mubr.f32.gmra.mxu0 %v6091
      %v6445 = vpop.f32.mrf.mxu0
      %v6446 = vadd.f32 0.0, %v6445
      %v6447 = vpop.f32.mrf.mxu0
      %v6448 = vadd.f32 0.0, %v6447
      %6449 = vmatprep.mubr.f32.mxu0 %v6343
      %6450 = vmatmul.mubr.f32.gmra.mxu0 %v6097
      %v6451 = vpop.f32.mrf.mxu0
      %v6452 = vadd.f32 0.0, %v6451
      %v6453 = vpop.f32.mrf.mxu0
      %v6454 = vadd.f32 0.0, %v6453
      %6455 = vmatprep.mubr.f32.mxu0 %v6346
      %6456 = vmatmul.mubr.f32.gmra.mxu0 %v6103
      %v6457 = vpop.f32.mrf.mxu0
      %v6458 = vadd.f32 0.0, %v6457
      %v6459 = vpop.f32.mrf.mxu0
      %v6460 = vadd.f32 0.0, %v6459
      %6461 = vmatprep.mubr.f32.mxu0 %v6349
      %6462 = vmatmul.mubr.f32.gmra.mxu0 %v6109
      %v6463 = vpop.f32.mrf.mxu0
      %v6464 = vpop.f32.mrf.mxu0
      %v6465 = vadd.f32 0.0, %v6464
      %6466 = vdwg.mxu0
      %6467 = vmatprep.subr.mxu0 %v6251
      %6468 = vmatpush1.msra.mxu0 %v6250
      %6469 = vmatprep.subr.mxu0 %v6242
      %6470 = vmatpush1.msra.mxu0 %v6241
      %6471 = vmatprep.subr.mxu0 %v6233
      %6472 = vmatpush1.msra.mxu0 %v6232
      %6473 = vmatprep.subr.mxu0 %v6224
      %6474 = vmatpush1.msra.mxu0 %v6223
      %6475 = vmatprep.subr.mxu0 %v6215
      %6476 = vmatpush1.msra.mxu0 %v6214
      %6477 = vmatprep.subr.mxu0 %v6206
      %6478 = vmatpush1.msra.mxu0 %v6205
      %6479 = vmatprep.subr.mxu0 %v6197
      %6480 = vmatpush1.msra.mxu0 %v6196
      %6481 = vmatprep.subr.mxu0 %v6188
      %6482 = vmatpush1.msra.mxu0 %v6187
      %6483 = vmatprep.subr.mxu0 %v6179
      %6484 = vmatpush1.msra.mxu0 %v6178
      %6485 = vmatprep.subr.mxu0 %v6170
      %6486 = vmatpush1.msra.mxu0 %v6169
      %6487 = vmatprep.subr.mxu0 %v6161
      %6488 = vmatpush1.msra.mxu0 %v6160
      %6489 = vmatprep.subr.mxu0 %v6152
      %6490 = vmatpush1.msra.mxu0 %v6151
      %6491 = vmatprep.subr.mxu0 %v6143
      %6492 = vmatpush1.msra.mxu0 %v6142
      %6493 = vmatprep.subr.mxu0 %v6134
      %6494 = vmatpush1.msra.mxu0 %v6133
      %6495 = vmatprep.subr.mxu0 %v6125
      %6496 = vmatpush1.msra.mxu0 %v6124
      %6497 = vmatprep.subr.mxu0 %v6116
      %6498 = vmatpush1.msra.mxu0 %v6115
      %6499 = vmatprep.subr.mxu0 0.0
      %6500 = vmatpush2.msra.mxu0 0.0
      %6501 = vmatprep.subr.mxu0 0.0
      %6502 = vmatpush2.msra.mxu0 0.0
      %6503 = vmatprep.subr.mxu0 0.0
      %6504 = vmatpush2.msra.mxu0 0.0
      %6505 = vmatprep.subr.mxu0 0.0
      %6506 = vmatpush2.msra.mxu0 0.0
      %6507 = vmatprep.subr.mxu0 0.0
      %6508 = vmatpush2.msra.mxu0 0.0
      %6509 = vmatprep.subr.mxu0 0.0
      %6510 = vmatpush2.msra.mxu0 0.0
      %6511 = vmatprep.subr.mxu0 0.0
      %6512 = vmatpush2.msra.mxu0 0.0
      %6513 = vmatprep.subr.mxu0 %v6362
      %6514 = vmatpush2.msra.mxu0 %v6359
      %6515 = vmatprep.subr.mxu0 %v6323
      %6516 = vmatpush2.msra.mxu0 %v6322
      %6517 = vmatprep.subr.mxu0 %v6314
      %6518 = vmatpush2.msra.mxu0 %v6313
      %6519 = vmatprep.subr.mxu0 %v6305
      %6520 = vmatpush2.msra.mxu0 %v6304
      %6521 = vmatprep.subr.mxu0 %v6296
      %6522 = vmatpush2.msra.mxu0 %v6295
      %6523 = vmatprep.subr.mxu0 %v6287
      %6524 = vmatpush2.msra.mxu0 %v6286
      %6525 = vmatprep.subr.mxu0 %v6278
      %6526 = vmatpush2.msra.mxu0 %v6277
      %6527 = vmatprep.subr.mxu0 %v6269
      %6528 = vmatpush2.msra.mxu0 %v6268
      %6529 = vmatprep.subr.mxu0 %v6260
      %6530 = vmatpush2.msra.mxu0 %v6259
      %6531 = vmatprep.mubr.f32.mxu0 %v6340
      %6532 = vmatmul.mubr.f32.gmra.mxu0 %v6091
      %v6533 = vpop.f32.mrf.mxu0
      %v6534 = vadd.f32 0.0, %v6533
      %v6535 = vpop.f32.mrf.mxu0
      %v6536 = vadd.f32 0.0, %v6535
      %6537 = vmatprep.mubr.f32.mxu0 %v6343
      %6538 = vmatmul.mubr.f32.gmra.mxu0 %v6097
      %v6539 = vpop.f32.mrf.mxu0
      %v6540 = vadd.f32 0.0, %v6539
      %v6541 = vpop.f32.mrf.mxu0
      %v6542 = vadd.f32 0.0, %v6541
      %6543 = vmatprep.mubr.f32.mxu0 %v6346
      %6544 = vmatmul.mubr.f32.gmra.mxu0 %v6103
      %v6545 = vpop.f32.mrf.mxu0
      %v6546 = vadd.f32 0.0, %v6545
      %v6547 = vpop.f32.mrf.mxu0
      %v6548 = vadd.f32 0.0, %v6547
      %6549 = vmatprep.mubr.f32.mxu0 %v6349
      %6550 = vmatmul.mubr.f32.gmra.mxu0 %v6109
      %v6551 = vpop.f32.mrf.mxu0
      %v6552 = vadd.f32 0.0, %v6551
      %v6553 = vpop.f32.mrf.mxu0
      %v6554 = vadd.f32 0.0, %v6553
      %6555 = vdwg.mxu0
      %6556 = vmatprep.subr.mxu0 %v6253
      %6557 = vmatpush1.msra.mxu0 %v6252
      %6558 = vmatprep.subr.mxu0 %v6244
      %6559 = vmatpush1.msra.mxu0 %v6243
      %6560 = vmatprep.subr.mxu0 %v6235
      %6561 = vmatpush1.msra.mxu0 %v6234
      %6562 = vmatprep.subr.mxu0 %v6226
      %6563 = vmatpush1.msra.mxu0 %v6225
      %6564 = vmatprep.subr.mxu0 %v6217
      %6565 = vmatpush1.msra.mxu0 %v6216
      %6566 = vmatprep.subr.mxu0 %v6208
      %6567 = vmatpush1.msra.mxu0 %v6207
      %6568 = vmatprep.subr.mxu0 %v6199
      %6569 = vmatpush1.msra.mxu0 %v6198
      %6570 = vmatprep.subr.mxu0 %v6190
      %6571 = vmatpush1.msra.mxu0 %v6189
      %6572 = vmatprep.subr.mxu0 %v6181
      %6573 = vmatpush1.msra.mxu0 %v6180
      %6574 = vmatprep.subr.mxu0 %v6172
      %6575 = vmatpush1.msra.mxu0 %v6171
      %6576 = vmatprep.subr.mxu0 %v6163
      %6577 = vmatpush1.msra.mxu0 %v6162
      %6578 = vmatprep.subr.mxu0 %v6154
      %6579 = vmatpush1.msra.mxu0 %v6153
      %6580 = vmatprep.subr.mxu0 %v6145
      %6581 = vmatpush1.msra.mxu0 %v6144
      %6582 = vmatprep.subr.mxu0 %v6136
      %6583 = vmatpush1.msra.mxu0 %v6135
      %6584 = vmatprep.subr.mxu0 %v6127
      %6585 = vmatpush1.msra.mxu0 %v6126
      %6586 = vmatprep.subr.mxu0 %v6118
      %6587 = vmatpush1.msra.mxu0 %v6117
      %6588 = vmatprep.subr.mxu0 0.0
      %6589 = vmatpush2.msra.mxu0 0.0
      %6590 = vmatprep.subr.mxu0 0.0
      %6591 = vmatpush2.msra.mxu0 0.0
      %6592 = vmatprep.subr.mxu0 0.0
      %6593 = vmatpush2.msra.mxu0 0.0
      %6594 = vmatprep.subr.mxu0 0.0
      %6595 = vmatpush2.msra.mxu0 0.0
      %6596 = vmatprep.subr.mxu0 0.0
      %6597 = vmatpush2.msra.mxu0 0.0
      %6598 = vmatprep.subr.mxu0 0.0
      %6599 = vmatpush2.msra.mxu0 0.0
      %6600 = vmatprep.subr.mxu0 0.0
      %6601 = vmatpush2.msra.mxu0 0.0
      %6602 = vmatprep.subr.mxu0 %v6368
      %6603 = vmatpush2.msra.mxu0 %v6365
      %6604 = vmatprep.subr.mxu0 %v6325
      %6605 = vmatpush2.msra.mxu0 %v6324
      %6606 = vmatprep.subr.mxu0 %v6316
      %6607 = vmatpush2.msra.mxu0 %v6315
      %6608 = vmatprep.subr.mxu0 %v6307
      %6609 = vmatpush2.msra.mxu0 %v6306
      %6610 = vmatprep.subr.mxu0 %v6298
      %6611 = vmatpush2.msra.mxu0 %v6297
      %6612 = vmatprep.subr.mxu0 %v6289
      %6613 = vmatpush2.msra.mxu0 %v6288
      %6614 = vmatprep.subr.mxu0 %v6280
      %6615 = vmatpush2.msra.mxu0 %v6279
      %6616 = vmatprep.subr.mxu0 %v6271
      %6617 = vmatpush2.msra.mxu0 %v6270
      %6618 = vmatprep.subr.mxu0 %v6262
      %6619 = vmatpush2.msra.mxu0 %v6261
      %6620 = vmatprep.mubr.f32.mxu0 %v6340
      %6621 = vmatmul.mubr.f32.gmra.mxu0 %v6091
      %v6622 = vpop.f32.mrf.mxu0
      %v6623 = vadd.f32 0.0, %v6622
      %v6624 = vpop.f32.mrf.mxu0
      %v6625 = vadd.f32 0.0, %v6624
      %6626 = vmatprep.mubr.f32.mxu0 %v6343
      %6627 = vmatmul.mubr.f32.gmra.mxu0 %v6097
      %v6628 = vpop.f32.mrf.mxu0
      %v6629 = vadd.f32 0.0, %v6628
      %v6630 = vpop.f32.mrf.mxu0
      %v6631 = vadd.f32 0.0, %v6630
      %6632 = vmatprep.mubr.f32.mxu0 %v6346
      %6633 = vmatmul.mubr.f32.gmra.mxu0 %v6103
      %v6634 = vpop.f32.mrf.mxu0
      %v6635 = vadd.f32 0.0, %v6634
      %v6636 = vpop.f32.mrf.mxu0
      %v6637 = vadd.f32 0.0, %v6636
      %6638 = vmatprep.mubr.f32.mxu0 %v6349
      %6639 = vmatmul.mubr.f32.gmra.mxu0 %v6109
      %v6640 = vpop.f32.mrf.mxu0
      %v6641 = vadd.f32 0.0, %v6640
      %v6642 = vpop.f32.mrf.mxu0
      %v6643 = vadd.f32 0.0, %v6642
      %6644 = vdwg.mxu0
      %6645 = vmatprep.subr.mxu0 %v6255
      %6646 = vmatpush1.msra.mxu0 %v6254
      %6647 = vmatprep.subr.mxu0 %v6246
      %6648 = vmatpush1.msra.mxu0 %v6245
      %6649 = vmatprep.subr.mxu0 %v6237
      %6650 = vmatpush1.msra.mxu0 %v6236
      %6651 = vmatprep.subr.mxu0 %v6228
      %6652 = vmatpush1.msra.mxu0 %v6227
      %6653 = vmatprep.subr.mxu0 %v6219
      %6654 = vmatpush1.msra.mxu0 %v6218
      %6655 = vmatprep.subr.mxu0 %v6210
      %6656 = vmatpush1.msra.mxu0 %v6209
      %6657 = vmatprep.subr.mxu0 %v6201
      %6658 = vmatpush1.msra.mxu0 %v6200
      %6659 = vmatprep.subr.mxu0 %v6192
      %6660 = vmatpush1.msra.mxu0 %v6191
      %6661 = vmatprep.subr.mxu0 %v6183
      %6662 = vmatpush1.msra.mxu0 %v6182
      %6663 = vmatprep.subr.mxu0 %v6174
      %6664 = vmatpush1.msra.mxu0 %v6173
      %6665 = vmatprep.subr.mxu0 %v6165
      %6666 = vmatpush1.msra.mxu0 %v6164
      %6667 = vmatprep.subr.mxu0 %v6156
      %6668 = vmatpush1.msra.mxu0 %v6155
      %6669 = vmatprep.subr.mxu0 %v6147
      %6670 = vmatpush1.msra.mxu0 %v6146
      %6671 = vmatprep.subr.mxu0 %v6138
      %6672 = vmatpush1.msra.mxu0 %v6137
      %6673 = vmatprep.subr.mxu0 %v6129
      %6674 = vmatpush1.msra.mxu0 %v6128
      %6675 = vmatprep.subr.mxu0 %v6120
      %6676 = vmatpush1.msra.mxu0 %v6119
      %6677 = vmatprep.subr.mxu0 0.0
      %6678 = vmatpush2.msra.mxu0 0.0
      %6679 = vmatprep.subr.mxu0 0.0
      %6680 = vmatpush2.msra.mxu0 0.0
      %6681 = vmatprep.subr.mxu0 0.0
      %6682 = vmatpush2.msra.mxu0 0.0
      %6683 = vmatprep.subr.mxu0 0.0
      %6684 = vmatpush2.msra.mxu0 0.0
      %6685 = vmatprep.subr.mxu0 0.0
      %6686 = vmatpush2.msra.mxu0 0.0
      %6687 = vmatprep.subr.mxu0 0.0
      %6688 = vmatpush2.msra.mxu0 0.0
      %6689 = vmatprep.subr.mxu0 0.0
      %6690 = vmatpush2.msra.mxu0 0.0
      %6691 = vmatprep.subr.mxu0 %v6374
      %6692 = vmatpush2.msra.mxu0 %v6371
      %6693 = vmatprep.subr.mxu0 %v6327
      %6694 = vmatpush2.msra.mxu0 %v6326
      %6695 = vmatprep.subr.mxu0 %v6318
      %6696 = vmatpush2.msra.mxu0 %v6317
      %6697 = vmatprep.subr.mxu0 %v6309
      %6698 = vmatpush2.msra.mxu0 %v6308
      %6699 = vmatprep.subr.mxu0 %v6300
      %6700 = vmatpush2.msra.mxu0 %v6299
      %6701 = vmatprep.subr.mxu0 %v6291
      %6702 = vmatpush2.msra.mxu0 %v6290
      %6703 = vmatprep.subr.mxu0 %v6282
      %6704 = vmatpush2.msra.mxu0 %v6281
      %6705 = vmatprep.subr.mxu0 %v6273
      %6706 = vmatpush2.msra.mxu0 %v6272
      %6707 = vmatprep.subr.mxu0 %v6264
      %6708 = vmatpush2.msra.mxu0 %v6263
      %6709 = vmatprep.mubr.f32.mxu0 %v6340
      %6710 = vmatmul.mubr.f32.gmra.mxu0 %v6091
      %v6711 = vpop.f32.mrf.mxu0
      %v6712 = vadd.f32 0.0, %v6711
      %v6713 = vpop.f32.mrf.mxu0
      %v6714 = vadd.f32 0.0, %v6713
      %6715 = vmatprep.mubr.f32.mxu0 %v6343
      %6716 = vmatmul.mubr.f32.gmra.mxu0 %v6097
      %v6717 = vpop.f32.mrf.mxu0
      %v6718 = vadd.f32 0.0, %v6717
      %v6719 = vpop.f32.mrf.mxu0
      %v6720 = vadd.f32 0.0, %v6719
      %6721 = vmatprep.mubr.f32.mxu0 %v6346
      %6722 = vmatmul.mubr.f32.gmra.mxu0 %v6103
      %v6723 = vpop.f32.mrf.mxu0
      %v6724 = vadd.f32 0.0, %v6723
      %v6725 = vpop.f32.mrf.mxu0
      %v6726 = vadd.f32 0.0, %v6725
      %6727 = vmatprep.mubr.f32.mxu0 %v6349
      %6728 = vmatmul.mubr.f32.gmra.mxu0 %v6109
      %v6729 = vpop.f32.mrf.mxu0
      %v6730 = vadd.f32 0.0, %v6729
      %v6731 = vpop.f32.mrf.mxu0
      %v6732 = vadd.f32 0.0, %v6731
      %6733 = vdwg.mxu0
      %6734 = vmatprep.subr.mxu0 0.0
      %6735 = vmatpush1.msra.mxu0 %v6256
      %6736 = vmatprep.subr.mxu0 0.0
      %6737 = vmatpush1.msra.mxu0 %v6247
      %6738 = vmatprep.subr.mxu0 0.0
      %6739 = vmatpush1.msra.mxu0 %v6238
      %6740 = vmatprep.subr.mxu0 0.0
      %6741 = vmatpush1.msra.mxu0 %v6229
      %6742 = vmatprep.subr.mxu0 0.0
      %6743 = vmatpush1.msra.mxu0 %v6220
      %6744 = vmatprep.subr.mxu0 0.0
      %6745 = vmatpush1.msra.mxu0 %v6211
      %6746 = vmatprep.subr.mxu0 0.0
      %6747 = vmatpush1.msra.mxu0 %v6202
      %6748 = vmatprep.subr.mxu0 0.0
      %6749 = vmatpush1.msra.mxu0 %v6193
      %6750 = vmatprep.subr.mxu0 0.0
      %6751 = vmatpush1.msra.mxu0 %v6184
      %6752 = vmatprep.subr.mxu0 0.0
      %6753 = vmatpush1.msra.mxu0 %v6175
      %6754 = vmatprep.subr.mxu0 0.0
      %6755 = vmatpush1.msra.mxu0 %v6166
      %6756 = vmatprep.subr.mxu0 0.0
      %6757 = vmatpush1.msra.mxu0 %v6157
      %6758 = vmatprep.subr.mxu0 0.0
      %6759 = vmatpush1.msra.mxu0 %v6148
      %6760 = vmatprep.subr.mxu0 0.0
      %6761 = vmatpush1.msra.mxu0 %v6139
      %6762 = vmatprep.subr.mxu0 0.0
      %6763 = vmatpush1.msra.mxu0 %v6130
      %6764 = vmatprep.subr.mxu0 0.0
      %6765 = vmatpush1.msra.mxu0 %v6121
      %6766 = vmatprep.subr.mxu0 0.0
      %6767 = vmatpush2.msra.mxu0 0.0
      %6768 = vmatprep.subr.mxu0 0.0
      %6769 = vmatpush2.msra.mxu0 0.0
      %6770 = vmatprep.subr.mxu0 0.0
      %6771 = vmatpush2.msra.mxu0 0.0
      %6772 = vmatprep.subr.mxu0 0.0
      %6773 = vmatpush2.msra.mxu0 0.0
      %6774 = vmatprep.subr.mxu0 0.0
      %6775 = vmatpush2.msra.mxu0 0.0
      %6776 = vmatprep.subr.mxu0 0.0
      %6777 = vmatpush2.msra.mxu0 0.0
      %6778 = vmatprep.subr.mxu0 0.0
      %6779 = vmatpush2.msra.mxu0 0.0
      %6780 = vmatprep.subr.mxu0 0.0
      %6781 = vmatpush2.msra.mxu0 %v6377
      %6782 = vmatprep.subr.mxu0 0.0
      %6783 = vmatpush2.msra.mxu0 %v6328
      %6784 = vmatprep.subr.mxu0 0.0
      %6785 = vmatpush2.msra.mxu0 %v6319
      %6786 = vmatprep.subr.mxu0 0.0
      %6787 = vmatpush2.msra.mxu0 %v6310
      %6788 = vmatprep.subr.mxu0 0.0
      %6789 = vmatpush2.msra.mxu0 %v6301
      %6790 = vmatprep.subr.mxu0 0.0
      %6791 = vmatpush2.msra.mxu0 %v6292
      %6792 = vmatprep.subr.mxu0 0.0
      %6793 = vmatpush2.msra.mxu0 %v6283
      %6794 = vmatprep.subr.mxu0 0.0
      %6795 = vmatpush2.msra.mxu0 %v6274
      %6796 = vmatprep.subr.mxu0 0.0
      %6797 = vmatpush2.msra.mxu0 %v6265
      %6798 = vmatprep.mubr.f32.mxu0 %v6340
      %6799 = vmatmul.mubr.f32.gmra.mxu0 %v6091
      %v6800 = vpop.f32.mrf.mxu0
      %v6801 = vpop.f32.mrf.mxu0
      %6802 = vmatprep.mubr.f32.mxu0 %v6343
      %6803 = vmatmul.mubr.f32.gmra.mxu0 %v6097
      %v6804 = vpop.f32.mrf.mxu0
      %v6805 = vpop.f32.mrf.mxu0
      %6806 = vmatprep.mubr.f32.mxu0 %v6346
      %6807 = vmatmul.mubr.f32.gmra.mxu0 %v6103
      %v6808 = vpop.f32.mrf.mxu0
      %v6809 = vadd.f32 0.0, %v6808
      %v6810 = vpop.f32.mrf.mxu0
      %6811 = vmatprep.mubr.f32.mxu0 %v6349
      %6812 = vmatmul.mubr.f32.gmra.mxu0 %v6109
      %v6813 = vpop.f32.mrf.mxu0
      %v6814 = vadd.f32 0.0, %v6813
      %v6815 = vpop.f32.mrf.mxu0
      %6816 = vdwg.mxu0
      %v6817 = vld [vmem:[#allocation2] sm:$0x1]
      %6819 = vset.pattern.permute.xlu0 0
      %6820 = vperm.xlu0 %6819, %v6817
      %v6821 = vpop.permute.xlu0 %6820
      %v6823 = vlaneseq
      %v6824 = vshrl.u32 %v6823, 7
      %v6825 = vsub.s32 0, %v6824
      %v6826 = vrot.slane %v6821, %v6825
      %v6827 = vadd.f32 %v6826, %v6446
      %v6828 = vadd.f32 %v6826, %v6448
      %v6829 = vadd.f32 %v6826, %v6534
      %v6830 = vadd.f32 %v6826, %v6536
      %v6831 = vadd.f32 %v6826, %v6623
      %v6832 = vadd.f32 %v6826, %v6625
      %v6833 = vadd.f32 %v6826, %v6712
      %v6842 = vrot.slane %v6446, 1
      %v6843 = vrot.slane %v6448, 1
      %v6844 = vrot.slane %v6534, 1
      %v6845 = vrot.slane %v6536, 1
      %v6846 = vrot.slane %v6623, 1
      %v6847 = vrot.slane %v6625, 1
      %v6848 = vrot.slane %v6712, 1
      %v6849 = vrot.slane %v6714, 1
      %6850 = vrot.lane.b32.xlu0 %v6842, 127
      %v6851 = vpop.permute.xlu0 %6850
      %6852 = vrot.lane.b32.xlu0 %v6843, 127
      %v6853 = vpop.permute.xlu0 %6852
      %6854 = vrot.lane.b32.xlu0 %v6844, 127
      %v6855 = vpop.permute.xlu0 %6854
      %6856 = vrot.lane.b32.xlu0 %v6845, 127
      %v6857 = vpop.permute.xlu0 %6856
      %6858 = vrot.lane.b32.xlu0 %v6846, 127
      %v6859 = vpop.permute.xlu0 %6858
      %6860 = vrot.lane.b32.xlu0 %v6847, 127
      %v6861 = vpop.permute.xlu0 %6860
      %6862 = vrot.lane.b32.xlu0 %v6848, 127
      %v6863 = vpop.permute.xlu0 %6862
      %6864 = vrot.lane.b32.xlu0 %v6849, 127
      %v6865 = vpop.permute.xlu0 %6864
      %vm6866 = vcmask 1039360
      %v6867 = vsel %vm6866, %v6851, %v6853
      %v6868 = vsel %vm6866, %v6853, %v6855
      %v6869 = vsel %vm6866, %v6855, %v6857
      %v6870 = vsel %vm6866, %v6857, %v6859
      %v6871 = vsel %vm6866, %v6859, %v6861
      %v6872 = vsel %vm6866, %v6861, %v6863
      %v6873 = vsel %vm6866, %v6863, %v6865
      %v6881 = vadd.f32 %v6827, %v6867
      %v6882 = vadd.f32 %v6828, %v6868
      %v6883 = vadd.f32 %v6829, %v6869
      %v6884 = vadd.f32 %v6830, %v6870
      %v6885 = vadd.f32 %v6831, %v6871
      %v6886 = vadd.f32 %v6832, %v6872
      %v6887 = vadd.f32 %v6833, %v6873
      %v6888 = vrot.slane %v6446, 2
      %v6889 = vrot.slane %v6448, 2
      %v6890 = vrot.slane %v6534, 2
      %v6891 = vrot.slane %v6536, 2
      %v6892 = vrot.slane %v6623, 2
      %v6893 = vrot.slane %v6625, 2
      %v6894 = vrot.slane %v6712, 2
      %v6895 = vrot.slane %v6714, 2
      %6896 = vrot.lane.b32.xlu0 %v6888, 126
      %v6897 = vpop.permute.xlu0 %6896
      %6898 = vrot.lane.b32.xlu0 %v6889, 126
      %v6899 = vpop.permute.xlu0 %6898
      %6900 = vrot.lane.b32.xlu0 %v6890, 126
      %v6901 = vpop.permute.xlu0 %6900
      %6902 = vrot.lane.b32.xlu0 %v6891, 126
      %v6903 = vpop.permute.xlu0 %6902
      %6904 = vrot.lane.b32.xlu0 %v6892, 126
      %v6905 = vpop.permute.xlu0 %6904
      %6906 = vrot.lane.b32.xlu0 %v6893, 126
      %v6907 = vpop.permute.xlu0 %6906
      %6908 = vrot.lane.b32.xlu0 %v6894, 126
      %v6909 = vpop.permute.xlu0 %6908
      %6910 = vrot.lane.b32.xlu0 %v6895, 126
      %v6911 = vpop.permute.xlu0 %6910
      %vm6912 = vcmask 1031168
      %v6913 = vsel %vm6912, %v6897, %v6899
      %v6914 = vsel %vm6912, %v6899, %v6901
      %v6915 = vsel %vm6912, %v6901, %v6903
      %v6916 = vsel %vm6912, %v6903, %v6905
      %v6917 = vsel %vm6912, %v6905, %v6907
      %v6918 = vsel %vm6912, %v6907, %v6909
      %v6919 = vsel %vm6912, %v6909, %v6911
      %v6927 = vadd.f32 %v6881, %v6913
      %v6928 = vadd.f32 %v6882, %v6914
      %v6929 = vadd.f32 %v6883, %v6915
      %v6930 = vadd.f32 %v6884, %v6916
      %v6931 = vadd.f32 %v6885, %v6917
      %v6932 = vadd.f32 %v6886, %v6918
      %v6933 = vadd.f32 %v6887, %v6919
      %v6934 = vrot.slane %v6446, 3
      %v6935 = vrot.slane %v6448, 3
      %v6936 = vrot.slane %v6534, 3
      %v6937 = vrot.slane %v6536, 3
      %v6938 = vrot.slane %v6623, 3
      %v6939 = vrot.slane %v6625, 3
      %v6940 = vrot.slane %v6712, 3
      %v6941 = vrot.slane %v6714, 3
      %6942 = vrot.lane.b32.xlu0 %v6934, 125
      %v6943 = vpop.permute.xlu0 %6942
      %6944 = vrot.lane.b32.xlu0 %v6935, 125
      %v6945 = vpop.permute.xlu0 %6944
      %6946 = vrot.lane.b32.xlu0 %v6936, 125
      %v6947 = vpop.permute.xlu0 %6946
      %6948 = vrot.lane.b32.xlu0 %v6937, 125
      %v6949 = vpop.permute.xlu0 %6948
      %6950 = vrot.lane.b32.xlu0 %v6938, 125
      %v6951 = vpop.permute.xlu0 %6950
      %6952 = vrot.lane.b32.xlu0 %v6939, 125
      %v6953 = vpop.permute.xlu0 %6952
      %6954 = vrot.lane.b32.xlu0 %v6940, 125
      %v6955 = vpop.permute.xlu0 %6954
      %6956 = vrot.lane.b32.xlu0 %v6941, 125
      %v6957 = vpop.permute.xlu0 %6956
      %vm6958 = vcmask 1022976
      %v6959 = vsel %vm6958, %v6943, %v6945
      %v6960 = vsel %vm6958, %v6945, %v6947
      %v6961 = vsel %vm6958, %v6947, %v6949
      %v6962 = vsel %vm6958, %v6949, %v6951
      %v6963 = vsel %vm6958, %v6951, %v6953
      %v6964 = vsel %vm6958, %v6953, %v6955
      %v6965 = vsel %vm6958, %v6955, %v6957
      %v6973 = vadd.f32 %v6927, %v6959
      %v6974 = vadd.f32 %v6928, %v6960
      %v6975 = vadd.f32 %v6929, %v6961
      %v6976 = vadd.f32 %v6930, %v6962
      %v6977 = vadd.f32 %v6931, %v6963
      %v6978 = vadd.f32 %v6932, %v6964
      %v6979 = vadd.f32 %v6933, %v6965
      %v6980 = vrot.slane %v6446, 4
      %v6981 = vrot.slane %v6448, 4
      %v6982 = vrot.slane %v6534, 4
      %v6983 = vrot.slane %v6536, 4
      %v6984 = vrot.slane %v6623, 4
      %v6985 = vrot.slane %v6625, 4
      %v6986 = vrot.slane %v6712, 4
      %v6987 = vrot.slane %v6714, 4
      %6988 = vrot.lane.b32.xlu0 %v6980, 124
      %v6989 = vpop.permute.xlu0 %6988
      %6990 = vrot.lane.b32.xlu0 %v6981, 124
      %v6991 = vpop.permute.xlu0 %6990
      %6992 = vrot.lane.b32.xlu0 %v6982, 124
      %v6993 = vpop.permute.xlu0 %6992
      %6994 = vrot.lane.b32.xlu0 %v6983, 124
      %v6995 = vpop.permute.xlu0 %6994
      %6996 = vrot.lane.b32.xlu0 %v6984, 124
      %v6997 = vpop.permute.xlu0 %6996
      %6998 = vrot.lane.b32.xlu0 %v6985, 124
      %v6999 = vpop.permute.xlu0 %6998
      %7000 = vrot.lane.b32.xlu0 %v6986, 124
      %v7001 = vpop.permute.xlu0 %7000
      %7002 = vrot.lane.b32.xlu0 %v6987, 124
      %v7003 = vpop.permute.xlu0 %7002
      %vm7004 = vcmask 1014784
      %v7005 = vsel %vm7004, %v6989, %v6991
      %v7006 = vsel %vm7004, %v6991, %v6993
      %v7007 = vsel %vm7004, %v6993, %v6995
      %v7008 = vsel %vm7004, %v6995, %v6997
      %v7009 = vsel %vm7004, %v6997, %v6999
      %v7010 = vsel %vm7004, %v6999, %v7001
      %v7011 = vsel %vm7004, %v7001, %v7003
      %v7019 = vadd.f32 %v6973, %v7005
      %v7020 = vadd.f32 %v6974, %v7006
      %v7021 = vadd.f32 %v6975, %v7007
      %v7022 = vadd.f32 %v6976, %v7008
      %v7023 = vadd.f32 %v6977, %v7009
      %v7024 = vadd.f32 %v6978, %v7010
      %v7025 = vadd.f32 %v6979, %v7011
      %v7026 = vrot.slane %v6446, 5
      %v7027 = vrot.slane %v6448, 5
      %v7028 = vrot.slane %v6534, 5
      %v7029 = vrot.slane %v6536, 5
      %v7030 = vrot.slane %v6623, 5
      %v7031 = vrot.slane %v6625, 5
      %v7032 = vrot.slane %v6712, 5
      %v7033 = vrot.slane %v6714, 5
      %7034 = vrot.lane.b32.xlu0 %v7026, 96
      %v7035 = vpop.permute.xlu0 %7034
      %7036 = vrot.lane.b32.xlu0 %v7027, 96
      %v7037 = vpop.permute.xlu0 %7036
      %7038 = vrot.lane.b32.xlu0 %v7028, 96
      %v7039 = vpop.permute.xlu0 %7038
      %7040 = vrot.lane.b32.xlu0 %v7029, 96
      %v7041 = vpop.permute.xlu0 %7040
      %7042 = vrot.lane.b32.xlu0 %v7030, 96
      %v7043 = vpop.permute.xlu0 %7042
      %7044 = vrot.lane.b32.xlu0 %v7031, 96
      %v7045 = vpop.permute.xlu0 %7044
      %7046 = vrot.lane.b32.xlu0 %v7032, 96
      %v7047 = vpop.permute.xlu0 %7046
      %7048 = vrot.lane.b32.xlu0 %v7033, 96
      %v7049 = vpop.permute.xlu0 %7048
      %vm7050 = vcmask 785408
      %v7051 = vsel %vm7050, %v7035, %v7037
      %v7052 = vsel %vm7050, %v7037, %v7039
      %v7053 = vsel %vm7050, %v7039, %v7041
      %v7054 = vsel %vm7050, %v7041, %v7043
      %v7055 = vsel %vm7050, %v7043, %v7045
      %v7056 = vsel %vm7050, %v7045, %v7047
      %v7057 = vsel %vm7050, %v7047, %v7049
      %v7065 = vadd.f32 %v7019, %v7051
      %v7066 = vadd.f32 %v7020, %v7052
      %v7067 = vadd.f32 %v7021, %v7053
      %v7068 = vadd.f32 %v7022, %v7054
      %v7069 = vadd.f32 %v7023, %v7055
      %v7070 = vadd.f32 %v7024, %v7056
      %v7071 = vadd.f32 %v7025, %v7057
      %v7072 = vrot.slane %v6446, 6
      %v7073 = vrot.slane %v6448, 6
      %v7074 = vrot.slane %v6534, 6
      %v7075 = vrot.slane %v6536, 6
      %v7076 = vrot.slane %v6623, 6
      %v7077 = vrot.slane %v6625, 6
      %v7078 = vrot.slane %v6712, 6
      %v7079 = vrot.slane %v6714, 6
      %7080 = vrot.lane.b32.xlu0 %v7072, 95
      %v7081 = vpop.permute.xlu0 %7080
      %7082 = vrot.lane.b32.xlu0 %v7073, 95
      %v7083 = vpop.permute.xlu0 %7082
      %7084 = vrot.lane.b32.xlu0 %v7074, 95
      %v7085 = vpop.permute.xlu0 %7084
      %7086 = vrot.lane.b32.xlu0 %v7075, 95
      %v7087 = vpop.permute.xlu0 %7086
      %7088 = vrot.lane.b32.xlu0 %v7076, 95
      %v7089 = vpop.permute.xlu0 %7088
      %7090 = vrot.lane.b32.xlu0 %v7077, 95
      %v7091 = vpop.permute.xlu0 %7090
      %7092 = vrot.lane.b32.xlu0 %v7078, 95
      %v7093 = vpop.permute.xlu0 %7092
      %7094 = vrot.lane.b32.xlu0 %v7079, 95
      %v7095 = vpop.permute.xlu0 %7094
      %vm7096 = vcmask 777216
      %v7097 = vsel %vm7096, %v7081, %v7083
      %v7098 = vsel %vm7096, %v7083, %v7085
      %v7099 = vsel %vm7096, %v7085, %v7087
      %v7100 = vsel %vm7096, %v7087, %v7089
      %v7101 = vsel %vm7096, %v7089, %v7091
      %v7102 = vsel %vm7096, %v7091, %v7093
      %v7103 = vsel %vm7096, %v7093, %v7095
      %v7111 = vadd.f32 %v7065, %v7097
      %v7112 = vadd.f32 %v7066, %v7098
      %v7113 = vadd.f32 %v7067, %v7099
      %v7114 = vadd.f32 %v7068, %v7100
      %v7115 = vadd.f32 %v7069, %v7101
      %v7116 = vadd.f32 %v7070, %v7102
      %v7117 = vadd.f32 %v7071, %v7103
      %v7118 = vrot.slane %v6446, 7
      %v7119 = vrot.slane %v6448, 7
      %v7120 = vrot.slane %v6534, 7
      %v7121 = vrot.slane %v6536, 7
      %v7122 = vrot.slane %v6623, 7
      %v7123 = vrot.slane %v6625, 7
      %v7124 = vrot.slane %v6712, 7
      %v7125 = vrot.slane %v6714, 7
      %7126 = vrot.lane.b32.xlu0 %v7118, 94
      %v7127 = vpop.permute.xlu0 %7126
      %7128 = vrot.lane.b32.xlu0 %v7119, 94
      %v7129 = vpop.permute.xlu0 %7128
      %7130 = vrot.lane.b32.xlu0 %v7120, 94
      %v7131 = vpop.permute.xlu0 %7130
      %7132 = vrot.lane.b32.xlu0 %v7121, 94
      %v7133 = vpop.permute.xlu0 %7132
      %7134 = vrot.lane.b32.xlu0 %v7122, 94
      %v7135 = vpop.permute.xlu0 %7134
      %7136 = vrot.lane.b32.xlu0 %v7123, 94
      %v7137 = vpop.permute.xlu0 %7136
      %7138 = vrot.lane.b32.xlu0 %v7124, 94
      %v7139 = vpop.permute.xlu0 %7138
      %7140 = vrot.lane.b32.xlu0 %v7125, 94
      %v7141 = vpop.permute.xlu0 %7140
      %vm7142 = vcmask 769024
      %v7143 = vsel %vm7142, %v7127, %v7129
      %v7144 = vsel %vm7142, %v7129, %v7131
      %v7145 = vsel %vm7142, %v7131, %v7133
      %v7146 = vsel %vm7142, %v7133, %v7135
      %v7147 = vsel %vm7142, %v7135, %v7137
      %v7148 = vsel %vm7142, %v7137, %v7139
      %v7149 = vsel %vm7142, %v7139, %v7141
      %v7157 = vadd.f32 %v7111, %v7143
      %v7158 = vadd.f32 %v7112, %v7144
      %v7159 = vadd.f32 %v7113, %v7145
      %v7160 = vadd.f32 %v7114, %v7146
      %v7161 = vadd.f32 %v7115, %v7147
      %v7162 = vadd.f32 %v7116, %v7148
      %v7163 = vadd.f32 %v7117, %v7149
      %7172 = vrot.lane.b32.xlu0 %v6452, 93
      %v7173 = vpop.permute.xlu0 %7172
      %7174 = vrot.lane.b32.xlu0 %v6454, 93
      %v7175 = vpop.permute.xlu0 %7174
      %7176 = vrot.lane.b32.xlu0 %v6540, 93
      %v7177 = vpop.permute.xlu0 %7176
      %7178 = vrot.lane.b32.xlu0 %v6542, 93
      %v7179 = vpop.permute.xlu0 %7178
      %7180 = vrot.lane.b32.xlu0 %v6629, 93
      %v7181 = vpop.permute.xlu0 %7180
      %7182 = vrot.lane.b32.xlu0 %v6631, 93
      %v7183 = vpop.permute.xlu0 %7182
      %7184 = vrot.lane.b32.xlu0 %v6718, 93
      %v7185 = vpop.permute.xlu0 %7184
      %7186 = vrot.lane.b32.xlu0 %v6720, 93
      %v7187 = vpop.permute.xlu0 %7186
      %vm7188 = vcmask 760832
      %v7189 = vsel %vm7188, %v7173, %v7175
      %v7190 = vsel %vm7188, %v7175, %v7177
      %v7191 = vsel %vm7188, %v7177, %v7179
      %v7192 = vsel %vm7188, %v7179, %v7181
      %v7193 = vsel %vm7188, %v7181, %v7183
      %v7194 = vsel %vm7188, %v7183, %v7185
      %v7195 = vsel %vm7188, %v7185, %v7187
      %v7203 = vadd.f32 %v7157, %v7189
      %v7204 = vadd.f32 %v7158, %v7190
      %v7205 = vadd.f32 %v7159, %v7191
      %v7206 = vadd.f32 %v7160, %v7192
      %v7207 = vadd.f32 %v7161, %v7193
      %v7208 = vadd.f32 %v7162, %v7194
      %v7209 = vadd.f32 %v7163, %v7195
      %v7210 = vrot.slane %v6452, 1
      %v7211 = vrot.slane %v6454, 1
      %v7212 = vrot.slane %v6540, 1
      %v7213 = vrot.slane %v6542, 1
      %v7214 = vrot.slane %v6629, 1
      %v7215 = vrot.slane %v6631, 1
      %v7216 = vrot.slane %v6718, 1
      %v7217 = vrot.slane %v6720, 1
      %7218 = vrot.lane.b32.xlu0 %v7210, 92
      %v7219 = vpop.permute.xlu0 %7218
      %7220 = vrot.lane.b32.xlu0 %v7211, 92
      %v7221 = vpop.permute.xlu0 %7220
      %7222 = vrot.lane.b32.xlu0 %v7212, 92
      %v7223 = vpop.permute.xlu0 %7222
      %7224 = vrot.lane.b32.xlu0 %v7213, 92
      %v7225 = vpop.permute.xlu0 %7224
      %7226 = vrot.lane.b32.xlu0 %v7214, 92
      %v7227 = vpop.permute.xlu0 %7226
      %7228 = vrot.lane.b32.xlu0 %v7215, 92
      %v7229 = vpop.permute.xlu0 %7228
      %7230 = vrot.lane.b32.xlu0 %v7216, 92
      %v7231 = vpop.permute.xlu0 %7230
      %7232 = vrot.lane.b32.xlu0 %v7217, 92
      %v7233 = vpop.permute.xlu0 %7232
      %vm7234 = vcmask 752640
      %v7235 = vsel %vm7234, %v7219, %v7221
      %v7236 = vsel %vm7234, %v7221, %v7223
      %v7237 = vsel %vm7234, %v7223, %v7225
      %v7238 = vsel %vm7234, %v7225, %v7227
      %v7239 = vsel %vm7234, %v7227, %v7229
      %v7240 = vsel %vm7234, %v7229, %v7231
      %v7241 = vsel %vm7234, %v7231, %v7233
      %v7249 = vadd.f32 %v7203, %v7235
      %v7250 = vadd.f32 %v7204, %v7236
      %v7251 = vadd.f32 %v7205, %v7237
      %v7252 = vadd.f32 %v7206, %v7238
      %v7253 = vadd.f32 %v7207, %v7239
      %v7254 = vadd.f32 %v7208, %v7240
      %v7255 = vadd.f32 %v7209, %v7241
      %v7256 = vrot.slane %v6452, 2
      %v7257 = vrot.slane %v6454, 2
      %v7258 = vrot.slane %v6540, 2
      %v7259 = vrot.slane %v6542, 2
      %v7260 = vrot.slane %v6629, 2
      %v7261 = vrot.slane %v6631, 2
      %v7262 = vrot.slane %v6718, 2
      %v7263 = vrot.slane %v6720, 2
      %7264 = vrot.lane.b32.xlu0 %v7256, 64
      %v7265 = vpop.permute.xlu0 %7264
      %7266 = vrot.lane.b32.xlu0 %v7257, 64
      %v7267 = vpop.permute.xlu0 %7266
      %7268 = vrot.lane.b32.xlu0 %v7258, 64
      %v7269 = vpop.permute.xlu0 %7268
      %7270 = vrot.lane.b32.xlu0 %v7259, 64
      %v7271 = vpop.permute.xlu0 %7270
      %7272 = vrot.lane.b32.xlu0 %v7260, 64
      %v7273 = vpop.permute.xlu0 %7272
      %7274 = vrot.lane.b32.xlu0 %v7261, 64
      %v7275 = vpop.permute.xlu0 %7274
      %7276 = vrot.lane.b32.xlu0 %v7262, 64
      %v7277 = vpop.permute.xlu0 %7276
      %7278 = vrot.lane.b32.xlu0 %v7263, 64
      %v7279 = vpop.permute.xlu0 %7278
      %v7280 = vsel %vm6011, %v7265, %v7267
      %v7281 = vsel %vm6011, %v7267, %v7269
      %v7282 = vsel %vm6011, %v7269, %v7271
      %v7283 = vsel %vm6011, %v7271, %v7273
      %v7284 = vsel %vm6011, %v7273, %v7275
      %v7285 = vsel %vm6011, %v7275, %v7277
      %v7286 = vsel %vm6011, %v7277, %v7279
      %v7294 = vadd.f32 %v7249, %v7280
      %v7295 = vadd.f32 %v7250, %v7281
      %v7296 = vadd.f32 %v7251, %v7282
      %v7297 = vadd.f32 %v7252, %v7283
      %v7298 = vadd.f32 %v7253, %v7284
      %v7299 = vadd.f32 %v7254, %v7285
      %v7300 = vadd.f32 %v7255, %v7286
      %v7301 = vrot.slane %v6452, 3
      %v7302 = vrot.slane %v6454, 3
      %v7303 = vrot.slane %v6540, 3
      %v7304 = vrot.slane %v6542, 3
      %v7305 = vrot.slane %v6629, 3
      %v7306 = vrot.slane %v6631, 3
      %v7307 = vrot.slane %v6718, 3
      %v7308 = vrot.slane %v6720, 3
      %7309 = vrot.lane.b32.xlu0 %v7301, 63
      %v7310 = vpop.permute.xlu0 %7309
      %7311 = vrot.lane.b32.xlu0 %v7302, 63
      %v7312 = vpop.permute.xlu0 %7311
      %7313 = vrot.lane.b32.xlu0 %v7303, 63
      %v7314 = vpop.permute.xlu0 %7313
      %7315 = vrot.lane.b32.xlu0 %v7304, 63
      %v7316 = vpop.permute.xlu0 %7315
      %7317 = vrot.lane.b32.xlu0 %v7305, 63
      %v7318 = vpop.permute.xlu0 %7317
      %7319 = vrot.lane.b32.xlu0 %v7306, 63
      %v7320 = vpop.permute.xlu0 %7319
      %7321 = vrot.lane.b32.xlu0 %v7307, 63
      %v7322 = vpop.permute.xlu0 %7321
      %7323 = vrot.lane.b32.xlu0 %v7308, 63
      %v7324 = vpop.permute.xlu0 %7323
      %vm7325 = vcmask 515072
      %v7326 = vsel %vm7325, %v7310, %v7312
      %v7327 = vsel %vm7325, %v7312, %v7314
      %v7328 = vsel %vm7325, %v7314, %v7316
      %v7329 = vsel %vm7325, %v7316, %v7318
      %v7330 = vsel %vm7325, %v7318, %v7320
      %v7331 = vsel %vm7325, %v7320, %v7322
      %v7332 = vsel %vm7325, %v7322, %v7324
      %v7340 = vadd.f32 %v7294, %v7326
      %v7341 = vadd.f32 %v7295, %v7327
      %v7342 = vadd.f32 %v7296, %v7328
      %v7343 = vadd.f32 %v7297, %v7329
      %v7344 = vadd.f32 %v7298, %v7330
      %v7345 = vadd.f32 %v7299, %v7331
      %v7346 = vadd.f32 %v7300, %v7332
      %v7347 = vrot.slane %v6452, 4
      %v7348 = vrot.slane %v6454, 4
      %v7349 = vrot.slane %v6540, 4
      %v7350 = vrot.slane %v6542, 4
      %v7351 = vrot.slane %v6629, 4
      %v7352 = vrot.slane %v6631, 4
      %v7353 = vrot.slane %v6718, 4
      %v7354 = vrot.slane %v6720, 4
      %7355 = vrot.lane.b32.xlu0 %v7347, 62
      %v7356 = vpop.permute.xlu0 %7355
      %7357 = vrot.lane.b32.xlu0 %v7348, 62
      %v7358 = vpop.permute.xlu0 %7357
      %7359 = vrot.lane.b32.xlu0 %v7349, 62
      %v7360 = vpop.permute.xlu0 %7359
      %7361 = vrot.lane.b32.xlu0 %v7350, 62
      %v7362 = vpop.permute.xlu0 %7361
      %7363 = vrot.lane.b32.xlu0 %v7351, 62
      %v7364 = vpop.permute.xlu0 %7363
      %7365 = vrot.lane.b32.xlu0 %v7352, 62
      %v7366 = vpop.permute.xlu0 %7365
      %7367 = vrot.lane.b32.xlu0 %v7353, 62
      %v7368 = vpop.permute.xlu0 %7367
      %7369 = vrot.lane.b32.xlu0 %v7354, 62
      %v7370 = vpop.permute.xlu0 %7369
      %vm7371 = vcmask 506880
      %v7372 = vsel %vm7371, %v7356, %v7358
      %v7373 = vsel %vm7371, %v7358, %v7360
      %v7374 = vsel %vm7371, %v7360, %v7362
      %v7375 = vsel %vm7371, %v7362, %v7364
      %v7376 = vsel %vm7371, %v7364, %v7366
      %v7377 = vsel %vm7371, %v7366, %v7368
      %v7378 = vsel %vm7371, %v7368, %v7370
      %v7386 = vadd.f32 %v7340, %v7372
      %v7387 = vadd.f32 %v7341, %v7373
      %v7388 = vadd.f32 %v7342, %v7374
      %v7389 = vadd.f32 %v7343, %v7375
      %v7390 = vadd.f32 %v7344, %v7376
      %v7391 = vadd.f32 %v7345, %v7377
      %v7392 = vadd.f32 %v7346, %v7378
      %v7393 = vrot.slane %v6452, 5
      %v7394 = vrot.slane %v6454, 5
      %v7395 = vrot.slane %v6540, 5
      %v7396 = vrot.slane %v6542, 5
      %v7397 = vrot.slane %v6629, 5
      %v7398 = vrot.slane %v6631, 5
      %v7399 = vrot.slane %v6718, 5
      %v7400 = vrot.slane %v6720, 5
      %7401 = vrot.lane.b32.xlu0 %v7393, 61
      %v7402 = vpop.permute.xlu0 %7401
      %7403 = vrot.lane.b32.xlu0 %v7394, 61
      %v7404 = vpop.permute.xlu0 %7403
      %7405 = vrot.lane.b32.xlu0 %v7395, 61
      %v7406 = vpop.permute.xlu0 %7405
      %7407 = vrot.lane.b32.xlu0 %v7396, 61
      %v7408 = vpop.permute.xlu0 %7407
      %7409 = vrot.lane.b32.xlu0 %v7397, 61
      %v7410 = vpop.permute.xlu0 %7409
      %7411 = vrot.lane.b32.xlu0 %v7398, 61
      %v7412 = vpop.permute.xlu0 %7411
      %7413 = vrot.lane.b32.xlu0 %v7399, 61
      %v7414 = vpop.permute.xlu0 %7413
      %7415 = vrot.lane.b32.xlu0 %v7400, 61
      %v7416 = vpop.permute.xlu0 %7415
      %vm7417 = vcmask 498688
      %v7418 = vsel %vm7417, %v7402, %v7404
      %v7419 = vsel %vm7417, %v7404, %v7406
      %v7420 = vsel %vm7417, %v7406, %v7408
      %v7421 = vsel %vm7417, %v7408, %v7410
      %v7422 = vsel %vm7417, %v7410, %v7412
      %v7423 = vsel %vm7417, %v7412, %v7414
      %v7424 = vsel %vm7417, %v7414, %v7416
      %v7432 = vadd.f32 %v7386, %v7418
      %v7433 = vadd.f32 %v7387, %v7419
      %v7434 = vadd.f32 %v7388, %v7420
      %v7435 = vadd.f32 %v7389, %v7421
      %v7436 = vadd.f32 %v7390, %v7422
      %v7437 = vadd.f32 %v7391, %v7423
      %v7438 = vadd.f32 %v7392, %v7424
      %v7439 = vrot.slane %v6452, 6
      %v7440 = vrot.slane %v6454, 6
      %v7441 = vrot.slane %v6540, 6
      %v7442 = vrot.slane %v6542, 6
      %v7443 = vrot.slane %v6629, 6
      %v7444 = vrot.slane %v6631, 6
      %v7445 = vrot.slane %v6718, 6
      %v7446 = vrot.slane %v6720, 6
      %7447 = vrot.lane.b32.xlu0 %v7439, 60
      %v7448 = vpop.permute.xlu0 %7447
      %7449 = vrot.lane.b32.xlu0 %v7440, 60
      %v7450 = vpop.permute.xlu0 %7449
      %7451 = vrot.lane.b32.xlu0 %v7441, 60
      %v7452 = vpop.permute.xlu0 %7451
      %7453 = vrot.lane.b32.xlu0 %v7442, 60
      %v7454 = vpop.permute.xlu0 %7453
      %7455 = vrot.lane.b32.xlu0 %v7443, 60
      %v7456 = vpop.permute.xlu0 %7455
      %7457 = vrot.lane.b32.xlu0 %v7444, 60
      %v7458 = vpop.permute.xlu0 %7457
      %7459 = vrot.lane.b32.xlu0 %v7445, 60
      %v7460 = vpop.permute.xlu0 %7459
      %7461 = vrot.lane.b32.xlu0 %v7446, 60
      %v7462 = vpop.permute.xlu0 %7461
      %vm7463 = vcmask 490496
      %v7464 = vsel %vm7463, %v7448, %v7450
      %v7465 = vsel %vm7463, %v7450, %v7452
      %v7466 = vsel %vm7463, %v7452, %v7454
      %v7467 = vsel %vm7463, %v7454, %v7456
      %v7468 = vsel %vm7463, %v7456, %v7458
      %v7469 = vsel %vm7463, %v7458, %v7460
      %v7470 = vsel %vm7463, %v7460, %v7462
      %v7478 = vadd.f32 %v7432, %v7464
      %v7479 = vadd.f32 %v7433, %v7465
      %v7480 = vadd.f32 %v7434, %v7466
      %v7481 = vadd.f32 %v7435, %v7467
      %v7482 = vadd.f32 %v7436, %v7468
      %v7483 = vadd.f32 %v7437, %v7469
      %v7484 = vadd.f32 %v7438, %v7470
      %v7485 = vrot.slane %v6452, 7
      %v7486 = vrot.slane %v6454, 7
      %v7487 = vrot.slane %v6540, 7
      %v7488 = vrot.slane %v6542, 7
      %v7489 = vrot.slane %v6629, 7
      %v7490 = vrot.slane %v6631, 7
      %v7491 = vrot.slane %v6718, 7
      %v7492 = vrot.slane %v6720, 7
      %7493 = vrot.lane.b32.xlu0 %v7485, 32
      %v7494 = vpop.permute.xlu0 %7493
      %7495 = vrot.lane.b32.xlu0 %v7486, 32
      %v7496 = vpop.permute.xlu0 %7495
      %7497 = vrot.lane.b32.xlu0 %v7487, 32
      %v7498 = vpop.permute.xlu0 %7497
      %7499 = vrot.lane.b32.xlu0 %v7488, 32
      %v7500 = vpop.permute.xlu0 %7499
      %7501 = vrot.lane.b32.xlu0 %v7489, 32
      %v7502 = vpop.permute.xlu0 %7501
      %7503 = vrot.lane.b32.xlu0 %v7490, 32
      %v7504 = vpop.permute.xlu0 %7503
      %7505 = vrot.lane.b32.xlu0 %v7491, 32
      %v7506 = vpop.permute.xlu0 %7505
      %7507 = vrot.lane.b32.xlu0 %v7492, 32
      %v7508 = vpop.permute.xlu0 %7507
      %vm7509 = vcmask 261120
      %v7510 = vsel %vm7509, %v7494, %v7496
      %v7511 = vsel %vm7509, %v7496, %v7498
      %v7512 = vsel %vm7509, %v7498, %v7500
      %v7513 = vsel %vm7509, %v7500, %v7502
      %v7514 = vsel %vm7509, %v7502, %v7504
      %v7515 = vsel %vm7509, %v7504, %v7506
      %v7516 = vsel %vm7509, %v7506, %v7508
      %v7524 = vadd.f32 %v7478, %v7510
      %v7525 = vadd.f32 %v7479, %v7511
      %v7526 = vadd.f32 %v7480, %v7512
      %v7527 = vadd.f32 %v7481, %v7513
      %v7528 = vadd.f32 %v7482, %v7514
      %v7529 = vadd.f32 %v7483, %v7515
      %v7530 = vadd.f32 %v7484, %v7516
      %7539 = vrot.lane.b32.xlu0 %v6458, 31
      %v7540 = vpop.permute.xlu0 %7539
      %7541 = vrot.lane.b32.xlu0 %v6460, 31
      %v7542 = vpop.permute.xlu0 %7541
      %7543 = vrot.lane.b32.xlu0 %v6546, 31
      %v7544 = vpop.permute.xlu0 %7543
      %7545 = vrot.lane.b32.xlu0 %v6548, 31
      %v7546 = vpop.permute.xlu0 %7545
      %7547 = vrot.lane.b32.xlu0 %v6635, 31
      %v7548 = vpop.permute.xlu0 %7547
      %7549 = vrot.lane.b32.xlu0 %v6637, 31
      %v7550 = vpop.permute.xlu0 %7549
      %7551 = vrot.lane.b32.xlu0 %v6724, 31
      %v7552 = vpop.permute.xlu0 %7551
      %7553 = vrot.lane.b32.xlu0 %v6726, 31
      %v7554 = vpop.permute.xlu0 %7553
      %vm7555 = vcmask 252928
      %v7556 = vsel %vm7555, %v7540, %v7542
      %v7557 = vsel %vm7555, %v7542, %v7544
      %v7558 = vsel %vm7555, %v7544, %v7546
      %v7559 = vsel %vm7555, %v7546, %v7548
      %v7560 = vsel %vm7555, %v7548, %v7550
      %v7561 = vsel %vm7555, %v7550, %v7552
      %v7562 = vsel %vm7555, %v7552, %v7554
      %v7570 = vadd.f32 %v7524, %v7556
      %v7571 = vadd.f32 %v7525, %v7557
      %v7572 = vadd.f32 %v7526, %v7558
      %v7573 = vadd.f32 %v7527, %v7559
      %v7574 = vadd.f32 %v7528, %v7560
      %v7575 = vadd.f32 %v7529, %v7561
      %v7576 = vadd.f32 %v7530, %v7562
      %v7577 = vrot.slane %v6458, 1
      %v7578 = vrot.slane %v6460, 1
      %v7579 = vrot.slane %v6546, 1
      %v7580 = vrot.slane %v6548, 1
      %v7581 = vrot.slane %v6635, 1
      %v7582 = vrot.slane %v6637, 1
      %v7583 = vrot.slane %v6724, 1
      %v7584 = vrot.slane %v6726, 1
      %7585 = vrot.lane.b32.xlu0 %v7577, 30
      %v7586 = vpop.permute.xlu0 %7585
      %7587 = vrot.lane.b32.xlu0 %v7578, 30
      %v7588 = vpop.permute.xlu0 %7587
      %7589 = vrot.lane.b32.xlu0 %v7579, 30
      %v7590 = vpop.permute.xlu0 %7589
      %7591 = vrot.lane.b32.xlu0 %v7580, 30
      %v7592 = vpop.permute.xlu0 %7591
      %7593 = vrot.lane.b32.xlu0 %v7581, 30
      %v7594 = vpop.permute.xlu0 %7593
      %7595 = vrot.lane.b32.xlu0 %v7582, 30
      %v7596 = vpop.permute.xlu0 %7595
      %7597 = vrot.lane.b32.xlu0 %v7583, 30
      %v7598 = vpop.permute.xlu0 %7597
      %7599 = vrot.lane.b32.xlu0 %v7584, 30
      %v7600 = vpop.permute.xlu0 %7599
      %vm7601 = vcmask 244736
      %v7602 = vsel %vm7601, %v7586, %v7588
      %v7603 = vsel %vm7601, %v7588, %v7590
      %v7604 = vsel %vm7601, %v7590, %v7592
      %v7605 = vsel %vm7601, %v7592, %v7594
      %v7606 = vsel %vm7601, %v7594, %v7596
      %v7607 = vsel %vm7601, %v7596, %v7598
      %v7608 = vsel %vm7601, %v7598, %v7600
      %v7616 = vadd.f32 %v7570, %v7602
      %v7617 = vadd.f32 %v7571, %v7603
      %v7618 = vadd.f32 %v7572, %v7604
      %v7619 = vadd.f32 %v7573, %v7605
      %v7620 = vadd.f32 %v7574, %v7606
      %v7621 = vadd.f32 %v7575, %v7607
      %v7622 = vadd.f32 %v7576, %v7608
      %v7623 = vrot.slane %v6458, 2
      %v7624 = vrot.slane %v6460, 2
      %v7625 = vrot.slane %v6546, 2
      %v7626 = vrot.slane %v6548, 2
      %v7627 = vrot.slane %v6635, 2
      %v7628 = vrot.slane %v6637, 2
      %v7629 = vrot.slane %v6724, 2
      %v7630 = vrot.slane %v6726, 2
      %7631 = vrot.lane.b32.xlu0 %v7623, 29
      %v7632 = vpop.permute.xlu0 %7631
      %7633 = vrot.lane.b32.xlu0 %v7624, 29
      %v7634 = vpop.permute.xlu0 %7633
      %7635 = vrot.lane.b32.xlu0 %v7625, 29
      %v7636 = vpop.permute.xlu0 %7635
      %7637 = vrot.lane.b32.xlu0 %v7626, 29
      %v7638 = vpop.permute.xlu0 %7637
      %7639 = vrot.lane.b32.xlu0 %v7627, 29
      %v7640 = vpop.permute.xlu0 %7639
      %7641 = vrot.lane.b32.xlu0 %v7628, 29
      %v7642 = vpop.permute.xlu0 %7641
      %7643 = vrot.lane.b32.xlu0 %v7629, 29
      %v7644 = vpop.permute.xlu0 %7643
      %7645 = vrot.lane.b32.xlu0 %v7630, 29
      %v7646 = vpop.permute.xlu0 %7645
      %vm7647 = vcmask 236544
      %v7648 = vsel %vm7647, %v7632, %v7634
      %v7649 = vsel %vm7647, %v7634, %v7636
      %v7650 = vsel %vm7647, %v7636, %v7638
      %v7651 = vsel %vm7647, %v7638, %v7640
      %v7652 = vsel %vm7647, %v7640, %v7642
      %v7653 = vsel %vm7647, %v7642, %v7644
      %v7654 = vsel %vm7647, %v7644, %v7646
      %v7662 = vadd.f32 %v7616, %v7648
      %v7663 = vadd.f32 %v7617, %v7649
      %v7664 = vadd.f32 %v7618, %v7650
      %v7665 = vadd.f32 %v7619, %v7651
      %v7666 = vadd.f32 %v7620, %v7652
      %v7667 = vadd.f32 %v7621, %v7653
      %v7668 = vadd.f32 %v7622, %v7654
      %v7669 = vrot.slane %v6458, 3
      %v7670 = vrot.slane %v6460, 3
      %v7671 = vrot.slane %v6546, 3
      %v7672 = vrot.slane %v6548, 3
      %v7673 = vrot.slane %v6635, 3
      %v7674 = vrot.slane %v6637, 3
      %v7675 = vrot.slane %v6724, 3
      %v7676 = vrot.slane %v6726, 3
      %7677 = vrot.lane.b32.xlu0 %v7669, 28
      %v7678 = vpop.permute.xlu0 %7677
      %7679 = vrot.lane.b32.xlu0 %v7670, 28
      %v7680 = vpop.permute.xlu0 %7679
      %7681 = vrot.lane.b32.xlu0 %v7671, 28
      %v7682 = vpop.permute.xlu0 %7681
      %7683 = vrot.lane.b32.xlu0 %v7672, 28
      %v7684 = vpop.permute.xlu0 %7683
      %7685 = vrot.lane.b32.xlu0 %v7673, 28
      %v7686 = vpop.permute.xlu0 %7685
      %7687 = vrot.lane.b32.xlu0 %v7674, 28
      %v7688 = vpop.permute.xlu0 %7687
      %7689 = vrot.lane.b32.xlu0 %v7675, 28
      %v7690 = vpop.permute.xlu0 %7689
      %7691 = vrot.lane.b32.xlu0 %v7676, 28
      %v7692 = vpop.permute.xlu0 %7691
      %vm7693 = vcmask 228352
      %v7694 = vsel %vm7693, %v7678, %v7680
      %v7695 = vsel %vm7693, %v7680, %v7682
      %v7696 = vsel %vm7693, %v7682, %v7684
      %v7697 = vsel %vm7693, %v7684, %v7686
      %v7698 = vsel %vm7693, %v7686, %v7688
      %v7699 = vsel %vm7693, %v7688, %v7690
      %v7700 = vsel %vm7693, %v7690, %v7692
      %v7708 = vadd.f32 %v7662, %v7694
      %v7709 = vadd.f32 %v7663, %v7695
      %v7710 = vadd.f32 %v7664, %v7696
      %v7711 = vadd.f32 %v7665, %v7697
      %v7712 = vadd.f32 %v7666, %v7698
      %v7713 = vadd.f32 %v7667, %v7699
      %v7714 = vadd.f32 %v7668, %v7700
      %v7715 = vrot.slane %v6460, 4
      %v7716 = vrot.slane %v6546, 4
      %v7717 = vrot.slane %v6548, 4
      %v7718 = vrot.slane %v6635, 4
      %v7719 = vrot.slane %v6637, 4
      %v7720 = vrot.slane %v6724, 4
      %v7721 = vrot.slane %v6726, 4
      %v7729 = vadd.f32 %v7708, %v7715
      %v7730 = vadd.f32 %v7709, %v7716
      %v7731 = vadd.f32 %v7710, %v7717
      %v7732 = vadd.f32 %v7711, %v7718
      %v7733 = vadd.f32 %v7712, %v7719
      %v7734 = vadd.f32 %v7713, %v7720
      %v7735 = vadd.f32 %v7714, %v7721
      %v7737 = vrot.slane %v6460, 5
      %v7738 = vrot.slane %v6546, 5
      %v7739 = vrot.slane %v6548, 5
      %v7740 = vrot.slane %v6635, 5
      %v7741 = vrot.slane %v6637, 5
      %v7742 = vrot.slane %v6724, 5
      %v7743 = vrot.slane %v6726, 5
      %v7744 = vrot.slane %v6809, 5
      %7745 = vrot.lane.b32.xlu0 %v7737, 127
      %v7746 = vpop.permute.xlu0 %7745
      %7747 = vrot.lane.b32.xlu0 %v7738, 127
      %v7748 = vpop.permute.xlu0 %7747
      %7749 = vrot.lane.b32.xlu0 %v7739, 127
      %v7750 = vpop.permute.xlu0 %7749
      %7751 = vrot.lane.b32.xlu0 %v7740, 127
      %v7752 = vpop.permute.xlu0 %7751
      %7753 = vrot.lane.b32.xlu0 %v7741, 127
      %v7754 = vpop.permute.xlu0 %7753
      %7755 = vrot.lane.b32.xlu0 %v7742, 127
      %v7756 = vpop.permute.xlu0 %7755
      %7757 = vrot.lane.b32.xlu0 %v7743, 127
      %v7758 = vpop.permute.xlu0 %7757
      %7759 = vrot.lane.b32.xlu0 %v7744, 127
      %v7760 = vpop.permute.xlu0 %7759
      %v7761 = vsel %vm6866, %v7746, %v7748
      %v7762 = vsel %vm6866, %v7748, %v7750
      %v7763 = vsel %vm6866, %v7750, %v7752
      %v7764 = vsel %vm6866, %v7752, %v7754
      %v7765 = vsel %vm6866, %v7754, %v7756
      %v7766 = vsel %vm6866, %v7756, %v7758
      %v7767 = vsel %vm6866, %v7758, %v7760
      %v7775 = vadd.f32 %v7729, %v7761
      %v7776 = vadd.f32 %v7730, %v7762
      %v7777 = vadd.f32 %v7731, %v7763
      %v7778 = vadd.f32 %v7732, %v7764
      %v7779 = vadd.f32 %v7733, %v7765
      %v7780 = vadd.f32 %v7734, %v7766
      %v7781 = vadd.f32 %v7735, %v7767
      %v7782 = vrot.slane %v6460, 6
      %v7783 = vrot.slane %v6546, 6
      %v7784 = vrot.slane %v6548, 6
      %v7785 = vrot.slane %v6635, 6
      %v7786 = vrot.slane %v6637, 6
      %v7787 = vrot.slane %v6724, 6
      %v7788 = vrot.slane %v6726, 6
      %v7789 = vrot.slane %v6809, 6
      %7790 = vrot.lane.b32.xlu0 %v7782, 126
      %v7791 = vpop.permute.xlu0 %7790
      %7792 = vrot.lane.b32.xlu0 %v7783, 126
      %v7793 = vpop.permute.xlu0 %7792
      %7794 = vrot.lane.b32.xlu0 %v7784, 126
      %v7795 = vpop.permute.xlu0 %7794
      %7796 = vrot.lane.b32.xlu0 %v7785, 126
      %v7797 = vpop.permute.xlu0 %7796
      %7798 = vrot.lane.b32.xlu0 %v7786, 126
      %v7799 = vpop.permute.xlu0 %7798
      %7800 = vrot.lane.b32.xlu0 %v7787, 126
      %v7801 = vpop.permute.xlu0 %7800
      %7802 = vrot.lane.b32.xlu0 %v7788, 126
      %v7803 = vpop.permute.xlu0 %7802
      %7804 = vrot.lane.b32.xlu0 %v7789, 126
      %v7805 = vpop.permute.xlu0 %7804
      %v7806 = vsel %vm6912, %v7791, %v7793
      %v7807 = vsel %vm6912, %v7793, %v7795
      %v7808 = vsel %vm6912, %v7795, %v7797
      %v7809 = vsel %vm6912, %v7797, %v7799
      %v7810 = vsel %vm6912, %v7799, %v7801
      %v7811 = vsel %vm6912, %v7801, %v7803
      %v7812 = vsel %vm6912, %v7803, %v7805
      %v7820 = vadd.f32 %v7775, %v7806
      %v7821 = vadd.f32 %v7776, %v7807
      %v7822 = vadd.f32 %v7777, %v7808
      %v7823 = vadd.f32 %v7778, %v7809
      %v7824 = vadd.f32 %v7779, %v7810
      %v7825 = vadd.f32 %v7780, %v7811
      %v7826 = vadd.f32 %v7781, %v7812
      %v7827 = vrot.slane %v6460, 7
      %v7828 = vrot.slane %v6546, 7
      %v7829 = vrot.slane %v6548, 7
      %v7830 = vrot.slane %v6635, 7
      %v7831 = vrot.slane %v6637, 7
      %v7832 = vrot.slane %v6724, 7
      %v7833 = vrot.slane %v6726, 7
      %v7834 = vrot.slane %v6809, 7
      %7835 = vrot.lane.b32.xlu0 %v7827, 125
      %v7836 = vpop.permute.xlu0 %7835
      %7837 = vrot.lane.b32.xlu0 %v7828, 125
      %v7838 = vpop.permute.xlu0 %7837
      %7839 = vrot.lane.b32.xlu0 %v7829, 125
      %v7840 = vpop.permute.xlu0 %7839
      %7841 = vrot.lane.b32.xlu0 %v7830, 125
      %v7842 = vpop.permute.xlu0 %7841
      %7843 = vrot.lane.b32.xlu0 %v7831, 125
      %v7844 = vpop.permute.xlu0 %7843
      %7845 = vrot.lane.b32.xlu0 %v7832, 125
      %v7846 = vpop.permute.xlu0 %7845
      %7847 = vrot.lane.b32.xlu0 %v7833, 125
      %v7848 = vpop.permute.xlu0 %7847
      %7849 = vrot.lane.b32.xlu0 %v7834, 125
      %v7850 = vpop.permute.xlu0 %7849
      %v7851 = vsel %vm6958, %v7836, %v7838
      %v7852 = vsel %vm6958, %v7838, %v7840
      %v7853 = vsel %vm6958, %v7840, %v7842
      %v7854 = vsel %vm6958, %v7842, %v7844
      %v7855 = vsel %vm6958, %v7844, %v7846
      %v7856 = vsel %vm6958, %v7846, %v7848
      %v7857 = vsel %vm6958, %v7848, %v7850
      %v7865 = vadd.f32 %v7820, %v7851
      %v7866 = vadd.f32 %v7821, %v7852
      %v7867 = vadd.f32 %v7822, %v7853
      %v7868 = vadd.f32 %v7823, %v7854
      %v7869 = vadd.f32 %v7824, %v7855
      %v7870 = vadd.f32 %v7825, %v7856
      %v7871 = vadd.f32 %v7826, %v7857
      %7880 = vrot.lane.b32.xlu0 %v6465, 124
      %v7881 = vpop.permute.xlu0 %7880
      %7882 = vrot.lane.b32.xlu0 %v6552, 124
      %v7883 = vpop.permute.xlu0 %7882
      %7884 = vrot.lane.b32.xlu0 %v6554, 124
      %v7885 = vpop.permute.xlu0 %7884
      %7886 = vrot.lane.b32.xlu0 %v6641, 124
      %v7887 = vpop.permute.xlu0 %7886
      %7888 = vrot.lane.b32.xlu0 %v6643, 124
      %v7889 = vpop.permute.xlu0 %7888
      %7890 = vrot.lane.b32.xlu0 %v6730, 124
      %v7891 = vpop.permute.xlu0 %7890
      %7892 = vrot.lane.b32.xlu0 %v6732, 124
      %v7893 = vpop.permute.xlu0 %7892
      %7894 = vrot.lane.b32.xlu0 %v6814, 124
      %v7895 = vpop.permute.xlu0 %7894
      %v7896 = vsel %vm7004, %v7881, %v7883
      %v7897 = vsel %vm7004, %v7883, %v7885
      %v7898 = vsel %vm7004, %v7885, %v7887
      %v7899 = vsel %vm7004, %v7887, %v7889
      %v7900 = vsel %vm7004, %v7889, %v7891
      %v7901 = vsel %vm7004, %v7891, %v7893
      %v7902 = vsel %vm7004, %v7893, %v7895
      %v7910 = vadd.f32 %v7865, %v7896
      %v7911 = vadd.f32 %v7866, %v7897
      %v7912 = vadd.f32 %v7867, %v7898
      %v7913 = vadd.f32 %v7868, %v7899
      %v7914 = vadd.f32 %v7869, %v7900
      %v7915 = vadd.f32 %v7870, %v7901
      %v7916 = vadd.f32 %v7871, %v7902
      %vm7917 = vcmp.gt.f32.partialorder %v7910, 0.0
      %vm7918 = vcmp.gt.f32.partialorder %v7911, 0.0
      %vm7919 = vcmp.gt.f32.partialorder %v7912, 0.0
      %vm7920 = vcmp.gt.f32.partialorder %v7913, 0.0
      %vm7921 = vcmp.gt.f32.partialorder %v7914, 0.0
      %vm7922 = vcmp.gt.f32.partialorder %v7915, 0.0
      %vm7923 = vcmp.gt.f32.partialorder %v7916, 0.0
      %v7924 = vmul.f32 %v7910, 0.2
      %v7925 = vmul.f32 %v7911, 0.2
      %v7926 = vmul.f32 %v7912, 0.2
      %v7927 = vmul.f32 %v7913, 0.2
      %v7928 = vmul.f32 %v7914, 0.2
      %v7929 = vmul.f32 %v7915, 0.2
      %v7930 = vmul.f32 %v7916, 0.2
      %v7931 = vsel %vm7917, %v7910, %v7924
      %v7932 = vsel %vm7918, %v7911, %v7925
      %v7933 = vsel %vm7919, %v7912, %v7926
      %v7934 = vsel %vm7920, %v7913, %v7927
      %v7935 = vsel %vm7921, %v7914, %v7928
      %v7936 = vsel %vm7922, %v7915, %v7929
      %v7937 = vsel %vm7923, %v7916, %v7930
      %v7945 = vcombine.low %v7931, %v7932
      %v7946 = vcombine.low %v7933, %v7934
      %v7947 = vcombine.low %v7935, %v7936
      %v7949 = vunpack.c.l.s4 1966171168
      %v7950 = vunpack.c.0.s8 %v7949
      %v7951 = vlaneseq
      %v7952 = vshrl.u32 %v7951, 7
      %v7953 = vsub.s32 %v7950, %v7952
      %v7954 = vrot.slane %v7945, %v7953
      %v7956 = vunpack.c.l.s4 1966171168
      %v7957 = vunpack.c.0.s8 %v7956
      %v7958 = vlaneseq
      %v7959 = vshrl.u32 %v7958, 7
      %v7960 = vsub.s32 %v7957, %v7959
      %v7961 = vrot.slane %v7946, %v7960
      %v7963 = vunpack.c.l.s4 1966171168
      %v7964 = vunpack.c.0.s8 %v7963
      %v7965 = vlaneseq
      %v7966 = vshrl.u32 %v7965, 7
      %v7967 = vsub.s32 %v7964, %v7966
      %v7968 = vrot.slane %v7947, %v7967
      %v7970 = vunpack.c.l.s4 1966171168
      %v7971 = vunpack.c.0.s8 %v7970
      %v7972 = vlaneseq
      %v7973 = vshrl.u32 %v7972, 7
      %v7974 = vsub.s32 %v7971, %v7973
      %v7975 = vrot.slane %v7937, %v7974
      %v7976 = vcombine.low %v7954, %v7961
      %v7977 = vcombine.low %v7968, %v7975
      %v7979 = vunpack.c.l.s4 1966171168
      %v7980 = vunpack.c.0.s8 %v7979
      %v7981 = vlaneseq
      %v7982 = vshrl.u32 %v7981, 7
      %v7983 = vsub.s32 %v7980, %v7982
      %v7984 = vrot.slane %v7976, %v7983
      %v7986 = vunpack.c.l.s4 1966171168
      %v7987 = vunpack.c.0.s8 %v7986
      %v7988 = vlaneseq
      %v7989 = vshrl.u32 %v7988, 7
      %v7990 = vsub.s32 %v7987, %v7989
      %v7991 = vrot.slane %v7977, %v7990
      %v7992 = vcombine.low %v7984, %v7991
      %v7994 = vlaneseq
      %vm7995 = vcmp.ge.s32.totalorder %v7994, 0
      %vm7996 = vcmp.lt.s32.totalorder %v7994, 896
      %vm7997 = vmand %vm7995, %vm7996
      %7998 = vst.msk [vmem:[%s278] sm:$0x7f] %vm7997, %v7992
      %p7999 = scmp.lt.s32.totalorder %s20, 1
      %s8000 = scalar_select %p7999, %s20, 1
      %s8001 = smul.addr %s8000, 7
      %s8002 = scalar_lea.vmem %s7, %s8001
      // Predicated region
      $region49: #{dcgan_generator_forward.3} parent=47 // pred_check
        %p8003 = pneg %p190
      $region50: #{dcgan_generator_forward.3} parent=47 // pred_check_branch
        %8005 = sbr.rel (%p8003) target = $region52
      $region51: #{dcgan_generator_forward.3} parent=47 // pred_region
        _
      $region52: #{dcgan_generator_forward.3} parent=47 // pred_fallthru
        _
    $region48: #{dcgan_generator_forward.3} parent=5 // pred_fallthru
      _
    %p8006 = scmp.le.s32.totalorder 2, %s15
    // Predicated region
    $region53: #{dcgan_generator_forward.3} parent=5 // pred_check
      %p8007 = pneg %p8006
    $region54: #{dcgan_generator_forward.3} parent=5 // pred_check_branch
      %8009 = sbr.rel (%p8007) target = $region56
    $region55: #{dcgan_generator_forward.3} parent=5 // pred_region
      %s8010 = ssub.s32 %s15, 2
      // Predicated region
      $region57: #{dcgan_generator_forward.3} parent=55 // pred_check
        %p8011 = pneg %p196
      $region58: #{dcgan_generator_forward.3} parent=55 // pred_check_branch
        %8013 = sbr.rel (%p8011) target = $region60
      $region59: #{dcgan_generator_forward.3} parent=55 // pred_region
        %p8014 = scmp.lt.s32.totalorder %s21, 1
        %s8015 = scalar_select %p8014, %s21, 1
        %s8016 = smul.addr %s8015, 7
        %s8017 = scalar_lea.vmem %s7, %s8016
      $region60: #{dcgan_generator_forward.3} parent=55 // pred_fallthru
        _
    $region56: #{dcgan_generator_forward.3} parent=5 // pred_fallthru
      _
  $region6: #{dcgan_generator_forward.3} parent=0 // loop_footer
    %s19 = sadd.s32 1, %s15
  $region7: #{dcgan_generator_forward.3} parent=0 // loop_footer_branch
    %14 = sbr.rel target = $region3
  $region8: #{dcgan_generator_forward.3} parent=0 // loop_exit
    _

</llo_original>
